<compile_context>
chip_gen: v7x
topology: tpu7x:2x2x1
jax: 0.10.0
libtpu: 0.0.40
codegen_flags: <defaults>
</compile_context>

<pallas_src>
import jax
import jax.numpy as jnp
from jax.experimental import pallas as pl
from jax.experimental.pallas import tpu as pltpu


def gcn6_kernel(a_ref, x_ref,
                w1_ref, b1_ref, w2_ref, b2_ref, w3_ref, b3_ref,
                w4_ref, b4_ref, w5_ref, b5_ref, w6_ref, b6_ref,
                mask_ref,
                wc1_ref, bc1_ref, wc2_ref, bc2_ref, wc3_ref, bc3_ref,
                out_ref):
    a = a_ref[...]            # [N, N] normalized adjacency (f32)
    h = x_ref[...]            # [N, F] node features (f32)

    # TODO(synk): the reference uses a custom GCNConv(..., aggr='sum', K=3);
    # K has no standard PyG GCNConv meaning, so standard single-hop
    # symmetric-normalized GCN propagation is implemented for each layer.
    def gcn_layer(h, w_ref, b_ref, leaky):
        # Feature transform on the MXU with bf16 operands, f32 accumulation.
        z = jnp.dot(h.astype(jnp.bfloat16), w_ref[...],
                    preferred_element_type=jnp.float32)
        # Propagation (A_hat @ Z) kept in f32; adjacency is tiny.
        z = jnp.dot(a, z, preferred_element_type=jnp.float32) + b_ref[...]
        if leaky:                      # LeakyReLU, PyTorch default slope 0.01
            z = jnp.where(z > 0, z, 0.01 * z)
        return z

    h = gcn_layer(h, w1_ref, b1_ref, True)    # F      -> H
    h = gcn_layer(h, w2_ref, b2_ref, True)    # H      -> 2H
    h = gcn_layer(h, w3_ref, b3_ref, True)    # 2H     -> 4H
    h = gcn_layer(h, w4_ref, b4_ref, True)    # 4H     -> 8H
    h = gcn_layer(h, w5_ref, b5_ref, True)    # 8H     -> 16H
    h = gcn_layer(h, w6_ref, b6_ref, False)   # 16H    -> 20H  (no relu, per forward)

    # --- global max pool per graph (gmp), vectorized masked reduce ------------
    m = mask_ref[...]                                   # [B_pad, N]
    neg = jnp.float32(-3.0e38)
    masked = jnp.where(m[:, :, None] > 0, h[None, :, :], neg)   # [B_pad, N, 20H]
    pooled = jnp.max(masked, axis=1)                            # [B_pad, 20H]
    has_nodes = jnp.sum(m, axis=1, keepdims=True) > 0           # [B_pad, 1]
    pooled = jnp.where(has_nodes, pooled, 0.0)   # keep padded/empty rows finite

    # --- classification MLP: 20H -> 1024 -> 512 -> 4 (lane-padded to 128) -----
    z = jnp.dot(pooled.astype(jnp.bfloat16), wc1_ref[...],
                preferred_element_type=jnp.float32) + bc1_ref[...]
    z = jnp.maximum(z, 0.0)
    z = jnp.dot(z.astype(jnp.bfloat16), wc2_ref[...],
                preferred_element_type=jnp.float32) + bc2_ref[...]
    z = jnp.maximum(z, 0.0)
    out_ref[...] = (jnp.dot(z.astype(jnp.bfloat16), wc3_ref[...],
                            preferred_element_type=jnp.float32) + bc3_ref[...])

    # NOTE: nn.Dropout is constructed in __init__ but never used in forward();
    # nothing to implement for it.


def build_normalized_adjacency(edge_index, num_nodes):
    """Dense A_hat = D^{-1/2} (A ∪ I) D^{-1/2}, messages flow src -> dst.

    Self-loops are merged with max (weight 1.0) so pre-existing self-loops in
    edge_index are not double-counted.
    """
    src, dst = edge_index[0], edge_index[1]
    ones = jnp.ones(src.shape[0], jnp.float32)
    A = jnp.zeros((num_nodes, num_nodes), jnp.float32).at[dst, src].max(ones)
    A = jnp.maximum(A, jnp.eye(num_nodes, dtype=jnp.float32))   # self loops
    deg = A.sum(axis=1)
    dinv = jax.lax.rsqrt(deg)
    return A * dinv[:, None] * dinv[None, :]


def gcn6_forward(x, edge_index, batch, num_graphs, params):
    n = x.shape[0]
    a_hat = build_normalized_adjacency(edge_index, n)

    # Pad graph count to a multiple of 8 sublanes for clean pooled/out tiles.
    b_pad = max(8, -(-num_graphs // 8) * 8)
    mask = (batch[None, :] == jnp.arange(b_pad)[:, None]).astype(jnp.float32)

    (w1, b1, w2, b2, w3, b3, w4, b4, w5, b5, w6, b6,
     wc1, bc1, wc2, bc2, wc3, bc3) = params
    args = (a_hat, x,
            w1, b1, w2, b2, w3, b3, w4, b4, w5, b5, w6, b6,
            mask,
            wc1, bc1, wc2, bc2, wc3, bc3)

    vmem_spec = pl.BlockSpec(memory_space=pltpu.MemorySpace.VMEM)
    out_padded = pl.pallas_call(
        gcn6_kernel,
        out_shape=jax.ShapeDtypeStruct((b_pad, 128), jnp.float32),
        in_specs=[vmem_spec] * len(args),
        out_specs=vmem_spec,
    )(*args)
    return out_padded[:num_graphs, :4]


def init_params(key, feature_dim, hidden_dim):
    ks = jax.random.split(key, 9)

    def linear(k, fan_in, fan_out, w_dtype=jnp.bfloat16):
        w = (jax.random.normal(k, (fan_in, fan_out), jnp.float32)
             / jnp.sqrt(jnp.float32(fan_in))).astype(w_dtype)
        b = jnp.zeros((1, fan_out), jnp.float32)
        return w, b

    h = hidden_dim
    w1, b1 = linear(ks[0], feature_dim, h)           # cconv1
    w2, b2 = linear(ks[1], h, h * 2)                 # cconv2
    w3, b3 = linear(ks[2], h * 2, h * 4)             # cconv3
    w4, b4 = linear(ks[3], h * 4, h * 8)             # cconv4
    w5, b5 = linear(ks[4], h * 8, h * 16)            # cconv5
    w6, b6 = linear(ks[5], h * 16, h * 20)           # cconv6
    wc1, bc1 = linear(ks[6], h * 20, 1024)           # Linear(20H, 1024)
    wc2, bc2 = linear(ks[7], 1024, 512)              # Linear(1024, 512)
    wc3, bc3 = linear(ks[8], 512, 4)                 # Linear(512, 4)

    # Lane-pad the final layer to 128 output columns (lane-dense store);
    # extra columns are zero and sliced away in the wrapper.
    wc3p = jnp.zeros((512, 128), jnp.bfloat16).at[:, :4].set(wc3)
    bc3p = jnp.zeros((1, 128), jnp.float32).at[:, :4].set(bc3)

    return (w1, b1, w2, b2, w3, b3, w4, b4, w5, b5, w6, b6,
            wc1, bc1, wc2, bc2, wc3p, bc3p)


if __name__ == "__main__":
    key = jax.random.PRNGKey(0)
    k_x, k_p = jax.random.split(key)

    feature_dim = 8
    hidden_dim = 32
    num_graphs = 2
    nodes_per_graph = 8
    num_nodes = num_graphs * nodes_per_graph

    # Deterministic small graph batch: a bidirectional ring within each graph.
    edges = []
    for g in range(num_graphs):
        base = g * nodes_per_graph
        for i in range(nodes_per_graph):
            u = base + i
            v = base + (i + 1) % nodes_per_graph
            edges.append((u, v))
            edges.append((v, u))
    edge_index = jnp.asarray(edges, dtype=jnp.int32).T            # [2, E]
    batch = jnp.asarray(
        [g for g in range(num_graphs) for _ in range(nodes_per_graph)],
        dtype=jnp.int32)                                           # [N]

    x = jax.random.normal(k_x, (num_nodes, feature_dim), jnp.float32)
    params = init_params(k_p, feature_dim, hidden_dim)

    out = gcn6_forward(x, edge_index, batch, num_graphs, params)
    jax.block_until_ready(out)
    assert out.shape == (num_graphs, 4)
    assert bool(jnp.all(jnp.isfinite(out)))
    print("KERNEL_OK")
</pallas_src>

<mosaic_0001>
module attributes {stable_mosaic.version = 11 : i64} {
  func.func @gcn6_kernel(%arg0: memref<16x16xf32, #tpu.memory_space<vmem>>, %arg1: memref<16x8xf32, #tpu.memory_space<vmem>>, %arg2: memref<8x32xbf16, #tpu.memory_space<vmem>>, %arg3: memref<1x32xf32, #tpu.memory_space<vmem>>, %arg4: memref<32x64xbf16, #tpu.memory_space<vmem>>, %arg5: memref<1x64xf32, #tpu.memory_space<vmem>>, %arg6: memref<64x128xbf16, #tpu.memory_space<vmem>>, %arg7: memref<1x128xf32, #tpu.memory_space<vmem>>, %arg8: memref<128x256xbf16, #tpu.memory_space<vmem>>, %arg9: memref<1x256xf32, #tpu.memory_space<vmem>>, %arg10: memref<256x512xbf16, #tpu.memory_space<vmem>>, %arg11: memref<1x512xf32, #tpu.memory_space<vmem>>, %arg12: memref<512x640xbf16, #tpu.memory_space<vmem>>, %arg13: memref<1x640xf32, #tpu.memory_space<vmem>>, %arg14: memref<8x16xf32, #tpu.memory_space<vmem>>, %arg15: memref<640x1024xbf16, #tpu.memory_space<vmem>>, %arg16: memref<1x1024xf32, #tpu.memory_space<vmem>>, %arg17: memref<1024x512xbf16, #tpu.memory_space<vmem>>, %arg18: memref<1x512xf32, #tpu.memory_space<vmem>>, %arg19: memref<512x128xbf16, #tpu.memory_space<vmem>>, %arg20: memref<1x128xf32, #tpu.memory_space<vmem>>, %arg21: memref<8x128xf32, #tpu.memory_space<vmem>>) attributes {dimension_semantics = [], scalar_prefetch = 0 : i64, scratch_operands = 0 : i64, tpu.core_type = #tpu.core_type<tc>} {
    %c0 = arith.constant 0 : index
    %c0_0 = arith.constant 0 : index
    %0 = vector.load %arg0[%c0, %c0_0] : memref<16x16xf32, #tpu.memory_space<vmem>>, vector<16x16xf32>
    %c0_1 = arith.constant 0 : index
    %c0_2 = arith.constant 0 : index
    %1 = vector.load %arg1[%c0_1, %c0_2] : memref<16x8xf32, #tpu.memory_space<vmem>>, vector<16x8xf32>
    %2 = arith.truncf %1 : vector<16x8xf32> to vector<16x8xbf16>
    %c0_3 = arith.constant 0 : index
    %c0_4 = arith.constant 0 : index
    %3 = vector.load %arg2[%c0_3, %c0_4] : memref<8x32xbf16, #tpu.memory_space<vmem>>, vector<8x32xbf16>
    %cst = arith.constant dense<0.000000e+00> : vector<16x32xf32>
    %4 = tpu.matmul %2, %3, %cst {dimension_numbers = #tpu.dot_dimension_numbers<[1], [0], [0], [1], [0, 0, 1, 1], [], []>} : vector<16x8xbf16>, vector<8x32xbf16>, vector<16x32xf32> -> vector<16x32xf32>
    %cst_5 = arith.constant dense<0.000000e+00> : vector<16x32xf32>
    %5 = tpu.matmul %0, %4, %cst_5 {dimension_numbers = #tpu.dot_dimension_numbers<[1], [0], [0], [1], [0, 0, 1, 1], [], []>} : vector<16x16xf32>, vector<16x32xf32>, vector<16x32xf32> -> vector<16x32xf32>
    %c0_6 = arith.constant 0 : index
    %c0_7 = arith.constant 0 : index
    %6 = vector.load %arg3[%c0_6, %c0_7] : memref<1x32xf32, #tpu.memory_space<vmem>>, vector<1x32xf32>
    %7 = vector.broadcast %6 : vector<1x32xf32> to vector<16x32xf32>
    %8 = arith.addf %5, %7 : vector<16x32xf32>
    %cst_8 = arith.constant 0.000000e+00 : f32
    %9 = vector.broadcast %cst_8 : f32 to vector<16x32xf32>
    %10 = arith.cmpf ogt, %8, %9 : vector<16x32xf32>
    %cst_9 = arith.constant 0.00999999977 : f32
    %11 = vector.broadcast %cst_9 : f32 to vector<16x32xf32>
    %12 = arith.mulf %11, %8 : vector<16x32xf32>
    %13 = arith.select %10, %8, %12 : vector<16x32xi1>, vector<16x32xf32>
    %14 = arith.truncf %13 : vector<16x32xf32> to vector<16x32xbf16>
    %c0_10 = arith.constant 0 : index
    %c0_11 = arith.constant 0 : index
    %15 = vector.load %arg4[%c0_10, %c0_11] : memref<32x64xbf16, #tpu.memory_space<vmem>>, vector<32x64xbf16>
    %cst_12 = arith.constant dense<0.000000e+00> : vector<16x64xf32>
    %16 = tpu.matmul %14, %15, %cst_12 {dimension_numbers = #tpu.dot_dimension_numbers<[1], [0], [0], [1], [0, 0, 1, 1], [], []>} : vector<16x32xbf16>, vector<32x64xbf16>, vector<16x64xf32> -> vector<16x64xf32>
    %cst_13 = arith.constant dense<0.000000e+00> : vector<16x64xf32>
    %17 = tpu.matmul %0, %16, %cst_13 {dimension_numbers = #tpu.dot_dimension_numbers<[1], [0], [0], [1], [0, 0, 1, 1], [], []>} : vector<16x16xf32>, vector<16x64xf32>, vector<16x64xf32> -> vector<16x64xf32>
    %c0_14 = arith.constant 0 : index
    %c0_15 = arith.constant 0 : index
    %18 = vector.load %arg5[%c0_14, %c0_15] : memref<1x64xf32, #tpu.memory_space<vmem>>, vector<1x64xf32>
    %19 = vector.broadcast %18 : vector<1x64xf32> to vector<16x64xf32>
    %20 = arith.addf %17, %19 : vector<16x64xf32>
    %cst_16 = arith.constant 0.000000e+00 : f32
    %21 = vector.broadcast %cst_16 : f32 to vector<16x64xf32>
    %22 = arith.cmpf ogt, %20, %21 : vector<16x64xf32>
    %cst_17 = arith.constant 0.00999999977 : f32
    %23 = vector.broadcast %cst_17 : f32 to vector<16x64xf32>
    %24 = arith.mulf %23, %20 : vector<16x64xf32>
    %25 = arith.select %22, %20, %24 : vector<16x64xi1>, vector<16x64xf32>
    %26 = arith.truncf %25 : vector<16x64xf32> to vector<16x64xbf16>
    %c0_18 = arith.constant 0 : index
    %c0_19 = arith.constant 0 : index
    %27 = vector.load %arg6[%c0_18, %c0_19] : memref<64x128xbf16, #tpu.memory_space<vmem>>, vector<64x128xbf16>
    %cst_20 = arith.constant dense<0.000000e+00> : vector<16x128xf32>
    %28 = tpu.matmul %26, %27, %cst_20 {dimension_numbers = #tpu.dot_dimension_numbers<[1], [0], [0], [1], [0, 0, 1, 1], [], []>} : vector<16x64xbf16>, vector<64x128xbf16>, vector<16x128xf32> -> vector<16x128xf32>
    %cst_21 = arith.constant dense<0.000000e+00> : vector<16x128xf32>
    %29 = tpu.matmul %0, %28, %cst_21 {dimension_numbers = #tpu.dot_dimension_numbers<[1], [0], [0], [1], [0, 0, 1, 1], [], []>} : vector<16x16xf32>, vector<16x128xf32>, vector<16x128xf32> -> vector<16x128xf32>
    %c0_22 = arith.constant 0 : index
    %c0_23 = arith.constant 0 : index
    %30 = vector.load %arg7[%c0_22, %c0_23] : memref<1x128xf32, #tpu.memory_space<vmem>>, vector<1x128xf32>
    %31 = vector.broadcast %30 : vector<1x128xf32> to vector<16x128xf32>
    %32 = arith.addf %29, %31 : vector<16x128xf32>
    %cst_24 = arith.constant 0.000000e+00 : f32
    %33 = vector.broadcast %cst_24 : f32 to vector<16x128xf32>
    %34 = arith.cmpf ogt, %32, %33 : vector<16x128xf32>
    %cst_25 = arith.constant 0.00999999977 : f32
    %35 = vector.broadcast %cst_25 : f32 to vector<16x128xf32>
    %36 = arith.mulf %35, %32 : vector<16x128xf32>
    %37 = arith.select %34, %32, %36 : vector<16x128xi1>, vector<16x128xf32>
    %38 = arith.truncf %37 : vector<16x128xf32> to vector<16x128xbf16>
    %c0_26 = arith.constant 0 : index
    %c0_27 = arith.constant 0 : index
    %39 = vector.load %arg8[%c0_26, %c0_27] : memref<128x256xbf16, #tpu.memory_space<vmem>>, vector<128x256xbf16>
    %cst_28 = arith.constant dense<0.000000e+00> : vector<16x256xf32>
    %40 = tpu.matmul %38, %39, %cst_28 {dimension_numbers = #tpu.dot_dimension_numbers<[1], [0], [0], [1], [0, 0, 1, 1], [], []>} : vector<16x128xbf16>, vector<128x256xbf16>, vector<16x256xf32> -> vector<16x256xf32>
    %cst_29 = arith.constant dense<0.000000e+00> : vector<16x256xf32>
    %41 = tpu.matmul %0, %40, %cst_29 {dimension_numbers = #tpu.dot_dimension_numbers<[1], [0], [0], [1], [0, 0, 1, 1], [], []>} : vector<16x16xf32>, vector<16x256xf32>, vector<16x256xf32> -> vector<16x256xf32>
    %c0_30 = arith.constant 0 : index
    %c0_31 = arith.constant 0 : index
    %42 = vector.load %arg9[%c0_30, %c0_31] : memref<1x256xf32, #tpu.memory_space<vmem>>, vector<1x256xf32>
    %43 = vector.broadcast %42 : vector<1x256xf32> to vector<16x256xf32>
    %44 = arith.addf %41, %43 : vector<16x256xf32>
    %cst_32 = arith.constant 0.000000e+00 : f32
    %45 = vector.broadcast %cst_32 : f32 to vector<16x256xf32>
    %46 = arith.cmpf ogt, %44, %45 : vector<16x256xf32>
    %cst_33 = arith.constant 0.00999999977 : f32
    %47 = vector.broadcast %cst_33 : f32 to vector<16x256xf32>
    %48 = arith.mulf %47, %44 : vector<16x256xf32>
    %49 = arith.select %46, %44, %48 : vector<16x256xi1>, vector<16x256xf32>
    %50 = arith.truncf %49 : vector<16x256xf32> to vector<16x256xbf16>
    %c0_34 = arith.constant 0 : index
    %c0_35 = arith.constant 0 : index
    %51 = vector.load %arg10[%c0_34, %c0_35] : memref<256x512xbf16, #tpu.memory_space<vmem>>, vector<256x512xbf16>
    %cst_36 = arith.constant dense<0.000000e+00> : vector<16x512xf32>
    %52 = tpu.matmul %50, %51, %cst_36 {dimension_numbers = #tpu.dot_dimension_numbers<[1], [0], [0], [1], [0, 0, 1, 1], [], []>} : vector<16x256xbf16>, vector<256x512xbf16>, vector<16x512xf32> -> vector<16x512xf32>
    %cst_37 = arith.constant dense<0.000000e+00> : vector<16x512xf32>
    %53 = tpu.matmul %0, %52, %cst_37 {dimension_numbers = #tpu.dot_dimension_numbers<[1], [0], [0], [1], [0, 0, 1, 1], [], []>} : vector<16x16xf32>, vector<16x512xf32>, vector<16x512xf32> -> vector<16x512xf32>
    %c0_38 = arith.constant 0 : index
    %c0_39 = arith.constant 0 : index
    %54 = vector.load %arg11[%c0_38, %c0_39] : memref<1x512xf32, #tpu.memory_space<vmem>>, vector<1x512xf32>
    %55 = vector.broadcast %54 : vector<1x512xf32> to vector<16x512xf32>
    %56 = arith.addf %53, %55 : vector<16x512xf32>
    %cst_40 = arith.constant 0.000000e+00 : f32
    %57 = vector.broadcast %cst_40 : f32 to vector<16x512xf32>
    %58 = arith.cmpf ogt, %56, %57 : vector<16x512xf32>
    %cst_41 = arith.constant 0.00999999977 : f32
    %59 = vector.broadcast %cst_41 : f32 to vector<16x512xf32>
    %60 = arith.mulf %59, %56 : vector<16x512xf32>
    %61 = arith.select %58, %56, %60 : vector<16x512xi1>, vector<16x512xf32>
    %62 = arith.truncf %61 : vector<16x512xf32> to vector<16x512xbf16>
    %c0_42 = arith.constant 0 : index
    %c0_43 = arith.constant 0 : index
    %63 = vector.load %arg12[%c0_42, %c0_43] : memref<512x640xbf16, #tpu.memory_space<vmem>>, vector<512x640xbf16>
    %cst_44 = arith.constant dense<0.000000e+00> : vector<16x640xf32>
    %64 = tpu.matmul %62, %63, %cst_44 {dimension_numbers = #tpu.dot_dimension_numbers<[1], [0], [0], [1], [0, 0, 1, 1], [], []>} : vector<16x512xbf16>, vector<512x640xbf16>, vector<16x640xf32> -> vector<16x640xf32>
    %cst_45 = arith.constant dense<0.000000e+00> : vector<16x640xf32>
    %65 = tpu.matmul %0, %64, %cst_45 {dimension_numbers = #tpu.dot_dimension_numbers<[1], [0], [0], [1], [0, 0, 1, 1], [], []>} : vector<16x16xf32>, vector<16x640xf32>, vector<16x640xf32> -> vector<16x640xf32>
    %c0_46 = arith.constant 0 : index
    %c0_47 = arith.constant 0 : index
    %66 = vector.load %arg13[%c0_46, %c0_47] : memref<1x640xf32, #tpu.memory_space<vmem>>, vector<1x640xf32>
    %67 = vector.broadcast %66 : vector<1x640xf32> to vector<16x640xf32>
    %68 = arith.addf %65, %67 : vector<16x640xf32>
    %c0_48 = arith.constant 0 : index
    %c0_49 = arith.constant 0 : index
    %69 = vector.load %arg14[%c0_48, %c0_49] : memref<8x16xf32, #tpu.memory_space<vmem>>, vector<8x16xf32>
    %70 = vector.shape_cast %69 : vector<8x16xf32> to vector<8x16x1xf32>
    %cst_50 = arith.constant 0.000000e+00 : f32
    %71 = vector.broadcast %cst_50 : f32 to vector<8x16x1xf32>
    %72 = arith.cmpf ogt, %70, %71 : vector<8x16x1xf32>
    %73 = vector.shape_cast %68 : vector<16x640xf32> to vector<1x16x640xf32>
    %cst_51 = arith.constant -3.000000e+38 : f32
    %74 = vector.shape_cast %72 : vector<8x16x1xi1> to vector<8x16x1xi1>
    %75 = vector.broadcast %74 : vector<8x16x1xi1> to vector<8x16x640xi1>
    %76 = vector.shape_cast %73 : vector<1x16x640xf32> to vector<1x16x640xf32>
    %77 = vector.broadcast %76 : vector<1x16x640xf32> to vector<8x16x640xf32>
    %78 = vector.broadcast %cst_51 : f32 to vector<8x16x640xf32>
    %79 = arith.select %75, %77, %78 : vector<8x16x640xi1>, vector<8x16x640xf32>
    %cst_52 = arith.constant dense<0xFF800000> : vector<8x640xf32>
    %80 = vector.multi_reduction <maximumf>, %79, %cst_52 [1] : vector<8x16x640xf32> to vector<8x640xf32>
    %cst_53 = arith.constant dense<0.000000e+00> : vector<8xf32>
    %81 = vector.multi_reduction <add>, %69, %cst_53 [1] : vector<8x16xf32> to vector<8xf32>
    %82 = vector.shape_cast %81 : vector<8xf32> to vector<8x1xf32>
    %cst_54 = arith.constant 0.000000e+00 : f32
    %83 = vector.broadcast %cst_54 : f32 to vector<8x1xf32>
    %84 = arith.cmpf ogt, %82, %83 : vector<8x1xf32>
    %cst_55 = arith.constant 0.000000e+00 : f32
    %85 = vector.shape_cast %84 : vector<8x1xi1> to vector<8x1xi1>
    %86 = vector.broadcast %85 : vector<8x1xi1> to vector<8x640xi1>
    %87 = vector.broadcast %cst_55 : f32 to vector<8x640xf32>
    %88 = arith.select %86, %80, %87 : vector<8x640xi1>, vector<8x640xf32>
    %89 = arith.truncf %88 : vector<8x640xf32> to vector<8x640xbf16>
    %c0_56 = arith.constant 0 : index
    %c0_57 = arith.constant 0 : index
    %90 = vector.load %arg15[%c0_56, %c0_57] : memref<640x1024xbf16, #tpu.memory_space<vmem>>, vector<640x1024xbf16>
    %cst_58 = arith.constant dense<0.000000e+00> : vector<8x1024xf32>
    %91 = tpu.matmul %89, %90, %cst_58 {dimension_numbers = #tpu.dot_dimension_numbers<[1], [0], [0], [1], [0, 0, 1, 1], [], []>} : vector<8x640xbf16>, vector<640x1024xbf16>, vector<8x1024xf32> -> vector<8x1024xf32>
    %c0_59 = arith.constant 0 : index
    %c0_60 = arith.constant 0 : index
    %92 = vector.load %arg16[%c0_59, %c0_60] : memref<1x1024xf32, #tpu.memory_space<vmem>>, vector<1x1024xf32>
    %93 = vector.broadcast %92 : vector<1x1024xf32> to vector<8x1024xf32>
    %94 = arith.addf %91, %93 : vector<8x1024xf32>
    %cst_61 = arith.constant 0.000000e+00 : f32
    %95 = vector.broadcast %cst_61 : f32 to vector<8x1024xf32>
    %96 = arith.maximumf %94, %95 : vector<8x1024xf32>
    %97 = arith.truncf %96 : vector<8x1024xf32> to vector<8x1024xbf16>
    %c0_62 = arith.constant 0 : index
    %c0_63 = arith.constant 0 : index
    %98 = vector.load %arg17[%c0_62, %c0_63] : memref<1024x512xbf16, #tpu.memory_space<vmem>>, vector<1024x512xbf16>
    %cst_64 = arith.constant dense<0.000000e+00> : vector<8x512xf32>
    %99 = tpu.matmul %97, %98, %cst_64 {dimension_numbers = #tpu.dot_dimension_numbers<[1], [0], [0], [1], [0, 0, 1, 1], [], []>} : vector<8x1024xbf16>, vector<1024x512xbf16>, vector<8x512xf32> -> vector<8x512xf32>
    %c0_65 = arith.constant 0 : index
    %c0_66 = arith.constant 0 : index
    %100 = vector.load %arg18[%c0_65, %c0_66] : memref<1x512xf32, #tpu.memory_space<vmem>>, vector<1x512xf32>
    %101 = vector.broadcast %100 : vector<1x512xf32> to vector<8x512xf32>
    %102 = arith.addf %99, %101 : vector<8x512xf32>
    %cst_67 = arith.constant 0.000000e+00 : f32
    %103 = vector.broadcast %cst_67 : f32 to vector<8x512xf32>
    %104 = arith.maximumf %102, %103 : vector<8x512xf32>
    %105 = arith.truncf %104 : vector<8x512xf32> to vector<8x512xbf16>
    %c0_68 = arith.constant 0 : index
    %c0_69 = arith.constant 0 : index
    %106 = vector.load %arg19[%c0_68, %c0_69] : memref<512x128xbf16, #tpu.memory_space<vmem>>, vector<512x128xbf16>
    %cst_70 = arith.constant dense<0.000000e+00> : vector<8x128xf32>
    %107 = tpu.matmul %105, %106, %cst_70 {dimension_numbers = #tpu.dot_dimension_numbers<[1], [0], [0], [1], [0, 0, 1, 1], [], []>} : vector<8x512xbf16>, vector<512x128xbf16>, vector<8x128xf32> -> vector<8x128xf32>
    %c0_71 = arith.constant 0 : index
    %c0_72 = arith.constant 0 : index
    %108 = vector.load %arg20[%c0_71, %c0_72] : memref<1x128xf32, #tpu.memory_space<vmem>>, vector<1x128xf32>
    %109 = vector.broadcast %108 : vector<1x128xf32> to vector<8x128xf32>
    %110 = arith.addf %107, %109 : vector<8x128xf32>
    %c0_73 = arith.constant 0 : index
    %c0_74 = arith.constant 0 : index
    %111 = vector.load %arg21[%c0_73, %c0_74] : memref<8x128xf32, #tpu.memory_space<vmem>>, vector<8x128xf32>
    tpu.vector_store %arg21[%c0_73, %c0_74], %110 {strides = array<i32>} : memref<8x128xf32, #tpu.memory_space<vmem>>, vector<8x128xf32>,
    return
  }
}

</mosaic_0001>

<llo_original>
// kernel: tpu_custom_call.1
$region0: #{tpu_custom_call.1}
  #allocation0 [shape = 'u32[]', space=smem, size = 0x4, offset = 0x4, fixed_abs, tag = 'smem constant byte address 0x4 - core index']
  #allocation1 [shape = 'u32[144,128]{1,0:T(1,128)}', space=vmem, size = 0x12000, scoped, tag = 'internal scratch']
  %s0 = inlined_call_operand.hbm [shape: f32[16,16], index: 0, kind: input, shape index: {}]
  %s1 = inlined_call_operand.vmem [shape: f32[16,8], index: 1, kind: input, shape index: {}]
  %s2 = inlined_call_operand.hbm [shape: bf16[8,32], index: 2, kind: input, shape index: {}]
  %s3 = inlined_call_operand.hbm [shape: f32[1,32], index: 3, kind: input, shape index: {}]
  %s4 = inlined_call_operand.hbm [shape: bf16[32,64], index: 4, kind: input, shape index: {}]
  %s5 = inlined_call_operand.hbm [shape: f32[1,64], index: 5, kind: input, shape index: {}]
  %s6 = inlined_call_operand.hbm [shape: bf16[64,128], index: 6, kind: input, shape index: {}]
  %s7 = inlined_call_operand.hbm [shape: f32[1,128], index: 7, kind: input, shape index: {}]
  %s8 = inlined_call_operand.hbm [shape: bf16[128,256], index: 8, kind: input, shape index: {}]
  %s9 = inlined_call_operand.hbm [shape: f32[1,256], index: 9, kind: input, shape index: {}]
  %s10 = inlined_call_operand.hbm [shape: bf16[256,512], index: 10, kind: input, shape index: {}]
  %s11 = inlined_call_operand.hbm [shape: f32[1,512], index: 11, kind: input, shape index: {}]
  %s12 = inlined_call_operand.hbm [shape: bf16[512,640], index: 12, kind: input, shape index: {}]
  %s13 = inlined_call_operand.hbm [shape: f32[1,640], index: 13, kind: input, shape index: {}]
  %s14 = inlined_call_operand.hbm [shape: f32[8,16], index: 14, kind: input, shape index: {}]
  %s15 = inlined_call_operand.hbm [shape: bf16[640,1024], index: 15, kind: input, shape index: {}]
  %s16 = inlined_call_operand.hbm [shape: f32[1,1024], index: 16, kind: input, shape index: {}]
  %s17 = inlined_call_operand.hbm [shape: bf16[1024,512], index: 17, kind: input, shape index: {}]
  %s18 = inlined_call_operand.hbm [shape: f32[1,512], index: 18, kind: input, shape index: {}]
  %s19 = inlined_call_operand.hbm [shape: bf16[512,128], index: 19, kind: input, shape index: {}]
  %s20 = inlined_call_operand.hbm [shape: f32[1,128], index: 20, kind: input, shape index: {}]
  %s21 = inlined_call_operand.hbm [shape: f32[8,128], index: 21, kind: output, shape index: {}]
  %s22 = sld [smem:[#allocation0]]
  $region174: #{tpu_custom_call.1} parent=0
    _
  %s24 = ssub.s32 1, %s22
  %s25 = scalar_select 0, %s24, %s22
  $region1: #{tpu_custom_call.1} parent=0
    #allocation2 [shape = 'u8[8192]{0}', space=vmem, size = 0x2000, scoped, tag = 'input window, operand 0, single buffered']
    #allocation3 [shape = 's32[1]{0}', space=sflag, size = 0x4, scoped, tag = 'scoped memory for tpu_custom_call.1']
    #allocation4 [shape = 's32[1]{0}', space=sflag, size = 0x4, scoped, tag = 'scoped memory for tpu_custom_call.1']
    #allocation5 [shape = 'u8[2048]{0}', space=vmem, size = 0x800, scoped, tag = 'input window, operand 2, single buffered']
    #allocation6 [shape = 's32[1]{0}', space=sflag, size = 0x4, scoped, tag = 'scoped memory for tpu_custom_call.1']
    #allocation7 [shape = 'u8[512]{0}', space=vmem, size = 0x400, scoped, tag = 'input window, operand 3, single buffered']
    #allocation8 [shape = 'u8[8192]{0}', space=vmem, size = 0x2000, scoped, tag = 'input window, operand 4, single buffered']
    #allocation9 [shape = 's32[1]{0}', space=sflag, size = 0x4, scoped, tag = 'scoped memory for tpu_custom_call.1']
    #allocation10 [shape = 'u8[512]{0}', space=vmem, size = 0x400, scoped, tag = 'input window, operand 5, single buffered']
    #allocation11 [shape = 'u8[16384]{0}', space=vmem, size = 0x4000, scoped, tag = 'input window, operand 6, single buffered']
    #allocation12 [shape = 's32[1]{0}', space=sflag, size = 0x4, scoped, tag = 'scoped memory for tpu_custom_call.1']
    #allocation13 [shape = 'u8[512]{0}', space=vmem, size = 0x400, scoped, tag = 'input window, operand 7, single buffered']
    #allocation14 [shape = 'u8[65536]{0}', space=vmem, size = 0x10000, scoped, tag = 'input window, operand 8, single buffered']
    #allocation15 [shape = 's32[1]{0}', space=sflag, size = 0x4, scoped, tag = 'scoped memory for tpu_custom_call.1']
    #allocation16 [shape = 'u8[1024]{0}', space=vmem, size = 0x400, scoped, tag = 'input window, operand 9, single buffered']
    #allocation17 [shape = 'u8[262144]{0}', space=vmem, size = 0x40000, scoped, tag = 'input window, operand 10, single buffered']
    #allocation18 [shape = 's32[1]{0}', space=sflag, size = 0x4, scoped, tag = 'scoped memory for tpu_custom_call.1']
    #allocation19 [shape = 'u8[2048]{0}', space=vmem, size = 0x800, scoped, tag = 'input window, operand 11, single buffered']
    #allocation20 [shape = 'u8[655360]{0}', space=vmem, size = 0xa0000, scoped, tag = 'input window, operand 12, single buffered']
    #allocation21 [shape = 's32[1]{0}', space=sflag, size = 0x4, scoped, tag = 'scoped memory for tpu_custom_call.1']
    #allocation22 [shape = 'u8[2560]{0}', space=vmem, size = 0xc00, scoped, tag = 'input window, operand 13, single buffered']
    #allocation23 [shape = 'u8[4096]{0}', space=vmem, size = 0x1000, scoped, tag = 'input window, operand 14, single buffered']
    #allocation24 [shape = 's32[1]{0}', space=sflag, size = 0x4, scoped, tag = 'scoped memory for tpu_custom_call.1']
    #allocation25 [shape = 'u8[1310720]{0}', space=vmem, size = 0x140000, scoped, tag = 'input window, operand 15, single buffered']
    #allocation26 [shape = 'u8[4096]{0}', space=vmem, size = 0x1000, scoped, tag = 'input window, operand 16, single buffered']
    #allocation27 [shape = 's32[1]{0}', space=sflag, size = 0x4, scoped, tag = 'scoped memory for tpu_custom_call.1']
    #allocation28 [shape = 'u8[1048576]{0}', space=vmem, size = 0x100000, scoped, tag = 'input window, operand 17, single buffered']
    #allocation29 [shape = 'u8[2048]{0}', space=vmem, size = 0x800, scoped, tag = 'input window, operand 18, single buffered']
    #allocation30 [shape = 's32[1]{0}', space=sflag, size = 0x4, scoped, tag = 'scoped memory for tpu_custom_call.1']
    #allocation31 [shape = 'u8[131072]{0}', space=vmem, size = 0x20000, scoped, tag = 'input window, operand 19, single buffered']
    #allocation32 [shape = 'u8[512]{0}', space=vmem, size = 0x400, scoped, tag = 'input window, operand 20, single buffered']
    #allocation33 [shape = 's32[1]{0}', space=sflag, size = 0x4, scoped, tag = 'scoped memory for tpu_custom_call.1']
    #allocation34 [shape = 'u8[4096]{0}', space=vmem, size = 0x1000, scoped, tag = 'output window, operand 0, single buffered']
    %26 = vsyncpa [#allocation3], 0
    %27 = vsyncpa [#allocation6], 0
    %28 = vsyncpa [#allocation9], 0
    %29 = vsyncpa [#allocation12], 0
    %30 = vsyncpa [#allocation15], 0
    %31 = vsyncpa [#allocation18], 0
    %32 = vsyncpa [#allocation21], 0
    %33 = vsyncpa [#allocation24], 0
    %34 = vsyncpa [#allocation27], 0
    %35 = vsyncpa [#allocation30], 0
    %36 = vsyncpa [#allocation33], 0
    %37 = vsyncpa [#allocation4], 0
    // Predicated region
    $region2: #{tpu_custom_call.1} parent=1 // pred_check
      _
    $region3: #{tpu_custom_call.1} parent=1 // pred_check_branch
      %39 = sbr.rel (0) target = $region5
    $region4: #{tpu_custom_call.1} parent=1 // pred_region
      %s41 = ssub.s32 256, 256
      %42 = vsyncadd [#allocation3], %s41
      %s43 = sshll.u32 [#allocation2], 4
      %s44 = int_to_ptr.vmem [resolvable:$true] %s43
      %49 = dma.hbm_to_vmem [thread:$0]  %s0, 256, %s44, [#allocation3], 128, 128, 8
    $region5: #{tpu_custom_call.1} parent=1 // pred_fallthru
      _
    // Predicated region
    $region6: #{tpu_custom_call.1} parent=1 // pred_check
      _
    $region7: #{tpu_custom_call.1} parent=1 // pred_check_branch
      %51 = sbr.rel (0) target = $region9
    $region8: #{tpu_custom_call.1} parent=1 // pred_region
      _
    $region9: #{tpu_custom_call.1} parent=1 // pred_fallthru
      _
    // Predicated region
    $region10: #{tpu_custom_call.1} parent=1 // pred_check
      _
    $region11: #{tpu_custom_call.1} parent=1 // pred_check_branch
      %53 = sbr.rel (0) target = $region13
    $region12: #{tpu_custom_call.1} parent=1 // pred_region
      %s55 = ssub.s32 64, 64
      %56 = vsyncadd [#allocation6], %s55
      %s58 = sshll.u32 [#allocation5], 4
      %s59 = int_to_ptr.vmem [resolvable:$true] %s58
      %61 = dma.hbm_to_vmem [thread:$0]  %s2, 64, %s59, [#allocation6]
    $region13: #{tpu_custom_call.1} parent=1 // pred_fallthru
      _
    // Predicated region
    $region14: #{tpu_custom_call.1} parent=1 // pred_check
      _
    $region15: #{tpu_custom_call.1} parent=1 // pred_check_branch
      %63 = sbr.rel (0) target = $region17
    $region16: #{tpu_custom_call.1} parent=1 // pred_region
      %s65 = ssub.s32 16, 16
      %66 = vsyncadd [#allocation6], %s65
      %s68 = sshll.u32 [#allocation7], 4
      %s69 = int_to_ptr.vmem [resolvable:$true] %s68
      %71 = dma.hbm_to_vmem [thread:$0]  %s3, 16, %s69, [#allocation6]
    $region17: #{tpu_custom_call.1} parent=1 // pred_fallthru
      _
    // Predicated region
    $region18: #{tpu_custom_call.1} parent=1 // pred_check
      _
    $region19: #{tpu_custom_call.1} parent=1 // pred_check_branch
      %73 = sbr.rel (0) target = $region21
    $region20: #{tpu_custom_call.1} parent=1 // pred_region
      %s75 = ssub.s32 256, 256
      %76 = vsyncadd [#allocation9], %s75
      %s77 = sshll.u32 [#allocation8], 4
      %s78 = int_to_ptr.vmem [resolvable:$true] %s77
      %83 = dma.hbm_to_vmem [thread:$0]  %s4, 256, %s78, [#allocation9], 64, 64, 4
    $region21: #{tpu_custom_call.1} parent=1 // pred_fallthru
      _
    // Predicated region
    $region22: #{tpu_custom_call.1} parent=1 // pred_check
      _
    $region23: #{tpu_custom_call.1} parent=1 // pred_check_branch
      %85 = sbr.rel (0) target = $region25
    $region24: #{tpu_custom_call.1} parent=1 // pred_region
      %s87 = ssub.s32 16, 16
      %88 = vsyncadd [#allocation9], %s87
      %s90 = sshll.u32 [#allocation10], 4
      %s91 = int_to_ptr.vmem [resolvable:$true] %s90
      %93 = dma.hbm_to_vmem [thread:$0]  %s5, 16, %s91, [#allocation9]
    $region25: #{tpu_custom_call.1} parent=1 // pred_fallthru
      _
    // Predicated region
    $region26: #{tpu_custom_call.1} parent=1 // pred_check
      _
    $region27: #{tpu_custom_call.1} parent=1 // pred_check_branch
      %95 = sbr.rel (0) target = $region29
    $region28: #{tpu_custom_call.1} parent=1 // pred_region
      %s97 = ssub.s32 512, 512
      %98 = vsyncadd [#allocation12], %s97
      %s99 = sshll.u32 [#allocation11], 4
      %s100 = int_to_ptr.vmem [resolvable:$true] %s99
      %105 = dma.hbm_to_vmem [thread:$0]  %s6, 512, %s100, [#allocation12], 64, 64, 4
    $region29: #{tpu_custom_call.1} parent=1 // pred_fallthru
      _
    // Predicated region
    $region30: #{tpu_custom_call.1} parent=1 // pred_check
      _
    $region31: #{tpu_custom_call.1} parent=1 // pred_check_branch
      %107 = sbr.rel (0) target = $region33
    $region32: #{tpu_custom_call.1} parent=1 // pred_region
      %s109 = ssub.s32 16, 16
      %110 = vsyncadd [#allocation12], %s109
      %s112 = sshll.u32 [#allocation13], 4
      %s113 = int_to_ptr.vmem [resolvable:$true] %s112
      %115 = dma.hbm_to_vmem [thread:$0]  %s7, 16, %s113, [#allocation12]
    $region33: #{tpu_custom_call.1} parent=1 // pred_fallthru
      _
    // Predicated region
    $region34: #{tpu_custom_call.1} parent=1 // pred_check
      _
    $region35: #{tpu_custom_call.1} parent=1 // pred_check_branch
      %117 = sbr.rel (0) target = $region37
    $region36: #{tpu_custom_call.1} parent=1 // pred_region
      %s119 = ssub.s32 2048, 2048
      %120 = vsyncadd [#allocation15], %s119
      %s121 = sshll.u32 [#allocation14], 4
      %s122 = int_to_ptr.vmem [resolvable:$true] %s121
      %127 = dma.hbm_to_vmem [thread:$0]  %s8, 2048, %s122, [#allocation15], 128, 128, 8
    $region37: #{tpu_custom_call.1} parent=1 // pred_fallthru
      _
    // Predicated region
    $region38: #{tpu_custom_call.1} parent=1 // pred_check
      _
    $region39: #{tpu_custom_call.1} parent=1 // pred_check_branch
      %129 = sbr.rel (0) target = $region41
    $region40: #{tpu_custom_call.1} parent=1 // pred_region
      %s131 = ssub.s32 32, 32
      %132 = vsyncadd [#allocation15], %s131
      %s134 = sshll.u32 [#allocation16], 4
      %s135 = int_to_ptr.vmem [resolvable:$true] %s134
      %137 = dma.hbm_to_vmem [thread:$0]  %s9, 32, %s135, [#allocation15]
    $region41: #{tpu_custom_call.1} parent=1 // pred_fallthru
      _
    // Predicated region
    $region42: #{tpu_custom_call.1} parent=1 // pred_check
      _
    $region43: #{tpu_custom_call.1} parent=1 // pred_check_branch
      %139 = sbr.rel (0) target = $region45
    $region44: #{tpu_custom_call.1} parent=1 // pred_region
      %s141 = ssub.s32 8192, 8192
      %142 = vsyncadd [#allocation18], %s141
      %s143 = sshll.u32 [#allocation17], 4
      %s144 = int_to_ptr.vmem [resolvable:$true] %s143
      %149 = dma.hbm_to_vmem [thread:$0]  %s10, 8192, %s144, [#allocation18], 256, 256, 16
    $region45: #{tpu_custom_call.1} parent=1 // pred_fallthru
      _
    // Predicated region
    $region46: #{tpu_custom_call.1} parent=1 // pred_check
      _
    $region47: #{tpu_custom_call.1} parent=1 // pred_check_branch
      %151 = sbr.rel (0) target = $region49
    $region48: #{tpu_custom_call.1} parent=1 // pred_region
      %s153 = ssub.s32 64, 64
      %154 = vsyncadd [#allocation18], %s153
      %s156 = sshll.u32 [#allocation19], 4
      %s157 = int_to_ptr.vmem [resolvable:$true] %s156
      %159 = dma.hbm_to_vmem [thread:$0]  %s11, 64, %s157, [#allocation18]
    $region49: #{tpu_custom_call.1} parent=1 // pred_fallthru
      _
    // Predicated region
    $region50: #{tpu_custom_call.1} parent=1 // pred_check
      _
    $region51: #{tpu_custom_call.1} parent=1 // pred_check_branch
      %161 = sbr.rel (0) target = $region53
    $region52: #{tpu_custom_call.1} parent=1 // pred_region
      %s163 = ssub.s32 20480, 20480
      %164 = vsyncadd [#allocation21], %s163
      %s165 = sshll.u32 [#allocation20], 4
      %s166 = int_to_ptr.vmem [resolvable:$true] %s165
      %171 = dma.hbm_to_vmem [thread:$0]  %s12, 20480, %s166, [#allocation21], 320, 320, 20
    $region53: #{tpu_custom_call.1} parent=1 // pred_fallthru
      _
    // Predicated region
    $region54: #{tpu_custom_call.1} parent=1 // pred_check
      _
    $region55: #{tpu_custom_call.1} parent=1 // pred_check_branch
      %173 = sbr.rel (0) target = $region57
    $region56: #{tpu_custom_call.1} parent=1 // pred_region
      %s175 = ssub.s32 80, 80
      %176 = vsyncadd [#allocation21], %s175
      %s178 = sshll.u32 [#allocation22], 4
      %s179 = int_to_ptr.vmem [resolvable:$true] %s178
      %181 = dma.hbm_to_vmem [thread:$0]  %s13, 80, %s179, [#allocation21]
    $region57: #{tpu_custom_call.1} parent=1 // pred_fallthru
      _
    // Predicated region
    $region58: #{tpu_custom_call.1} parent=1 // pred_check
      _
    $region59: #{tpu_custom_call.1} parent=1 // pred_check_branch
      %183 = sbr.rel (0) target = $region61
    $region60: #{tpu_custom_call.1} parent=1 // pred_region
      %s185 = ssub.s32 128, 128
      %186 = vsyncadd [#allocation24], %s185
      %s188 = sshll.u32 [#allocation23], 4
      %s189 = int_to_ptr.vmem [resolvable:$true] %s188
      %191 = dma.hbm_to_vmem [thread:$0]  %s14, 128, %s189, [#allocation24]
    $region61: #{tpu_custom_call.1} parent=1 // pred_fallthru
      _
    // Predicated region
    $region62: #{tpu_custom_call.1} parent=1 // pred_check
      _
    $region63: #{tpu_custom_call.1} parent=1 // pred_check_branch
      %193 = sbr.rel (0) target = $region65
    $region64: #{tpu_custom_call.1} parent=1 // pred_region
      %s195 = ssub.s32 40960, 40960
      %196 = vsyncadd [#allocation24], %s195
      %s197 = sshll.u32 [#allocation25], 4
      %s198 = int_to_ptr.vmem [resolvable:$true] %s197
      %203 = dma.hbm_to_vmem [thread:$0]  %s15, 40960, %s198, [#allocation24], 512, 512, 32
    $region65: #{tpu_custom_call.1} parent=1 // pred_fallthru
      _
    // Predicated region
    $region66: #{tpu_custom_call.1} parent=1 // pred_check
      _
    $region67: #{tpu_custom_call.1} parent=1 // pred_check_branch
      %205 = sbr.rel (0) target = $region69
    $region68: #{tpu_custom_call.1} parent=1 // pred_region
      %s207 = ssub.s32 128, 128
      %208 = vsyncadd [#allocation27], %s207
      %s210 = sshll.u32 [#allocation26], 4
      %s211 = int_to_ptr.vmem [resolvable:$true] %s210
      %213 = dma.hbm_to_vmem [thread:$0]  %s16, 128, %s211, [#allocation27]
    $region69: #{tpu_custom_call.1} parent=1 // pred_fallthru
      _
    // Predicated region
    $region70: #{tpu_custom_call.1} parent=1 // pred_check
      _
    $region71: #{tpu_custom_call.1} parent=1 // pred_check_branch
      %215 = sbr.rel (0) target = $region73
    $region72: #{tpu_custom_call.1} parent=1 // pred_region
      %s217 = ssub.s32 32768, 32768
      %218 = vsyncadd [#allocation27], %s217
      %s219 = sshll.u32 [#allocation28], 4
      %s220 = int_to_ptr.vmem [resolvable:$true] %s219
      %225 = dma.hbm_to_vmem [thread:$0]  %s17, 32768, %s220, [#allocation27], 256, 256, 16
    $region73: #{tpu_custom_call.1} parent=1 // pred_fallthru
      _
    // Predicated region
    $region74: #{tpu_custom_call.1} parent=1 // pred_check
      _
    $region75: #{tpu_custom_call.1} parent=1 // pred_check_branch
      %227 = sbr.rel (0) target = $region77
    $region76: #{tpu_custom_call.1} parent=1 // pred_region
      %s229 = ssub.s32 64, 64
      %230 = vsyncadd [#allocation30], %s229
      %s232 = sshll.u32 [#allocation29], 4
      %s233 = int_to_ptr.vmem [resolvable:$true] %s232
      %235 = dma.hbm_to_vmem [thread:$0]  %s18, 64, %s233, [#allocation30]
    $region77: #{tpu_custom_call.1} parent=1 // pred_fallthru
      _
    // Predicated region
    $region78: #{tpu_custom_call.1} parent=1 // pred_check
      _
    $region79: #{tpu_custom_call.1} parent=1 // pred_check_branch
      %237 = sbr.rel (0) target = $region81
    $region80: #{tpu_custom_call.1} parent=1 // pred_region
      %s239 = ssub.s32 4096, 4096
      %240 = vsyncadd [#allocation30], %s239
      %s241 = sshll.u32 [#allocation31], 4
      %s242 = int_to_ptr.vmem [resolvable:$true] %s241
      %247 = dma.hbm_to_vmem [thread:$0]  %s19, 4096, %s242, [#allocation30], 64, 64, 4
    $region81: #{tpu_custom_call.1} parent=1 // pred_fallthru
      _
    // Predicated region
    $region82: #{tpu_custom_call.1} parent=1 // pred_check
      _
    $region83: #{tpu_custom_call.1} parent=1 // pred_check_branch
      %249 = sbr.rel (0) target = $region85
    $region84: #{tpu_custom_call.1} parent=1 // pred_region
      %s251 = ssub.s32 16, 16
      %252 = vsyncadd [#allocation33], %s251
      %s254 = sshll.u32 [#allocation32], 4
      %s255 = int_to_ptr.vmem [resolvable:$true] %s254
      %257 = dma.hbm_to_vmem [thread:$0]  %s20, 16, %s255, [#allocation33]
    $region85: #{tpu_custom_call.1} parent=1 // pred_fallthru
      _
    // Predicated region
    $region86: #{tpu_custom_call.1} parent=1 // pred_check
      _
    $region87: #{tpu_custom_call.1} parent=1 // pred_check_branch
      %259 = sbr.rel (0) target = $region89
    $region88: #{tpu_custom_call.1} parent=1 // pred_region
      %260 = dma.done [#allocation3], 256
    $region89: #{tpu_custom_call.1} parent=1 // pred_fallthru
      _
    // Predicated region
    $region90: #{tpu_custom_call.1} parent=1 // pred_check
      _
    $region91: #{tpu_custom_call.1} parent=1 // pred_check_branch
      %262 = sbr.rel (0) target = $region93
    $region92: #{tpu_custom_call.1} parent=1 // pred_region
      %263 = dma.done [#allocation6], 64
    $region93: #{tpu_custom_call.1} parent=1 // pred_fallthru
      _
    // Predicated region
    $region94: #{tpu_custom_call.1} parent=1 // pred_check
      _
    $region95: #{tpu_custom_call.1} parent=1 // pred_check_branch
      %265 = sbr.rel (0) target = $region97
    $region96: #{tpu_custom_call.1} parent=1 // pred_region
      %266 = dma.done [#allocation6], 16
    $region97: #{tpu_custom_call.1} parent=1 // pred_fallthru
      _
    // Predicated region
    $region98: #{tpu_custom_call.1} parent=1 // pred_check
      _
    $region99: #{tpu_custom_call.1} parent=1 // pred_check_branch
      %268 = sbr.rel (0) target = $region101
    $region100: #{tpu_custom_call.1} parent=1 // pred_region
      %269 = dma.done [#allocation9], 256
    $region101: #{tpu_custom_call.1} parent=1 // pred_fallthru
      _
    // Predicated region
    $region102: #{tpu_custom_call.1} parent=1 // pred_check
      _
    $region103: #{tpu_custom_call.1} parent=1 // pred_check_branch
      %271 = sbr.rel (0) target = $region105
    $region104: #{tpu_custom_call.1} parent=1 // pred_region
      %272 = dma.done [#allocation9], 16
    $region105: #{tpu_custom_call.1} parent=1 // pred_fallthru
      _
    // Predicated region
    $region106: #{tpu_custom_call.1} parent=1 // pred_check
      _
    $region107: #{tpu_custom_call.1} parent=1 // pred_check_branch
      %274 = sbr.rel (0) target = $region109
    $region108: #{tpu_custom_call.1} parent=1 // pred_region
      %275 = dma.done [#allocation12], 512
    $region109: #{tpu_custom_call.1} parent=1 // pred_fallthru
      _
    // Predicated region
    $region110: #{tpu_custom_call.1} parent=1 // pred_check
      _
    $region111: #{tpu_custom_call.1} parent=1 // pred_check_branch
      %277 = sbr.rel (0) target = $region113
    $region112: #{tpu_custom_call.1} parent=1 // pred_region
      %278 = dma.done [#allocation12], 16
    $region113: #{tpu_custom_call.1} parent=1 // pred_fallthru
      _
    // Predicated region
    $region114: #{tpu_custom_call.1} parent=1 // pred_check
      _
    $region115: #{tpu_custom_call.1} parent=1 // pred_check_branch
      %280 = sbr.rel (0) target = $region117
    $region116: #{tpu_custom_call.1} parent=1 // pred_region
      %281 = dma.done [#allocation15], 2048
    $region117: #{tpu_custom_call.1} parent=1 // pred_fallthru
      _
    // Predicated region
    $region118: #{tpu_custom_call.1} parent=1 // pred_check
      _
    $region119: #{tpu_custom_call.1} parent=1 // pred_check_branch
      %283 = sbr.rel (0) target = $region121
    $region120: #{tpu_custom_call.1} parent=1 // pred_region
      %284 = dma.done [#allocation15], 32
    $region121: #{tpu_custom_call.1} parent=1 // pred_fallthru
      _
    // Predicated region
    $region122: #{tpu_custom_call.1} parent=1 // pred_check
      _
    $region123: #{tpu_custom_call.1} parent=1 // pred_check_branch
      %286 = sbr.rel (0) target = $region125
    $region124: #{tpu_custom_call.1} parent=1 // pred_region
      %287 = dma.done [#allocation18], 8192
    $region125: #{tpu_custom_call.1} parent=1 // pred_fallthru
      _
    // Predicated region
    $region126: #{tpu_custom_call.1} parent=1 // pred_check
      _
    $region127: #{tpu_custom_call.1} parent=1 // pred_check_branch
      %289 = sbr.rel (0) target = $region129
    $region128: #{tpu_custom_call.1} parent=1 // pred_region
      %290 = dma.done [#allocation18], 64
    $region129: #{tpu_custom_call.1} parent=1 // pred_fallthru
      _
    // Predicated region
    $region130: #{tpu_custom_call.1} parent=1 // pred_check
      _
    $region131: #{tpu_custom_call.1} parent=1 // pred_check_branch
      %292 = sbr.rel (0) target = $region133
    $region132: #{tpu_custom_call.1} parent=1 // pred_region
      %293 = dma.done [#allocation21], 20480
    $region133: #{tpu_custom_call.1} parent=1 // pred_fallthru
      _
    // Predicated region
    $region134: #{tpu_custom_call.1} parent=1 // pred_check
      _
    $region135: #{tpu_custom_call.1} parent=1 // pred_check_branch
      %295 = sbr.rel (0) target = $region137
    $region136: #{tpu_custom_call.1} parent=1 // pred_region
      %296 = dma.done [#allocation21], 80
    $region137: #{tpu_custom_call.1} parent=1 // pred_fallthru
      _
    // Predicated region
    $region138: #{tpu_custom_call.1} parent=1 // pred_check
      _
    $region139: #{tpu_custom_call.1} parent=1 // pred_check_branch
      %298 = sbr.rel (0) target = $region141
    $region140: #{tpu_custom_call.1} parent=1 // pred_region
      %299 = dma.done [#allocation24], 128
    $region141: #{tpu_custom_call.1} parent=1 // pred_fallthru
      _
    // Predicated region
    $region142: #{tpu_custom_call.1} parent=1 // pred_check
      _
    $region143: #{tpu_custom_call.1} parent=1 // pred_check_branch
      %301 = sbr.rel (0) target = $region145
    $region144: #{tpu_custom_call.1} parent=1 // pred_region
      %302 = dma.done [#allocation24], 40960
    $region145: #{tpu_custom_call.1} parent=1 // pred_fallthru
      _
    // Predicated region
    $region146: #{tpu_custom_call.1} parent=1 // pred_check
      _
    $region147: #{tpu_custom_call.1} parent=1 // pred_check_branch
      %304 = sbr.rel (0) target = $region149
    $region148: #{tpu_custom_call.1} parent=1 // pred_region
      %305 = dma.done [#allocation27], 128
    $region149: #{tpu_custom_call.1} parent=1 // pred_fallthru
      _
    // Predicated region
    $region150: #{tpu_custom_call.1} parent=1 // pred_check
      _
    $region151: #{tpu_custom_call.1} parent=1 // pred_check_branch
      %307 = sbr.rel (0) target = $region153
    $region152: #{tpu_custom_call.1} parent=1 // pred_region
      %308 = dma.done [#allocation27], 32768
    $region153: #{tpu_custom_call.1} parent=1 // pred_fallthru
      _
    // Predicated region
    $region154: #{tpu_custom_call.1} parent=1 // pred_check
      _
    $region155: #{tpu_custom_call.1} parent=1 // pred_check_branch
      %310 = sbr.rel (0) target = $region157
    $region156: #{tpu_custom_call.1} parent=1 // pred_region
      %311 = dma.done [#allocation30], 64
    $region157: #{tpu_custom_call.1} parent=1 // pred_fallthru
      _
    // Predicated region
    $region158: #{tpu_custom_call.1} parent=1 // pred_check
      _
    $region159: #{tpu_custom_call.1} parent=1 // pred_check_branch
      %313 = sbr.rel (0) target = $region161
    $region160: #{tpu_custom_call.1} parent=1 // pred_region
      %314 = dma.done [#allocation30], 4096
    $region161: #{tpu_custom_call.1} parent=1 // pred_fallthru
      _
    // Predicated region
    $region162: #{tpu_custom_call.1} parent=1 // pred_check
      _
    $region163: #{tpu_custom_call.1} parent=1 // pred_check_branch
      %316 = sbr.rel (0) target = $region165
    $region164: #{tpu_custom_call.1} parent=1 // pred_region
      %317 = dma.done [#allocation33], 16
    $region165: #{tpu_custom_call.1} parent=1 // pred_fallthru
      _
    %v319 = vld [vmem:[#allocation2] sm:$0xff]
    %v320 = vld [vmem:[#allocation2 + $0x8] sm:$0xff]
    %v321 = vld [vmem:[%s1] sm:$0xff]
    %v322 = vld [vmem:[%s1 + $0x8] sm:$0xff]
    %v323 = vpack.c.bf16 %v322, %v321
    %v324 = vld [vmem:[#allocation5] sm:$0xf]
    %vm325 = vcmask 64512
    %v327 = vsel %vm325, %v323, 0
    %vm329 = vcmask 1043456
    %v331 = vsel %vm329, %v324, 0
    %333 = vmatprep.subr.bf16.mxu0 0
    %334 = vmatpush1.bf16.msra.mxu0 %v331
    %335 = vmatprep.subr.bf16.mxu0 0
    %336 = vmatpush1.bf16.msra.mxu0 0
    %337 = vmatprep.subr.bf16.mxu0 0
    %338 = vmatpush1.bf16.msra.mxu0 0
    %339 = vmatprep.subr.bf16.mxu0 0
    %340 = vmatpush1.bf16.msra.mxu0 0
    %341 = vmatprep.subr.bf16.mxu0 0
    %342 = vmatpush1.bf16.msra.mxu0 0
    %343 = vmatprep.subr.bf16.mxu0 0
    %344 = vmatpush1.bf16.msra.mxu0 0
    %345 = vmatprep.subr.bf16.mxu0 0
    %346 = vmatpush1.bf16.msra.mxu0 0
    %347 = vmatprep.subr.bf16.mxu0 0
    %348 = vmatpush1.bf16.msra.mxu0 0
    %349 = vmatprep.subr.bf16.mxu0 0
    %350 = vmatpush1.bf16.msra.mxu0 0
    %351 = vmatprep.subr.bf16.mxu0 0
    %352 = vmatpush1.bf16.msra.mxu0 0
    %353 = vmatprep.subr.bf16.mxu0 0
    %354 = vmatpush1.bf16.msra.mxu0 0
    %355 = vmatprep.subr.bf16.mxu0 0
    %356 = vmatpush1.bf16.msra.mxu0 0
    %357 = vmatprep.subr.bf16.mxu0 0
    %358 = vmatpush1.bf16.msra.mxu0 0
    %359 = vmatprep.subr.bf16.mxu0 0
    %360 = vmatpush1.bf16.msra.mxu0 0
    %361 = vmatprep.subr.bf16.mxu0 0
    %362 = vmatpush1.bf16.msra.mxu0 0
    %363 = vmatprep.subr.bf16.mxu0 0
    %364 = vmatpush1.bf16.msra.mxu0 0
    %365 = vmatprep.mubr.bf16.mxu0 0
    %366 = vmatmul.mubr.bf16.gmra.mrb[0].mxu0 %v327
    %v367 = vpop.f32.mrb[0].mxu0
    %v368 = vadd.f32 0.0, %v367
    %v369 = vpop.f32.mrb[0].mxu0
    %v370 = vpop.f32.mrb[0].mxu0
    %v371 = vadd.f32 0.0, %v370
    %v372 = vpop.f32.mrb[0].mxu0
    %373 = vdwg.mxu0
    %v374 = vld [vmem:[#allocation7] sm:$0x1]
    %v376 = vlaneseq
    %v377 = vshrl.u32 %v376, 7
    %v378 = vsub.s32 0, %v377
    %v379 = vrot.slane %v374, %v378
    %vm381 = vcmask 130048
    %v383 = vsel %vm381, %v319, 0
    %v386 = vsel %vm381, %v320, 0
    %388 = vmatprep.subr.mxu0 0.0
    %389 = vmatpush1.msra.mxu0 %v368
    %390 = vmatprep.subr.mxu0 0.0
    %391 = vmatpush1.msra.mxu0 %v371
    %392 = vmatprep.subr.mxu0 0.0
    %393 = vmatpush1.msra.mxu0 0.0
    %394 = vmatprep.subr.mxu0 0.0
    %395 = vmatpush1.msra.mxu0 0.0
    %396 = vmatprep.subr.mxu0 0.0
    %397 = vmatpush1.msra.mxu0 0.0
    %398 = vmatprep.subr.mxu0 0.0
    %399 = vmatpush1.msra.mxu0 0.0
    %400 = vmatprep.subr.mxu0 0.0
    %401 = vmatpush1.msra.mxu0 0.0
    %402 = vmatprep.subr.mxu0 0.0
    %403 = vmatpush1.msra.mxu0 0.0
    %404 = vmatprep.subr.mxu0 0.0
    %405 = vmatpush1.msra.mxu0 0.0
    %406 = vmatprep.subr.mxu0 0.0
    %407 = vmatpush1.msra.mxu0 0.0
    %408 = vmatprep.subr.mxu0 0.0
    %409 = vmatpush1.msra.mxu0 0.0
    %410 = vmatprep.subr.mxu0 0.0
    %411 = vmatpush1.msra.mxu0 0.0
    %412 = vmatprep.subr.mxu0 0.0
    %413 = vmatpush1.msra.mxu0 0.0
    %414 = vmatprep.subr.mxu0 0.0
    %415 = vmatpush1.msra.mxu0 0.0
    %416 = vmatprep.subr.mxu0 0.0
    %417 = vmatpush1.msra.mxu0 0.0
    %418 = vmatprep.subr.mxu0 0.0
    %419 = vmatpush1.msra.mxu0 0.0
    %420 = vmatprep.subr.mxu0 0.0
    %421 = vmatpush1.msra.mxu0 0.0
    %422 = vmatprep.subr.mxu0 0.0
    %423 = vmatpush1.msra.mxu0 0.0
    %424 = vmatprep.subr.mxu0 0.0
    %425 = vmatpush1.msra.mxu0 0.0
    %426 = vmatprep.subr.mxu0 0.0
    %427 = vmatpush1.msra.mxu0 0.0
    %428 = vmatprep.subr.mxu0 0.0
    %429 = vmatpush1.msra.mxu0 0.0
    %430 = vmatprep.subr.mxu0 0.0
    %431 = vmatpush1.msra.mxu0 0.0
    %432 = vmatprep.subr.mxu0 0.0
    %433 = vmatpush1.msra.mxu0 0.0
    %434 = vmatprep.subr.mxu0 0.0
    %435 = vmatpush1.msra.mxu0 0.0
    %436 = vmatprep.subr.mxu0 0.0
    %437 = vmatpush1.msra.mxu0 0.0
    %438 = vmatprep.subr.mxu0 0.0
    %439 = vmatpush1.msra.mxu0 0.0
    %440 = vmatprep.subr.mxu0 0.0
    %441 = vmatpush1.msra.mxu0 0.0
    %442 = vmatprep.subr.mxu0 0.0
    %443 = vmatpush1.msra.mxu0 0.0
    %444 = vmatprep.subr.mxu0 0.0
    %445 = vmatpush1.msra.mxu0 0.0
    %446 = vmatprep.subr.mxu0 0.0
    %447 = vmatpush1.msra.mxu0 0.0
    %448 = vmatprep.subr.mxu0 0.0
    %449 = vmatpush1.msra.mxu0 0.0
    %450 = vmatprep.subr.mxu0 0.0
    %451 = vmatpush1.msra.mxu0 0.0
    %452 = vmatprep.mubr.f32.mxu0 0.0
    %453 = vmatmul.mubr.f32.gmra.mrb[0].mxu0 %v383
    %v454 = vpop.f32.mrb[0].mxu0
    %v455 = vadd.f32 %v379, %v454
    %v456 = vpop.f32.mrb[0].mxu0
    %457 = vmatprep.mubr.f32.mxu0 0.0
    %458 = vmatmul.mubr.f32.gmra.mrb[0].mxu0 %v386
    %v459 = vpop.f32.mrb[0].mxu0
    %v460 = vadd.f32 %v379, %v459
    %v461 = vpop.f32.mrb[0].mxu0
    %462 = vdwg.mxu0
    %vm463 = vcmp.gt.f32.partialorder %v455, 0.0
    %vm464 = vcmp.gt.f32.partialorder %v460, 0.0
    %v465 = vmul.f32 %v455, 0.01
    %v466 = vmul.f32 %v460, 0.01
    %v467 = vsel %vm463, %v455, %v465
    %v468 = vsel %vm464, %v460, %v466
    %v469 = vpack.c.bf16 %v468, %v467
    %v470 = vld [vmem:[#allocation8] sm:$0xf]
    %v471 = vld [vmem:[#allocation8 + $0x4] sm:$0xf]
    %v472 = vld [vmem:[#allocation8 + $0x8] sm:$0xf]
    %v473 = vld [vmem:[#allocation8 + $0xc] sm:$0xf]
    %v478 = vunpack.c.l.b16 %v470
    %v479 = vunpack.c.l.b16 %v471
    %v480 = vunpack.c.l.b16 %v472
    %v481 = vunpack.c.l.b16 %v473
    %v482 = vpack.c.b16 %v479, %v478
    %v483 = vpack.c.b16 %v481, %v480
    %vm486 = vcmask 261120
    %v488 = vsel %vm486, %v469, 0
    %490 = vmatprep.subr.bf16.mxu0 0
    %491 = vmatpush1.bf16.msra.mxu0 %v482
    %492 = vmatprep.subr.bf16.mxu0 0
    %493 = vmatpush1.bf16.msra.mxu0 %v483
    %494 = vmatprep.subr.bf16.mxu0 0
    %495 = vmatpush1.bf16.msra.mxu0 0
    %496 = vmatprep.subr.bf16.mxu0 0
    %497 = vmatpush1.bf16.msra.mxu0 0
    %498 = vmatprep.subr.bf16.mxu0 0
    %499 = vmatpush1.bf16.msra.mxu0 0
    %500 = vmatprep.subr.bf16.mxu0 0
    %501 = vmatpush1.bf16.msra.mxu0 0
    %502 = vmatprep.subr.bf16.mxu0 0
    %503 = vmatpush1.bf16.msra.mxu0 0
    %504 = vmatprep.subr.bf16.mxu0 0
    %505 = vmatpush1.bf16.msra.mxu0 0
    %506 = vmatprep.subr.bf16.mxu0 0
    %507 = vmatpush1.bf16.msra.mxu0 0
    %508 = vmatprep.subr.bf16.mxu0 0
    %509 = vmatpush1.bf16.msra.mxu0 0
    %510 = vmatprep.subr.bf16.mxu0 0
    %511 = vmatpush1.bf16.msra.mxu0 0
    %512 = vmatprep.subr.bf16.mxu0 0
    %513 = vmatpush1.bf16.msra.mxu0 0
    %514 = vmatprep.subr.bf16.mxu0 0
    %515 = vmatpush1.bf16.msra.mxu0 0
    %516 = vmatprep.subr.bf16.mxu0 0
    %517 = vmatpush1.bf16.msra.mxu0 0
    %518 = vmatprep.subr.bf16.mxu0 0
    %519 = vmatpush1.bf16.msra.mxu0 0
    %520 = vmatprep.subr.bf16.mxu0 0
    %521 = vmatpush1.bf16.msra.mxu0 0
    %522 = vmatprep.mubr.bf16.mxu0 0
    %523 = vmatmul.mubr.bf16.gmra.mrb[0].mxu0 %v488
    %v524 = vpop.f32.mrb[0].mxu0
    %v525 = vadd.f32 0.0, %v524
    %v526 = vpop.f32.mrb[0].mxu0
    %v527 = vpop.f32.mrb[0].mxu0
    %v528 = vadd.f32 0.0, %v527
    %v529 = vpop.f32.mrb[0].mxu0
    %530 = vdwg.mxu0
    %v531 = vld [vmem:[#allocation10] sm:$0x1]
    %v533 = vlaneseq
    %v534 = vshrl.u32 %v533, 7
    %v535 = vsub.s32 0, %v534
    %v536 = vrot.slane %v531, %v535
    %538 = vmatprep.subr.mxu0 0.0
    %539 = vmatpush1.msra.mxu0 %v525
    %540 = vmatprep.subr.mxu0 0.0
    %541 = vmatpush1.msra.mxu0 %v528
    %542 = vmatprep.subr.mxu0 0.0
    %543 = vmatpush1.msra.mxu0 0.0
    %544 = vmatprep.subr.mxu0 0.0
    %545 = vmatpush1.msra.mxu0 0.0
    %546 = vmatprep.subr.mxu0 0.0
    %547 = vmatpush1.msra.mxu0 0.0
    %548 = vmatprep.subr.mxu0 0.0
    %549 = vmatpush1.msra.mxu0 0.0
    %550 = vmatprep.subr.mxu0 0.0
    %551 = vmatpush1.msra.mxu0 0.0
    %552 = vmatprep.subr.mxu0 0.0
    %553 = vmatpush1.msra.mxu0 0.0
    %554 = vmatprep.subr.mxu0 0.0
    %555 = vmatpush1.msra.mxu0 0.0
    %556 = vmatprep.subr.mxu0 0.0
    %557 = vmatpush1.msra.mxu0 0.0
    %558 = vmatprep.subr.mxu0 0.0
    %559 = vmatpush1.msra.mxu0 0.0
    %560 = vmatprep.subr.mxu0 0.0
    %561 = vmatpush1.msra.mxu0 0.0
    %562 = vmatprep.subr.mxu0 0.0
    %563 = vmatpush1.msra.mxu0 0.0
    %564 = vmatprep.subr.mxu0 0.0
    %565 = vmatpush1.msra.mxu0 0.0
    %566 = vmatprep.subr.mxu0 0.0
    %567 = vmatpush1.msra.mxu0 0.0
    %568 = vmatprep.subr.mxu0 0.0
    %569 = vmatpush1.msra.mxu0 0.0
    %570 = vmatprep.subr.mxu0 0.0
    %571 = vmatpush1.msra.mxu0 0.0
    %572 = vmatprep.subr.mxu0 0.0
    %573 = vmatpush1.msra.mxu0 0.0
    %574 = vmatprep.subr.mxu0 0.0
    %575 = vmatpush1.msra.mxu0 0.0
    %576 = vmatprep.subr.mxu0 0.0
    %577 = vmatpush1.msra.mxu0 0.0
    %578 = vmatprep.subr.mxu0 0.0
    %579 = vmatpush1.msra.mxu0 0.0
    %580 = vmatprep.subr.mxu0 0.0
    %581 = vmatpush1.msra.mxu0 0.0
    %582 = vmatprep.subr.mxu0 0.0
    %583 = vmatpush1.msra.mxu0 0.0
    %584 = vmatprep.subr.mxu0 0.0
    %585 = vmatpush1.msra.mxu0 0.0
    %586 = vmatprep.subr.mxu0 0.0
    %587 = vmatpush1.msra.mxu0 0.0
    %588 = vmatprep.subr.mxu0 0.0
    %589 = vmatpush1.msra.mxu0 0.0
    %590 = vmatprep.subr.mxu0 0.0
    %591 = vmatpush1.msra.mxu0 0.0
    %592 = vmatprep.subr.mxu0 0.0
    %593 = vmatpush1.msra.mxu0 0.0
    %594 = vmatprep.subr.mxu0 0.0
    %595 = vmatpush1.msra.mxu0 0.0
    %596 = vmatprep.subr.mxu0 0.0
    %597 = vmatpush1.msra.mxu0 0.0
    %598 = vmatprep.subr.mxu0 0.0
    %599 = vmatpush1.msra.mxu0 0.0
    %600 = vmatprep.subr.mxu0 0.0
    %601 = vmatpush1.msra.mxu0 0.0
    %602 = vmatprep.mubr.f32.mxu0 0.0
    %603 = vmatmul.mubr.f32.gmra.mrb[0].mxu0 %v383
    %v604 = vpop.f32.mrb[0].mxu0
    %v605 = vadd.f32 %v536, %v604
    %v606 = vpop.f32.mrb[0].mxu0
    %607 = vmatprep.mubr.f32.mxu0 0.0
    %608 = vmatmul.mubr.f32.gmra.mrb[0].mxu0 %v386
    %v609 = vpop.f32.mrb[0].mxu0
    %v610 = vadd.f32 %v536, %v609
    %v611 = vpop.f32.mrb[0].mxu0
    %612 = vdwg.mxu0
    %vm613 = vcmp.gt.f32.partialorder %v605, 0.0
    %vm614 = vcmp.gt.f32.partialorder %v610, 0.0
    %v615 = vmul.f32 %v605, 0.01
    %v616 = vmul.f32 %v610, 0.01
    %v617 = vsel %vm613, %v605, %v615
    %v618 = vsel %vm614, %v610, %v616
    %v619 = vpack.c.bf16 %v618, %v617
    %v620 = vld [vmem:[#allocation11] sm:$0xf]
    %v621 = vld [vmem:[#allocation11 + $0x4] sm:$0xf]
    %v622 = vld [vmem:[#allocation11 + $0x8] sm:$0xf]
    %v623 = vld [vmem:[#allocation11 + $0xc] sm:$0xf]
    %v624 = vld [vmem:[#allocation11 + $0x10] sm:$0xf]
    %v625 = vld [vmem:[#allocation11 + $0x14] sm:$0xf]
    %v626 = vld [vmem:[#allocation11 + $0x18] sm:$0xf]
    %v627 = vld [vmem:[#allocation11 + $0x1c] sm:$0xf]
    %v636 = vunpack.c.l.b16 %v620
    %v637 = vunpack.c.l.b16 %v621
    %v638 = vunpack.c.l.b16 %v622
    %v639 = vunpack.c.l.b16 %v623
    %v640 = vunpack.c.l.b16 %v624
    %v641 = vunpack.c.l.b16 %v625
    %v642 = vunpack.c.l.b16 %v626
    %v643 = vunpack.c.l.b16 %v627
    %v644 = vpack.c.b16 %v637, %v636
    %v645 = vpack.c.b16 %v639, %v638
    %v646 = vpack.c.b16 %v641, %v640
    %v647 = vpack.c.b16 %v643, %v642
    %vm652 = vcmask 523264
    %v654 = vsel %vm652, %v619, 0
    %656 = vmatprep.subr.bf16.mxu0 0
    %657 = vmatpush1.bf16.msra.mxu0 %v644
    %658 = vmatprep.subr.bf16.mxu0 0
    %659 = vmatpush1.bf16.msra.mxu0 %v645
    %660 = vmatprep.subr.bf16.mxu0 0
    %661 = vmatpush1.bf16.msra.mxu0 %v646
    %662 = vmatprep.subr.bf16.mxu0 0
    %663 = vmatpush1.bf16.msra.mxu0 %v647
    %664 = vmatprep.subr.bf16.mxu0 0
    %665 = vmatpush1.bf16.msra.mxu0 0
    %666 = vmatprep.subr.bf16.mxu0 0
    %667 = vmatpush1.bf16.msra.mxu0 0
    %668 = vmatprep.subr.bf16.mxu0 0
    %669 = vmatpush1.bf16.msra.mxu0 0
    %670 = vmatprep.subr.bf16.mxu0 0
    %671 = vmatpush1.bf16.msra.mxu0 0
    %672 = vmatprep.subr.bf16.mxu0 0
    %673 = vmatpush1.bf16.msra.mxu0 0
    %674 = vmatprep.subr.bf16.mxu0 0
    %675 = vmatpush1.bf16.msra.mxu0 0
    %676 = vmatprep.subr.bf16.mxu0 0
    %677 = vmatpush1.bf16.msra.mxu0 0
    %678 = vmatprep.subr.bf16.mxu0 0
    %679 = vmatpush1.bf16.msra.mxu0 0
    %680 = vmatprep.subr.bf16.mxu0 0
    %681 = vmatpush1.bf16.msra.mxu0 0
    %682 = vmatprep.subr.bf16.mxu0 0
    %683 = vmatpush1.bf16.msra.mxu0 0
    %684 = vmatprep.subr.bf16.mxu0 0
    %685 = vmatpush1.bf16.msra.mxu0 0
    %686 = vmatprep.subr.bf16.mxu0 0
    %687 = vmatpush1.bf16.msra.mxu0 0
    %688 = vmatprep.mubr.bf16.mxu0 0
    %689 = vmatmul.mubr.bf16.gmra.mrb[0].mxu0 %v654
    %v690 = vpop.f32.mrb[0].mxu0
    %v691 = vadd.f32 0.0, %v690
    %v692 = vpop.f32.mrb[0].mxu0
    %v693 = vpop.f32.mrb[0].mxu0
    %v694 = vadd.f32 0.0, %v693
    %v695 = vpop.f32.mrb[0].mxu0
    %696 = vdwg.mxu0
    %v697 = vld [vmem:[#allocation13] sm:$0x1]
    %v699 = vlaneseq
    %v700 = vshrl.u32 %v699, 7
    %v701 = vsub.s32 0, %v700
    %v702 = vrot.slane %v697, %v701
    %704 = vmatprep.subr.mxu0 0.0
    %705 = vmatpush1.msra.mxu0 %v691
    %706 = vmatprep.subr.mxu0 0.0
    %707 = vmatpush1.msra.mxu0 %v694
    %708 = vmatprep.subr.mxu0 0.0
    %709 = vmatpush1.msra.mxu0 0.0
    %710 = vmatprep.subr.mxu0 0.0
    %711 = vmatpush1.msra.mxu0 0.0
    %712 = vmatprep.subr.mxu0 0.0
    %713 = vmatpush1.msra.mxu0 0.0
    %714 = vmatprep.subr.mxu0 0.0
    %715 = vmatpush1.msra.mxu0 0.0
    %716 = vmatprep.subr.mxu0 0.0
    %717 = vmatpush1.msra.mxu0 0.0
    %718 = vmatprep.subr.mxu0 0.0
    %719 = vmatpush1.msra.mxu0 0.0
    %720 = vmatprep.subr.mxu0 0.0
    %721 = vmatpush1.msra.mxu0 0.0
    %722 = vmatprep.subr.mxu0 0.0
    %723 = vmatpush1.msra.mxu0 0.0
    %724 = vmatprep.subr.mxu0 0.0
    %725 = vmatpush1.msra.mxu0 0.0
    %726 = vmatprep.subr.mxu0 0.0
    %727 = vmatpush1.msra.mxu0 0.0
    %728 = vmatprep.subr.mxu0 0.0
    %729 = vmatpush1.msra.mxu0 0.0
    %730 = vmatprep.subr.mxu0 0.0
    %731 = vmatpush1.msra.mxu0 0.0
    %732 = vmatprep.subr.mxu0 0.0
    %733 = vmatpush1.msra.mxu0 0.0
    %734 = vmatprep.subr.mxu0 0.0
    %735 = vmatpush1.msra.mxu0 0.0
    %736 = vmatprep.subr.mxu0 0.0
    %737 = vmatpush1.msra.mxu0 0.0
    %738 = vmatprep.subr.mxu0 0.0
    %739 = vmatpush1.msra.mxu0 0.0
    %740 = vmatprep.subr.mxu0 0.0
    %741 = vmatpush1.msra.mxu0 0.0
    %742 = vmatprep.subr.mxu0 0.0
    %743 = vmatpush1.msra.mxu0 0.0
    %744 = vmatprep.subr.mxu0 0.0
    %745 = vmatpush1.msra.mxu0 0.0
    %746 = vmatprep.subr.mxu0 0.0
    %747 = vmatpush1.msra.mxu0 0.0
    %748 = vmatprep.subr.mxu0 0.0
    %749 = vmatpush1.msra.mxu0 0.0
    %750 = vmatprep.subr.mxu0 0.0
    %751 = vmatpush1.msra.mxu0 0.0
    %752 = vmatprep.subr.mxu0 0.0
    %753 = vmatpush1.msra.mxu0 0.0
    %754 = vmatprep.subr.mxu0 0.0
    %755 = vmatpush1.msra.mxu0 0.0
    %756 = vmatprep.subr.mxu0 0.0
    %757 = vmatpush1.msra.mxu0 0.0
    %758 = vmatprep.subr.mxu0 0.0
    %759 = vmatpush1.msra.mxu0 0.0
    %760 = vmatprep.subr.mxu0 0.0
    %761 = vmatpush1.msra.mxu0 0.0
    %762 = vmatprep.subr.mxu0 0.0
    %763 = vmatpush1.msra.mxu0 0.0
    %764 = vmatprep.subr.mxu0 0.0
    %765 = vmatpush1.msra.mxu0 0.0
    %766 = vmatprep.subr.mxu0 0.0
    %767 = vmatpush1.msra.mxu0 0.0
    %768 = vmatprep.mubr.f32.mxu0 0.0
    %769 = vmatmul.mubr.f32.gmra.mrb[0].mxu0 %v383
    %v770 = vpop.f32.mrb[0].mxu0
    %v771 = vadd.f32 %v702, %v770
    %v772 = vpop.f32.mrb[0].mxu0
    %773 = vmatprep.mubr.f32.mxu0 0.0
    %774 = vmatmul.mubr.f32.gmra.mrb[0].mxu0 %v386
    %v775 = vpop.f32.mrb[0].mxu0
    %v776 = vadd.f32 %v702, %v775
    %v777 = vpop.f32.mrb[0].mxu0
    %778 = vdwg.mxu0
    %vm779 = vcmp.gt.f32.partialorder %v771, 0.0
    %vm780 = vcmp.gt.f32.partialorder %v776, 0.0
    %v781 = vmul.f32 %v771, 0.01
    %v782 = vmul.f32 %v776, 0.01
    %v783 = vsel %vm779, %v771, %v781
    %v784 = vsel %vm780, %v776, %v782
    %v785 = vpack.c.bf16 %v784, %v783
    %v786 = vld [vmem:[#allocation14] sm:$0xff]
    %v787 = vld [vmem:[#allocation14 + $0x8] sm:$0xff]
    %v788 = vld [vmem:[#allocation14 + $0x10] sm:$0xff]
    %v789 = vld [vmem:[#allocation14 + $0x18] sm:$0xff]
    %v790 = vld [vmem:[#allocation14 + $0x20] sm:$0xff]
    %v791 = vld [vmem:[#allocation14 + $0x28] sm:$0xff]
    %v792 = vld [vmem:[#allocation14 + $0x30] sm:$0xff]
    %v793 = vld [vmem:[#allocation14 + $0x38] sm:$0xff]
    %v794 = vld [vmem:[#allocation14 + $0x40] sm:$0xff]
    %v795 = vld [vmem:[#allocation14 + $0x48] sm:$0xff]
    %v796 = vld [vmem:[#allocation14 + $0x50] sm:$0xff]
    %v797 = vld [vmem:[#allocation14 + $0x58] sm:$0xff]
    %v798 = vld [vmem:[#allocation14 + $0x60] sm:$0xff]
    %v799 = vld [vmem:[#allocation14 + $0x68] sm:$0xff]
    %v800 = vld [vmem:[#allocation14 + $0x70] sm:$0xff]
    %v801 = vld [vmem:[#allocation14 + $0x78] sm:$0xff]
    %v818 = vunpack.c.l.b16 %v786
    %v819 = vunpack.c.h.b16 %v786
    %v820 = vunpack.c.l.b16 %v787
    %v821 = vunpack.c.h.b16 %v787
    %v822 = vunpack.c.l.b16 %v788
    %v823 = vunpack.c.h.b16 %v788
    %v824 = vunpack.c.l.b16 %v789
    %v825 = vunpack.c.h.b16 %v789
    %v826 = vunpack.c.l.b16 %v790
    %v827 = vunpack.c.h.b16 %v790
    %v828 = vunpack.c.l.b16 %v791
    %v829 = vunpack.c.h.b16 %v791
    %v830 = vunpack.c.l.b16 %v792
    %v831 = vunpack.c.h.b16 %v792
    %v832 = vunpack.c.l.b16 %v793
    %v833 = vunpack.c.h.b16 %v793
    %v834 = vunpack.c.l.b16 %v794
    %v835 = vunpack.c.h.b16 %v794
    %v836 = vunpack.c.l.b16 %v795
    %v837 = vunpack.c.h.b16 %v795
    %v838 = vunpack.c.l.b16 %v796
    %v839 = vunpack.c.h.b16 %v796
    %v840 = vunpack.c.l.b16 %v797
    %v841 = vunpack.c.h.b16 %v797
    %v842 = vunpack.c.l.b16 %v798
    %v843 = vunpack.c.h.b16 %v798
    %v844 = vunpack.c.l.b16 %v799
    %v845 = vunpack.c.h.b16 %v799
    %v846 = vunpack.c.l.b16 %v800
    %v847 = vunpack.c.h.b16 %v800
    %v848 = vunpack.c.l.b16 %v801
    %v849 = vunpack.c.h.b16 %v801
    %v850 = vpack.c.b16 %v820, %v818
    %v851 = vpack.c.b16 %v821, %v819
    %v852 = vpack.c.b16 %v824, %v822
    %v853 = vpack.c.b16 %v825, %v823
    %v854 = vpack.c.b16 %v828, %v826
    %v855 = vpack.c.b16 %v829, %v827
    %v856 = vpack.c.b16 %v832, %v830
    %v857 = vpack.c.b16 %v833, %v831
    %v858 = vpack.c.b16 %v836, %v834
    %v859 = vpack.c.b16 %v837, %v835
    %v860 = vpack.c.b16 %v840, %v838
    %v861 = vpack.c.b16 %v841, %v839
    %v862 = vpack.c.b16 %v844, %v842
    %v863 = vpack.c.b16 %v845, %v843
    %v864 = vpack.c.b16 %v848, %v846
    %v865 = vpack.c.b16 %v849, %v847
    %882 = vmatprep.subr.bf16.mxu0 %v851
    %883 = vmatpush1.bf16.msra.mxu0 %v850
    %884 = vmatprep.subr.bf16.mxu0 %v853
    %885 = vmatpush1.bf16.msra.mxu0 %v852
    %886 = vmatprep.subr.bf16.mxu0 %v855
    %887 = vmatpush1.bf16.msra.mxu0 %v854
    %888 = vmatprep.subr.bf16.mxu0 %v857
    %889 = vmatpush1.bf16.msra.mxu0 %v856
    %890 = vmatprep.subr.bf16.mxu0 %v859
    %891 = vmatpush1.bf16.msra.mxu0 %v858
    %892 = vmatprep.subr.bf16.mxu0 %v861
    %893 = vmatpush1.bf16.msra.mxu0 %v860
    %894 = vmatprep.subr.bf16.mxu0 %v863
    %895 = vmatpush1.bf16.msra.mxu0 %v862
    %896 = vmatprep.subr.bf16.mxu0 %v865
    %897 = vmatpush1.bf16.msra.mxu0 %v864
    %898 = vmatprep.subr.bf16.mxu0 0
    %899 = vmatpush1.bf16.msra.mxu0 0
    %900 = vmatprep.subr.bf16.mxu0 0
    %901 = vmatpush1.bf16.msra.mxu0 0
    %902 = vmatprep.subr.bf16.mxu0 0
    %903 = vmatpush1.bf16.msra.mxu0 0
    %904 = vmatprep.subr.bf16.mxu0 0
    %905 = vmatpush1.bf16.msra.mxu0 0
    %906 = vmatprep.subr.bf16.mxu0 0
    %907 = vmatpush1.bf16.msra.mxu0 0
    %908 = vmatprep.subr.bf16.mxu0 0
    %909 = vmatpush1.bf16.msra.mxu0 0
    %910 = vmatprep.subr.bf16.mxu0 0
    %911 = vmatpush1.bf16.msra.mxu0 0
    %912 = vmatprep.subr.bf16.mxu0 0
    %913 = vmatpush1.bf16.msra.mxu0 0
    %914 = vmatprep.mubr.bf16.mxu0 0
    %915 = vmatmul.mubr.bf16.gmra.mrb[0].mxu0 %v785
    %v916 = vpop.f32.mrb[0].mxu0
    %v917 = vadd.f32 0.0, %v916
    %v918 = vpop.f32.mrb[0].mxu0
    %v919 = vadd.f32 0.0, %v918
    %v920 = vpop.f32.mrb[0].mxu0
    %v921 = vadd.f32 0.0, %v920
    %v922 = vpop.f32.mrb[0].mxu0
    %v923 = vadd.f32 0.0, %v922
    %924 = vdwg.mxu0
    %v925 = vld [vmem:[#allocation16] sm:$0x3]
    %v927 = vlaneseq
    %v928 = vshrl.u32 %v927, 7
    %v929 = vsub.s32 0, %v928
    %v930 = vrot.slane %v925, %v929
    %v931 = vlaneseq
    %v932 = vshrl.u32 %v931, 7
    %v933 = vsub.s32 1, %v932
    %v934 = vrot.slane %v925, %v933
    %937 = vmatprep.subr.mxu0 %v919
    %938 = vmatpush1.msra.mxu0 %v917
    %939 = vmatprep.subr.mxu0 %v923
    %940 = vmatpush1.msra.mxu0 %v921
    %941 = vmatprep.subr.mxu0 0.0
    %942 = vmatpush1.msra.mxu0 0.0
    %943 = vmatprep.subr.mxu0 0.0
    %944 = vmatpush1.msra.mxu0 0.0
    %945 = vmatprep.subr.mxu0 0.0
    %946 = vmatpush1.msra.mxu0 0.0
    %947 = vmatprep.subr.mxu0 0.0
    %948 = vmatpush1.msra.mxu0 0.0
    %949 = vmatprep.subr.mxu0 0.0
    %950 = vmatpush1.msra.mxu0 0.0
    %951 = vmatprep.subr.mxu0 0.0
    %952 = vmatpush1.msra.mxu0 0.0
    %953 = vmatprep.subr.mxu0 0.0
    %954 = vmatpush1.msra.mxu0 0.0
    %955 = vmatprep.subr.mxu0 0.0
    %956 = vmatpush1.msra.mxu0 0.0
    %957 = vmatprep.subr.mxu0 0.0
    %958 = vmatpush1.msra.mxu0 0.0
    %959 = vmatprep.subr.mxu0 0.0
    %960 = vmatpush1.msra.mxu0 0.0
    %961 = vmatprep.subr.mxu0 0.0
    %962 = vmatpush1.msra.mxu0 0.0
    %963 = vmatprep.subr.mxu0 0.0
    %964 = vmatpush1.msra.mxu0 0.0
    %965 = vmatprep.subr.mxu0 0.0
    %966 = vmatpush1.msra.mxu0 0.0
    %967 = vmatprep.subr.mxu0 0.0
    %968 = vmatpush1.msra.mxu0 0.0
    %969 = vmatprep.subr.mxu0 0.0
    %970 = vmatpush1.msra.mxu0 0.0
    %971 = vmatprep.subr.mxu0 0.0
    %972 = vmatpush1.msra.mxu0 0.0
    %973 = vmatprep.subr.mxu0 0.0
    %974 = vmatpush1.msra.mxu0 0.0
    %975 = vmatprep.subr.mxu0 0.0
    %976 = vmatpush1.msra.mxu0 0.0
    %977 = vmatprep.subr.mxu0 0.0
    %978 = vmatpush1.msra.mxu0 0.0
    %979 = vmatprep.subr.mxu0 0.0
    %980 = vmatpush1.msra.mxu0 0.0
    %981 = vmatprep.subr.mxu0 0.0
    %982 = vmatpush1.msra.mxu0 0.0
    %983 = vmatprep.subr.mxu0 0.0
    %984 = vmatpush1.msra.mxu0 0.0
    %985 = vmatprep.subr.mxu0 0.0
    %986 = vmatpush1.msra.mxu0 0.0
    %987 = vmatprep.subr.mxu0 0.0
    %988 = vmatpush1.msra.mxu0 0.0
    %989 = vmatprep.subr.mxu0 0.0
    %990 = vmatpush1.msra.mxu0 0.0
    %991 = vmatprep.subr.mxu0 0.0
    %992 = vmatpush1.msra.mxu0 0.0
    %993 = vmatprep.subr.mxu0 0.0
    %994 = vmatpush1.msra.mxu0 0.0
    %995 = vmatprep.subr.mxu0 0.0
    %996 = vmatpush1.msra.mxu0 0.0
    %997 = vmatprep.subr.mxu0 0.0
    %998 = vmatpush1.msra.mxu0 0.0
    %999 = vmatprep.subr.mxu0 0.0
    %1000 = vmatpush1.msra.mxu0 0.0
    %1001 = vmatprep.mubr.f32.mxu0 0.0
    %1002 = vmatmul.mubr.f32.gmra.mrb[0].mxu0 %v383
    %v1003 = vpop.f32.mrb[0].mxu0
    %v1004 = vadd.f32 %v930, %v1003
    %v1005 = vpop.f32.mrb[0].mxu0
    %v1006 = vadd.f32 %v934, %v1005
    %1007 = vmatprep.mubr.f32.mxu0 0.0
    %1008 = vmatmul.mubr.f32.gmra.mrb[0].mxu0 %v386
    %v1009 = vpop.f32.mrb[0].mxu0
    %v1010 = vadd.f32 %v930, %v1009
    %v1011 = vpop.f32.mrb[0].mxu0
    %v1012 = vadd.f32 %v934, %v1011
    %1013 = vdwg.mxu0
    %vm1014 = vcmp.gt.f32.partialorder %v1004, 0.0
    %vm1015 = vcmp.gt.f32.partialorder %v1006, 0.0
    %vm1016 = vcmp.gt.f32.partialorder %v1010, 0.0
    %vm1017 = vcmp.gt.f32.partialorder %v1012, 0.0
    %v1018 = vmul.f32 %v1004, 0.01
    %v1019 = vmul.f32 %v1006, 0.01
    %v1020 = vmul.f32 %v1010, 0.01
    %v1021 = vmul.f32 %v1012, 0.01
    %v1022 = vsel %vm1014, %v1004, %v1018
    %v1023 = vsel %vm1015, %v1006, %v1019
    %v1024 = vsel %vm1016, %v1010, %v1020
    %v1025 = vsel %vm1017, %v1012, %v1021
    %v1026 = vpack.c.bf16 %v1024, %v1022
    %v1027 = vpack.c.bf16 %v1025, %v1023
    %v1028 = vld [vmem:[#allocation17] sm:$0xff]
    %v1029 = vld [vmem:[#allocation17 + $0x8] sm:$0xff]
    %v1030 = vld [vmem:[#allocation17 + $0x10] sm:$0xff]
    %v1031 = vld [vmem:[#allocation17 + $0x18] sm:$0xff]
    %v1032 = vld [vmem:[#allocation17 + $0x20] sm:$0xff]
    %v1033 = vld [vmem:[#allocation17 + $0x28] sm:$0xff]
    %v1034 = vld [vmem:[#allocation17 + $0x30] sm:$0xff]
    %v1035 = vld [vmem:[#allocation17 + $0x38] sm:$0xff]
    %v1036 = vld [vmem:[#allocation17 + $0x40] sm:$0xff]
    %v1037 = vld [vmem:[#allocation17 + $0x48] sm:$0xff]
    %v1038 = vld [vmem:[#allocation17 + $0x50] sm:$0xff]
    %v1039 = vld [vmem:[#allocation17 + $0x58] sm:$0xff]
    %v1040 = vld [vmem:[#allocation17 + $0x60] sm:$0xff]
    %v1041 = vld [vmem:[#allocation17 + $0x68] sm:$0xff]
    %v1042 = vld [vmem:[#allocation17 + $0x70] sm:$0xff]
    %v1043 = vld [vmem:[#allocation17 + $0x78] sm:$0xff]
    %v1044 = vld [vmem:[#allocation17 + $0x80] sm:$0xff]
    %v1045 = vld [vmem:[#allocation17 + $0x88] sm:$0xff]
    %v1046 = vld [vmem:[#allocation17 + $0x90] sm:$0xff]
    %v1047 = vld [vmem:[#allocation17 + $0x98] sm:$0xff]
    %v1048 = vld [vmem:[#allocation17 + $0xa0] sm:$0xff]
    %v1049 = vld [vmem:[#allocation17 + $0xa8] sm:$0xff]
    %v1050 = vld [vmem:[#allocation17 + $0xb0] sm:$0xff]
    %v1051 = vld [vmem:[#allocation17 + $0xb8] sm:$0xff]
    %v1052 = vld [vmem:[#allocation17 + $0xc0] sm:$0xff]
    %v1053 = vld [vmem:[#allocation17 + $0xc8] sm:$0xff]
    %v1054 = vld [vmem:[#allocation17 + $0xd0] sm:$0xff]
    %v1055 = vld [vmem:[#allocation17 + $0xd8] sm:$0xff]
    %v1056 = vld [vmem:[#allocation17 + $0xe0] sm:$0xff]
    %v1057 = vld [vmem:[#allocation17 + $0xe8] sm:$0xff]
    %v1058 = vld [vmem:[#allocation17 + $0xf0] sm:$0xff]
    %v1059 = vld [vmem:[#allocation17 + $0xf8] sm:$0xff]
    %v1060 = vld [vmem:[#allocation17 + $0x100] sm:$0xff]
    %v1061 = vld [vmem:[#allocation17 + $0x108] sm:$0xff]
    %v1062 = vld [vmem:[#allocation17 + $0x110] sm:$0xff]
    %v1063 = vld [vmem:[#allocation17 + $0x118] sm:$0xff]
    %v1064 = vld [vmem:[#allocation17 + $0x120] sm:$0xff]
    %v1065 = vld [vmem:[#allocation17 + $0x128] sm:$0xff]
    %v1066 = vld [vmem:[#allocation17 + $0x130] sm:$0xff]
    %v1067 = vld [vmem:[#allocation17 + $0x138] sm:$0xff]
    %v1068 = vld [vmem:[#allocation17 + $0x140] sm:$0xff]
    %v1069 = vld [vmem:[#allocation17 + $0x148] sm:$0xff]
    %v1070 = vld [vmem:[#allocation17 + $0x150] sm:$0xff]
    %v1071 = vld [vmem:[#allocation17 + $0x158] sm:$0xff]
    %v1072 = vld [vmem:[#allocation17 + $0x160] sm:$0xff]
    %v1073 = vld [vmem:[#allocation17 + $0x168] sm:$0xff]
    %v1074 = vld [vmem:[#allocation17 + $0x170] sm:$0xff]
    %v1075 = vld [vmem:[#allocation17 + $0x178] sm:$0xff]
    %v1076 = vld [vmem:[#allocation17 + $0x180] sm:$0xff]
    %v1077 = vld [vmem:[#allocation17 + $0x188] sm:$0xff]
    %v1078 = vld [vmem:[#allocation17 + $0x190] sm:$0xff]
    %v1079 = vld [vmem:[#allocation17 + $0x198] sm:$0xff]
    %v1080 = vld [vmem:[#allocation17 + $0x1a0] sm:$0xff]
    %v1081 = vld [vmem:[#allocation17 + $0x1a8] sm:$0xff]
    %v1082 = vld [vmem:[#allocation17 + $0x1b0] sm:$0xff]
    %v1083 = vld [vmem:[#allocation17 + $0x1b8] sm:$0xff]
    %v1084 = vld [vmem:[#allocation17 + $0x1c0] sm:$0xff]
    %v1085 = vld [vmem:[#allocation17 + $0x1c8] sm:$0xff]
    %v1086 = vld [vmem:[#allocation17 + $0x1d0] sm:$0xff]
    %v1087 = vld [vmem:[#allocation17 + $0x1d8] sm:$0xff]
    %v1088 = vld [vmem:[#allocation17 + $0x1e0] sm:$0xff]
    %v1089 = vld [vmem:[#allocation17 + $0x1e8] sm:$0xff]
    %v1090 = vld [vmem:[#allocation17 + $0x1f0] sm:$0xff]
    %v1091 = vld [vmem:[#allocation17 + $0x1f8] sm:$0xff]
    %v1156 = vunpack.c.l.b16 %v1028
    %v1157 = vunpack.c.h.b16 %v1028
    %v1158 = vunpack.c.l.b16 %v1029
    %v1159 = vunpack.c.h.b16 %v1029
    %v1160 = vunpack.c.l.b16 %v1030
    %v1161 = vunpack.c.h.b16 %v1030
    %v1162 = vunpack.c.l.b16 %v1031
    %v1163 = vunpack.c.h.b16 %v1031
    %v1164 = vunpack.c.l.b16 %v1032
    %v1165 = vunpack.c.h.b16 %v1032
    %v1166 = vunpack.c.l.b16 %v1033
    %v1167 = vunpack.c.h.b16 %v1033
    %v1168 = vunpack.c.l.b16 %v1034
    %v1169 = vunpack.c.h.b16 %v1034
    %v1170 = vunpack.c.l.b16 %v1035
    %v1171 = vunpack.c.h.b16 %v1035
    %v1172 = vunpack.c.l.b16 %v1036
    %v1173 = vunpack.c.h.b16 %v1036
    %v1174 = vunpack.c.l.b16 %v1037
    %v1175 = vunpack.c.h.b16 %v1037
    %v1176 = vunpack.c.l.b16 %v1038
    %v1177 = vunpack.c.h.b16 %v1038
    %v1178 = vunpack.c.l.b16 %v1039
    %v1179 = vunpack.c.h.b16 %v1039
    %v1180 = vunpack.c.l.b16 %v1040
    %v1181 = vunpack.c.h.b16 %v1040
    %v1182 = vunpack.c.l.b16 %v1041
    %v1183 = vunpack.c.h.b16 %v1041
    %v1184 = vunpack.c.l.b16 %v1042
    %v1185 = vunpack.c.h.b16 %v1042
    %v1186 = vunpack.c.l.b16 %v1043
    %v1187 = vunpack.c.h.b16 %v1043
    %v1188 = vunpack.c.l.b16 %v1044
    %v1189 = vunpack.c.h.b16 %v1044
    %v1190 = vunpack.c.l.b16 %v1045
    %v1191 = vunpack.c.h.b16 %v1045
    %v1192 = vunpack.c.l.b16 %v1046
    %v1193 = vunpack.c.h.b16 %v1046
    %v1194 = vunpack.c.l.b16 %v1047
    %v1195 = vunpack.c.h.b16 %v1047
    %v1196 = vunpack.c.l.b16 %v1048
    %v1197 = vunpack.c.h.b16 %v1048
    %v1198 = vunpack.c.l.b16 %v1049
    %v1199 = vunpack.c.h.b16 %v1049
    %v1200 = vunpack.c.l.b16 %v1050
    %v1201 = vunpack.c.h.b16 %v1050
    %v1202 = vunpack.c.l.b16 %v1051
    %v1203 = vunpack.c.h.b16 %v1051
    %v1204 = vunpack.c.l.b16 %v1052
    %v1205 = vunpack.c.h.b16 %v1052
    %v1206 = vunpack.c.l.b16 %v1053
    %v1207 = vunpack.c.h.b16 %v1053
    %v1208 = vunpack.c.l.b16 %v1054
    %v1209 = vunpack.c.h.b16 %v1054
    %v1210 = vunpack.c.l.b16 %v1055
    %v1211 = vunpack.c.h.b16 %v1055
    %v1212 = vunpack.c.l.b16 %v1056
    %v1213 = vunpack.c.h.b16 %v1056
    %v1214 = vunpack.c.l.b16 %v1057
    %v1215 = vunpack.c.h.b16 %v1057
    %v1216 = vunpack.c.l.b16 %v1058
    %v1217 = vunpack.c.h.b16 %v1058
    %v1218 = vunpack.c.l.b16 %v1059
    %v1219 = vunpack.c.h.b16 %v1059
    %v1220 = vunpack.c.l.b16 %v1060
    %v1221 = vunpack.c.h.b16 %v1060
    %v1222 = vunpack.c.l.b16 %v1061
    %v1223 = vunpack.c.h.b16 %v1061
    %v1224 = vunpack.c.l.b16 %v1062
    %v1225 = vunpack.c.h.b16 %v1062
    %v1226 = vunpack.c.l.b16 %v1063
    %v1227 = vunpack.c.h.b16 %v1063
    %v1228 = vunpack.c.l.b16 %v1064
    %v1229 = vunpack.c.h.b16 %v1064
    %v1230 = vunpack.c.l.b16 %v1065
    %v1231 = vunpack.c.h.b16 %v1065
    %v1232 = vunpack.c.l.b16 %v1066
    %v1233 = vunpack.c.h.b16 %v1066
    %v1234 = vunpack.c.l.b16 %v1067
    %v1235 = vunpack.c.h.b16 %v1067
    %v1236 = vunpack.c.l.b16 %v1068
    %v1237 = vunpack.c.h.b16 %v1068
    %v1238 = vunpack.c.l.b16 %v1069
    %v1239 = vunpack.c.h.b16 %v1069
    %v1240 = vunpack.c.l.b16 %v1070
    %v1241 = vunpack.c.h.b16 %v1070
    %v1242 = vunpack.c.l.b16 %v1071
    %v1243 = vunpack.c.h.b16 %v1071
    %v1244 = vunpack.c.l.b16 %v1072
    %v1245 = vunpack.c.h.b16 %v1072
    %v1246 = vunpack.c.l.b16 %v1073
    %v1247 = vunpack.c.h.b16 %v1073
    %v1248 = vunpack.c.l.b16 %v1074
    %v1249 = vunpack.c.h.b16 %v1074
    %v1250 = vunpack.c.l.b16 %v1075
    %v1251 = vunpack.c.h.b16 %v1075
    %v1252 = vunpack.c.l.b16 %v1076
    %v1253 = vunpack.c.h.b16 %v1076
    %v1254 = vunpack.c.l.b16 %v1077
    %v1255 = vunpack.c.h.b16 %v1077
    %v1256 = vunpack.c.l.b16 %v1078
    %v1257 = vunpack.c.h.b16 %v1078
    %v1258 = vunpack.c.l.b16 %v1079
    %v1259 = vunpack.c.h.b16 %v1079
    %v1260 = vunpack.c.l.b16 %v1080
    %v1261 = vunpack.c.h.b16 %v1080
    %v1262 = vunpack.c.l.b16 %v1081
    %v1263 = vunpack.c.h.b16 %v1081
    %v1264 = vunpack.c.l.b16 %v1082
    %v1265 = vunpack.c.h.b16 %v1082
    %v1266 = vunpack.c.l.b16 %v1083
    %v1267 = vunpack.c.h.b16 %v1083
    %v1268 = vunpack.c.l.b16 %v1084
    %v1269 = vunpack.c.h.b16 %v1084
    %v1270 = vunpack.c.l.b16 %v1085
    %v1271 = vunpack.c.h.b16 %v1085
    %v1272 = vunpack.c.l.b16 %v1086
    %v1273 = vunpack.c.h.b16 %v1086
    %v1274 = vunpack.c.l.b16 %v1087
    %v1275 = vunpack.c.h.b16 %v1087
    %v1276 = vunpack.c.l.b16 %v1088
    %v1277 = vunpack.c.h.b16 %v1088
    %v1278 = vunpack.c.l.b16 %v1089
    %v1279 = vunpack.c.h.b16 %v1089
    %v1280 = vunpack.c.l.b16 %v1090
    %v1281 = vunpack.c.h.b16 %v1090
    %v1282 = vunpack.c.l.b16 %v1091
    %v1283 = vunpack.c.h.b16 %v1091
    %v1284 = vpack.c.b16 %v1160, %v1156
    %v1285 = vpack.c.b16 %v1161, %v1157
    %v1286 = vpack.c.b16 %v1162, %v1158
    %v1287 = vpack.c.b16 %v1163, %v1159
    %v1288 = vpack.c.b16 %v1168, %v1164
    %v1289 = vpack.c.b16 %v1169, %v1165
    %v1290 = vpack.c.b16 %v1170, %v1166
    %v1291 = vpack.c.b16 %v1171, %v1167
    %v1292 = vpack.c.b16 %v1176, %v1172
    %v1293 = vpack.c.b16 %v1177, %v1173
    %v1294 = vpack.c.b16 %v1178, %v1174
    %v1295 = vpack.c.b16 %v1179, %v1175
    %v1296 = vpack.c.b16 %v1184, %v1180
    %v1297 = vpack.c.b16 %v1185, %v1181
    %v1298 = vpack.c.b16 %v1186, %v1182
    %v1299 = vpack.c.b16 %v1187, %v1183
    %v1300 = vpack.c.b16 %v1192, %v1188
    %v1301 = vpack.c.b16 %v1193, %v1189
    %v1302 = vpack.c.b16 %v1194, %v1190
    %v1303 = vpack.c.b16 %v1195, %v1191
    %v1304 = vpack.c.b16 %v1200, %v1196
    %v1305 = vpack.c.b16 %v1201, %v1197
    %v1306 = vpack.c.b16 %v1202, %v1198
    %v1307 = vpack.c.b16 %v1203, %v1199
    %v1308 = vpack.c.b16 %v1208, %v1204
    %v1309 = vpack.c.b16 %v1209, %v1205
    %v1310 = vpack.c.b16 %v1210, %v1206
    %v1311 = vpack.c.b16 %v1211, %v1207
    %v1312 = vpack.c.b16 %v1216, %v1212
    %v1313 = vpack.c.b16 %v1217, %v1213
    %v1314 = vpack.c.b16 %v1218, %v1214
    %v1315 = vpack.c.b16 %v1219, %v1215
    %v1316 = vpack.c.b16 %v1224, %v1220
    %v1317 = vpack.c.b16 %v1225, %v1221
    %v1318 = vpack.c.b16 %v1226, %v1222
    %v1319 = vpack.c.b16 %v1227, %v1223
    %v1320 = vpack.c.b16 %v1232, %v1228
    %v1321 = vpack.c.b16 %v1233, %v1229
    %v1322 = vpack.c.b16 %v1234, %v1230
    %v1323 = vpack.c.b16 %v1235, %v1231
    %v1324 = vpack.c.b16 %v1240, %v1236
    %v1325 = vpack.c.b16 %v1241, %v1237
    %v1326 = vpack.c.b16 %v1242, %v1238
    %v1327 = vpack.c.b16 %v1243, %v1239
    %v1328 = vpack.c.b16 %v1248, %v1244
    %v1329 = vpack.c.b16 %v1249, %v1245
    %v1330 = vpack.c.b16 %v1250, %v1246
    %v1331 = vpack.c.b16 %v1251, %v1247
    %v1332 = vpack.c.b16 %v1256, %v1252
    %v1333 = vpack.c.b16 %v1257, %v1253
    %v1334 = vpack.c.b16 %v1258, %v1254
    %v1335 = vpack.c.b16 %v1259, %v1255
    %v1336 = vpack.c.b16 %v1264, %v1260
    %v1337 = vpack.c.b16 %v1265, %v1261
    %v1338 = vpack.c.b16 %v1266, %v1262
    %v1339 = vpack.c.b16 %v1267, %v1263
    %v1340 = vpack.c.b16 %v1272, %v1268
    %v1341 = vpack.c.b16 %v1273, %v1269
    %v1342 = vpack.c.b16 %v1274, %v1270
    %v1343 = vpack.c.b16 %v1275, %v1271
    %v1344 = vpack.c.b16 %v1280, %v1276
    %v1345 = vpack.c.b16 %v1281, %v1277
    %v1346 = vpack.c.b16 %v1282, %v1278
    %v1347 = vpack.c.b16 %v1283, %v1279
    %1412 = vmatprep.subr.bf16.mxu0 %v1285
    %1413 = vmatpush1.bf16.msra.mxu0 %v1284
    %1414 = vmatprep.subr.bf16.mxu0 %v1289
    %1415 = vmatpush1.bf16.msra.mxu0 %v1288
    %1416 = vmatprep.subr.bf16.mxu0 %v1293
    %1417 = vmatpush1.bf16.msra.mxu0 %v1292
    %1418 = vmatprep.subr.bf16.mxu0 %v1297
    %1419 = vmatpush1.bf16.msra.mxu0 %v1296
    %1420 = vmatprep.subr.bf16.mxu0 %v1301
    %1421 = vmatpush1.bf16.msra.mxu0 %v1300
    %1422 = vmatprep.subr.bf16.mxu0 %v1305
    %1423 = vmatpush1.bf16.msra.mxu0 %v1304
    %1424 = vmatprep.subr.bf16.mxu0 %v1309
    %1425 = vmatpush1.bf16.msra.mxu0 %v1308
    %1426 = vmatprep.subr.bf16.mxu0 %v1313
    %1427 = vmatpush1.bf16.msra.mxu0 %v1312
    %1428 = vmatprep.subr.bf16.mxu0 %v1317
    %1429 = vmatpush1.bf16.msra.mxu0 %v1316
    %1430 = vmatprep.subr.bf16.mxu0 %v1321
    %1431 = vmatpush1.bf16.msra.mxu0 %v1320
    %1432 = vmatprep.subr.bf16.mxu0 %v1325
    %1433 = vmatpush1.bf16.msra.mxu0 %v1324
    %1434 = vmatprep.subr.bf16.mxu0 %v1329
    %1435 = vmatpush1.bf16.msra.mxu0 %v1328
    %1436 = vmatprep.subr.bf16.mxu0 %v1333
    %1437 = vmatpush1.bf16.msra.mxu0 %v1332
    %1438 = vmatprep.subr.bf16.mxu0 %v1337
    %1439 = vmatpush1.bf16.msra.mxu0 %v1336
    %1440 = vmatprep.subr.bf16.mxu0 %v1341
    %1441 = vmatpush1.bf16.msra.mxu0 %v1340
    %1442 = vmatprep.subr.bf16.mxu0 %v1345
    %1443 = vmatpush1.bf16.msra.mxu0 %v1344
    %1444 = vmatprep.mubr.bf16.mxu0 %v1027
    %1445 = vmatmul.mubr.bf16.gmra.mrb[0].mxu0 %v1026
    %v1446 = vpop.f32.mrb[0].mxu0
    %v1447 = vadd.f32 0.0, %v1446
    %v1448 = vpop.f32.mrb[0].mxu0
    %v1449 = vadd.f32 0.0, %v1448
    %v1450 = vpop.f32.mrb[0].mxu0
    %v1451 = vadd.f32 0.0, %v1450
    %v1452 = vpop.f32.mrb[0].mxu0
    %v1453 = vadd.f32 0.0, %v1452
    %1454 = vdwg.mxu0
    %1455 = vmatprep.subr.bf16.mxu0 %v1287
    %1456 = vmatpush1.bf16.msra.mxu0 %v1286
    %1457 = vmatprep.subr.bf16.mxu0 %v1291
    %1458 = vmatpush1.bf16.msra.mxu0 %v1290
    %1459 = vmatprep.subr.bf16.mxu0 %v1295
    %1460 = vmatpush1.bf16.msra.mxu0 %v1294
    %1461 = vmatprep.subr.bf16.mxu0 %v1299
    %1462 = vmatpush1.bf16.msra.mxu0 %v1298
    %1463 = vmatprep.subr.bf16.mxu0 %v1303
    %1464 = vmatpush1.bf16.msra.mxu0 %v1302
    %1465 = vmatprep.subr.bf16.mxu0 %v1307
    %1466 = vmatpush1.bf16.msra.mxu0 %v1306
    %1467 = vmatprep.subr.bf16.mxu0 %v1311
    %1468 = vmatpush1.bf16.msra.mxu0 %v1310
    %1469 = vmatprep.subr.bf16.mxu0 %v1315
    %1470 = vmatpush1.bf16.msra.mxu0 %v1314
    %1471 = vmatprep.subr.bf16.mxu0 %v1319
    %1472 = vmatpush1.bf16.msra.mxu0 %v1318
    %1473 = vmatprep.subr.bf16.mxu0 %v1323
    %1474 = vmatpush1.bf16.msra.mxu0 %v1322
    %1475 = vmatprep.subr.bf16.mxu0 %v1327
    %1476 = vmatpush1.bf16.msra.mxu0 %v1326
    %1477 = vmatprep.subr.bf16.mxu0 %v1331
    %1478 = vmatpush1.bf16.msra.mxu0 %v1330
    %1479 = vmatprep.subr.bf16.mxu0 %v1335
    %1480 = vmatpush1.bf16.msra.mxu0 %v1334
    %1481 = vmatprep.subr.bf16.mxu0 %v1339
    %1482 = vmatpush1.bf16.msra.mxu0 %v1338
    %1483 = vmatprep.subr.bf16.mxu0 %v1343
    %1484 = vmatpush1.bf16.msra.mxu0 %v1342
    %1485 = vmatprep.subr.bf16.mxu0 %v1347
    %1486 = vmatpush1.bf16.msra.mxu0 %v1346
    %1487 = vmatprep.mubr.bf16.mxu0 %v1027
    %1488 = vmatmul.mubr.bf16.gmra.mrb[0].mxu0 %v1026
    %v1489 = vpop.f32.mrb[0].mxu0
    %v1490 = vadd.f32 0.0, %v1489
    %v1491 = vpop.f32.mrb[0].mxu0
    %v1492 = vadd.f32 0.0, %v1491
    %v1493 = vpop.f32.mrb[0].mxu0
    %v1494 = vadd.f32 0.0, %v1493
    %v1495 = vpop.f32.mrb[0].mxu0
    %v1496 = vadd.f32 0.0, %v1495
    %1497 = vdwg.mxu0
    %v1498 = vld [vmem:[#allocation19] sm:$0xf]
    %v1500 = vlaneseq
    %v1501 = vshrl.u32 %v1500, 7
    %v1502 = vsub.s32 0, %v1501
    %v1503 = vrot.slane %v1498, %v1502
    %v1504 = vlaneseq
    %v1505 = vshrl.u32 %v1504, 7
    %v1506 = vsub.s32 1, %v1505
    %v1507 = vrot.slane %v1498, %v1506
    %v1508 = vlaneseq
    %v1509 = vshrl.u32 %v1508, 7
    %v1510 = vsub.s32 2, %v1509
    %v1511 = vrot.slane %v1498, %v1510
    %v1512 = vlaneseq
    %v1513 = vshrl.u32 %v1512, 7
    %v1514 = vsub.s32 3, %v1513
    %v1515 = vrot.slane %v1498, %v1514
    %1520 = vmatprep.subr.mxu0 %v1449
    %1521 = vmatpush1.msra.mxu0 %v1447
    %1522 = vmatprep.subr.mxu0 %v1453
    %1523 = vmatpush1.msra.mxu0 %v1451
    %1524 = vmatprep.subr.mxu0 0.0
    %1525 = vmatpush1.msra.mxu0 0.0
    %1526 = vmatprep.subr.mxu0 0.0
    %1527 = vmatpush1.msra.mxu0 0.0
    %1528 = vmatprep.subr.mxu0 0.0
    %1529 = vmatpush1.msra.mxu0 0.0
    %1530 = vmatprep.subr.mxu0 0.0
    %1531 = vmatpush1.msra.mxu0 0.0
    %1532 = vmatprep.subr.mxu0 0.0
    %1533 = vmatpush1.msra.mxu0 0.0
    %1534 = vmatprep.subr.mxu0 0.0
    %1535 = vmatpush1.msra.mxu0 0.0
    %1536 = vmatprep.subr.mxu0 0.0
    %1537 = vmatpush1.msra.mxu0 0.0
    %1538 = vmatprep.subr.mxu0 0.0
    %1539 = vmatpush1.msra.mxu0 0.0
    %1540 = vmatprep.subr.mxu0 0.0
    %1541 = vmatpush1.msra.mxu0 0.0
    %1542 = vmatprep.subr.mxu0 0.0
    %1543 = vmatpush1.msra.mxu0 0.0
    %1544 = vmatprep.subr.mxu0 0.0
    %1545 = vmatpush1.msra.mxu0 0.0
    %1546 = vmatprep.subr.mxu0 0.0
    %1547 = vmatpush1.msra.mxu0 0.0
    %1548 = vmatprep.subr.mxu0 0.0
    %1549 = vmatpush1.msra.mxu0 0.0
    %1550 = vmatprep.subr.mxu0 0.0
    %1551 = vmatpush1.msra.mxu0 0.0
    %1552 = vmatprep.subr.mxu0 0.0
    %1553 = vmatpush1.msra.mxu0 0.0
    %1554 = vmatprep.subr.mxu0 0.0
    %1555 = vmatpush1.msra.mxu0 0.0
    %1556 = vmatprep.subr.mxu0 0.0
    %1557 = vmatpush1.msra.mxu0 0.0
    %1558 = vmatprep.subr.mxu0 0.0
    %1559 = vmatpush1.msra.mxu0 0.0
    %1560 = vmatprep.subr.mxu0 0.0
    %1561 = vmatpush1.msra.mxu0 0.0
    %1562 = vmatprep.subr.mxu0 0.0
    %1563 = vmatpush1.msra.mxu0 0.0
    %1564 = vmatprep.subr.mxu0 0.0
    %1565 = vmatpush1.msra.mxu0 0.0
    %1566 = vmatprep.subr.mxu0 0.0
    %1567 = vmatpush1.msra.mxu0 0.0
    %1568 = vmatprep.subr.mxu0 0.0
    %1569 = vmatpush1.msra.mxu0 0.0
    %1570 = vmatprep.subr.mxu0 0.0
    %1571 = vmatpush1.msra.mxu0 0.0
    %1572 = vmatprep.subr.mxu0 0.0
    %1573 = vmatpush1.msra.mxu0 0.0
    %1574 = vmatprep.subr.mxu0 0.0
    %1575 = vmatpush1.msra.mxu0 0.0
    %1576 = vmatprep.subr.mxu0 0.0
    %1577 = vmatpush1.msra.mxu0 0.0
    %1578 = vmatprep.subr.mxu0 0.0
    %1579 = vmatpush1.msra.mxu0 0.0
    %1580 = vmatprep.subr.mxu0 0.0
    %1581 = vmatpush1.msra.mxu0 0.0
    %1582 = vmatprep.subr.mxu0 0.0
    %1583 = vmatpush1.msra.mxu0 0.0
    %1584 = vmatprep.mubr.f32.mxu0 0.0
    %1585 = vmatmul.mubr.f32.gmra.mrb[0].mxu0 %v383
    %v1586 = vpop.f32.mrb[0].mxu0
    %v1587 = vadd.f32 %v1503, %v1586
    %v1588 = vpop.f32.mrb[0].mxu0
    %v1589 = vadd.f32 %v1507, %v1588
    %1590 = vmatprep.mubr.f32.mxu0 0.0
    %1591 = vmatmul.mubr.f32.gmra.mrb[0].mxu0 %v386
    %v1592 = vpop.f32.mrb[0].mxu0
    %v1593 = vadd.f32 %v1503, %v1592
    %v1594 = vpop.f32.mrb[0].mxu0
    %v1595 = vadd.f32 %v1507, %v1594
    %1596 = vdwg.mxu0
    %1597 = vmatprep.subr.mxu0 %v1492
    %1598 = vmatpush1.msra.mxu0 %v1490
    %1599 = vmatprep.subr.mxu0 %v1496
    %1600 = vmatpush1.msra.mxu0 %v1494
    %1601 = vmatprep.subr.mxu0 0.0
    %1602 = vmatpush1.msra.mxu0 0.0
    %1603 = vmatprep.subr.mxu0 0.0
    %1604 = vmatpush1.msra.mxu0 0.0
    %1605 = vmatprep.subr.mxu0 0.0
    %1606 = vmatpush1.msra.mxu0 0.0
    %1607 = vmatprep.subr.mxu0 0.0
    %1608 = vmatpush1.msra.mxu0 0.0
    %1609 = vmatprep.subr.mxu0 0.0
    %1610 = vmatpush1.msra.mxu0 0.0
    %1611 = vmatprep.subr.mxu0 0.0
    %1612 = vmatpush1.msra.mxu0 0.0
    %1613 = vmatprep.subr.mxu0 0.0
    %1614 = vmatpush1.msra.mxu0 0.0
    %1615 = vmatprep.subr.mxu0 0.0
    %1616 = vmatpush1.msra.mxu0 0.0
    %1617 = vmatprep.subr.mxu0 0.0
    %1618 = vmatpush1.msra.mxu0 0.0
    %1619 = vmatprep.subr.mxu0 0.0
    %1620 = vmatpush1.msra.mxu0 0.0
    %1621 = vmatprep.subr.mxu0 0.0
    %1622 = vmatpush1.msra.mxu0 0.0
    %1623 = vmatprep.subr.mxu0 0.0
    %1624 = vmatpush1.msra.mxu0 0.0
    %1625 = vmatprep.subr.mxu0 0.0
    %1626 = vmatpush1.msra.mxu0 0.0
    %1627 = vmatprep.subr.mxu0 0.0
    %1628 = vmatpush1.msra.mxu0 0.0
    %1629 = vmatprep.subr.mxu0 0.0
    %1630 = vmatpush1.msra.mxu0 0.0
    %1631 = vmatprep.subr.mxu0 0.0
    %1632 = vmatpush1.msra.mxu0 0.0
    %1633 = vmatprep.subr.mxu0 0.0
    %1634 = vmatpush1.msra.mxu0 0.0
    %1635 = vmatprep.subr.mxu0 0.0
    %1636 = vmatpush1.msra.mxu0 0.0
    %1637 = vmatprep.subr.mxu0 0.0
    %1638 = vmatpush1.msra.mxu0 0.0
    %1639 = vmatprep.subr.mxu0 0.0
    %1640 = vmatpush1.msra.mxu0 0.0
    %1641 = vmatprep.subr.mxu0 0.0
    %1642 = vmatpush1.msra.mxu0 0.0
    %1643 = vmatprep.subr.mxu0 0.0
    %1644 = vmatpush1.msra.mxu0 0.0
    %1645 = vmatprep.subr.mxu0 0.0
    %1646 = vmatpush1.msra.mxu0 0.0
    %1647 = vmatprep.subr.mxu0 0.0
    %1648 = vmatpush1.msra.mxu0 0.0
    %1649 = vmatprep.subr.mxu0 0.0
    %1650 = vmatpush1.msra.mxu0 0.0
    %1651 = vmatprep.subr.mxu0 0.0
    %1652 = vmatpush1.msra.mxu0 0.0
    %1653 = vmatprep.subr.mxu0 0.0
    %1654 = vmatpush1.msra.mxu0 0.0
    %1655 = vmatprep.subr.mxu0 0.0
    %1656 = vmatpush1.msra.mxu0 0.0
    %1657 = vmatprep.subr.mxu0 0.0
    %1658 = vmatpush1.msra.mxu0 0.0
    %1659 = vmatprep.subr.mxu0 0.0
    %1660 = vmatpush1.msra.mxu0 0.0
    %1661 = vmatprep.mubr.f32.mxu0 0.0
    %1662 = vmatmul.mubr.f32.gmra.mrb[0].mxu0 %v383
    %v1663 = vpop.f32.mrb[0].mxu0
    %v1664 = vadd.f32 %v1511, %v1663
    %v1665 = vpop.f32.mrb[0].mxu0
    %v1666 = vadd.f32 %v1515, %v1665
    %1667 = vmatprep.mubr.f32.mxu0 0.0
    %1668 = vmatmul.mubr.f32.gmra.mrb[0].mxu0 %v386
    %v1669 = vpop.f32.mrb[0].mxu0
    %v1670 = vadd.f32 %v1511, %v1669
    %v1671 = vpop.f32.mrb[0].mxu0
    %v1672 = vadd.f32 %v1515, %v1671
    %1673 = vdwg.mxu0
    %vm1674 = vcmp.gt.f32.partialorder %v1587, 0.0
    %vm1675 = vcmp.gt.f32.partialorder %v1589, 0.0
    %vm1676 = vcmp.gt.f32.partialorder %v1664, 0.0
    %vm1677 = vcmp.gt.f32.partialorder %v1666, 0.0
    %vm1678 = vcmp.gt.f32.partialorder %v1593, 0.0
    %vm1679 = vcmp.gt.f32.partialorder %v1595, 0.0
    %vm1680 = vcmp.gt.f32.partialorder %v1670, 0.0
    %vm1681 = vcmp.gt.f32.partialorder %v1672, 0.0
    %v1682 = vmul.f32 %v1587, 0.01
    %v1683 = vmul.f32 %v1589, 0.01
    %v1684 = vmul.f32 %v1664, 0.01
    %v1685 = vmul.f32 %v1666, 0.01
    %v1686 = vmul.f32 %v1593, 0.01
    %v1687 = vmul.f32 %v1595, 0.01
    %v1688 = vmul.f32 %v1670, 0.01
    %v1689 = vmul.f32 %v1672, 0.01
    %v1690 = vsel %vm1674, %v1587, %v1682
    %v1691 = vsel %vm1675, %v1589, %v1683
    %v1692 = vsel %vm1676, %v1664, %v1684
    %v1693 = vsel %vm1677, %v1666, %v1685
    %v1694 = vsel %vm1678, %v1593, %v1686
    %v1695 = vsel %vm1679, %v1595, %v1687
    %v1696 = vsel %vm1680, %v1670, %v1688
    %v1697 = vsel %vm1681, %v1672, %v1689
    %v1698 = vpack.c.bf16 %v1694, %v1690
    %v1699 = vpack.c.bf16 %v1695, %v1691
    %v1700 = vpack.c.bf16 %v1696, %v1692
    %v1701 = vpack.c.bf16 %v1697, %v1693
    %v1702 = vld [vmem:[#allocation20] sm:$0xff]
    %v1703 = vld [vmem:[#allocation20 + $0x8] sm:$0xff]
    %v1704 = vld [vmem:[#allocation20 + $0x10] sm:$0xf]
    %v1705 = vld [vmem:[#allocation20 + $0x14] sm:$0xff]
    %v1706 = vld [vmem:[#allocation20 + $0x1c] sm:$0xff]
    %v1707 = vld [vmem:[#allocation20 + $0x24] sm:$0xf]
    %v1708 = vld [vmem:[#allocation20 + $0x28] sm:$0xff]
    %v1709 = vld [vmem:[#allocation20 + $0x30] sm:$0xff]
    %v1710 = vld [vmem:[#allocation20 + $0x38] sm:$0xf]
    %v1711 = vld [vmem:[#allocation20 + $0x3c] sm:$0xff]
    %v1712 = vld [vmem:[#allocation20 + $0x44] sm:$0xff]
    %v1713 = vld [vmem:[#allocation20 + $0x4c] sm:$0xf]
    %v1714 = vld [vmem:[#allocation20 + $0x50] sm:$0xff]
    %v1715 = vld [vmem:[#allocation20 + $0x58] sm:$0xff]
    %v1716 = vld [vmem:[#allocation20 + $0x60] sm:$0xf]
    %v1717 = vld [vmem:[#allocation20 + $0x64] sm:$0xff]
    %v1718 = vld [vmem:[#allocation20 + $0x6c] sm:$0xff]
    %v1719 = vld [vmem:[#allocation20 + $0x74] sm:$0xf]
    %v1720 = vld [vmem:[#allocation20 + $0x78] sm:$0xff]
    %v1721 = vld [vmem:[#allocation20 + $0x80] sm:$0xff]
    %v1722 = vld [vmem:[#allocation20 + $0x88] sm:$0xf]
    %v1723 = vld [vmem:[#allocation20 + $0x8c] sm:$0xff]
    %v1724 = vld [vmem:[#allocation20 + $0x94] sm:$0xff]
    %v1725 = vld [vmem:[#allocation20 + $0x9c] sm:$0xf]
    %v1726 = vld [vmem:[#allocation20 + $0xa0] sm:$0xff]
    %v1727 = vld [vmem:[#allocation20 + $0xa8] sm:$0xff]
    %v1728 = vld [vmem:[#allocation20 + $0xb0] sm:$0xf]
    %v1729 = vld [vmem:[#allocation20 + $0xb4] sm:$0xff]
    %v1730 = vld [vmem:[#allocation20 + $0xbc] sm:$0xff]
    %v1731 = vld [vmem:[#allocation20 + $0xc4] sm:$0xf]
    %v1732 = vld [vmem:[#allocation20 + $0xc8] sm:$0xff]
    %v1733 = vld [vmem:[#allocation20 + $0xd0] sm:$0xff]
    %v1734 = vld [vmem:[#allocation20 + $0xd8] sm:$0xf]
    %v1735 = vld [vmem:[#allocation20 + $0xdc] sm:$0xff]
    %v1736 = vld [vmem:[#allocation20 + $0xe4] sm:$0xff]
    %v1737 = vld [vmem:[#allocation20 + $0xec] sm:$0xf]
    %v1738 = vld [vmem:[#allocation20 + $0xf0] sm:$0xff]
    %v1739 = vld [vmem:[#allocation20 + $0xf8] sm:$0xff]
    %v1740 = vld [vmem:[#allocation20 + $0x100] sm:$0xf]
    %v1741 = vld [vmem:[#allocation20 + $0x104] sm:$0xff]
    %v1742 = vld [vmem:[#allocation20 + $0x10c] sm:$0xff]
    %v1743 = vld [vmem:[#allocation20 + $0x114] sm:$0xf]
    %v1744 = vld [vmem:[#allocation20 + $0x118] sm:$0xff]
    %v1745 = vld [vmem:[#allocation20 + $0x120] sm:$0xff]
    %v1746 = vld [vmem:[#allocation20 + $0x128] sm:$0xf]
    %v1747 = vld [vmem:[#allocation20 + $0x12c] sm:$0xff]
    %v1748 = vld [vmem:[#allocation20 + $0x134] sm:$0xff]
    %v1749 = vld [vmem:[#allocation20 + $0x13c] sm:$0xf]
    %v1750 = vld [vmem:[#allocation20 + $0x140] sm:$0xff]
    %v1751 = vld [vmem:[#allocation20 + $0x148] sm:$0xff]
    %v1752 = vld [vmem:[#allocation20 + $0x150] sm:$0xf]
    %v1753 = vld [vmem:[#allocation20 + $0x154] sm:$0xff]
    %v1754 = vld [vmem:[#allocation20 + $0x15c] sm:$0xff]
    %v1755 = vld [vmem:[#allocation20 + $0x164] sm:$0xf]
    %v1756 = vld [vmem:[#allocation20 + $0x168] sm:$0xff]
    %v1757 = vld [vmem:[#allocation20 + $0x170] sm:$0xff]
    %v1758 = vld [vmem:[#allocation20 + $0x178] sm:$0xf]
    %v1759 = vld [vmem:[#allocation20 + $0x17c] sm:$0xff]
    %v1760 = vld [vmem:[#allocation20 + $0x184] sm:$0xff]
    %v1761 = vld [vmem:[#allocation20 + $0x18c] sm:$0xf]
    %v1762 = vld [vmem:[#allocation20 + $0x190] sm:$0xff]
    %v1763 = vld [vmem:[#allocation20 + $0x198] sm:$0xff]
    %v1764 = vld [vmem:[#allocation20 + $0x1a0] sm:$0xf]
    %v1765 = vld [vmem:[#allocation20 + $0x1a4] sm:$0xff]
    %v1766 = vld [vmem:[#allocation20 + $0x1ac] sm:$0xff]
    %v1767 = vld [vmem:[#allocation20 + $0x1b4] sm:$0xf]
    %v1768 = vld [vmem:[#allocation20 + $0x1b8] sm:$0xff]
    %v1769 = vld [vmem:[#allocation20 + $0x1c0] sm:$0xff]
    %v1770 = vld [vmem:[#allocation20 + $0x1c8] sm:$0xf]
    %v1771 = vld [vmem:[#allocation20 + $0x1cc] sm:$0xff]
    %v1772 = vld [vmem:[#allocation20 + $0x1d4] sm:$0xff]
    %v1773 = vld [vmem:[#allocation20 + $0x1dc] sm:$0xf]
    %v1774 = vld [vmem:[#allocation20 + $0x1e0] sm:$0xff]
    %v1775 = vld [vmem:[#allocation20 + $0x1e8] sm:$0xff]
    %v1776 = vld [vmem:[#allocation20 + $0x1f0] sm:$0xf]
    %v1777 = vld [vmem:[#allocation20 + $0x1f4] sm:$0xff]
    %v1778 = vld [vmem:[#allocation20 + $0x1fc] sm:$0xff]
    %v1779 = vld [vmem:[#allocation20 + $0x204] sm:$0xf]
    %v1780 = vld [vmem:[#allocation20 + $0x208] sm:$0xff]
    %v1781 = vld [vmem:[#allocation20 + $0x210] sm:$0xff]
    %v1782 = vld [vmem:[#allocation20 + $0x218] sm:$0xf]
    %v1783 = vld [vmem:[#allocation20 + $0x21c] sm:$0xff]
    %v1784 = vld [vmem:[#allocation20 + $0x224] sm:$0xff]
    %v1785 = vld [vmem:[#allocation20 + $0x22c] sm:$0xf]
    %v1786 = vld [vmem:[#allocation20 + $0x230] sm:$0xff]
    %v1787 = vld [vmem:[#allocation20 + $0x238] sm:$0xff]
    %v1788 = vld [vmem:[#allocation20 + $0x240] sm:$0xf]
    %v1789 = vld [vmem:[#allocation20 + $0x244] sm:$0xff]
    %v1790 = vld [vmem:[#allocation20 + $0x24c] sm:$0xff]
    %v1791 = vld [vmem:[#allocation20 + $0x254] sm:$0xf]
    %v1792 = vld [vmem:[#allocation20 + $0x258] sm:$0xff]
    %v1793 = vld [vmem:[#allocation20 + $0x260] sm:$0xff]
    %v1794 = vld [vmem:[#allocation20 + $0x268] sm:$0xf]
    %v1795 = vld [vmem:[#allocation20 + $0x26c] sm:$0xff]
    %v1796 = vld [vmem:[#allocation20 + $0x274] sm:$0xff]
    %v1797 = vld [vmem:[#allocation20 + $0x27c] sm:$0xf]
    %v1798 = vld [vmem:[#allocation20 + $0x280] sm:$0xff]
    %v1799 = vld [vmem:[#allocation20 + $0x288] sm:$0xff]
    %v1800 = vld [vmem:[#allocation20 + $0x290] sm:$0xf]
    %v1801 = vld [vmem:[#allocation20 + $0x294] sm:$0xff]
    %v1802 = vld [vmem:[#allocation20 + $0x29c] sm:$0xff]
    %v1803 = vld [vmem:[#allocation20 + $0x2a4] sm:$0xf]
    %v1804 = vld [vmem:[#allocation20 + $0x2a8] sm:$0xff]
    %v1805 = vld [vmem:[#allocation20 + $0x2b0] sm:$0xff]
    %v1806 = vld [vmem:[#allocation20 + $0x2b8] sm:$0xf]
    %v1807 = vld [vmem:[#allocation20 + $0x2bc] sm:$0xff]
    %v1808 = vld [vmem:[#allocation20 + $0x2c4] sm:$0xff]
    %v1809 = vld [vmem:[#allocation20 + $0x2cc] sm:$0xf]
    %v1810 = vld [vmem:[#allocation20 + $0x2d0] sm:$0xff]
    %v1811 = vld [vmem:[#allocation20 + $0x2d8] sm:$0xff]
    %v1812 = vld [vmem:[#allocation20 + $0x2e0] sm:$0xf]
    %v1813 = vld [vmem:[#allocation20 + $0x2e4] sm:$0xff]
    %v1814 = vld [vmem:[#allocation20 + $0x2ec] sm:$0xff]
    %v1815 = vld [vmem:[#allocation20 + $0x2f4] sm:$0xf]
    %v1816 = vld [vmem:[#allocation20 + $0x2f8] sm:$0xff]
    %v1817 = vld [vmem:[#allocation20 + $0x300] sm:$0xff]
    %v1818 = vld [vmem:[#allocation20 + $0x308] sm:$0xf]
    %v1819 = vld [vmem:[#allocation20 + $0x30c] sm:$0xff]
    %v1820 = vld [vmem:[#allocation20 + $0x314] sm:$0xff]
    %v1821 = vld [vmem:[#allocation20 + $0x31c] sm:$0xf]
    %v1822 = vld [vmem:[#allocation20 + $0x320] sm:$0xff]
    %v1823 = vld [vmem:[#allocation20 + $0x328] sm:$0xff]
    %v1824 = vld [vmem:[#allocation20 + $0x330] sm:$0xf]
    %v1825 = vld [vmem:[#allocation20 + $0x334] sm:$0xff]
    %v1826 = vld [vmem:[#allocation20 + $0x33c] sm:$0xff]
    %v1827 = vld [vmem:[#allocation20 + $0x344] sm:$0xf]
    %v1828 = vld [vmem:[#allocation20 + $0x348] sm:$0xff]
    %v1829 = vld [vmem:[#allocation20 + $0x350] sm:$0xff]
    %v1830 = vld [vmem:[#allocation20 + $0x358] sm:$0xf]
    %v1831 = vld [vmem:[#allocation20 + $0x35c] sm:$0xff]
    %v1832 = vld [vmem:[#allocation20 + $0x364] sm:$0xff]
    %v1833 = vld [vmem:[#allocation20 + $0x36c] sm:$0xf]
    %v1834 = vld [vmem:[#allocation20 + $0x370] sm:$0xff]
    %v1835 = vld [vmem:[#allocation20 + $0x378] sm:$0xff]
    %v1836 = vld [vmem:[#allocation20 + $0x380] sm:$0xf]
    %v1837 = vld [vmem:[#allocation20 + $0x384] sm:$0xff]
    %v1838 = vld [vmem:[#allocation20 + $0x38c] sm:$0xff]
    %v1839 = vld [vmem:[#allocation20 + $0x394] sm:$0xf]
    %v1840 = vld [vmem:[#allocation20 + $0x398] sm:$0xff]
    %v1841 = vld [vmem:[#allocation20 + $0x3a0] sm:$0xff]
    %v1842 = vld [vmem:[#allocation20 + $0x3a8] sm:$0xf]
    %v1843 = vld [vmem:[#allocation20 + $0x3ac] sm:$0xff]
    %v1844 = vld [vmem:[#allocation20 + $0x3b4] sm:$0xff]
    %v1845 = vld [vmem:[#allocation20 + $0x3bc] sm:$0xf]
    %v1846 = vld [vmem:[#allocation20 + $0x3c0] sm:$0xff]
    %v1847 = vld [vmem:[#allocation20 + $0x3c8] sm:$0xff]
    %v1848 = vld [vmem:[#allocation20 + $0x3d0] sm:$0xf]
    %v1849 = vld [vmem:[#allocation20 + $0x3d4] sm:$0xff]
    %v1850 = vld [vmem:[#allocation20 + $0x3dc] sm:$0xff]
    %v1851 = vld [vmem:[#allocation20 + $0x3e4] sm:$0xf]
    %v1852 = vld [vmem:[#allocation20 + $0x3e8] sm:$0xff]
    %v1853 = vld [vmem:[#allocation20 + $0x3f0] sm:$0xff]
    %v1854 = vld [vmem:[#allocation20 + $0x3f8] sm:$0xf]
    %v1855 = vld [vmem:[#allocation20 + $0x3fc] sm:$0xff]
    %v1856 = vld [vmem:[#allocation20 + $0x404] sm:$0xff]
    %v1857 = vld [vmem:[#allocation20 + $0x40c] sm:$0xf]
    %v1858 = vld [vmem:[#allocation20 + $0x410] sm:$0xff]
    %v1859 = vld [vmem:[#allocation20 + $0x418] sm:$0xff]
    %v1860 = vld [vmem:[#allocation20 + $0x420] sm:$0xf]
    %v1861 = vld [vmem:[#allocation20 + $0x424] sm:$0xff]
    %v1862 = vld [vmem:[#allocation20 + $0x42c] sm:$0xff]
    %v1863 = vld [vmem:[#allocation20 + $0x434] sm:$0xf]
    %v1864 = vld [vmem:[#allocation20 + $0x438] sm:$0xff]
    %v1865 = vld [vmem:[#allocation20 + $0x440] sm:$0xff]
    %v1866 = vld [vmem:[#allocation20 + $0x448] sm:$0xf]
    %v1867 = vld [vmem:[#allocation20 + $0x44c] sm:$0xff]
    %v1868 = vld [vmem:[#allocation20 + $0x454] sm:$0xff]
    %v1869 = vld [vmem:[#allocation20 + $0x45c] sm:$0xf]
    %v1870 = vld [vmem:[#allocation20 + $0x460] sm:$0xff]
    %v1871 = vld [vmem:[#allocation20 + $0x468] sm:$0xff]
    %v1872 = vld [vmem:[#allocation20 + $0x470] sm:$0xf]
    %v1873 = vld [vmem:[#allocation20 + $0x474] sm:$0xff]
    %v1874 = vld [vmem:[#allocation20 + $0x47c] sm:$0xff]
    %v1875 = vld [vmem:[#allocation20 + $0x484] sm:$0xf]
    %v1876 = vld [vmem:[#allocation20 + $0x488] sm:$0xff]
    %v1877 = vld [vmem:[#allocation20 + $0x490] sm:$0xff]
    %v1878 = vld [vmem:[#allocation20 + $0x498] sm:$0xf]
    %v1879 = vld [vmem:[#allocation20 + $0x49c] sm:$0xff]
    %v1880 = vld [vmem:[#allocation20 + $0x4a4] sm:$0xff]
    %v1881 = vld [vmem:[#allocation20 + $0x4ac] sm:$0xf]
    %v1882 = vld [vmem:[#allocation20 + $0x4b0] sm:$0xff]
    %v1883 = vld [vmem:[#allocation20 + $0x4b8] sm:$0xff]
    %v1884 = vld [vmem:[#allocation20 + $0x4c0] sm:$0xf]
    %v1885 = vld [vmem:[#allocation20 + $0x4c4] sm:$0xff]
    %v1886 = vld [vmem:[#allocation20 + $0x4cc] sm:$0xff]
    %v1887 = vld [vmem:[#allocation20 + $0x4d4] sm:$0xf]
    %v1888 = vld [vmem:[#allocation20 + $0x4d8] sm:$0xff]
    %v1889 = vld [vmem:[#allocation20 + $0x4e0] sm:$0xff]
    %v1890 = vld [vmem:[#allocation20 + $0x4e8] sm:$0xf]
    %v1891 = vld [vmem:[#allocation20 + $0x4ec] sm:$0xff]
    %v1892 = vld [vmem:[#allocation20 + $0x4f4] sm:$0xff]
    %v1893 = vld [vmem:[#allocation20 + $0x4fc] sm:$0xf]
    %v2086 = vunpack.c.l.b16 %v1702
    %v2087 = vunpack.c.h.b16 %v1702
    %v2088 = vunpack.c.l.b16 %v1703
    %v2089 = vunpack.c.h.b16 %v1703
    %v2090 = vunpack.c.l.b16 %v1704
    %v2091 = vunpack.c.l.b16 %v1705
    %v2092 = vunpack.c.h.b16 %v1705
    %v2093 = vunpack.c.l.b16 %v1706
    %v2094 = vunpack.c.h.b16 %v1706
    %v2095 = vunpack.c.l.b16 %v1707
    %v2096 = vunpack.c.l.b16 %v1708
    %v2097 = vunpack.c.h.b16 %v1708
    %v2098 = vunpack.c.l.b16 %v1709
    %v2099 = vunpack.c.h.b16 %v1709
    %v2100 = vunpack.c.l.b16 %v1710
    %v2101 = vunpack.c.l.b16 %v1711
    %v2102 = vunpack.c.h.b16 %v1711
    %v2103 = vunpack.c.l.b16 %v1712
    %v2104 = vunpack.c.h.b16 %v1712
    %v2105 = vunpack.c.l.b16 %v1713
    %v2106 = vunpack.c.l.b16 %v1714
    %v2107 = vunpack.c.h.b16 %v1714
    %v2108 = vunpack.c.l.b16 %v1715
    %v2109 = vunpack.c.h.b16 %v1715
    %v2110 = vunpack.c.l.b16 %v1716
    %v2111 = vunpack.c.l.b16 %v1717
    %v2112 = vunpack.c.h.b16 %v1717
    %v2113 = vunpack.c.l.b16 %v1718
    %v2114 = vunpack.c.h.b16 %v1718
    %v2115 = vunpack.c.l.b16 %v1719
    %v2116 = vunpack.c.l.b16 %v1720
    %v2117 = vunpack.c.h.b16 %v1720
    %v2118 = vunpack.c.l.b16 %v1721
    %v2119 = vunpack.c.h.b16 %v1721
    %v2120 = vunpack.c.l.b16 %v1722
    %v2121 = vunpack.c.l.b16 %v1723
    %v2122 = vunpack.c.h.b16 %v1723
    %v2123 = vunpack.c.l.b16 %v1724
    %v2124 = vunpack.c.h.b16 %v1724
    %v2125 = vunpack.c.l.b16 %v1725
    %v2126 = vunpack.c.l.b16 %v1726
    %v2127 = vunpack.c.h.b16 %v1726
    %v2128 = vunpack.c.l.b16 %v1727
    %v2129 = vunpack.c.h.b16 %v1727
    %v2130 = vunpack.c.l.b16 %v1728
    %v2131 = vunpack.c.l.b16 %v1729
    %v2132 = vunpack.c.h.b16 %v1729
    %v2133 = vunpack.c.l.b16 %v1730
    %v2134 = vunpack.c.h.b16 %v1730
    %v2135 = vunpack.c.l.b16 %v1731
    %v2136 = vunpack.c.l.b16 %v1732
    %v2137 = vunpack.c.h.b16 %v1732
    %v2138 = vunpack.c.l.b16 %v1733
    %v2139 = vunpack.c.h.b16 %v1733
    %v2140 = vunpack.c.l.b16 %v1734
    %v2141 = vunpack.c.l.b16 %v1735
    %v2142 = vunpack.c.h.b16 %v1735
    %v2143 = vunpack.c.l.b16 %v1736
    %v2144 = vunpack.c.h.b16 %v1736
    %v2145 = vunpack.c.l.b16 %v1737
    %v2146 = vunpack.c.l.b16 %v1738
    %v2147 = vunpack.c.h.b16 %v1738
    %v2148 = vunpack.c.l.b16 %v1739
    %v2149 = vunpack.c.h.b16 %v1739
    %v2150 = vunpack.c.l.b16 %v1740
    %v2151 = vunpack.c.l.b16 %v1741
    %v2152 = vunpack.c.h.b16 %v1741
    %v2153 = vunpack.c.l.b16 %v1742
    %v2154 = vunpack.c.h.b16 %v1742
    %v2155 = vunpack.c.l.b16 %v1743
    %v2156 = vunpack.c.l.b16 %v1744
    %v2157 = vunpack.c.h.b16 %v1744
    %v2158 = vunpack.c.l.b16 %v1745
    %v2159 = vunpack.c.h.b16 %v1745
    %v2160 = vunpack.c.l.b16 %v1746
    %v2161 = vunpack.c.l.b16 %v1747
    %v2162 = vunpack.c.h.b16 %v1747
    %v2163 = vunpack.c.l.b16 %v1748
    %v2164 = vunpack.c.h.b16 %v1748
    %v2165 = vunpack.c.l.b16 %v1749
    %v2166 = vunpack.c.l.b16 %v1750
    %v2167 = vunpack.c.h.b16 %v1750
    %v2168 = vunpack.c.l.b16 %v1751
    %v2169 = vunpack.c.h.b16 %v1751
    %v2170 = vunpack.c.l.b16 %v1752
    %v2171 = vunpack.c.l.b16 %v1753
    %v2172 = vunpack.c.h.b16 %v1753
    %v2173 = vunpack.c.l.b16 %v1754
    %v2174 = vunpack.c.h.b16 %v1754
    %v2175 = vunpack.c.l.b16 %v1755
    %v2176 = vunpack.c.l.b16 %v1756
    %v2177 = vunpack.c.h.b16 %v1756
    %v2178 = vunpack.c.l.b16 %v1757
    %v2179 = vunpack.c.h.b16 %v1757
    %v2180 = vunpack.c.l.b16 %v1758
    %v2181 = vunpack.c.l.b16 %v1759
    %v2182 = vunpack.c.h.b16 %v1759
    %v2183 = vunpack.c.l.b16 %v1760
    %v2184 = vunpack.c.h.b16 %v1760
    %v2185 = vunpack.c.l.b16 %v1761
    %v2186 = vunpack.c.l.b16 %v1762
    %v2187 = vunpack.c.h.b16 %v1762
    %v2188 = vunpack.c.l.b16 %v1763
    %v2189 = vunpack.c.h.b16 %v1763
    %v2190 = vunpack.c.l.b16 %v1764
    %v2191 = vunpack.c.l.b16 %v1765
    %v2192 = vunpack.c.h.b16 %v1765
    %v2193 = vunpack.c.l.b16 %v1766
    %v2194 = vunpack.c.h.b16 %v1766
    %v2195 = vunpack.c.l.b16 %v1767
    %v2196 = vunpack.c.l.b16 %v1768
    %v2197 = vunpack.c.h.b16 %v1768
    %v2198 = vunpack.c.l.b16 %v1769
    %v2199 = vunpack.c.h.b16 %v1769
    %v2200 = vunpack.c.l.b16 %v1770
    %v2201 = vunpack.c.l.b16 %v1771
    %v2202 = vunpack.c.h.b16 %v1771
    %v2203 = vunpack.c.l.b16 %v1772
    %v2204 = vunpack.c.h.b16 %v1772
    %v2205 = vunpack.c.l.b16 %v1773
    %v2206 = vunpack.c.l.b16 %v1774
    %v2207 = vunpack.c.h.b16 %v1774
    %v2208 = vunpack.c.l.b16 %v1775
    %v2209 = vunpack.c.h.b16 %v1775
    %v2210 = vunpack.c.l.b16 %v1776
    %v2211 = vunpack.c.l.b16 %v1777
    %v2212 = vunpack.c.h.b16 %v1777
    %v2213 = vunpack.c.l.b16 %v1778
    %v2214 = vunpack.c.h.b16 %v1778
    %v2215 = vunpack.c.l.b16 %v1779
    %v2216 = vunpack.c.l.b16 %v1780
    %v2217 = vunpack.c.h.b16 %v1780
    %v2218 = vunpack.c.l.b16 %v1781
    %v2219 = vunpack.c.h.b16 %v1781
    %v2220 = vunpack.c.l.b16 %v1782
    %v2221 = vunpack.c.l.b16 %v1783
    %v2222 = vunpack.c.h.b16 %v1783
    %v2223 = vunpack.c.l.b16 %v1784
    %v2224 = vunpack.c.h.b16 %v1784
    %v2225 = vunpack.c.l.b16 %v1785
    %v2226 = vunpack.c.l.b16 %v1786
    %v2227 = vunpack.c.h.b16 %v1786
    %v2228 = vunpack.c.l.b16 %v1787
    %v2229 = vunpack.c.h.b16 %v1787
    %v2230 = vunpack.c.l.b16 %v1788
    %v2231 = vunpack.c.l.b16 %v1789
    %v2232 = vunpack.c.h.b16 %v1789
    %v2233 = vunpack.c.l.b16 %v1790
    %v2234 = vunpack.c.h.b16 %v1790
    %v2235 = vunpack.c.l.b16 %v1791
    %v2236 = vunpack.c.l.b16 %v1792
    %v2237 = vunpack.c.h.b16 %v1792
    %v2238 = vunpack.c.l.b16 %v1793
    %v2239 = vunpack.c.h.b16 %v1793
    %v2240 = vunpack.c.l.b16 %v1794
    %v2241 = vunpack.c.l.b16 %v1795
    %v2242 = vunpack.c.h.b16 %v1795
    %v2243 = vunpack.c.l.b16 %v1796
    %v2244 = vunpack.c.h.b16 %v1796
    %v2245 = vunpack.c.l.b16 %v1797
    %v2246 = vunpack.c.l.b16 %v1798
    %v2247 = vunpack.c.h.b16 %v1798
    %v2248 = vunpack.c.l.b16 %v1799
    %v2249 = vunpack.c.h.b16 %v1799
    %v2250 = vunpack.c.l.b16 %v1800
    %v2251 = vunpack.c.l.b16 %v1801
    %v2252 = vunpack.c.h.b16 %v1801
    %v2253 = vunpack.c.l.b16 %v1802
    %v2254 = vunpack.c.h.b16 %v1802
    %v2255 = vunpack.c.l.b16 %v1803
    %v2256 = vunpack.c.l.b16 %v1804
    %v2257 = vunpack.c.h.b16 %v1804
    %v2258 = vunpack.c.l.b16 %v1805
    %v2259 = vunpack.c.h.b16 %v1805
    %v2260 = vunpack.c.l.b16 %v1806
    %v2261 = vunpack.c.l.b16 %v1807
    %v2262 = vunpack.c.h.b16 %v1807
    %v2263 = vunpack.c.l.b16 %v1808
    %v2264 = vunpack.c.h.b16 %v1808
    %v2265 = vunpack.c.l.b16 %v1809
    %v2266 = vunpack.c.l.b16 %v1810
    %v2267 = vunpack.c.h.b16 %v1810
    %v2268 = vunpack.c.l.b16 %v1811
    %v2269 = vunpack.c.h.b16 %v1811
    %v2270 = vunpack.c.l.b16 %v1812
    %v2271 = vunpack.c.l.b16 %v1813
    %v2272 = vunpack.c.h.b16 %v1813
    %v2273 = vunpack.c.l.b16 %v1814
    %v2274 = vunpack.c.h.b16 %v1814
    %v2275 = vunpack.c.l.b16 %v1815
    %v2276 = vunpack.c.l.b16 %v1816
    %v2277 = vunpack.c.h.b16 %v1816
    %v2278 = vunpack.c.l.b16 %v1817
    %v2279 = vunpack.c.h.b16 %v1817
    %v2280 = vunpack.c.l.b16 %v1818
    %v2281 = vunpack.c.l.b16 %v1819
    %v2282 = vunpack.c.h.b16 %v1819
    %v2283 = vunpack.c.l.b16 %v1820
    %v2284 = vunpack.c.h.b16 %v1820
    %v2285 = vunpack.c.l.b16 %v1821
    %v2286 = vunpack.c.l.b16 %v1822
    %v2287 = vunpack.c.h.b16 %v1822
    %v2288 = vunpack.c.l.b16 %v1823
    %v2289 = vunpack.c.h.b16 %v1823
    %v2290 = vunpack.c.l.b16 %v1824
    %v2291 = vunpack.c.l.b16 %v1825
    %v2292 = vunpack.c.h.b16 %v1825
    %v2293 = vunpack.c.l.b16 %v1826
    %v2294 = vunpack.c.h.b16 %v1826
    %v2295 = vunpack.c.l.b16 %v1827
    %v2296 = vunpack.c.l.b16 %v1828
    %v2297 = vunpack.c.h.b16 %v1828
    %v2298 = vunpack.c.l.b16 %v1829
    %v2299 = vunpack.c.h.b16 %v1829
    %v2300 = vunpack.c.l.b16 %v1830
    %v2301 = vunpack.c.l.b16 %v1831
    %v2302 = vunpack.c.h.b16 %v1831
    %v2303 = vunpack.c.l.b16 %v1832
    %v2304 = vunpack.c.h.b16 %v1832
    %v2305 = vunpack.c.l.b16 %v1833
    %v2306 = vunpack.c.l.b16 %v1834
    %v2307 = vunpack.c.h.b16 %v1834
    %v2308 = vunpack.c.l.b16 %v1835
    %v2309 = vunpack.c.h.b16 %v1835
    %v2310 = vunpack.c.l.b16 %v1836
    %v2311 = vunpack.c.l.b16 %v1837
    %v2312 = vunpack.c.h.b16 %v1837
    %v2313 = vunpack.c.l.b16 %v1838
    %v2314 = vunpack.c.h.b16 %v1838
    %v2315 = vunpack.c.l.b16 %v1839
    %v2316 = vunpack.c.l.b16 %v1840
    %v2317 = vunpack.c.h.b16 %v1840
    %v2318 = vunpack.c.l.b16 %v1841
    %v2319 = vunpack.c.h.b16 %v1841
    %v2320 = vunpack.c.l.b16 %v1842
    %v2321 = vunpack.c.l.b16 %v1843
    %v2322 = vunpack.c.h.b16 %v1843
    %v2323 = vunpack.c.l.b16 %v1844
    %v2324 = vunpack.c.h.b16 %v1844
    %v2325 = vunpack.c.l.b16 %v1845
    %v2326 = vunpack.c.l.b16 %v1846
    %v2327 = vunpack.c.h.b16 %v1846
    %v2328 = vunpack.c.l.b16 %v1847
    %v2329 = vunpack.c.h.b16 %v1847
    %v2330 = vunpack.c.l.b16 %v1848
    %v2331 = vunpack.c.l.b16 %v1849
    %v2332 = vunpack.c.h.b16 %v1849
    %v2333 = vunpack.c.l.b16 %v1850
    %v2334 = vunpack.c.h.b16 %v1850
    %v2335 = vunpack.c.l.b16 %v1851
    %v2336 = vunpack.c.l.b16 %v1852
    %v2337 = vunpack.c.h.b16 %v1852
    %v2338 = vunpack.c.l.b16 %v1853
    %v2339 = vunpack.c.h.b16 %v1853
    %v2340 = vunpack.c.l.b16 %v1854
    %v2341 = vunpack.c.l.b16 %v1855
    %v2342 = vunpack.c.h.b16 %v1855
    %v2343 = vunpack.c.l.b16 %v1856
    %v2344 = vunpack.c.h.b16 %v1856
    %v2345 = vunpack.c.l.b16 %v1857
    %v2346 = vunpack.c.l.b16 %v1858
    %v2347 = vunpack.c.h.b16 %v1858
    %v2348 = vunpack.c.l.b16 %v1859
    %v2349 = vunpack.c.h.b16 %v1859
    %v2350 = vunpack.c.l.b16 %v1860
    %v2351 = vunpack.c.l.b16 %v1861
    %v2352 = vunpack.c.h.b16 %v1861
    %v2353 = vunpack.c.l.b16 %v1862
    %v2354 = vunpack.c.h.b16 %v1862
    %v2355 = vunpack.c.l.b16 %v1863
    %v2356 = vunpack.c.l.b16 %v1864
    %v2357 = vunpack.c.h.b16 %v1864
    %v2358 = vunpack.c.l.b16 %v1865
    %v2359 = vunpack.c.h.b16 %v1865
    %v2360 = vunpack.c.l.b16 %v1866
    %v2361 = vunpack.c.l.b16 %v1867
    %v2362 = vunpack.c.h.b16 %v1867
    %v2363 = vunpack.c.l.b16 %v1868
    %v2364 = vunpack.c.h.b16 %v1868
    %v2365 = vunpack.c.l.b16 %v1869
    %v2366 = vunpack.c.l.b16 %v1870
    %v2367 = vunpack.c.h.b16 %v1870
    %v2368 = vunpack.c.l.b16 %v1871
    %v2369 = vunpack.c.h.b16 %v1871
    %v2370 = vunpack.c.l.b16 %v1872
    %v2371 = vunpack.c.l.b16 %v1873
    %v2372 = vunpack.c.h.b16 %v1873
    %v2373 = vunpack.c.l.b16 %v1874
    %v2374 = vunpack.c.h.b16 %v1874
    %v2375 = vunpack.c.l.b16 %v1875
    %v2376 = vunpack.c.l.b16 %v1876
    %v2377 = vunpack.c.h.b16 %v1876
    %v2378 = vunpack.c.l.b16 %v1877
    %v2379 = vunpack.c.h.b16 %v1877
    %v2380 = vunpack.c.l.b16 %v1878
    %v2381 = vunpack.c.l.b16 %v1879
    %v2382 = vunpack.c.h.b16 %v1879
    %v2383 = vunpack.c.l.b16 %v1880
    %v2384 = vunpack.c.h.b16 %v1880
    %v2385 = vunpack.c.l.b16 %v1881
    %v2386 = vunpack.c.l.b16 %v1882
    %v2387 = vunpack.c.h.b16 %v1882
    %v2388 = vunpack.c.l.b16 %v1883
    %v2389 = vunpack.c.h.b16 %v1883
    %v2390 = vunpack.c.l.b16 %v1884
    %v2391 = vunpack.c.l.b16 %v1885
    %v2392 = vunpack.c.h.b16 %v1885
    %v2393 = vunpack.c.l.b16 %v1886
    %v2394 = vunpack.c.h.b16 %v1886
    %v2395 = vunpack.c.l.b16 %v1887
    %v2396 = vunpack.c.l.b16 %v1888
    %v2397 = vunpack.c.h.b16 %v1888
    %v2398 = vunpack.c.l.b16 %v1889
    %v2399 = vunpack.c.h.b16 %v1889
    %v2400 = vunpack.c.l.b16 %v1890
    %v2401 = vunpack.c.l.b16 %v1891
    %v2402 = vunpack.c.h.b16 %v1891
    %v2403 = vunpack.c.l.b16 %v1892
    %v2404 = vunpack.c.h.b16 %v1892
    %v2405 = vunpack.c.l.b16 %v1893
    %v2406 = vpack.c.b16 %v2091, %v2086
    %v2407 = vpack.c.b16 %v2092, %v2087
    %v2408 = vpack.c.b16 %v2093, %v2088
    %v2409 = vpack.c.b16 %v2094, %v2089
    %v2410 = vpack.c.b16 %v2095, %v2090
    %v2411 = vpack.c.b16 %v2101, %v2096
    %v2412 = vpack.c.b16 %v2102, %v2097
    %v2413 = vpack.c.b16 %v2103, %v2098
    %v2414 = vpack.c.b16 %v2104, %v2099
    %v2415 = vpack.c.b16 %v2105, %v2100
    %v2416 = vpack.c.b16 %v2111, %v2106
    %v2417 = vpack.c.b16 %v2112, %v2107
    %v2418 = vpack.c.b16 %v2113, %v2108
    %v2419 = vpack.c.b16 %v2114, %v2109
    %v2420 = vpack.c.b16 %v2115, %v2110
    %v2421 = vpack.c.b16 %v2121, %v2116
    %v2422 = vpack.c.b16 %v2122, %v2117
    %v2423 = vpack.c.b16 %v2123, %v2118
    %v2424 = vpack.c.b16 %v2124, %v2119
    %v2425 = vpack.c.b16 %v2125, %v2120
    %v2426 = vpack.c.b16 %v2131, %v2126
    %v2427 = vpack.c.b16 %v2132, %v2127
    %v2428 = vpack.c.b16 %v2133, %v2128
    %v2429 = vpack.c.b16 %v2134, %v2129
    %v2430 = vpack.c.b16 %v2135, %v2130
    %v2431 = vpack.c.b16 %v2141, %v2136
    %v2432 = vpack.c.b16 %v2142, %v2137
    %v2433 = vpack.c.b16 %v2143, %v2138
    %v2434 = vpack.c.b16 %v2144, %v2139
    %v2435 = vpack.c.b16 %v2145, %v2140
    %v2436 = vpack.c.b16 %v2151, %v2146
    %v2437 = vpack.c.b16 %v2152, %v2147
    %v2438 = vpack.c.b16 %v2153, %v2148
    %v2439 = vpack.c.b16 %v2154, %v2149
    %v2440 = vpack.c.b16 %v2155, %v2150
    %v2441 = vpack.c.b16 %v2161, %v2156
    %v2442 = vpack.c.b16 %v2162, %v2157
    %v2443 = vpack.c.b16 %v2163, %v2158
    %v2444 = vpack.c.b16 %v2164, %v2159
    %v2445 = vpack.c.b16 %v2165, %v2160
    %v2446 = vpack.c.b16 %v2171, %v2166
    %v2447 = vpack.c.b16 %v2172, %v2167
    %v2448 = vpack.c.b16 %v2173, %v2168
    %v2449 = vpack.c.b16 %v2174, %v2169
    %v2450 = vpack.c.b16 %v2175, %v2170
    %v2451 = vpack.c.b16 %v2181, %v2176
    %v2452 = vpack.c.b16 %v2182, %v2177
    %v2453 = vpack.c.b16 %v2183, %v2178
    %v2454 = vpack.c.b16 %v2184, %v2179
    %v2455 = vpack.c.b16 %v2185, %v2180
    %v2456 = vpack.c.b16 %v2191, %v2186
    %v2457 = vpack.c.b16 %v2192, %v2187
    %v2458 = vpack.c.b16 %v2193, %v2188
    %v2459 = vpack.c.b16 %v2194, %v2189
    %v2460 = vpack.c.b16 %v2195, %v2190
    %v2461 = vpack.c.b16 %v2201, %v2196
    %v2462 = vpack.c.b16 %v2202, %v2197
    %v2463 = vpack.c.b16 %v2203, %v2198
    %v2464 = vpack.c.b16 %v2204, %v2199
    %v2465 = vpack.c.b16 %v2205, %v2200
    %v2466 = vpack.c.b16 %v2211, %v2206
    %v2467 = vpack.c.b16 %v2212, %v2207
    %v2468 = vpack.c.b16 %v2213, %v2208
    %v2469 = vpack.c.b16 %v2214, %v2209
    %v2470 = vpack.c.b16 %v2215, %v2210
    %v2471 = vpack.c.b16 %v2221, %v2216
    %v2472 = vpack.c.b16 %v2222, %v2217
    %v2473 = vpack.c.b16 %v2223, %v2218
    %v2474 = vpack.c.b16 %v2224, %v2219
    %v2475 = vpack.c.b16 %v2225, %v2220
    %v2476 = vpack.c.b16 %v2231, %v2226
    %v2477 = vpack.c.b16 %v2232, %v2227
    %v2478 = vpack.c.b16 %v2233, %v2228
    %v2479 = vpack.c.b16 %v2234, %v2229
    %v2480 = vpack.c.b16 %v2235, %v2230
    %v2481 = vpack.c.b16 %v2241, %v2236
    %v2482 = vpack.c.b16 %v2242, %v2237
    %v2483 = vpack.c.b16 %v2243, %v2238
    %v2484 = vpack.c.b16 %v2244, %v2239
    %v2485 = vpack.c.b16 %v2245, %v2240
    %v2486 = vpack.c.b16 %v2251, %v2246
    %v2487 = vpack.c.b16 %v2252, %v2247
    %v2488 = vpack.c.b16 %v2253, %v2248
    %v2489 = vpack.c.b16 %v2254, %v2249
    %v2490 = vpack.c.b16 %v2255, %v2250
    %v2491 = vpack.c.b16 %v2261, %v2256
    %v2492 = vpack.c.b16 %v2262, %v2257
    %v2493 = vpack.c.b16 %v2263, %v2258
    %v2494 = vpack.c.b16 %v2264, %v2259
    %v2495 = vpack.c.b16 %v2265, %v2260
    %v2496 = vpack.c.b16 %v2271, %v2266
    %v2497 = vpack.c.b16 %v2272, %v2267
    %v2498 = vpack.c.b16 %v2273, %v2268
    %v2499 = vpack.c.b16 %v2274, %v2269
    %v2500 = vpack.c.b16 %v2275, %v2270
    %v2501 = vpack.c.b16 %v2281, %v2276
    %v2502 = vpack.c.b16 %v2282, %v2277
    %v2503 = vpack.c.b16 %v2283, %v2278
    %v2504 = vpack.c.b16 %v2284, %v2279
    %v2505 = vpack.c.b16 %v2285, %v2280
    %v2506 = vpack.c.b16 %v2291, %v2286
    %v2507 = vpack.c.b16 %v2292, %v2287
    %v2508 = vpack.c.b16 %v2293, %v2288
    %v2509 = vpack.c.b16 %v2294, %v2289
    %v2510 = vpack.c.b16 %v2295, %v2290
    %v2511 = vpack.c.b16 %v2301, %v2296
    %v2512 = vpack.c.b16 %v2302, %v2297
    %v2513 = vpack.c.b16 %v2303, %v2298
    %v2514 = vpack.c.b16 %v2304, %v2299
    %v2515 = vpack.c.b16 %v2305, %v2300
    %v2516 = vpack.c.b16 %v2311, %v2306
    %v2517 = vpack.c.b16 %v2312, %v2307
    %v2518 = vpack.c.b16 %v2313, %v2308
    %v2519 = vpack.c.b16 %v2314, %v2309
    %v2520 = vpack.c.b16 %v2315, %v2310
    %v2521 = vpack.c.b16 %v2321, %v2316
    %v2522 = vpack.c.b16 %v2322, %v2317
    %v2523 = vpack.c.b16 %v2323, %v2318
    %v2524 = vpack.c.b16 %v2324, %v2319
    %v2525 = vpack.c.b16 %v2325, %v2320
    %v2526 = vpack.c.b16 %v2331, %v2326
    %v2527 = vpack.c.b16 %v2332, %v2327
    %v2528 = vpack.c.b16 %v2333, %v2328
    %v2529 = vpack.c.b16 %v2334, %v2329
    %v2530 = vpack.c.b16 %v2335, %v2330
    %v2531 = vpack.c.b16 %v2341, %v2336
    %v2532 = vpack.c.b16 %v2342, %v2337
    %v2533 = vpack.c.b16 %v2343, %v2338
    %v2534 = vpack.c.b16 %v2344, %v2339
    %v2535 = vpack.c.b16 %v2345, %v2340
    %v2536 = vpack.c.b16 %v2351, %v2346
    %v2537 = vpack.c.b16 %v2352, %v2347
    %v2538 = vpack.c.b16 %v2353, %v2348
    %v2539 = vpack.c.b16 %v2354, %v2349
    %v2540 = vpack.c.b16 %v2355, %v2350
    %v2541 = vpack.c.b16 %v2361, %v2356
    %v2542 = vpack.c.b16 %v2362, %v2357
    %v2543 = vpack.c.b16 %v2363, %v2358
    %v2544 = vpack.c.b16 %v2364, %v2359
    %v2545 = vpack.c.b16 %v2365, %v2360
    %v2546 = vpack.c.b16 %v2371, %v2366
    %v2547 = vpack.c.b16 %v2372, %v2367
    %v2548 = vpack.c.b16 %v2373, %v2368
    %v2549 = vpack.c.b16 %v2374, %v2369
    %v2550 = vpack.c.b16 %v2375, %v2370
    %v2551 = vpack.c.b16 %v2381, %v2376
    %v2552 = vpack.c.b16 %v2382, %v2377
    %v2553 = vpack.c.b16 %v2383, %v2378
    %v2554 = vpack.c.b16 %v2384, %v2379
    %v2555 = vpack.c.b16 %v2385, %v2380
    %v2556 = vpack.c.b16 %v2391, %v2386
    %v2557 = vpack.c.b16 %v2392, %v2387
    %v2558 = vpack.c.b16 %v2393, %v2388
    %v2559 = vpack.c.b16 %v2394, %v2389
    %v2560 = vpack.c.b16 %v2395, %v2390
    %v2561 = vpack.c.b16 %v2401, %v2396
    %v2562 = vpack.c.b16 %v2402, %v2397
    %v2563 = vpack.c.b16 %v2403, %v2398
    %v2564 = vpack.c.b16 %v2404, %v2399
    %v2565 = vpack.c.b16 %v2405, %v2400
    %2726 = vmatprep.subr.bf16.mxu0 %v2407
    %2727 = vmatpush1.bf16.msra.mxu0 %v2406
    %2728 = vmatprep.subr.bf16.mxu0 %v2412
    %2729 = vmatpush1.bf16.msra.mxu0 %v2411
    %2730 = vmatprep.subr.bf16.mxu0 %v2417
    %2731 = vmatpush1.bf16.msra.mxu0 %v2416
    %2732 = vmatprep.subr.bf16.mxu0 %v2422
    %2733 = vmatpush1.bf16.msra.mxu0 %v2421
    %2734 = vmatprep.subr.bf16.mxu0 %v2427
    %2735 = vmatpush1.bf16.msra.mxu0 %v2426
    %2736 = vmatprep.subr.bf16.mxu0 %v2432
    %2737 = vmatpush1.bf16.msra.mxu0 %v2431
    %2738 = vmatprep.subr.bf16.mxu0 %v2437
    %2739 = vmatpush1.bf16.msra.mxu0 %v2436
    %2740 = vmatprep.subr.bf16.mxu0 %v2442
    %2741 = vmatpush1.bf16.msra.mxu0 %v2441
    %2742 = vmatprep.subr.bf16.mxu0 %v2447
    %2743 = vmatpush1.bf16.msra.mxu0 %v2446
    %2744 = vmatprep.subr.bf16.mxu0 %v2452
    %2745 = vmatpush1.bf16.msra.mxu0 %v2451
    %2746 = vmatprep.subr.bf16.mxu0 %v2457
    %2747 = vmatpush1.bf16.msra.mxu0 %v2456
    %2748 = vmatprep.subr.bf16.mxu0 %v2462
    %2749 = vmatpush1.bf16.msra.mxu0 %v2461
    %2750 = vmatprep.subr.bf16.mxu0 %v2467
    %2751 = vmatpush1.bf16.msra.mxu0 %v2466
    %2752 = vmatprep.subr.bf16.mxu0 %v2472
    %2753 = vmatpush1.bf16.msra.mxu0 %v2471
    %2754 = vmatprep.subr.bf16.mxu0 %v2477
    %2755 = vmatpush1.bf16.msra.mxu0 %v2476
    %2756 = vmatprep.subr.bf16.mxu0 %v2482
    %2757 = vmatpush1.bf16.msra.mxu0 %v2481
    %2758 = vmatprep.mubr.bf16.mxu0 %v1699
    %2759 = vmatmul.mubr.bf16.gmra.mrb[0].mxu0 %v1698
    %v2760 = vpop.f32.mrb[0].mxu0
    %v2761 = vadd.f32 0.0, %v2760
    %v2762 = vpop.f32.mrb[0].mxu0
    %v2763 = vadd.f32 0.0, %v2762
    %v2764 = vpop.f32.mrb[0].mxu0
    %v2765 = vadd.f32 0.0, %v2764
    %v2766 = vpop.f32.mrb[0].mxu0
    %v2767 = vadd.f32 0.0, %v2766
    %2768 = vdwg.mxu0
    %2769 = vmatprep.subr.bf16.mxu0 %v2487
    %2770 = vmatpush1.bf16.msra.mxu0 %v2486
    %2771 = vmatprep.subr.bf16.mxu0 %v2492
    %2772 = vmatpush1.bf16.msra.mxu0 %v2491
    %2773 = vmatprep.subr.bf16.mxu0 %v2497
    %2774 = vmatpush1.bf16.msra.mxu0 %v2496
    %2775 = vmatprep.subr.bf16.mxu0 %v2502
    %2776 = vmatpush1.bf16.msra.mxu0 %v2501
    %2777 = vmatprep.subr.bf16.mxu0 %v2507
    %2778 = vmatpush1.bf16.msra.mxu0 %v2506
    %2779 = vmatprep.subr.bf16.mxu0 %v2512
    %2780 = vmatpush1.bf16.msra.mxu0 %v2511
    %2781 = vmatprep.subr.bf16.mxu0 %v2517
    %2782 = vmatpush1.bf16.msra.mxu0 %v2516
    %2783 = vmatprep.subr.bf16.mxu0 %v2522
    %2784 = vmatpush1.bf16.msra.mxu0 %v2521
    %2785 = vmatprep.subr.bf16.mxu0 %v2527
    %2786 = vmatpush1.bf16.msra.mxu0 %v2526
    %2787 = vmatprep.subr.bf16.mxu0 %v2532
    %2788 = vmatpush1.bf16.msra.mxu0 %v2531
    %2789 = vmatprep.subr.bf16.mxu0 %v2537
    %2790 = vmatpush1.bf16.msra.mxu0 %v2536
    %2791 = vmatprep.subr.bf16.mxu0 %v2542
    %2792 = vmatpush1.bf16.msra.mxu0 %v2541
    %2793 = vmatprep.subr.bf16.mxu0 %v2547
    %2794 = vmatpush1.bf16.msra.mxu0 %v2546
    %2795 = vmatprep.subr.bf16.mxu0 %v2552
    %2796 = vmatpush1.bf16.msra.mxu0 %v2551
    %2797 = vmatprep.subr.bf16.mxu0 %v2557
    %2798 = vmatpush1.bf16.msra.mxu0 %v2556
    %2799 = vmatprep.subr.bf16.mxu0 %v2562
    %2800 = vmatpush1.bf16.msra.mxu0 %v2561
    %2801 = vmatprep.mubr.bf16.mxu0 %v1701
    %2802 = vmatmul.mubr.bf16.gmra.mrb[0].mxu0 %v1700
    %v2803 = vpop.f32.mrb[0].mxu0
    %v2804 = vadd.f32 %v2761, %v2803
    %v2805 = vpop.f32.mrb[0].mxu0
    %v2806 = vadd.f32 %v2763, %v2805
    %v2807 = vpop.f32.mrb[0].mxu0
    %v2808 = vadd.f32 %v2765, %v2807
    %v2809 = vpop.f32.mrb[0].mxu0
    %v2810 = vadd.f32 %v2767, %v2809
    %2811 = vdwg.mxu0
    %2812 = vmatprep.subr.bf16.mxu0 %v2409
    %2813 = vmatpush1.bf16.msra.mxu0 %v2408
    %2814 = vmatprep.subr.bf16.mxu0 %v2414
    %2815 = vmatpush1.bf16.msra.mxu0 %v2413
    %2816 = vmatprep.subr.bf16.mxu0 %v2419
    %2817 = vmatpush1.bf16.msra.mxu0 %v2418
    %2818 = vmatprep.subr.bf16.mxu0 %v2424
    %2819 = vmatpush1.bf16.msra.mxu0 %v2423
    %2820 = vmatprep.subr.bf16.mxu0 %v2429
    %2821 = vmatpush1.bf16.msra.mxu0 %v2428
    %2822 = vmatprep.subr.bf16.mxu0 %v2434
    %2823 = vmatpush1.bf16.msra.mxu0 %v2433
    %2824 = vmatprep.subr.bf16.mxu0 %v2439
    %2825 = vmatpush1.bf16.msra.mxu0 %v2438
    %2826 = vmatprep.subr.bf16.mxu0 %v2444
    %2827 = vmatpush1.bf16.msra.mxu0 %v2443
    %2828 = vmatprep.subr.bf16.mxu0 %v2449
    %2829 = vmatpush1.bf16.msra.mxu0 %v2448
    %2830 = vmatprep.subr.bf16.mxu0 %v2454
    %2831 = vmatpush1.bf16.msra.mxu0 %v2453
    %2832 = vmatprep.subr.bf16.mxu0 %v2459
    %2833 = vmatpush1.bf16.msra.mxu0 %v2458
    %2834 = vmatprep.subr.bf16.mxu0 %v2464
    %2835 = vmatpush1.bf16.msra.mxu0 %v2463
    %2836 = vmatprep.subr.bf16.mxu0 %v2469
    %2837 = vmatpush1.bf16.msra.mxu0 %v2468
    %2838 = vmatprep.subr.bf16.mxu0 %v2474
    %2839 = vmatpush1.bf16.msra.mxu0 %v2473
    %2840 = vmatprep.subr.bf16.mxu0 %v2479
    %2841 = vmatpush1.bf16.msra.mxu0 %v2478
    %2842 = vmatprep.subr.bf16.mxu0 %v2484
    %2843 = vmatpush1.bf16.msra.mxu0 %v2483
    %2844 = vmatprep.mubr.bf16.mxu0 %v1699
    %2845 = vmatmul.mubr.bf16.gmra.mrb[0].mxu0 %v1698
    %v2846 = vpop.f32.mrb[0].mxu0
    %v2847 = vadd.f32 0.0, %v2846
    %v2848 = vpop.f32.mrb[0].mxu0
    %v2849 = vadd.f32 0.0, %v2848
    %v2850 = vpop.f32.mrb[0].mxu0
    %v2851 = vadd.f32 0.0, %v2850
    %v2852 = vpop.f32.mrb[0].mxu0
    %v2853 = vadd.f32 0.0, %v2852
    %2854 = vdwg.mxu0
    %2855 = vmatprep.subr.bf16.mxu0 %v2489
    %2856 = vmatpush1.bf16.msra.mxu0 %v2488
    %2857 = vmatprep.subr.bf16.mxu0 %v2494
    %2858 = vmatpush1.bf16.msra.mxu0 %v2493
    %2859 = vmatprep.subr.bf16.mxu0 %v2499
    %2860 = vmatpush1.bf16.msra.mxu0 %v2498
    %2861 = vmatprep.subr.bf16.mxu0 %v2504
    %2862 = vmatpush1.bf16.msra.mxu0 %v2503
    %2863 = vmatprep.subr.bf16.mxu0 %v2509
    %2864 = vmatpush1.bf16.msra.mxu0 %v2508
    %2865 = vmatprep.subr.bf16.mxu0 %v2514
    %2866 = vmatpush1.bf16.msra.mxu0 %v2513
    %2867 = vmatprep.subr.bf16.mxu0 %v2519
    %2868 = vmatpush1.bf16.msra.mxu0 %v2518
    %2869 = vmatprep.subr.bf16.mxu0 %v2524
    %2870 = vmatpush1.bf16.msra.mxu0 %v2523
    %2871 = vmatprep.subr.bf16.mxu0 %v2529
    %2872 = vmatpush1.bf16.msra.mxu0 %v2528
    %2873 = vmatprep.subr.bf16.mxu0 %v2534
    %2874 = vmatpush1.bf16.msra.mxu0 %v2533
    %2875 = vmatprep.subr.bf16.mxu0 %v2539
    %2876 = vmatpush1.bf16.msra.mxu0 %v2538
    %2877 = vmatprep.subr.bf16.mxu0 %v2544
    %2878 = vmatpush1.bf16.msra.mxu0 %v2543
    %2879 = vmatprep.subr.bf16.mxu0 %v2549
    %2880 = vmatpush1.bf16.msra.mxu0 %v2548
    %2881 = vmatprep.subr.bf16.mxu0 %v2554
    %2882 = vmatpush1.bf16.msra.mxu0 %v2553
    %2883 = vmatprep.subr.bf16.mxu0 %v2559
    %2884 = vmatpush1.bf16.msra.mxu0 %v2558
    %2885 = vmatprep.subr.bf16.mxu0 %v2564
    %2886 = vmatpush1.bf16.msra.mxu0 %v2563
    %2887 = vmatprep.mubr.bf16.mxu0 %v1701
    %2888 = vmatmul.mubr.bf16.gmra.mrb[0].mxu0 %v1700
    %v2889 = vpop.f32.mrb[0].mxu0
    %v2890 = vadd.f32 %v2847, %v2889
    %v2891 = vpop.f32.mrb[0].mxu0
    %v2892 = vadd.f32 %v2849, %v2891
    %v2893 = vpop.f32.mrb[0].mxu0
    %v2894 = vadd.f32 %v2851, %v2893
    %v2895 = vpop.f32.mrb[0].mxu0
    %v2896 = vadd.f32 %v2853, %v2895
    %2897 = vdwg.mxu0
    %2898 = vmatprep.subr.bf16.mxu0 0
    %2899 = vmatpush1.bf16.msra.mxu0 %v2410
    %2900 = vmatprep.subr.bf16.mxu0 0
    %2901 = vmatpush1.bf16.msra.mxu0 %v2415
    %2902 = vmatprep.subr.bf16.mxu0 0
    %2903 = vmatpush1.bf16.msra.mxu0 %v2420
    %2904 = vmatprep.subr.bf16.mxu0 0
    %2905 = vmatpush1.bf16.msra.mxu0 %v2425
    %2906 = vmatprep.subr.bf16.mxu0 0
    %2907 = vmatpush1.bf16.msra.mxu0 %v2430
    %2908 = vmatprep.subr.bf16.mxu0 0
    %2909 = vmatpush1.bf16.msra.mxu0 %v2435
    %2910 = vmatprep.subr.bf16.mxu0 0
    %2911 = vmatpush1.bf16.msra.mxu0 %v2440
    %2912 = vmatprep.subr.bf16.mxu0 0
    %2913 = vmatpush1.bf16.msra.mxu0 %v2445
    %2914 = vmatprep.subr.bf16.mxu0 0
    %2915 = vmatpush1.bf16.msra.mxu0 %v2450
    %2916 = vmatprep.subr.bf16.mxu0 0
    %2917 = vmatpush1.bf16.msra.mxu0 %v2455
    %2918 = vmatprep.subr.bf16.mxu0 0
    %2919 = vmatpush1.bf16.msra.mxu0 %v2460
    %2920 = vmatprep.subr.bf16.mxu0 0
    %2921 = vmatpush1.bf16.msra.mxu0 %v2465
    %2922 = vmatprep.subr.bf16.mxu0 0
    %2923 = vmatpush1.bf16.msra.mxu0 %v2470
    %2924 = vmatprep.subr.bf16.mxu0 0
    %2925 = vmatpush1.bf16.msra.mxu0 %v2475
    %2926 = vmatprep.subr.bf16.mxu0 0
    %2927 = vmatpush1.bf16.msra.mxu0 %v2480
    %2928 = vmatprep.subr.bf16.mxu0 0
    %2929 = vmatpush1.bf16.msra.mxu0 %v2485
    %2930 = vmatprep.mubr.bf16.mxu0 %v1699
    %2931 = vmatmul.mubr.bf16.gmra.mrb[0].mxu0 %v1698
    %v2932 = vpop.f32.mrb[0].mxu0
    %v2933 = vadd.f32 0.0, %v2932
    %v2934 = vpop.f32.mrb[0].mxu0
    %v2935 = vpop.f32.mrb[0].mxu0
    %v2936 = vadd.f32 0.0, %v2935
    %v2937 = vpop.f32.mrb[0].mxu0
    %2938 = vdwg.mxu0
    %2939 = vmatprep.subr.bf16.mxu0 0
    %2940 = vmatpush1.bf16.msra.mxu0 %v2490
    %2941 = vmatprep.subr.bf16.mxu0 0
    %2942 = vmatpush1.bf16.msra.mxu0 %v2495
    %2943 = vmatprep.subr.bf16.mxu0 0
    %2944 = vmatpush1.bf16.msra.mxu0 %v2500
    %2945 = vmatprep.subr.bf16.mxu0 0
    %2946 = vmatpush1.bf16.msra.mxu0 %v2505
    %2947 = vmatprep.subr.bf16.mxu0 0
    %2948 = vmatpush1.bf16.msra.mxu0 %v2510
    %2949 = vmatprep.subr.bf16.mxu0 0
    %2950 = vmatpush1.bf16.msra.mxu0 %v2515
    %2951 = vmatprep.subr.bf16.mxu0 0
    %2952 = vmatpush1.bf16.msra.mxu0 %v2520
    %2953 = vmatprep.subr.bf16.mxu0 0
    %2954 = vmatpush1.bf16.msra.mxu0 %v2525
    %2955 = vmatprep.subr.bf16.mxu0 0
    %2956 = vmatpush1.bf16.msra.mxu0 %v2530
    %2957 = vmatprep.subr.bf16.mxu0 0
    %2958 = vmatpush1.bf16.msra.mxu0 %v2535
    %2959 = vmatprep.subr.bf16.mxu0 0
    %2960 = vmatpush1.bf16.msra.mxu0 %v2540
    %2961 = vmatprep.subr.bf16.mxu0 0
    %2962 = vmatpush1.bf16.msra.mxu0 %v2545
    %2963 = vmatprep.subr.bf16.mxu0 0
    %2964 = vmatpush1.bf16.msra.mxu0 %v2550
    %2965 = vmatprep.subr.bf16.mxu0 0
    %2966 = vmatpush1.bf16.msra.mxu0 %v2555
    %2967 = vmatprep.subr.bf16.mxu0 0
    %2968 = vmatpush1.bf16.msra.mxu0 %v2560
    %2969 = vmatprep.subr.bf16.mxu0 0
    %2970 = vmatpush1.bf16.msra.mxu0 %v2565
    %2971 = vmatprep.mubr.bf16.mxu0 %v1701
    %2972 = vmatmul.mubr.bf16.gmra.mrb[0].mxu0 %v1700
    %v2973 = vpop.f32.mrb[0].mxu0
    %v2974 = vadd.f32 %v2933, %v2973
    %v2975 = vpop.f32.mrb[0].mxu0
    %v2976 = vpop.f32.mrb[0].mxu0
    %v2977 = vadd.f32 %v2936, %v2976
    %v2978 = vpop.f32.mrb[0].mxu0
    %2979 = vdwg.mxu0
    %v2980 = vld [vmem:[#allocation22] sm:$0x1f]
    %v2982 = vlaneseq
    %v2983 = vshrl.u32 %v2982, 7
    %v2984 = vsub.s32 0, %v2983
    %v2985 = vrot.slane %v2980, %v2984
    %v2986 = vlaneseq
    %v2987 = vshrl.u32 %v2986, 7
    %v2988 = vsub.s32 1, %v2987
    %v2989 = vrot.slane %v2980, %v2988
    %v2990 = vlaneseq
    %v2991 = vshrl.u32 %v2990, 7
    %v2992 = vsub.s32 2, %v2991
    %v2993 = vrot.slane %v2980, %v2992
    %v2994 = vlaneseq
    %v2995 = vshrl.u32 %v2994, 7
    %v2996 = vsub.s32 3, %v2995
    %v2997 = vrot.slane %v2980, %v2996
    %v2998 = vlaneseq
    %v2999 = vshrl.u32 %v2998, 7
    %v3000 = vsub.s32 4, %v2999
    %v3001 = vrot.slane %v2980, %v3000
    %3007 = vmatprep.subr.mxu0 %v2806
    %3008 = vmatpush1.msra.mxu0 %v2804
    %3009 = vmatprep.subr.mxu0 %v2810
    %3010 = vmatpush1.msra.mxu0 %v2808
    %3011 = vmatprep.subr.mxu0 0.0
    %3012 = vmatpush1.msra.mxu0 0.0
    %3013 = vmatprep.subr.mxu0 0.0
    %3014 = vmatpush1.msra.mxu0 0.0
    %3015 = vmatprep.subr.mxu0 0.0
    %3016 = vmatpush1.msra.mxu0 0.0
    %3017 = vmatprep.subr.mxu0 0.0
    %3018 = vmatpush1.msra.mxu0 0.0
    %3019 = vmatprep.subr.mxu0 0.0
    %3020 = vmatpush1.msra.mxu0 0.0
    %3021 = vmatprep.subr.mxu0 0.0
    %3022 = vmatpush1.msra.mxu0 0.0
    %3023 = vmatprep.subr.mxu0 0.0
    %3024 = vmatpush1.msra.mxu0 0.0
    %3025 = vmatprep.subr.mxu0 0.0
    %3026 = vmatpush1.msra.mxu0 0.0
    %3027 = vmatprep.subr.mxu0 0.0
    %3028 = vmatpush1.msra.mxu0 0.0
    %3029 = vmatprep.subr.mxu0 0.0
    %3030 = vmatpush1.msra.mxu0 0.0
    %3031 = vmatprep.subr.mxu0 0.0
    %3032 = vmatpush1.msra.mxu0 0.0
    %3033 = vmatprep.subr.mxu0 0.0
    %3034 = vmatpush1.msra.mxu0 0.0
    %3035 = vmatprep.subr.mxu0 0.0
    %3036 = vmatpush1.msra.mxu0 0.0
    %3037 = vmatprep.subr.mxu0 0.0
    %3038 = vmatpush1.msra.mxu0 0.0
    %3039 = vmatprep.subr.mxu0 0.0
    %3040 = vmatpush1.msra.mxu0 0.0
    %3041 = vmatprep.subr.mxu0 0.0
    %3042 = vmatpush1.msra.mxu0 0.0
    %3043 = vmatprep.subr.mxu0 0.0
    %3044 = vmatpush1.msra.mxu0 0.0
    %3045 = vmatprep.subr.mxu0 0.0
    %3046 = vmatpush1.msra.mxu0 0.0
    %3047 = vmatprep.subr.mxu0 0.0
    %3048 = vmatpush1.msra.mxu0 0.0
    %3049 = vmatprep.subr.mxu0 0.0
    %3050 = vmatpush1.msra.mxu0 0.0
    %3051 = vmatprep.subr.mxu0 0.0
    %3052 = vmatpush1.msra.mxu0 0.0
    %3053 = vmatprep.subr.mxu0 0.0
    %3054 = vmatpush1.msra.mxu0 0.0
    %3055 = vmatprep.subr.mxu0 0.0
    %3056 = vmatpush1.msra.mxu0 0.0
    %3057 = vmatprep.subr.mxu0 0.0
    %3058 = vmatpush1.msra.mxu0 0.0
    %3059 = vmatprep.subr.mxu0 0.0
    %3060 = vmatpush1.msra.mxu0 0.0
    %3061 = vmatprep.subr.mxu0 0.0
    %3062 = vmatpush1.msra.mxu0 0.0
    %3063 = vmatprep.subr.mxu0 0.0
    %3064 = vmatpush1.msra.mxu0 0.0
    %3065 = vmatprep.subr.mxu0 0.0
    %3066 = vmatpush1.msra.mxu0 0.0
    %3067 = vmatprep.subr.mxu0 0.0
    %3068 = vmatpush1.msra.mxu0 0.0
    %3069 = vmatprep.subr.mxu0 0.0
    %3070 = vmatpush1.msra.mxu0 0.0
    %3071 = vmatprep.mubr.f32.mxu0 0.0
    %3072 = vmatmul.mubr.f32.gmra.mrb[0].mxu0 %v383
    %v3073 = vpop.f32.mrb[0].mxu0
    %v3074 = vadd.f32 %v2985, %v3073
    %v3075 = vpop.f32.mrb[0].mxu0
    %v3076 = vadd.f32 %v2989, %v3075
    %3077 = vmatprep.mubr.f32.mxu0 0.0
    %3078 = vmatmul.mubr.f32.gmra.mrb[0].mxu0 %v386
    %v3079 = vpop.f32.mrb[0].mxu0
    %v3080 = vadd.f32 %v2985, %v3079
    %v3081 = vpop.f32.mrb[0].mxu0
    %v3082 = vadd.f32 %v2989, %v3081
    %3083 = vdwg.mxu0
    %3084 = vmatprep.subr.mxu0 %v2892
    %3085 = vmatpush1.msra.mxu0 %v2890
    %3086 = vmatprep.subr.mxu0 %v2896
    %3087 = vmatpush1.msra.mxu0 %v2894
    %3088 = vmatprep.subr.mxu0 0.0
    %3089 = vmatpush1.msra.mxu0 0.0
    %3090 = vmatprep.subr.mxu0 0.0
    %3091 = vmatpush1.msra.mxu0 0.0
    %3092 = vmatprep.subr.mxu0 0.0
    %3093 = vmatpush1.msra.mxu0 0.0
    %3094 = vmatprep.subr.mxu0 0.0
    %3095 = vmatpush1.msra.mxu0 0.0
    %3096 = vmatprep.subr.mxu0 0.0
    %3097 = vmatpush1.msra.mxu0 0.0
    %3098 = vmatprep.subr.mxu0 0.0
    %3099 = vmatpush1.msra.mxu0 0.0
    %3100 = vmatprep.subr.mxu0 0.0
    %3101 = vmatpush1.msra.mxu0 0.0
    %3102 = vmatprep.subr.mxu0 0.0
    %3103 = vmatpush1.msra.mxu0 0.0
    %3104 = vmatprep.subr.mxu0 0.0
    %3105 = vmatpush1.msra.mxu0 0.0
    %3106 = vmatprep.subr.mxu0 0.0
    %3107 = vmatpush1.msra.mxu0 0.0
    %3108 = vmatprep.subr.mxu0 0.0
    %3109 = vmatpush1.msra.mxu0 0.0
    %3110 = vmatprep.subr.mxu0 0.0
    %3111 = vmatpush1.msra.mxu0 0.0
    %3112 = vmatprep.subr.mxu0 0.0
    %3113 = vmatpush1.msra.mxu0 0.0
    %3114 = vmatprep.subr.mxu0 0.0
    %3115 = vmatpush1.msra.mxu0 0.0
    %3116 = vmatprep.subr.mxu0 0.0
    %3117 = vmatpush1.msra.mxu0 0.0
    %3118 = vmatprep.subr.mxu0 0.0
    %3119 = vmatpush1.msra.mxu0 0.0
    %3120 = vmatprep.subr.mxu0 0.0
    %3121 = vmatpush1.msra.mxu0 0.0
    %3122 = vmatprep.subr.mxu0 0.0
    %3123 = vmatpush1.msra.mxu0 0.0
    %3124 = vmatprep.subr.mxu0 0.0
    %3125 = vmatpush1.msra.mxu0 0.0
    %3126 = vmatprep.subr.mxu0 0.0
    %3127 = vmatpush1.msra.mxu0 0.0
    %3128 = vmatprep.subr.mxu0 0.0
    %3129 = vmatpush1.msra.mxu0 0.0
    %3130 = vmatprep.subr.mxu0 0.0
    %3131 = vmatpush1.msra.mxu0 0.0
    %3132 = vmatprep.subr.mxu0 0.0
    %3133 = vmatpush1.msra.mxu0 0.0
    %3134 = vmatprep.subr.mxu0 0.0
    %3135 = vmatpush1.msra.mxu0 0.0
    %3136 = vmatprep.subr.mxu0 0.0
    %3137 = vmatpush1.msra.mxu0 0.0
    %3138 = vmatprep.subr.mxu0 0.0
    %3139 = vmatpush1.msra.mxu0 0.0
    %3140 = vmatprep.subr.mxu0 0.0
    %3141 = vmatpush1.msra.mxu0 0.0
    %3142 = vmatprep.subr.mxu0 0.0
    %3143 = vmatpush1.msra.mxu0 0.0
    %3144 = vmatprep.subr.mxu0 0.0
    %3145 = vmatpush1.msra.mxu0 0.0
    %3146 = vmatprep.subr.mxu0 0.0
    %3147 = vmatpush1.msra.mxu0 0.0
    %3148 = vmatprep.mubr.f32.mxu0 0.0
    %3149 = vmatmul.mubr.f32.gmra.mrb[0].mxu0 %v383
    %v3150 = vpop.f32.mrb[0].mxu0
    %v3151 = vadd.f32 %v2993, %v3150
    %v3152 = vpop.f32.mrb[0].mxu0
    %v3153 = vadd.f32 %v2997, %v3152
    %3154 = vmatprep.mubr.f32.mxu0 0.0
    %3155 = vmatmul.mubr.f32.gmra.mrb[0].mxu0 %v386
    %v3156 = vpop.f32.mrb[0].mxu0
    %v3157 = vadd.f32 %v2993, %v3156
    %v3158 = vpop.f32.mrb[0].mxu0
    %v3159 = vadd.f32 %v2997, %v3158
    %3160 = vdwg.mxu0
    %3161 = vmatprep.subr.mxu0 0.0
    %3162 = vmatpush1.msra.mxu0 %v2974
    %3163 = vmatprep.subr.mxu0 0.0
    %3164 = vmatpush1.msra.mxu0 %v2977
    %3165 = vmatprep.subr.mxu0 0.0
    %3166 = vmatpush1.msra.mxu0 0.0
    %3167 = vmatprep.subr.mxu0 0.0
    %3168 = vmatpush1.msra.mxu0 0.0
    %3169 = vmatprep.subr.mxu0 0.0
    %3170 = vmatpush1.msra.mxu0 0.0
    %3171 = vmatprep.subr.mxu0 0.0
    %3172 = vmatpush1.msra.mxu0 0.0
    %3173 = vmatprep.subr.mxu0 0.0
    %3174 = vmatpush1.msra.mxu0 0.0
    %3175 = vmatprep.subr.mxu0 0.0
    %3176 = vmatpush1.msra.mxu0 0.0
    %3177 = vmatprep.subr.mxu0 0.0
    %3178 = vmatpush1.msra.mxu0 0.0
    %3179 = vmatprep.subr.mxu0 0.0
    %3180 = vmatpush1.msra.mxu0 0.0
    %3181 = vmatprep.subr.mxu0 0.0
    %3182 = vmatpush1.msra.mxu0 0.0
    %3183 = vmatprep.subr.mxu0 0.0
    %3184 = vmatpush1.msra.mxu0 0.0
    %3185 = vmatprep.subr.mxu0 0.0
    %3186 = vmatpush1.msra.mxu0 0.0
    %3187 = vmatprep.subr.mxu0 0.0
    %3188 = vmatpush1.msra.mxu0 0.0
    %3189 = vmatprep.subr.mxu0 0.0
    %3190 = vmatpush1.msra.mxu0 0.0
    %3191 = vmatprep.subr.mxu0 0.0
    %3192 = vmatpush1.msra.mxu0 0.0
    %3193 = vmatprep.subr.mxu0 0.0
    %3194 = vmatpush1.msra.mxu0 0.0
    %3195 = vmatprep.subr.mxu0 0.0
    %3196 = vmatpush1.msra.mxu0 0.0
    %3197 = vmatprep.subr.mxu0 0.0
    %3198 = vmatpush1.msra.mxu0 0.0
    %3199 = vmatprep.subr.mxu0 0.0
    %3200 = vmatpush1.msra.mxu0 0.0
    %3201 = vmatprep.subr.mxu0 0.0
    %3202 = vmatpush1.msra.mxu0 0.0
    %3203 = vmatprep.subr.mxu0 0.0
    %3204 = vmatpush1.msra.mxu0 0.0
    %3205 = vmatprep.subr.mxu0 0.0
    %3206 = vmatpush1.msra.mxu0 0.0
    %3207 = vmatprep.subr.mxu0 0.0
    %3208 = vmatpush1.msra.mxu0 0.0
    %3209 = vmatprep.subr.mxu0 0.0
    %3210 = vmatpush1.msra.mxu0 0.0
    %3211 = vmatprep.subr.mxu0 0.0
    %3212 = vmatpush1.msra.mxu0 0.0
    %3213 = vmatprep.subr.mxu0 0.0
    %3214 = vmatpush1.msra.mxu0 0.0
    %3215 = vmatprep.subr.mxu0 0.0
    %3216 = vmatpush1.msra.mxu0 0.0
    %3217 = vmatprep.subr.mxu0 0.0
    %3218 = vmatpush1.msra.mxu0 0.0
    %3219 = vmatprep.subr.mxu0 0.0
    %3220 = vmatpush1.msra.mxu0 0.0
    %3221 = vmatprep.subr.mxu0 0.0
    %3222 = vmatpush1.msra.mxu0 0.0
    %3223 = vmatprep.subr.mxu0 0.0
    %3224 = vmatpush1.msra.mxu0 0.0
    %3225 = vmatprep.mubr.f32.mxu0 0.0
    %3226 = vmatmul.mubr.f32.gmra.mrb[0].mxu0 %v383
    %v3227 = vpop.f32.mrb[0].mxu0
    %v3228 = vadd.f32 %v3001, %v3227
    %v3229 = vpop.f32.mrb[0].mxu0
    %3230 = vmatprep.mubr.f32.mxu0 0.0
    %3231 = vmatmul.mubr.f32.gmra.mrb[0].mxu0 %v386
    %v3232 = vpop.f32.mrb[0].mxu0
    %v3233 = vadd.f32 %v3001, %v3232
    %v3234 = vpop.f32.mrb[0].mxu0
    %3235 = vdwg.mxu0
    %v3236 = vld [vmem:[#allocation23] sm:$0xff]
    %v3237 = vlaneseq
    %v3238 = vshrl.u32 %v3237, 7
    %v3239 = vsub.s32 0, %v3238
    %v3240 = vrot.slane %v3236, %v3239
    %3242 = vbcast.lane.b32.xlu0 %v3240, 256
    %v3243 = vpop.permute.xlu0 %3242
    %s3245 = sor.u32 256, 8
    %3246 = vbcast.lane.b32.xlu0 %v3240, %s3245
    %v3247 = vpop.permute.xlu0 %3246
    %v3248 = vlaneseq
    %v3249 = vshrl.u32 %v3248, 7
    %v3250 = vsub.s32 1, %v3249
    %v3251 = vrot.slane %v3236, %v3250
    %3253 = vbcast.lane.b32.xlu0 %v3251, 256
    %v3254 = vpop.permute.xlu0 %3253
    %s3256 = sor.u32 256, 8
    %3257 = vbcast.lane.b32.xlu0 %v3251, %s3256
    %v3258 = vpop.permute.xlu0 %3257
    %v3259 = vlaneseq
    %v3260 = vshrl.u32 %v3259, 7
    %v3261 = vsub.s32 2, %v3260
    %v3262 = vrot.slane %v3236, %v3261
    %3264 = vbcast.lane.b32.xlu0 %v3262, 256
    %v3265 = vpop.permute.xlu0 %3264
    %s3267 = sor.u32 256, 8
    %3268 = vbcast.lane.b32.xlu0 %v3262, %s3267
    %v3269 = vpop.permute.xlu0 %3268
    %v3270 = vlaneseq
    %v3271 = vshrl.u32 %v3270, 7
    %v3272 = vsub.s32 3, %v3271
    %v3273 = vrot.slane %v3236, %v3272
    %3275 = vbcast.lane.b32.xlu0 %v3273, 256
    %v3276 = vpop.permute.xlu0 %3275
    %s3278 = sor.u32 256, 8
    %3279 = vbcast.lane.b32.xlu0 %v3273, %s3278
    %v3280 = vpop.permute.xlu0 %3279
    %v3281 = vlaneseq
    %v3282 = vshrl.u32 %v3281, 7
    %v3283 = vsub.s32 4, %v3282
    %v3284 = vrot.slane %v3236, %v3283
    %3286 = vbcast.lane.b32.xlu0 %v3284, 256
    %v3287 = vpop.permute.xlu0 %3286
    %s3289 = sor.u32 256, 8
    %3290 = vbcast.lane.b32.xlu0 %v3284, %s3289
    %v3291 = vpop.permute.xlu0 %3290
    %v3292 = vlaneseq
    %v3293 = vshrl.u32 %v3292, 7
    %v3294 = vsub.s32 5, %v3293
    %v3295 = vrot.slane %v3236, %v3294
    %3297 = vbcast.lane.b32.xlu0 %v3295, 256
    %v3298 = vpop.permute.xlu0 %3297
    %s3300 = sor.u32 256, 8
    %3301 = vbcast.lane.b32.xlu0 %v3295, %s3300
    %v3302 = vpop.permute.xlu0 %3301
    %v3303 = vlaneseq
    %v3304 = vshrl.u32 %v3303, 7
    %v3305 = vsub.s32 6, %v3304
    %v3306 = vrot.slane %v3236, %v3305
    %3308 = vbcast.lane.b32.xlu0 %v3306, 256
    %v3309 = vpop.permute.xlu0 %3308
    %s3311 = sor.u32 256, 8
    %3312 = vbcast.lane.b32.xlu0 %v3306, %s3311
    %v3313 = vpop.permute.xlu0 %3312
    %v3314 = vlaneseq
    %v3315 = vshrl.u32 %v3314, 7
    %v3316 = vsub.s32 7, %v3315
    %v3317 = vrot.slane %v3236, %v3316
    %3319 = vbcast.lane.b32.xlu0 %v3317, 256
    %v3320 = vpop.permute.xlu0 %3319
    %s3322 = sor.u32 256, 8
    %3323 = vbcast.lane.b32.xlu0 %v3317, %s3322
    %v3324 = vpop.permute.xlu0 %3323
    %vm3325 = vcmp.gt.f32.partialorder %v3243, 0.0
    %vm3326 = vcmp.gt.f32.partialorder %v3247, 0.0
    %vm3327 = vcmp.gt.f32.partialorder %v3254, 0.0
    %vm3328 = vcmp.gt.f32.partialorder %v3258, 0.0
    %vm3329 = vcmp.gt.f32.partialorder %v3265, 0.0
    %vm3330 = vcmp.gt.f32.partialorder %v3269, 0.0
    %vm3331 = vcmp.gt.f32.partialorder %v3276, 0.0
    %vm3332 = vcmp.gt.f32.partialorder %v3280, 0.0
    %vm3333 = vcmp.gt.f32.partialorder %v3287, 0.0
    %vm3334 = vcmp.gt.f32.partialorder %v3291, 0.0
    %vm3335 = vcmp.gt.f32.partialorder %v3298, 0.0
    %vm3336 = vcmp.gt.f32.partialorder %v3302, 0.0
    %vm3337 = vcmp.gt.f32.partialorder %v3309, 0.0
    %vm3338 = vcmp.gt.f32.partialorder %v3313, 0.0
    %vm3339 = vcmp.gt.f32.partialorder %v3320, 0.0
    %vm3340 = vcmp.gt.f32.partialorder %v3324, 0.0
    %v3341 = vsel %vm3325, 1, 0
    %v3342 = vsel %vm3326, 1, 0
    %v3343 = vsel %vm3327, 1, 0
    %v3344 = vsel %vm3328, 1, 0
    %v3345 = vsel %vm3329, 1, 0
    %v3346 = vsel %vm3330, 1, 0
    %v3347 = vsel %vm3331, 1, 0
    %v3348 = vsel %vm3332, 1, 0
    %v3349 = vsel %vm3333, 1, 0
    %v3350 = vsel %vm3334, 1, 0
    %v3351 = vsel %vm3335, 1, 0
    %v3352 = vsel %vm3336, 1, 0
    %v3353 = vsel %vm3337, 1, 0
    %v3354 = vsel %vm3338, 1, 0
    %v3355 = vsel %vm3339, 1, 0
    %v3356 = vsel %vm3340, 1, 0
    %vm3357 = vcmp.eq.s32.totalorder %v3341, 1
    %vm3358 = vcmp.eq.s32.totalorder %v3342, 1
    %vm3359 = vcmp.eq.s32.totalorder %v3343, 1
    %vm3360 = vcmp.eq.s32.totalorder %v3344, 1
    %vm3361 = vcmp.eq.s32.totalorder %v3345, 1
    %vm3362 = vcmp.eq.s32.totalorder %v3346, 1
    %vm3363 = vcmp.eq.s32.totalorder %v3347, 1
    %vm3364 = vcmp.eq.s32.totalorder %v3348, 1
    %vm3365 = vcmp.eq.s32.totalorder %v3349, 1
    %vm3366 = vcmp.eq.s32.totalorder %v3350, 1
    %vm3367 = vcmp.eq.s32.totalorder %v3351, 1
    %vm3368 = vcmp.eq.s32.totalorder %v3352, 1
    %vm3369 = vcmp.eq.s32.totalorder %v3353, 1
    %vm3370 = vcmp.eq.s32.totalorder %v3354, 1
    %vm3371 = vcmp.eq.s32.totalorder %v3355, 1
    %vm3372 = vcmp.eq.s32.totalorder %v3356, 1
    %v3373 = vsel %vm3357, %v3074, -3e+38
    %v3374 = vsel %vm3357, %v3076, -3e+38
    %v3375 = vsel %vm3357, %v3151, -3e+38
    %v3376 = vsel %vm3357, %v3153, -3e+38
    %v3377 = vsel %vm3357, %v3228, -3e+38
    %v3378 = vsel %vm3358, %v3080, -3e+38
    %v3379 = vsel %vm3358, %v3082, -3e+38
    %v3380 = vsel %vm3358, %v3157, -3e+38
    %v3381 = vsel %vm3358, %v3159, -3e+38
    %v3382 = vsel %vm3358, %v3233, -3e+38
    %v3383 = vsel %vm3359, %v3074, -3e+38
    %v3384 = vsel %vm3359, %v3076, -3e+38
    %v3385 = vsel %vm3359, %v3151, -3e+38
    %v3386 = vsel %vm3359, %v3153, -3e+38
    %v3387 = vsel %vm3359, %v3228, -3e+38
    %v3388 = vsel %vm3360, %v3080, -3e+38
    %v3389 = vsel %vm3360, %v3082, -3e+38
    %v3390 = vsel %vm3360, %v3157, -3e+38
    %v3391 = vsel %vm3360, %v3159, -3e+38
    %v3392 = vsel %vm3360, %v3233, -3e+38
    %v3393 = vsel %vm3361, %v3074, -3e+38
    %v3394 = vsel %vm3361, %v3076, -3e+38
    %v3395 = vsel %vm3361, %v3151, -3e+38
    %v3396 = vsel %vm3361, %v3153, -3e+38
    %v3397 = vsel %vm3361, %v3228, -3e+38
    %v3398 = vsel %vm3362, %v3080, -3e+38
    %v3399 = vsel %vm3362, %v3082, -3e+38
    %v3400 = vsel %vm3362, %v3157, -3e+38
    %v3401 = vsel %vm3362, %v3159, -3e+38
    %v3402 = vsel %vm3362, %v3233, -3e+38
    %v3403 = vsel %vm3363, %v3074, -3e+38
    %v3404 = vsel %vm3363, %v3076, -3e+38
    %v3405 = vsel %vm3363, %v3151, -3e+38
    %v3406 = vsel %vm3363, %v3153, -3e+38
    %v3407 = vsel %vm3363, %v3228, -3e+38
    %v3408 = vsel %vm3364, %v3080, -3e+38
    %v3409 = vsel %vm3364, %v3082, -3e+38
    %v3410 = vsel %vm3364, %v3157, -3e+38
    %v3411 = vsel %vm3364, %v3159, -3e+38
    %v3412 = vsel %vm3364, %v3233, -3e+38
    %v3413 = vsel %vm3365, %v3074, -3e+38
    %v3414 = vsel %vm3365, %v3076, -3e+38
    %v3415 = vsel %vm3365, %v3151, -3e+38
    %v3416 = vsel %vm3365, %v3153, -3e+38
    %v3417 = vsel %vm3365, %v3228, -3e+38
    %v3418 = vsel %vm3366, %v3080, -3e+38
    %v3419 = vsel %vm3366, %v3082, -3e+38
    %v3420 = vsel %vm3366, %v3157, -3e+38
    %v3421 = vsel %vm3366, %v3159, -3e+38
    %v3422 = vsel %vm3366, %v3233, -3e+38
    %v3423 = vsel %vm3367, %v3074, -3e+38
    %v3424 = vsel %vm3367, %v3076, -3e+38
    %v3425 = vsel %vm3367, %v3151, -3e+38
    %v3426 = vsel %vm3367, %v3153, -3e+38
    %v3427 = vsel %vm3367, %v3228, -3e+38
    %v3428 = vsel %vm3368, %v3080, -3e+38
    %v3429 = vsel %vm3368, %v3082, -3e+38
    %v3430 = vsel %vm3368, %v3157, -3e+38
    %v3431 = vsel %vm3368, %v3159, -3e+38
    %v3432 = vsel %vm3368, %v3233, -3e+38
    %v3433 = vsel %vm3369, %v3074, -3e+38
    %v3434 = vsel %vm3369, %v3076, -3e+38
    %v3435 = vsel %vm3369, %v3151, -3e+38
    %v3436 = vsel %vm3369, %v3153, -3e+38
    %v3437 = vsel %vm3369, %v3228, -3e+38
    %v3438 = vsel %vm3370, %v3080, -3e+38
    %v3439 = vsel %vm3370, %v3082, -3e+38
    %v3440 = vsel %vm3370, %v3157, -3e+38
    %v3441 = vsel %vm3370, %v3159, -3e+38
    %v3442 = vsel %vm3370, %v3233, -3e+38
    %v3443 = vsel %vm3371, %v3074, -3e+38
    %v3444 = vsel %vm3371, %v3076, -3e+38
    %v3445 = vsel %vm3371, %v3151, -3e+38
    %v3446 = vsel %vm3371, %v3153, -3e+38
    %v3447 = vsel %vm3371, %v3228, -3e+38
    %v3448 = vsel %vm3372, %v3080, -3e+38
    %v3449 = vsel %vm3372, %v3082, -3e+38
    %v3450 = vsel %vm3372, %v3157, -3e+38
    %v3451 = vsel %vm3372, %v3159, -3e+38
    %v3452 = vsel %vm3372, %v3233, -3e+38
    %v3453 = vmax.f32 %v3373, %v3378
    %v3454 = vrot.slane %v3453, 4
    %v3455 = vmax.f32 %v3453, %v3454
    %v3456 = vrot.slane %v3455, 2
    %v3457 = vmax.f32 %v3455, %v3456
    %v3458 = vrot.slane %v3457, 1
    %v3459 = vmax.f32 %v3457, %v3458
    %v3460 = vmax.f32 %v3374, %v3379
    %v3461 = vrot.slane %v3460, 4
    %v3462 = vmax.f32 %v3460, %v3461
    %v3463 = vrot.slane %v3462, 2
    %v3464 = vmax.f32 %v3462, %v3463
    %v3465 = vrot.slane %v3464, 1
    %v3466 = vmax.f32 %v3464, %v3465
    %v3467 = vmax.f32 %v3375, %v3380
    %v3468 = vrot.slane %v3467, 4
    %v3469 = vmax.f32 %v3467, %v3468
    %v3470 = vrot.slane %v3469, 2
    %v3471 = vmax.f32 %v3469, %v3470
    %v3472 = vrot.slane %v3471, 1
    %v3473 = vmax.f32 %v3471, %v3472
    %v3474 = vmax.f32 %v3376, %v3381
    %v3475 = vrot.slane %v3474, 4
    %v3476 = vmax.f32 %v3474, %v3475
    %v3477 = vrot.slane %v3476, 2
    %v3478 = vmax.f32 %v3476, %v3477
    %v3479 = vrot.slane %v3478, 1
    %v3480 = vmax.f32 %v3478, %v3479
    %v3481 = vmax.f32 %v3377, %v3382
    %v3482 = vrot.slane %v3481, 4
    %v3483 = vmax.f32 %v3481, %v3482
    %v3484 = vrot.slane %v3483, 2
    %v3485 = vmax.f32 %v3483, %v3484
    %v3486 = vrot.slane %v3485, 1
    %v3487 = vmax.f32 %v3485, %v3486
    %v3488 = vmax.f32 %v3383, %v3388
    %v3489 = vrot.slane %v3488, 4
    %v3490 = vmax.f32 %v3488, %v3489
    %v3491 = vrot.slane %v3490, 2
    %v3492 = vmax.f32 %v3490, %v3491
    %v3493 = vrot.slane %v3492, 1
    %v3494 = vmax.f32 %v3492, %v3493
    %v3495 = vmax.f32 %v3384, %v3389
    %v3496 = vrot.slane %v3495, 4
    %v3497 = vmax.f32 %v3495, %v3496
    %v3498 = vrot.slane %v3497, 2
    %v3499 = vmax.f32 %v3497, %v3498
    %v3500 = vrot.slane %v3499, 1
    %v3501 = vmax.f32 %v3499, %v3500
    %v3502 = vmax.f32 %v3385, %v3390
    %v3503 = vrot.slane %v3502, 4
    %v3504 = vmax.f32 %v3502, %v3503
    %v3505 = vrot.slane %v3504, 2
    %v3506 = vmax.f32 %v3504, %v3505
    %v3507 = vrot.slane %v3506, 1
    %v3508 = vmax.f32 %v3506, %v3507
    %v3509 = vmax.f32 %v3386, %v3391
    %v3510 = vrot.slane %v3509, 4
    %v3511 = vmax.f32 %v3509, %v3510
    %v3512 = vrot.slane %v3511, 2
    %v3513 = vmax.f32 %v3511, %v3512
    %v3514 = vrot.slane %v3513, 1
    %v3515 = vmax.f32 %v3513, %v3514
    %v3516 = vmax.f32 %v3387, %v3392
    %v3517 = vrot.slane %v3516, 4
    %v3518 = vmax.f32 %v3516, %v3517
    %v3519 = vrot.slane %v3518, 2
    %v3520 = vmax.f32 %v3518, %v3519
    %v3521 = vrot.slane %v3520, 1
    %v3522 = vmax.f32 %v3520, %v3521
    %v3523 = vmax.f32 %v3393, %v3398
    %v3524 = vrot.slane %v3523, 4
    %v3525 = vmax.f32 %v3523, %v3524
    %v3526 = vrot.slane %v3525, 2
    %v3527 = vmax.f32 %v3525, %v3526
    %v3528 = vrot.slane %v3527, 1
    %v3529 = vmax.f32 %v3527, %v3528
    %v3530 = vmax.f32 %v3394, %v3399
    %v3531 = vrot.slane %v3530, 4
    %v3532 = vmax.f32 %v3530, %v3531
    %v3533 = vrot.slane %v3532, 2
    %v3534 = vmax.f32 %v3532, %v3533
    %v3535 = vrot.slane %v3534, 1
    %v3536 = vmax.f32 %v3534, %v3535
    %v3537 = vmax.f32 %v3395, %v3400
    %v3538 = vrot.slane %v3537, 4
    %v3539 = vmax.f32 %v3537, %v3538
    %v3540 = vrot.slane %v3539, 2
    %v3541 = vmax.f32 %v3539, %v3540
    %v3542 = vrot.slane %v3541, 1
    %v3543 = vmax.f32 %v3541, %v3542
    %v3544 = vmax.f32 %v3396, %v3401
    %v3545 = vrot.slane %v3544, 4
    %v3546 = vmax.f32 %v3544, %v3545
    %v3547 = vrot.slane %v3546, 2
    %v3548 = vmax.f32 %v3546, %v3547
    %v3549 = vrot.slane %v3548, 1
    %v3550 = vmax.f32 %v3548, %v3549
    %v3551 = vmax.f32 %v3397, %v3402
    %v3552 = vrot.slane %v3551, 4
    %v3553 = vmax.f32 %v3551, %v3552
    %v3554 = vrot.slane %v3553, 2
    %v3555 = vmax.f32 %v3553, %v3554
    %v3556 = vrot.slane %v3555, 1
    %v3557 = vmax.f32 %v3555, %v3556
    %v3558 = vmax.f32 %v3403, %v3408
    %v3559 = vrot.slane %v3558, 4
    %v3560 = vmax.f32 %v3558, %v3559
    %v3561 = vrot.slane %v3560, 2
    %v3562 = vmax.f32 %v3560, %v3561
    %v3563 = vrot.slane %v3562, 1
    %v3564 = vmax.f32 %v3562, %v3563
    %v3565 = vmax.f32 %v3404, %v3409
    %v3566 = vrot.slane %v3565, 4
    %v3567 = vmax.f32 %v3565, %v3566
    %v3568 = vrot.slane %v3567, 2
    %v3569 = vmax.f32 %v3567, %v3568
    %v3570 = vrot.slane %v3569, 1
    %v3571 = vmax.f32 %v3569, %v3570
    %v3572 = vmax.f32 %v3405, %v3410
    %v3573 = vrot.slane %v3572, 4
    %v3574 = vmax.f32 %v3572, %v3573
    %v3575 = vrot.slane %v3574, 2
    %v3576 = vmax.f32 %v3574, %v3575
    %v3577 = vrot.slane %v3576, 1
    %v3578 = vmax.f32 %v3576, %v3577
    %v3579 = vmax.f32 %v3406, %v3411
    %v3580 = vrot.slane %v3579, 4
    %v3581 = vmax.f32 %v3579, %v3580
    %v3582 = vrot.slane %v3581, 2
    %v3583 = vmax.f32 %v3581, %v3582
    %v3584 = vrot.slane %v3583, 1
    %v3585 = vmax.f32 %v3583, %v3584
    %v3586 = vmax.f32 %v3407, %v3412
    %v3587 = vrot.slane %v3586, 4
    %v3588 = vmax.f32 %v3586, %v3587
    %v3589 = vrot.slane %v3588, 2
    %v3590 = vmax.f32 %v3588, %v3589
    %v3591 = vrot.slane %v3590, 1
    %v3592 = vmax.f32 %v3590, %v3591
    %v3593 = vmax.f32 %v3413, %v3418
    %v3594 = vrot.slane %v3593, 4
    %v3595 = vmax.f32 %v3593, %v3594
    %v3596 = vrot.slane %v3595, 2
    %v3597 = vmax.f32 %v3595, %v3596
    %v3598 = vrot.slane %v3597, 1
    %v3599 = vmax.f32 %v3597, %v3598
    %v3600 = vmax.f32 %v3414, %v3419
    %v3601 = vrot.slane %v3600, 4
    %v3602 = vmax.f32 %v3600, %v3601
    %v3603 = vrot.slane %v3602, 2
    %v3604 = vmax.f32 %v3602, %v3603
    %v3605 = vrot.slane %v3604, 1
    %v3606 = vmax.f32 %v3604, %v3605
    %v3607 = vmax.f32 %v3415, %v3420
    %v3608 = vrot.slane %v3607, 4
    %v3609 = vmax.f32 %v3607, %v3608
    %v3610 = vrot.slane %v3609, 2
    %v3611 = vmax.f32 %v3609, %v3610
    %v3612 = vrot.slane %v3611, 1
    %v3613 = vmax.f32 %v3611, %v3612
    %v3614 = vmax.f32 %v3416, %v3421
    %v3615 = vrot.slane %v3614, 4
    %v3616 = vmax.f32 %v3614, %v3615
    %v3617 = vrot.slane %v3616, 2
    %v3618 = vmax.f32 %v3616, %v3617
    %v3619 = vrot.slane %v3618, 1
    %v3620 = vmax.f32 %v3618, %v3619
    %v3621 = vmax.f32 %v3417, %v3422
    %v3622 = vrot.slane %v3621, 4
    %v3623 = vmax.f32 %v3621, %v3622
    %v3624 = vrot.slane %v3623, 2
    %v3625 = vmax.f32 %v3623, %v3624
    %v3626 = vrot.slane %v3625, 1
    %v3627 = vmax.f32 %v3625, %v3626
    %v3628 = vmax.f32 %v3423, %v3428
    %v3629 = vrot.slane %v3628, 4
    %v3630 = vmax.f32 %v3628, %v3629
    %v3631 = vrot.slane %v3630, 2
    %v3632 = vmax.f32 %v3630, %v3631
    %v3633 = vrot.slane %v3632, 1
    %v3634 = vmax.f32 %v3632, %v3633
    %v3635 = vmax.f32 %v3424, %v3429
    %v3636 = vrot.slane %v3635, 4
    %v3637 = vmax.f32 %v3635, %v3636
    %v3638 = vrot.slane %v3637, 2
    %v3639 = vmax.f32 %v3637, %v3638
    %v3640 = vrot.slane %v3639, 1
    %v3641 = vmax.f32 %v3639, %v3640
    %v3642 = vmax.f32 %v3425, %v3430
    %v3643 = vrot.slane %v3642, 4
    %v3644 = vmax.f32 %v3642, %v3643
    %v3645 = vrot.slane %v3644, 2
    %v3646 = vmax.f32 %v3644, %v3645
    %v3647 = vrot.slane %v3646, 1
    %v3648 = vmax.f32 %v3646, %v3647
    %v3649 = vmax.f32 %v3426, %v3431
    %v3650 = vrot.slane %v3649, 4
    %v3651 = vmax.f32 %v3649, %v3650
    %v3652 = vrot.slane %v3651, 2
    %v3653 = vmax.f32 %v3651, %v3652
    %v3654 = vrot.slane %v3653, 1
    %v3655 = vmax.f32 %v3653, %v3654
    %v3656 = vmax.f32 %v3427, %v3432
    %v3657 = vrot.slane %v3656, 4
    %v3658 = vmax.f32 %v3656, %v3657
    %v3659 = vrot.slane %v3658, 2
    %v3660 = vmax.f32 %v3658, %v3659
    %v3661 = vrot.slane %v3660, 1
    %v3662 = vmax.f32 %v3660, %v3661
    %v3663 = vmax.f32 %v3433, %v3438
    %v3664 = vrot.slane %v3663, 4
    %v3665 = vmax.f32 %v3663, %v3664
    %v3666 = vrot.slane %v3665, 2
    %v3667 = vmax.f32 %v3665, %v3666
    %v3668 = vrot.slane %v3667, 1
    %v3669 = vmax.f32 %v3667, %v3668
    %v3670 = vmax.f32 %v3434, %v3439
    %v3671 = vrot.slane %v3670, 4
    %v3672 = vmax.f32 %v3670, %v3671
    %v3673 = vrot.slane %v3672, 2
    %v3674 = vmax.f32 %v3672, %v3673
    %v3675 = vrot.slane %v3674, 1
    %v3676 = vmax.f32 %v3674, %v3675
    %v3677 = vmax.f32 %v3435, %v3440
    %v3678 = vrot.slane %v3677, 4
    %v3679 = vmax.f32 %v3677, %v3678
    %v3680 = vrot.slane %v3679, 2
    %v3681 = vmax.f32 %v3679, %v3680
    %v3682 = vrot.slane %v3681, 1
    %v3683 = vmax.f32 %v3681, %v3682
    %v3684 = vmax.f32 %v3436, %v3441
    %v3685 = vrot.slane %v3684, 4
    %v3686 = vmax.f32 %v3684, %v3685
    %v3687 = vrot.slane %v3686, 2
    %v3688 = vmax.f32 %v3686, %v3687
    %v3689 = vrot.slane %v3688, 1
    %v3690 = vmax.f32 %v3688, %v3689
    %v3691 = vmax.f32 %v3437, %v3442
    %v3692 = vrot.slane %v3691, 4
    %v3693 = vmax.f32 %v3691, %v3692
    %v3694 = vrot.slane %v3693, 2
    %v3695 = vmax.f32 %v3693, %v3694
    %v3696 = vrot.slane %v3695, 1
    %v3697 = vmax.f32 %v3695, %v3696
    %v3698 = vmax.f32 %v3443, %v3448
    %v3699 = vrot.slane %v3698, 4
    %v3700 = vmax.f32 %v3698, %v3699
    %v3701 = vrot.slane %v3700, 2
    %v3702 = vmax.f32 %v3700, %v3701
    %v3703 = vrot.slane %v3702, 1
    %v3704 = vmax.f32 %v3702, %v3703
    %v3705 = vmax.f32 %v3444, %v3449
    %v3706 = vrot.slane %v3705, 4
    %v3707 = vmax.f32 %v3705, %v3706
    %v3708 = vrot.slane %v3707, 2
    %v3709 = vmax.f32 %v3707, %v3708
    %v3710 = vrot.slane %v3709, 1
    %v3711 = vmax.f32 %v3709, %v3710
    %v3712 = vmax.f32 %v3445, %v3450
    %v3713 = vrot.slane %v3712, 4
    %v3714 = vmax.f32 %v3712, %v3713
    %v3715 = vrot.slane %v3714, 2
    %v3716 = vmax.f32 %v3714, %v3715
    %v3717 = vrot.slane %v3716, 1
    %v3718 = vmax.f32 %v3716, %v3717
    %v3719 = vmax.f32 %v3446, %v3451
    %v3720 = vrot.slane %v3719, 4
    %v3721 = vmax.f32 %v3719, %v3720
    %v3722 = vrot.slane %v3721, 2
    %v3723 = vmax.f32 %v3721, %v3722
    %v3724 = vrot.slane %v3723, 1
    %v3725 = vmax.f32 %v3723, %v3724
    %v3726 = vmax.f32 %v3447, %v3452
    %v3727 = vrot.slane %v3726, 4
    %v3728 = vmax.f32 %v3726, %v3727
    %v3729 = vrot.slane %v3728, 2
    %v3730 = vmax.f32 %v3728, %v3729
    %v3731 = vrot.slane %v3730, 1
    %v3732 = vmax.f32 %v3730, %v3731
    %v3733 = vsel %vm381, %v3236, 0.0
    %3734 = vadd.xlane.f32.xlu0 %v3733
    %v3735 = vpop.xlane.xlu0 %3734
    %vm3736 = vcmp.gt.f32.partialorder %v3735, 0.0
    %v3737 = vsel %vm3736, 1, 0
    %vm3738 = vcmp.eq.s32.totalorder %v3737, 1
    %vm3779 = vcmask 1041409
    %v3780 = vsel %vm3779, %v3494, %v3459
    %vm3781 = vcmask 1042434
    %v3782 = vsel %vm3781, %v3529, %v3780
    %vm3783 = vcmask 1043459
    %v3784 = vsel %vm3783, %v3564, %v3782
    %vm3785 = vcmask 1044484
    %v3786 = vsel %vm3785, %v3599, %v3784
    %vm3787 = vcmask 1045509
    %v3788 = vsel %vm3787, %v3634, %v3786
    %vm3789 = vcmask 1046534
    %v3790 = vsel %vm3789, %v3669, %v3788
    %vm3791 = vcmask 1047559
    %v3792 = vsel %vm3791, %v3704, %v3790
    %v3793 = vsel %vm3779, %v3501, %v3466
    %v3794 = vsel %vm3781, %v3536, %v3793
    %v3795 = vsel %vm3783, %v3571, %v3794
    %v3796 = vsel %vm3785, %v3606, %v3795
    %v3797 = vsel %vm3787, %v3641, %v3796
    %v3798 = vsel %vm3789, %v3676, %v3797
    %v3799 = vsel %vm3791, %v3711, %v3798
    %v3800 = vsel %vm3779, %v3508, %v3473
    %v3801 = vsel %vm3781, %v3543, %v3800
    %v3802 = vsel %vm3783, %v3578, %v3801
    %v3803 = vsel %vm3785, %v3613, %v3802
    %v3804 = vsel %vm3787, %v3648, %v3803
    %v3805 = vsel %vm3789, %v3683, %v3804
    %v3806 = vsel %vm3791, %v3718, %v3805
    %v3807 = vsel %vm3779, %v3515, %v3480
    %v3808 = vsel %vm3781, %v3550, %v3807
    %v3809 = vsel %vm3783, %v3585, %v3808
    %v3810 = vsel %vm3785, %v3620, %v3809
    %v3811 = vsel %vm3787, %v3655, %v3810
    %v3812 = vsel %vm3789, %v3690, %v3811
    %v3813 = vsel %vm3791, %v3725, %v3812
    %v3814 = vsel %vm3779, %v3522, %v3487
    %v3815 = vsel %vm3781, %v3557, %v3814
    %v3816 = vsel %vm3783, %v3592, %v3815
    %v3817 = vsel %vm3785, %v3627, %v3816
    %v3818 = vsel %vm3787, %v3662, %v3817
    %v3819 = vsel %vm3789, %v3697, %v3818
    %v3820 = vsel %vm3791, %v3732, %v3819
    %v3826 = vsel %vm3738, %v3792, 0.0
    %v3827 = vsel %vm3738, %v3799, 0.0
    %v3828 = vsel %vm3738, %v3806, 0.0
    %v3829 = vsel %vm3738, %v3813, 0.0
    %v3830 = vsel %vm3738, %v3820, 0.0
    %v3831 = vpack.c.bf16 %v3826, %v3826
    %v3832 = vpack.c.bf16 %v3827, %v3827
    %v3833 = vpack.c.bf16 %v3828, %v3828
    %v3834 = vpack.c.bf16 %v3829, %v3829
    %v3835 = vpack.c.bf16 %v3830, %v3830
    %v3836 = vld [vmem:[#allocation25] sm:$0xff]
    %v3837 = vld [vmem:[#allocation25 + $0x8] sm:$0xff]
    %v3838 = vld [vmem:[#allocation25 + $0x10] sm:$0xff]
    %v3839 = vld [vmem:[#allocation25 + $0x18] sm:$0xff]
    %v3840 = vld [vmem:[#allocation25 + $0x20] sm:$0xff]
    %v3841 = vld [vmem:[#allocation25 + $0x28] sm:$0xff]
    %v3842 = vld [vmem:[#allocation25 + $0x30] sm:$0xff]
    %v3843 = vld [vmem:[#allocation25 + $0x38] sm:$0xff]
    %v3844 = vld [vmem:[#allocation25 + $0x40] sm:$0xff]
    %v3845 = vld [vmem:[#allocation25 + $0x48] sm:$0xff]
    %v3846 = vld [vmem:[#allocation25 + $0x50] sm:$0xff]
    %v3847 = vld [vmem:[#allocation25 + $0x58] sm:$0xff]
    %v3848 = vld [vmem:[#allocation25 + $0x60] sm:$0xff]
    %v3849 = vld [vmem:[#allocation25 + $0x68] sm:$0xff]
    %v3850 = vld [vmem:[#allocation25 + $0x70] sm:$0xff]
    %v3851 = vld [vmem:[#allocation25 + $0x78] sm:$0xff]
    %v3852 = vld [vmem:[#allocation25 + $0x80] sm:$0xff]
    %v3853 = vld [vmem:[#allocation25 + $0x88] sm:$0xff]
    %v3854 = vld [vmem:[#allocation25 + $0x90] sm:$0xff]
    %v3855 = vld [vmem:[#allocation25 + $0x98] sm:$0xff]
    %v3856 = vld [vmem:[#allocation25 + $0xa0] sm:$0xff]
    %v3857 = vld [vmem:[#allocation25 + $0xa8] sm:$0xff]
    %v3858 = vld [vmem:[#allocation25 + $0xb0] sm:$0xff]
    %v3859 = vld [vmem:[#allocation25 + $0xb8] sm:$0xff]
    %v3860 = vld [vmem:[#allocation25 + $0xc0] sm:$0xff]
    %v3861 = vld [vmem:[#allocation25 + $0xc8] sm:$0xff]
    %v3862 = vld [vmem:[#allocation25 + $0xd0] sm:$0xff]
    %v3863 = vld [vmem:[#allocation25 + $0xd8] sm:$0xff]
    %v3864 = vld [vmem:[#allocation25 + $0xe0] sm:$0xff]
    %v3865 = vld [vmem:[#allocation25 + $0xe8] sm:$0xff]
    %v3866 = vld [vmem:[#allocation25 + $0xf0] sm:$0xff]
    %v3867 = vld [vmem:[#allocation25 + $0xf8] sm:$0xff]
    %v3868 = vld [vmem:[#allocation25 + $0x100] sm:$0xff]
    %v3869 = vld [vmem:[#allocation25 + $0x108] sm:$0xff]
    %v3870 = vld [vmem:[#allocation25 + $0x110] sm:$0xff]
    %v3871 = vld [vmem:[#allocation25 + $0x118] sm:$0xff]
    %v3872 = vld [vmem:[#allocation25 + $0x120] sm:$0xff]
    %v3873 = vld [vmem:[#allocation25 + $0x128] sm:$0xff]
    %v3874 = vld [vmem:[#allocation25 + $0x130] sm:$0xff]
    %v3875 = vld [vmem:[#allocation25 + $0x138] sm:$0xff]
    %v3876 = vld [vmem:[#allocation25 + $0x140] sm:$0xff]
    %v3877 = vld [vmem:[#allocation25 + $0x148] sm:$0xff]
    %v3878 = vld [vmem:[#allocation25 + $0x150] sm:$0xff]
    %v3879 = vld [vmem:[#allocation25 + $0x158] sm:$0xff]
    %v3880 = vld [vmem:[#allocation25 + $0x160] sm:$0xff]
    %v3881 = vld [vmem:[#allocation25 + $0x168] sm:$0xff]
    %v3882 = vld [vmem:[#allocation25 + $0x170] sm:$0xff]
    %v3883 = vld [vmem:[#allocation25 + $0x178] sm:$0xff]
    %v3884 = vld [vmem:[#allocation25 + $0x180] sm:$0xff]
    %v3885 = vld [vmem:[#allocation25 + $0x188] sm:$0xff]
    %v3886 = vld [vmem:[#allocation25 + $0x190] sm:$0xff]
    %v3887 = vld [vmem:[#allocation25 + $0x198] sm:$0xff]
    %v3888 = vld [vmem:[#allocation25 + $0x1a0] sm:$0xff]
    %v3889 = vld [vmem:[#allocation25 + $0x1a8] sm:$0xff]
    %v3890 = vld [vmem:[#allocation25 + $0x1b0] sm:$0xff]
    %v3891 = vld [vmem:[#allocation25 + $0x1b8] sm:$0xff]
    %v3892 = vld [vmem:[#allocation25 + $0x1c0] sm:$0xff]
    %v3893 = vld [vmem:[#allocation25 + $0x1c8] sm:$0xff]
    %v3894 = vld [vmem:[#allocation25 + $0x1d0] sm:$0xff]
    %v3895 = vld [vmem:[#allocation25 + $0x1d8] sm:$0xff]
    %v3896 = vld [vmem:[#allocation25 + $0x1e0] sm:$0xff]
    %v3897 = vld [vmem:[#allocation25 + $0x1e8] sm:$0xff]
    %v3898 = vld [vmem:[#allocation25 + $0x1f0] sm:$0xff]
    %v3899 = vld [vmem:[#allocation25 + $0x1f8] sm:$0xff]
    %v3900 = vld [vmem:[#allocation25 + $0x200] sm:$0xff]
    %v3901 = vld [vmem:[#allocation25 + $0x208] sm:$0xff]
    %v3902 = vld [vmem:[#allocation25 + $0x210] sm:$0xff]
    %v3903 = vld [vmem:[#allocation25 + $0x218] sm:$0xff]
    %v3904 = vld [vmem:[#allocation25 + $0x220] sm:$0xff]
    %v3905 = vld [vmem:[#allocation25 + $0x228] sm:$0xff]
    %v3906 = vld [vmem:[#allocation25 + $0x230] sm:$0xff]
    %v3907 = vld [vmem:[#allocation25 + $0x238] sm:$0xff]
    %v3908 = vld [vmem:[#allocation25 + $0x240] sm:$0xff]
    %v3909 = vld [vmem:[#allocation25 + $0x248] sm:$0xff]
    %v3910 = vld [vmem:[#allocation25 + $0x250] sm:$0xff]
    %v3911 = vld [vmem:[#allocation25 + $0x258] sm:$0xff]
    %v3912 = vld [vmem:[#allocation25 + $0x260] sm:$0xff]
    %v3913 = vld [vmem:[#allocation25 + $0x268] sm:$0xff]
    %v3914 = vld [vmem:[#allocation25 + $0x270] sm:$0xff]
    %v3915 = vld [vmem:[#allocation25 + $0x278] sm:$0xff]
    %v3916 = vld [vmem:[#allocation25 + $0x280] sm:$0xff]
    %v3917 = vld [vmem:[#allocation25 + $0x288] sm:$0xff]
    %v3918 = vld [vmem:[#allocation25 + $0x290] sm:$0xff]
    %v3919 = vld [vmem:[#allocation25 + $0x298] sm:$0xff]
    %v3920 = vld [vmem:[#allocation25 + $0x2a0] sm:$0xff]
    %v3921 = vld [vmem:[#allocation25 + $0x2a8] sm:$0xff]
    %v3922 = vld [vmem:[#allocation25 + $0x2b0] sm:$0xff]
    %v3923 = vld [vmem:[#allocation25 + $0x2b8] sm:$0xff]
    %v3924 = vld [vmem:[#allocation25 + $0x2c0] sm:$0xff]
    %v3925 = vld [vmem:[#allocation25 + $0x2c8] sm:$0xff]
    %v3926 = vld [vmem:[#allocation25 + $0x2d0] sm:$0xff]
    %v3927 = vld [vmem:[#allocation25 + $0x2d8] sm:$0xff]
    %v3928 = vld [vmem:[#allocation25 + $0x2e0] sm:$0xff]
    %v3929 = vld [vmem:[#allocation25 + $0x2e8] sm:$0xff]
    %v3930 = vld [vmem:[#allocation25 + $0x2f0] sm:$0xff]
    %v3931 = vld [vmem:[#allocation25 + $0x2f8] sm:$0xff]
    %v3932 = vld [vmem:[#allocation25 + $0x300] sm:$0xff]
    %v3933 = vld [vmem:[#allocation25 + $0x308] sm:$0xff]
    %v3934 = vld [vmem:[#allocation25 + $0x310] sm:$0xff]
    %v3935 = vld [vmem:[#allocation25 + $0x318] sm:$0xff]
    %v3936 = vld [vmem:[#allocation25 + $0x320] sm:$0xff]
    %v3937 = vld [vmem:[#allocation25 + $0x328] sm:$0xff]
    %v3938 = vld [vmem:[#allocation25 + $0x330] sm:$0xff]
    %v3939 = vld [vmem:[#allocation25 + $0x338] sm:$0xff]
    %v3940 = vld [vmem:[#allocation25 + $0x340] sm:$0xff]
    %v3941 = vld [vmem:[#allocation25 + $0x348] sm:$0xff]
    %v3942 = vld [vmem:[#allocation25 + $0x350] sm:$0xff]
    %v3943 = vld [vmem:[#allocation25 + $0x358] sm:$0xff]
    %v3944 = vld [vmem:[#allocation25 + $0x360] sm:$0xff]
    %v3945 = vld [vmem:[#allocation25 + $0x368] sm:$0xff]
    %v3946 = vld [vmem:[#allocation25 + $0x370] sm:$0xff]
    %v3947 = vld [vmem:[#allocation25 + $0x378] sm:$0xff]
    %v3948 = vld [vmem:[#allocation25 + $0x380] sm:$0xff]
    %v3949 = vld [vmem:[#allocation25 + $0x388] sm:$0xff]
    %v3950 = vld [vmem:[#allocation25 + $0x390] sm:$0xff]
    %v3951 = vld [vmem:[#allocation25 + $0x398] sm:$0xff]
    %v3952 = vld [vmem:[#allocation25 + $0x3a0] sm:$0xff]
    %v3953 = vld [vmem:[#allocation25 + $0x3a8] sm:$0xff]
    %v3954 = vld [vmem:[#allocation25 + $0x3b0] sm:$0xff]
    %v3955 = vld [vmem:[#allocation25 + $0x3b8] sm:$0xff]
    %v3956 = vld [vmem:[#allocation25 + $0x3c0] sm:$0xff]
    %v3957 = vld [vmem:[#allocation25 + $0x3c8] sm:$0xff]
    %v3958 = vld [vmem:[#allocation25 + $0x3d0] sm:$0xff]
    %v3959 = vld [vmem:[#allocation25 + $0x3d8] sm:$0xff]
    %v3960 = vld [vmem:[#allocation25 + $0x3e0] sm:$0xff]
    %v3961 = vld [vmem:[#allocation25 + $0x3e8] sm:$0xff]
    %v3962 = vld [vmem:[#allocation25 + $0x3f0] sm:$0xff]
    %v3963 = vld [vmem:[#allocation25 + $0x3f8] sm:$0xff]
    %v3964 = vld [vmem:[#allocation25 + $0x400] sm:$0xff]
    %v3965 = vld [vmem:[#allocation25 + $0x408] sm:$0xff]
    %v3966 = vld [vmem:[#allocation25 + $0x410] sm:$0xff]
    %v3967 = vld [vmem:[#allocation25 + $0x418] sm:$0xff]
    %v3968 = vld [vmem:[#allocation25 + $0x420] sm:$0xff]
    %v3969 = vld [vmem:[#allocation25 + $0x428] sm:$0xff]
    %v3970 = vld [vmem:[#allocation25 + $0x430] sm:$0xff]
    %v3971 = vld [vmem:[#allocation25 + $0x438] sm:$0xff]
    %v3972 = vld [vmem:[#allocation25 + $0x440] sm:$0xff]
    %v3973 = vld [vmem:[#allocation25 + $0x448] sm:$0xff]
    %v3974 = vld [vmem:[#allocation25 + $0x450] sm:$0xff]
    %v3975 = vld [vmem:[#allocation25 + $0x458] sm:$0xff]
    %v3976 = vld [vmem:[#allocation25 + $0x460] sm:$0xff]
    %v3977 = vld [vmem:[#allocation25 + $0x468] sm:$0xff]
    %v3978 = vld [vmem:[#allocation25 + $0x470] sm:$0xff]
    %v3979 = vld [vmem:[#allocation25 + $0x478] sm:$0xff]
    %v3980 = vld [vmem:[#allocation25 + $0x480] sm:$0xff]
    %v3981 = vld [vmem:[#allocation25 + $0x488] sm:$0xff]
    %v3982 = vld [vmem:[#allocation25 + $0x490] sm:$0xff]
    %v3983 = vld [vmem:[#allocation25 + $0x498] sm:$0xff]
    %v3984 = vld [vmem:[#allocation25 + $0x4a0] sm:$0xff]
    %v3985 = vld [vmem:[#allocation25 + $0x4a8] sm:$0xff]
    %v3986 = vld [vmem:[#allocation25 + $0x4b0] sm:$0xff]
    %v3987 = vld [vmem:[#allocation25 + $0x4b8] sm:$0xff]
    %v3988 = vld [vmem:[#allocation25 + $0x4c0] sm:$0xff]
    %v3989 = vld [vmem:[#allocation25 + $0x4c8] sm:$0xff]
    %v3990 = vld [vmem:[#allocation25 + $0x4d0] sm:$0xff]
    %v3991 = vld [vmem:[#allocation25 + $0x4d8] sm:$0xff]
    %v3992 = vld [vmem:[#allocation25 + $0x4e0] sm:$0xff]
    %v3993 = vld [vmem:[#allocation25 + $0x4e8] sm:$0xff]
    %v3994 = vld [vmem:[#allocation25 + $0x4f0] sm:$0xff]
    %v3995 = vld [vmem:[#allocation25 + $0x4f8] sm:$0xff]
    %v3996 = vld [vmem:[#allocation25 + $0x500] sm:$0xff]
    %v3997 = vld [vmem:[#allocation25 + $0x508] sm:$0xff]
    %v3998 = vld [vmem:[#allocation25 + $0x510] sm:$0xff]
    %v3999 = vld [vmem:[#allocation25 + $0x518] sm:$0xff]
    %v4000 = vld [vmem:[#allocation25 + $0x520] sm:$0xff]
    %v4001 = vld [vmem:[#allocation25 + $0x528] sm:$0xff]
    %v4002 = vld [vmem:[#allocation25 + $0x530] sm:$0xff]
    %v4003 = vld [vmem:[#allocation25 + $0x538] sm:$0xff]
    %v4004 = vld [vmem:[#allocation25 + $0x540] sm:$0xff]
    %v4005 = vld [vmem:[#allocation25 + $0x548] sm:$0xff]
    %v4006 = vld [vmem:[#allocation25 + $0x550] sm:$0xff]
    %v4007 = vld [vmem:[#allocation25 + $0x558] sm:$0xff]
    %v4008 = vld [vmem:[#allocation25 + $0x560] sm:$0xff]
    %v4009 = vld [vmem:[#allocation25 + $0x568] sm:$0xff]
    %v4010 = vld [vmem:[#allocation25 + $0x570] sm:$0xff]
    %v4011 = vld [vmem:[#allocation25 + $0x578] sm:$0xff]
    %v4012 = vld [vmem:[#allocation25 + $0x580] sm:$0xff]
    %v4013 = vld [vmem:[#allocation25 + $0x588] sm:$0xff]
    %v4014 = vld [vmem:[#allocation25 + $0x590] sm:$0xff]
    %v4015 = vld [vmem:[#allocation25 + $0x598] sm:$0xff]
    %v4016 = vld [vmem:[#allocation25 + $0x5a0] sm:$0xff]
    %v4017 = vld [vmem:[#allocation25 + $0x5a8] sm:$0xff]
    %v4018 = vld [vmem:[#allocation25 + $0x5b0] sm:$0xff]
    %v4019 = vld [vmem:[#allocation25 + $0x5b8] sm:$0xff]
    %v4020 = vld [vmem:[#allocation25 + $0x5c0] sm:$0xff]
    %v4021 = vld [vmem:[#allocation25 + $0x5c8] sm:$0xff]
    %v4022 = vld [vmem:[#allocation25 + $0x5d0] sm:$0xff]
    %v4023 = vld [vmem:[#allocation25 + $0x5d8] sm:$0xff]
    %v4024 = vld [vmem:[#allocation25 + $0x5e0] sm:$0xff]
    %v4025 = vld [vmem:[#allocation25 + $0x5e8] sm:$0xff]
    %v4026 = vld [vmem:[#allocation25 + $0x5f0] sm:$0xff]
    %v4027 = vld [vmem:[#allocation25 + $0x5f8] sm:$0xff]
    %v4028 = vld [vmem:[#allocation25 + $0x600] sm:$0xff]
    %v4029 = vld [vmem:[#allocation25 + $0x608] sm:$0xff]
    %v4030 = vld [vmem:[#allocation25 + $0x610] sm:$0xff]
    %v4031 = vld [vmem:[#allocation25 + $0x618] sm:$0xff]
    %v4032 = vld [vmem:[#allocation25 + $0x620] sm:$0xff]
    %v4033 = vld [vmem:[#allocation25 + $0x628] sm:$0xff]
    %v4034 = vld [vmem:[#allocation25 + $0x630] sm:$0xff]
    %v4035 = vld [vmem:[#allocation25 + $0x638] sm:$0xff]
    %v4036 = vld [vmem:[#allocation25 + $0x640] sm:$0xff]
    %v4037 = vld [vmem:[#allocation25 + $0x648] sm:$0xff]
    %v4038 = vld [vmem:[#allocation25 + $0x650] sm:$0xff]
    %v4039 = vld [vmem:[#allocation25 + $0x658] sm:$0xff]
    %v4040 = vld [vmem:[#allocation25 + $0x660] sm:$0xff]
    %v4041 = vld [vmem:[#allocation25 + $0x668] sm:$0xff]
    %v4042 = vld [vmem:[#allocation25 + $0x670] sm:$0xff]
    %v4043 = vld [vmem:[#allocation25 + $0x678] sm:$0xff]
    %v4044 = vld [vmem:[#allocation25 + $0x680] sm:$0xff]
    %v4045 = vld [vmem:[#allocation25 + $0x688] sm:$0xff]
    %v4046 = vld [vmem:[#allocation25 + $0x690] sm:$0xff]
    %v4047 = vld [vmem:[#allocation25 + $0x698] sm:$0xff]
    %v4048 = vld [vmem:[#allocation25 + $0x6a0] sm:$0xff]
    %v4049 = vld [vmem:[#allocation25 + $0x6a8] sm:$0xff]
    %v4050 = vld [vmem:[#allocation25 + $0x6b0] sm:$0xff]
    %v4051 = vld [vmem:[#allocation25 + $0x6b8] sm:$0xff]
    %v4052 = vld [vmem:[#allocation25 + $0x6c0] sm:$0xff]
    %v4053 = vld [vmem:[#allocation25 + $0x6c8] sm:$0xff]
    %v4054 = vld [vmem:[#allocation25 + $0x6d0] sm:$0xff]
    %v4055 = vld [vmem:[#allocation25 + $0x6d8] sm:$0xff]
    %v4056 = vld [vmem:[#allocation25 + $0x6e0] sm:$0xff]
    %v4057 = vld [vmem:[#allocation25 + $0x6e8] sm:$0xff]
    %v4058 = vld [vmem:[#allocation25 + $0x6f0] sm:$0xff]
    %v4059 = vld [vmem:[#allocation25 + $0x6f8] sm:$0xff]
    %v4060 = vld [vmem:[#allocation25 + $0x700] sm:$0xff]
    %v4061 = vld [vmem:[#allocation25 + $0x708] sm:$0xff]
    %v4062 = vld [vmem:[#allocation25 + $0x710] sm:$0xff]
    %v4063 = vld [vmem:[#allocation25 + $0x718] sm:$0xff]
    %v4064 = vld [vmem:[#allocation25 + $0x720] sm:$0xff]
    %v4065 = vld [vmem:[#allocation25 + $0x728] sm:$0xff]
    %v4066 = vld [vmem:[#allocation25 + $0x730] sm:$0xff]
    %v4067 = vld [vmem:[#allocation25 + $0x738] sm:$0xff]
    %v4068 = vld [vmem:[#allocation25 + $0x740] sm:$0xff]
    %v4069 = vld [vmem:[#allocation25 + $0x748] sm:$0xff]
    %v4070 = vld [vmem:[#allocation25 + $0x750] sm:$0xff]
    %v4071 = vld [vmem:[#allocation25 + $0x758] sm:$0xff]
    %v4072 = vld [vmem:[#allocation25 + $0x760] sm:$0xff]
    %v4073 = vld [vmem:[#allocation25 + $0x768] sm:$0xff]
    %v4074 = vld [vmem:[#allocation25 + $0x770] sm:$0xff]
    %v4075 = vld [vmem:[#allocation25 + $0x778] sm:$0xff]
    %v4076 = vld [vmem:[#allocation25 + $0x780] sm:$0xff]
    %v4077 = vld [vmem:[#allocation25 + $0x788] sm:$0xff]
    %v4078 = vld [vmem:[#allocation25 + $0x790] sm:$0xff]
    %v4079 = vld [vmem:[#allocation25 + $0x798] sm:$0xff]
    %v4080 = vld [vmem:[#allocation25 + $0x7a0] sm:$0xff]
    %v4081 = vld [vmem:[#allocation25 + $0x7a8] sm:$0xff]
    %v4082 = vld [vmem:[#allocation25 + $0x7b0] sm:$0xff]
    %v4083 = vld [vmem:[#allocation25 + $0x7b8] sm:$0xff]
    %v4084 = vld [vmem:[#allocation25 + $0x7c0] sm:$0xff]
    %v4085 = vld [vmem:[#allocation25 + $0x7c8] sm:$0xff]
    %v4086 = vld [vmem:[#allocation25 + $0x7d0] sm:$0xff]
    %v4087 = vld [vmem:[#allocation25 + $0x7d8] sm:$0xff]
    %v4088 = vld [vmem:[#allocation25 + $0x7e0] sm:$0xff]
    %v4089 = vld [vmem:[#allocation25 + $0x7e8] sm:$0xff]
    %v4090 = vld [vmem:[#allocation25 + $0x7f0] sm:$0xff]
    %v4091 = vld [vmem:[#allocation25 + $0x7f8] sm:$0xff]
    %v4092 = vld [vmem:[#allocation25 + $0x800] sm:$0xff]
    %v4093 = vld [vmem:[#allocation25 + $0x808] sm:$0xff]
    %v4094 = vld [vmem:[#allocation25 + $0x810] sm:$0xff]
    %v4095 = vld [vmem:[#allocation25 + $0x818] sm:$0xff]
    %v4096 = vld [vmem:[#allocation25 + $0x820] sm:$0xff]
    %v4097 = vld [vmem:[#allocation25 + $0x828] sm:$0xff]
    %v4098 = vld [vmem:[#allocation25 + $0x830] sm:$0xff]
    %v4099 = vld [vmem:[#allocation25 + $0x838] sm:$0xff]
    %v4100 = vld [vmem:[#allocation25 + $0x840] sm:$0xff]
    %v4101 = vld [vmem:[#allocation25 + $0x848] sm:$0xff]
    %v4102 = vld [vmem:[#allocation25 + $0x850] sm:$0xff]
    %v4103 = vld [vmem:[#allocation25 + $0x858] sm:$0xff]
    %v4104 = vld [vmem:[#allocation25 + $0x860] sm:$0xff]
    %v4105 = vld [vmem:[#allocation25 + $0x868] sm:$0xff]
    %v4106 = vld [vmem:[#allocation25 + $0x870] sm:$0xff]
    %v4107 = vld [vmem:[#allocation25 + $0x878] sm:$0xff]
    %v4108 = vld [vmem:[#allocation25 + $0x880] sm:$0xff]
    %v4109 = vld [vmem:[#allocation25 + $0x888] sm:$0xff]
    %v4110 = vld [vmem:[#allocation25 + $0x890] sm:$0xff]
    %v4111 = vld [vmem:[#allocation25 + $0x898] sm:$0xff]
    %v4112 = vld [vmem:[#allocation25 + $0x8a0] sm:$0xff]
    %v4113 = vld [vmem:[#allocation25 + $0x8a8] sm:$0xff]
    %v4114 = vld [vmem:[#allocation25 + $0x8b0] sm:$0xff]
    %v4115 = vld [vmem:[#allocation25 + $0x8b8] sm:$0xff]
    %v4116 = vld [vmem:[#allocation25 + $0x8c0] sm:$0xff]
    %v4117 = vld [vmem:[#allocation25 + $0x8c8] sm:$0xff]
    %v4118 = vld [vmem:[#allocation25 + $0x8d0] sm:$0xff]
    %v4119 = vld [vmem:[#allocation25 + $0x8d8] sm:$0xff]
    %v4120 = vld [vmem:[#allocation25 + $0x8e0] sm:$0xff]
    %v4121 = vld [vmem:[#allocation25 + $0x8e8] sm:$0xff]
    %v4122 = vld [vmem:[#allocation25 + $0x8f0] sm:$0xff]
    %v4123 = vld [vmem:[#allocation25 + $0x8f8] sm:$0xff]
    %v4124 = vld [vmem:[#allocation25 + $0x900] sm:$0xff]
    %v4125 = vld [vmem:[#allocation25 + $0x908] sm:$0xff]
    %v4126 = vld [vmem:[#allocation25 + $0x910] sm:$0xff]
    %v4127 = vld [vmem:[#allocation25 + $0x918] sm:$0xff]
    %v4128 = vld [vmem:[#allocation25 + $0x920] sm:$0xff]
    %v4129 = vld [vmem:[#allocation25 + $0x928] sm:$0xff]
    %v4130 = vld [vmem:[#allocation25 + $0x930] sm:$0xff]
    %v4131 = vld [vmem:[#allocation25 + $0x938] sm:$0xff]
    %v4132 = vld [vmem:[#allocation25 + $0x940] sm:$0xff]
    %v4133 = vld [vmem:[#allocation25 + $0x948] sm:$0xff]
    %v4134 = vld [vmem:[#allocation25 + $0x950] sm:$0xff]
    %v4135 = vld [vmem:[#allocation25 + $0x958] sm:$0xff]
    %v4136 = vld [vmem:[#allocation25 + $0x960] sm:$0xff]
    %v4137 = vld [vmem:[#allocation25 + $0x968] sm:$0xff]
    %v4138 = vld [vmem:[#allocation25 + $0x970] sm:$0xff]
    %v4139 = vld [vmem:[#allocation25 + $0x978] sm:$0xff]
    %v4140 = vld [vmem:[#allocation25 + $0x980] sm:$0xff]
    %v4141 = vld [vmem:[#allocation25 + $0x988] sm:$0xff]
    %v4142 = vld [vmem:[#allocation25 + $0x990] sm:$0xff]
    %v4143 = vld [vmem:[#allocation25 + $0x998] sm:$0xff]
    %v4144 = vld [vmem:[#allocation25 + $0x9a0] sm:$0xff]
    %v4145 = vld [vmem:[#allocation25 + $0x9a8] sm:$0xff]
    %v4146 = vld [vmem:[#allocation25 + $0x9b0] sm:$0xff]
    %v4147 = vld [vmem:[#allocation25 + $0x9b8] sm:$0xff]
    %v4148 = vld [vmem:[#allocation25 + $0x9c0] sm:$0xff]
    %v4149 = vld [vmem:[#allocation25 + $0x9c8] sm:$0xff]
    %v4150 = vld [vmem:[#allocation25 + $0x9d0] sm:$0xff]
    %v4151 = vld [vmem:[#allocation25 + $0x9d8] sm:$0xff]
    %v4152 = vld [vmem:[#allocation25 + $0x9e0] sm:$0xff]
    %v4153 = vld [vmem:[#allocation25 + $0x9e8] sm:$0xff]
    %v4154 = vld [vmem:[#allocation25 + $0x9f0] sm:$0xff]
    %v4155 = vld [vmem:[#allocation25 + $0x9f8] sm:$0xff]
    %v4156 = vld [vmem:[#allocation26] sm:$0xff]
    %v4158 = vlaneseq
    %v4159 = vshrl.u32 %v4158, 7
    %v4160 = vsub.s32 0, %v4159
    %v4161 = vrot.slane %v4156, %v4160
    %v4162 = vlaneseq
    %v4163 = vshrl.u32 %v4162, 7
    %v4164 = vsub.s32 1, %v4163
    %v4165 = vrot.slane %v4156, %v4164
    %v4166 = vlaneseq
    %v4167 = vshrl.u32 %v4166, 7
    %v4168 = vsub.s32 2, %v4167
    %v4169 = vrot.slane %v4156, %v4168
    %v4170 = vlaneseq
    %v4171 = vshrl.u32 %v4170, 7
    %v4172 = vsub.s32 3, %v4171
    %v4173 = vrot.slane %v4156, %v4172
    %v4174 = vlaneseq
    %v4175 = vshrl.u32 %v4174, 7
    %v4176 = vsub.s32 4, %v4175
    %v4177 = vrot.slane %v4156, %v4176
    %v4178 = vlaneseq
    %v4179 = vshrl.u32 %v4178, 7
    %v4180 = vsub.s32 5, %v4179
    %v4181 = vrot.slane %v4156, %v4180
    %v4182 = vlaneseq
    %v4183 = vshrl.u32 %v4182, 7
    %v4184 = vsub.s32 6, %v4183
    %v4185 = vrot.slane %v4156, %v4184
    %v4186 = vlaneseq
    %v4187 = vshrl.u32 %v4186, 7
    %v4188 = vsub.s32 7, %v4187
    %v4189 = vrot.slane %v4156, %v4188
    %v4518 = vunpack.c.l.b16 %v3836
    %v4519 = vunpack.c.h.b16 %v3836
    %v4520 = vunpack.c.l.b16 %v3837
    %v4521 = vunpack.c.h.b16 %v3837
    %v4522 = vunpack.c.l.b16 %v3838
    %v4523 = vunpack.c.h.b16 %v3838
    %v4524 = vunpack.c.l.b16 %v3839
    %v4525 = vunpack.c.h.b16 %v3839
    %v4526 = vunpack.c.l.b16 %v3840
    %v4527 = vunpack.c.h.b16 %v3840
    %v4528 = vunpack.c.l.b16 %v3841
    %v4529 = vunpack.c.h.b16 %v3841
    %v4530 = vunpack.c.l.b16 %v3842
    %v4531 = vunpack.c.h.b16 %v3842
    %v4532 = vunpack.c.l.b16 %v3843
    %v4533 = vunpack.c.h.b16 %v3843
    %v4534 = vunpack.c.l.b16 %v3844
    %v4535 = vunpack.c.h.b16 %v3844
    %v4536 = vunpack.c.l.b16 %v3845
    %v4537 = vunpack.c.h.b16 %v3845
    %v4538 = vunpack.c.l.b16 %v3846
    %v4539 = vunpack.c.h.b16 %v3846
    %v4540 = vunpack.c.l.b16 %v3847
    %v4541 = vunpack.c.h.b16 %v3847
    %v4542 = vunpack.c.l.b16 %v3848
    %v4543 = vunpack.c.h.b16 %v3848
    %v4544 = vunpack.c.l.b16 %v3849
    %v4545 = vunpack.c.h.b16 %v3849
    %v4546 = vunpack.c.l.b16 %v3850
    %v4547 = vunpack.c.h.b16 %v3850
    %v4548 = vunpack.c.l.b16 %v3851
    %v4549 = vunpack.c.h.b16 %v3851
    %v4550 = vunpack.c.l.b16 %v3852
    %v4551 = vunpack.c.h.b16 %v3852
    %v4552 = vunpack.c.l.b16 %v3853
    %v4553 = vunpack.c.h.b16 %v3853
    %v4554 = vunpack.c.l.b16 %v3854
    %v4555 = vunpack.c.h.b16 %v3854
    %v4556 = vunpack.c.l.b16 %v3855
    %v4557 = vunpack.c.h.b16 %v3855
    %v4558 = vunpack.c.l.b16 %v3856
    %v4559 = vunpack.c.h.b16 %v3856
    %v4560 = vunpack.c.l.b16 %v3857
    %v4561 = vunpack.c.h.b16 %v3857
    %v4562 = vunpack.c.l.b16 %v3858
    %v4563 = vunpack.c.h.b16 %v3858
    %v4564 = vunpack.c.l.b16 %v3859
    %v4565 = vunpack.c.h.b16 %v3859
    %v4566 = vunpack.c.l.b16 %v3860
    %v4567 = vunpack.c.h.b16 %v3860
    %v4568 = vunpack.c.l.b16 %v3861
    %v4569 = vunpack.c.h.b16 %v3861
    %v4570 = vunpack.c.l.b16 %v3862
    %v4571 = vunpack.c.h.b16 %v3862
    %v4572 = vunpack.c.l.b16 %v3863
    %v4573 = vunpack.c.h.b16 %v3863
    %v4574 = vunpack.c.l.b16 %v3864
    %v4575 = vunpack.c.h.b16 %v3864
    %v4576 = vunpack.c.l.b16 %v3865
    %v4577 = vunpack.c.h.b16 %v3865
    %v4578 = vunpack.c.l.b16 %v3866
    %v4579 = vunpack.c.h.b16 %v3866
    %v4580 = vunpack.c.l.b16 %v3867
    %v4581 = vunpack.c.h.b16 %v3867
    %v4582 = vunpack.c.l.b16 %v3868
    %v4583 = vunpack.c.h.b16 %v3868
    %v4584 = vunpack.c.l.b16 %v3869
    %v4585 = vunpack.c.h.b16 %v3869
    %v4586 = vunpack.c.l.b16 %v3870
    %v4587 = vunpack.c.h.b16 %v3870
    %v4588 = vunpack.c.l.b16 %v3871
    %v4589 = vunpack.c.h.b16 %v3871
    %v4590 = vunpack.c.l.b16 %v3872
    %v4591 = vunpack.c.h.b16 %v3872
    %v4592 = vunpack.c.l.b16 %v3873
    %v4593 = vunpack.c.h.b16 %v3873
    %v4594 = vunpack.c.l.b16 %v3874
    %v4595 = vunpack.c.h.b16 %v3874
    %v4596 = vunpack.c.l.b16 %v3875
    %v4597 = vunpack.c.h.b16 %v3875
    %v4598 = vunpack.c.l.b16 %v3876
    %v4599 = vunpack.c.h.b16 %v3876
    %v4600 = vunpack.c.l.b16 %v3877
    %v4601 = vunpack.c.h.b16 %v3877
    %v4602 = vunpack.c.l.b16 %v3878
    %v4603 = vunpack.c.h.b16 %v3878
    %v4604 = vunpack.c.l.b16 %v3879
    %v4605 = vunpack.c.h.b16 %v3879
    %v4606 = vunpack.c.l.b16 %v3880
    %v4607 = vunpack.c.h.b16 %v3880
    %v4608 = vunpack.c.l.b16 %v3881
    %v4609 = vunpack.c.h.b16 %v3881
    %v4610 = vunpack.c.l.b16 %v3882
    %v4611 = vunpack.c.h.b16 %v3882
    %v4612 = vunpack.c.l.b16 %v3883
    %v4613 = vunpack.c.h.b16 %v3883
    %v4614 = vunpack.c.l.b16 %v3884
    %v4615 = vunpack.c.h.b16 %v3884
    %v4616 = vunpack.c.l.b16 %v3885
    %v4617 = vunpack.c.h.b16 %v3885
    %v4618 = vunpack.c.l.b16 %v3886
    %v4619 = vunpack.c.h.b16 %v3886
    %v4620 = vunpack.c.l.b16 %v3887
    %v4621 = vunpack.c.h.b16 %v3887
    %v4622 = vunpack.c.l.b16 %v3888
    %v4623 = vunpack.c.h.b16 %v3888
    %v4624 = vunpack.c.l.b16 %v3889
    %v4625 = vunpack.c.h.b16 %v3889
    %v4626 = vunpack.c.l.b16 %v3890
    %v4627 = vunpack.c.h.b16 %v3890
    %v4628 = vunpack.c.l.b16 %v3891
    %v4629 = vunpack.c.h.b16 %v3891
    %v4630 = vunpack.c.l.b16 %v3892
    %v4631 = vunpack.c.h.b16 %v3892
    %v4632 = vunpack.c.l.b16 %v3893
    %v4633 = vunpack.c.h.b16 %v3893
    %v4634 = vunpack.c.l.b16 %v3894
    %v4635 = vunpack.c.h.b16 %v3894
    %v4636 = vunpack.c.l.b16 %v3895
    %v4637 = vunpack.c.h.b16 %v3895
    %v4638 = vunpack.c.l.b16 %v3896
    %v4639 = vunpack.c.h.b16 %v3896
    %v4640 = vunpack.c.l.b16 %v3897
    %v4641 = vunpack.c.h.b16 %v3897
    %v4642 = vunpack.c.l.b16 %v3898
    %v4643 = vunpack.c.h.b16 %v3898
    %v4644 = vunpack.c.l.b16 %v3899
    %v4645 = vunpack.c.h.b16 %v3899
    %v4646 = vunpack.c.l.b16 %v3900
    %v4647 = vunpack.c.h.b16 %v3900
    %v4648 = vunpack.c.l.b16 %v3901
    %v4649 = vunpack.c.h.b16 %v3901
    %v4650 = vunpack.c.l.b16 %v3902
    %v4651 = vunpack.c.h.b16 %v3902
    %v4652 = vunpack.c.l.b16 %v3903
    %v4653 = vunpack.c.h.b16 %v3903
    %v4654 = vunpack.c.l.b16 %v3904
    %v4655 = vunpack.c.h.b16 %v3904
    %v4656 = vunpack.c.l.b16 %v3905
    %v4657 = vunpack.c.h.b16 %v3905
    %v4658 = vunpack.c.l.b16 %v3906
    %v4659 = vunpack.c.h.b16 %v3906
    %v4660 = vunpack.c.l.b16 %v3907
    %v4661 = vunpack.c.h.b16 %v3907
    %v4662 = vunpack.c.l.b16 %v3908
    %v4663 = vunpack.c.h.b16 %v3908
    %v4664 = vunpack.c.l.b16 %v3909
    %v4665 = vunpack.c.h.b16 %v3909
    %v4666 = vunpack.c.l.b16 %v3910
    %v4667 = vunpack.c.h.b16 %v3910
    %v4668 = vunpack.c.l.b16 %v3911
    %v4669 = vunpack.c.h.b16 %v3911
    %v4670 = vunpack.c.l.b16 %v3912
    %v4671 = vunpack.c.h.b16 %v3912
    %v4672 = vunpack.c.l.b16 %v3913
    %v4673 = vunpack.c.h.b16 %v3913
    %v4674 = vunpack.c.l.b16 %v3914
    %v4675 = vunpack.c.h.b16 %v3914
    %v4676 = vunpack.c.l.b16 %v3915
    %v4677 = vunpack.c.h.b16 %v3915
    %v4678 = vunpack.c.l.b16 %v3916
    %v4679 = vunpack.c.h.b16 %v3916
    %v4680 = vunpack.c.l.b16 %v3917
    %v4681 = vunpack.c.h.b16 %v3917
    %v4682 = vunpack.c.l.b16 %v3918
    %v4683 = vunpack.c.h.b16 %v3918
    %v4684 = vunpack.c.l.b16 %v3919
    %v4685 = vunpack.c.h.b16 %v3919
    %v4686 = vunpack.c.l.b16 %v3920
    %v4687 = vunpack.c.h.b16 %v3920
    %v4688 = vunpack.c.l.b16 %v3921
    %v4689 = vunpack.c.h.b16 %v3921
    %v4690 = vunpack.c.l.b16 %v3922
    %v4691 = vunpack.c.h.b16 %v3922
    %v4692 = vunpack.c.l.b16 %v3923
    %v4693 = vunpack.c.h.b16 %v3923
    %v4694 = vunpack.c.l.b16 %v3924
    %v4695 = vunpack.c.h.b16 %v3924
    %v4696 = vunpack.c.l.b16 %v3925
    %v4697 = vunpack.c.h.b16 %v3925
    %v4698 = vunpack.c.l.b16 %v3926
    %v4699 = vunpack.c.h.b16 %v3926
    %v4700 = vunpack.c.l.b16 %v3927
    %v4701 = vunpack.c.h.b16 %v3927
    %v4702 = vunpack.c.l.b16 %v3928
    %v4703 = vunpack.c.h.b16 %v3928
    %v4704 = vunpack.c.l.b16 %v3929
    %v4705 = vunpack.c.h.b16 %v3929
    %v4706 = vunpack.c.l.b16 %v3930
    %v4707 = vunpack.c.h.b16 %v3930
    %v4708 = vunpack.c.l.b16 %v3931
    %v4709 = vunpack.c.h.b16 %v3931
    %v4710 = vunpack.c.l.b16 %v3932
    %v4711 = vunpack.c.h.b16 %v3932
    %v4712 = vunpack.c.l.b16 %v3933
    %v4713 = vunpack.c.h.b16 %v3933
    %v4714 = vunpack.c.l.b16 %v3934
    %v4715 = vunpack.c.h.b16 %v3934
    %v4716 = vunpack.c.l.b16 %v3935
    %v4717 = vunpack.c.h.b16 %v3935
    %v4718 = vunpack.c.l.b16 %v3936
    %v4719 = vunpack.c.h.b16 %v3936
    %v4720 = vunpack.c.l.b16 %v3937
    %v4721 = vunpack.c.h.b16 %v3937
    %v4722 = vunpack.c.l.b16 %v3938
    %v4723 = vunpack.c.h.b16 %v3938
    %v4724 = vunpack.c.l.b16 %v3939
    %v4725 = vunpack.c.h.b16 %v3939
    %v4726 = vunpack.c.l.b16 %v3940
    %v4727 = vunpack.c.h.b16 %v3940
    %v4728 = vunpack.c.l.b16 %v3941
    %v4729 = vunpack.c.h.b16 %v3941
    %v4730 = vunpack.c.l.b16 %v3942
    %v4731 = vunpack.c.h.b16 %v3942
    %v4732 = vunpack.c.l.b16 %v3943
    %v4733 = vunpack.c.h.b16 %v3943
    %v4734 = vunpack.c.l.b16 %v3944
    %v4735 = vunpack.c.h.b16 %v3944
    %v4736 = vunpack.c.l.b16 %v3945
    %v4737 = vunpack.c.h.b16 %v3945
    %v4738 = vunpack.c.l.b16 %v3946
    %v4739 = vunpack.c.h.b16 %v3946
    %v4740 = vunpack.c.l.b16 %v3947
    %v4741 = vunpack.c.h.b16 %v3947
    %v4742 = vunpack.c.l.b16 %v3948
    %v4743 = vunpack.c.h.b16 %v3948
    %v4744 = vunpack.c.l.b16 %v3949
    %v4745 = vunpack.c.h.b16 %v3949
    %v4746 = vunpack.c.l.b16 %v3950
    %v4747 = vunpack.c.h.b16 %v3950
    %v4748 = vunpack.c.l.b16 %v3951
    %v4749 = vunpack.c.h.b16 %v3951
    %v4750 = vunpack.c.l.b16 %v3952
    %v4751 = vunpack.c.h.b16 %v3952
    %v4752 = vunpack.c.l.b16 %v3953
    %v4753 = vunpack.c.h.b16 %v3953
    %v4754 = vunpack.c.l.b16 %v3954
    %v4755 = vunpack.c.h.b16 %v3954
    %v4756 = vunpack.c.l.b16 %v3955
    %v4757 = vunpack.c.h.b16 %v3955
    %v4758 = vunpack.c.l.b16 %v3956
    %v4759 = vunpack.c.h.b16 %v3956
    %v4760 = vunpack.c.l.b16 %v3957
    %v4761 = vunpack.c.h.b16 %v3957
    %v4762 = vunpack.c.l.b16 %v3958
    %v4763 = vunpack.c.h.b16 %v3958
    %v4764 = vunpack.c.l.b16 %v3959
    %v4765 = vunpack.c.h.b16 %v3959
    %v4766 = vunpack.c.l.b16 %v3960
    %v4767 = vunpack.c.h.b16 %v3960
    %v4768 = vunpack.c.l.b16 %v3961
    %v4769 = vunpack.c.h.b16 %v3961
    %v4770 = vunpack.c.l.b16 %v3962
    %v4771 = vunpack.c.h.b16 %v3962
    %v4772 = vunpack.c.l.b16 %v3963
    %v4773 = vunpack.c.h.b16 %v3963
    %v4774 = vunpack.c.l.b16 %v3964
    %v4775 = vunpack.c.h.b16 %v3964
    %v4776 = vunpack.c.l.b16 %v3965
    %v4777 = vunpack.c.h.b16 %v3965
    %v4778 = vunpack.c.l.b16 %v3966
    %v4779 = vunpack.c.h.b16 %v3966
    %v4780 = vunpack.c.l.b16 %v3967
    %v4781 = vunpack.c.h.b16 %v3967
    %v4782 = vunpack.c.l.b16 %v3968
    %v4783 = vunpack.c.h.b16 %v3968
    %v4784 = vunpack.c.l.b16 %v3969
    %v4785 = vunpack.c.h.b16 %v3969
    %v4786 = vunpack.c.l.b16 %v3970
    %v4787 = vunpack.c.h.b16 %v3970
    %v4788 = vunpack.c.l.b16 %v3971
    %v4789 = vunpack.c.h.b16 %v3971
    %v4790 = vunpack.c.l.b16 %v3972
    %v4791 = vunpack.c.h.b16 %v3972
    %v4792 = vunpack.c.l.b16 %v3973
    %v4793 = vunpack.c.h.b16 %v3973
    %v4794 = vunpack.c.l.b16 %v3974
    %v4795 = vunpack.c.h.b16 %v3974
    %v4796 = vunpack.c.l.b16 %v3975
    %v4797 = vunpack.c.h.b16 %v3975
    %v4798 = vunpack.c.l.b16 %v3976
    %v4799 = vunpack.c.h.b16 %v3976
    %v4800 = vunpack.c.l.b16 %v3977
    %v4801 = vunpack.c.h.b16 %v3977
    %v4802 = vunpack.c.l.b16 %v3978
    %v4803 = vunpack.c.h.b16 %v3978
    %v4804 = vunpack.c.l.b16 %v3979
    %v4805 = vunpack.c.h.b16 %v3979
    %v4806 = vunpack.c.l.b16 %v3980
    %v4807 = vunpack.c.h.b16 %v3980
    %v4808 = vunpack.c.l.b16 %v3981
    %v4809 = vunpack.c.h.b16 %v3981
    %v4810 = vunpack.c.l.b16 %v3982
    %v4811 = vunpack.c.h.b16 %v3982
    %v4812 = vunpack.c.l.b16 %v3983
    %v4813 = vunpack.c.h.b16 %v3983
    %v4814 = vunpack.c.l.b16 %v3984
    %v4815 = vunpack.c.h.b16 %v3984
    %v4816 = vunpack.c.l.b16 %v3985
    %v4817 = vunpack.c.h.b16 %v3985
    %v4818 = vunpack.c.l.b16 %v3986
    %v4819 = vunpack.c.h.b16 %v3986
    %v4820 = vunpack.c.l.b16 %v3987
    %v4821 = vunpack.c.h.b16 %v3987
    %v4822 = vunpack.c.l.b16 %v3988
    %v4823 = vunpack.c.h.b16 %v3988
    %v4824 = vunpack.c.l.b16 %v3989
    %v4825 = vunpack.c.h.b16 %v3989
    %v4826 = vunpack.c.l.b16 %v3990
    %v4827 = vunpack.c.h.b16 %v3990
    %v4828 = vunpack.c.l.b16 %v3991
    %v4829 = vunpack.c.h.b16 %v3991
    %v4830 = vunpack.c.l.b16 %v3992
    %v4831 = vunpack.c.h.b16 %v3992
    %v4832 = vunpack.c.l.b16 %v3993
    %v4833 = vunpack.c.h.b16 %v3993
    %v4834 = vunpack.c.l.b16 %v3994
    %v4835 = vunpack.c.h.b16 %v3994
    %v4836 = vunpack.c.l.b16 %v3995
    %v4837 = vunpack.c.h.b16 %v3995
    %v4838 = vunpack.c.l.b16 %v3996
    %v4839 = vunpack.c.h.b16 %v3996
    %v4840 = vunpack.c.l.b16 %v3997
    %v4841 = vunpack.c.h.b16 %v3997
    %v4842 = vunpack.c.l.b16 %v3998
    %v4843 = vunpack.c.h.b16 %v3998
    %v4844 = vunpack.c.l.b16 %v3999
    %v4845 = vunpack.c.h.b16 %v3999
    %v4846 = vunpack.c.l.b16 %v4000
    %v4847 = vunpack.c.h.b16 %v4000
    %v4848 = vunpack.c.l.b16 %v4001
    %v4849 = vunpack.c.h.b16 %v4001
    %v4850 = vunpack.c.l.b16 %v4002
    %v4851 = vunpack.c.h.b16 %v4002
    %v4852 = vunpack.c.l.b16 %v4003
    %v4853 = vunpack.c.h.b16 %v4003
    %v4854 = vunpack.c.l.b16 %v4004
    %v4855 = vunpack.c.h.b16 %v4004
    %v4856 = vunpack.c.l.b16 %v4005
    %v4857 = vunpack.c.h.b16 %v4005
    %v4858 = vunpack.c.l.b16 %v4006
    %v4859 = vunpack.c.h.b16 %v4006
    %v4860 = vunpack.c.l.b16 %v4007
    %v4861 = vunpack.c.h.b16 %v4007
    %v4862 = vunpack.c.l.b16 %v4008
    %v4863 = vunpack.c.h.b16 %v4008
    %v4864 = vunpack.c.l.b16 %v4009
    %v4865 = vunpack.c.h.b16 %v4009
    %v4866 = vunpack.c.l.b16 %v4010
    %v4867 = vunpack.c.h.b16 %v4010
    %v4868 = vunpack.c.l.b16 %v4011
    %v4869 = vunpack.c.h.b16 %v4011
    %v4870 = vunpack.c.l.b16 %v4012
    %v4871 = vunpack.c.h.b16 %v4012
    %v4872 = vunpack.c.l.b16 %v4013
    %v4873 = vunpack.c.h.b16 %v4013
    %v4874 = vunpack.c.l.b16 %v4014
    %v4875 = vunpack.c.h.b16 %v4014
    %v4876 = vunpack.c.l.b16 %v4015
    %v4877 = vunpack.c.h.b16 %v4015
    %v4878 = vunpack.c.l.b16 %v4016
    %v4879 = vunpack.c.h.b16 %v4016
    %v4880 = vunpack.c.l.b16 %v4017
    %v4881 = vunpack.c.h.b16 %v4017
    %v4882 = vunpack.c.l.b16 %v4018
    %v4883 = vunpack.c.h.b16 %v4018
    %v4884 = vunpack.c.l.b16 %v4019
    %v4885 = vunpack.c.h.b16 %v4019
    %v4886 = vunpack.c.l.b16 %v4020
    %v4887 = vunpack.c.h.b16 %v4020
    %v4888 = vunpack.c.l.b16 %v4021
    %v4889 = vunpack.c.h.b16 %v4021
    %v4890 = vunpack.c.l.b16 %v4022
    %v4891 = vunpack.c.h.b16 %v4022
    %v4892 = vunpack.c.l.b16 %v4023
    %v4893 = vunpack.c.h.b16 %v4023
    %v4894 = vunpack.c.l.b16 %v4024
    %v4895 = vunpack.c.h.b16 %v4024
    %v4896 = vunpack.c.l.b16 %v4025
    %v4897 = vunpack.c.h.b16 %v4025
    %v4898 = vunpack.c.l.b16 %v4026
    %v4899 = vunpack.c.h.b16 %v4026
    %v4900 = vunpack.c.l.b16 %v4027
    %v4901 = vunpack.c.h.b16 %v4027
    %v4902 = vunpack.c.l.b16 %v4028
    %v4903 = vunpack.c.h.b16 %v4028
    %v4904 = vunpack.c.l.b16 %v4029
    %v4905 = vunpack.c.h.b16 %v4029
    %v4906 = vunpack.c.l.b16 %v4030
    %v4907 = vunpack.c.h.b16 %v4030
    %v4908 = vunpack.c.l.b16 %v4031
    %v4909 = vunpack.c.h.b16 %v4031
    %v4910 = vunpack.c.l.b16 %v4032
    %v4911 = vunpack.c.h.b16 %v4032
    %v4912 = vunpack.c.l.b16 %v4033
    %v4913 = vunpack.c.h.b16 %v4033
    %v4914 = vunpack.c.l.b16 %v4034
    %v4915 = vunpack.c.h.b16 %v4034
    %v4916 = vunpack.c.l.b16 %v4035
    %v4917 = vunpack.c.h.b16 %v4035
    %v4918 = vunpack.c.l.b16 %v4036
    %v4919 = vunpack.c.h.b16 %v4036
    %v4920 = vunpack.c.l.b16 %v4037
    %v4921 = vunpack.c.h.b16 %v4037
    %v4922 = vunpack.c.l.b16 %v4038
    %v4923 = vunpack.c.h.b16 %v4038
    %v4924 = vunpack.c.l.b16 %v4039
    %v4925 = vunpack.c.h.b16 %v4039
    %v4926 = vunpack.c.l.b16 %v4040
    %v4927 = vunpack.c.h.b16 %v4040
    %v4928 = vunpack.c.l.b16 %v4041
    %v4929 = vunpack.c.h.b16 %v4041
    %v4930 = vunpack.c.l.b16 %v4042
    %v4931 = vunpack.c.h.b16 %v4042
    %v4932 = vunpack.c.l.b16 %v4043
    %v4933 = vunpack.c.h.b16 %v4043
    %v4934 = vunpack.c.l.b16 %v4044
    %v4935 = vunpack.c.h.b16 %v4044
    %v4936 = vunpack.c.l.b16 %v4045
    %v4937 = vunpack.c.h.b16 %v4045
    %v4938 = vunpack.c.l.b16 %v4046
    %v4939 = vunpack.c.h.b16 %v4046
    %v4940 = vunpack.c.l.b16 %v4047
    %v4941 = vunpack.c.h.b16 %v4047
    %v4942 = vunpack.c.l.b16 %v4048
    %v4943 = vunpack.c.h.b16 %v4048
    %v4944 = vunpack.c.l.b16 %v4049
    %v4945 = vunpack.c.h.b16 %v4049
    %v4946 = vunpack.c.l.b16 %v4050
    %v4947 = vunpack.c.h.b16 %v4050
    %v4948 = vunpack.c.l.b16 %v4051
    %v4949 = vunpack.c.h.b16 %v4051
    %v4950 = vunpack.c.l.b16 %v4052
    %v4951 = vunpack.c.h.b16 %v4052
    %v4952 = vunpack.c.l.b16 %v4053
    %v4953 = vunpack.c.h.b16 %v4053
    %v4954 = vunpack.c.l.b16 %v4054
    %v4955 = vunpack.c.h.b16 %v4054
    %v4956 = vunpack.c.l.b16 %v4055
    %v4957 = vunpack.c.h.b16 %v4055
    %v4958 = vunpack.c.l.b16 %v4056
    %v4959 = vunpack.c.h.b16 %v4056
    %v4960 = vunpack.c.l.b16 %v4057
    %v4961 = vunpack.c.h.b16 %v4057
    %v4962 = vunpack.c.l.b16 %v4058
    %v4963 = vunpack.c.h.b16 %v4058
    %v4964 = vunpack.c.l.b16 %v4059
    %v4965 = vunpack.c.h.b16 %v4059
    %v4966 = vunpack.c.l.b16 %v4060
    %v4967 = vunpack.c.h.b16 %v4060
    %v4968 = vunpack.c.l.b16 %v4061
    %v4969 = vunpack.c.h.b16 %v4061
    %v4970 = vunpack.c.l.b16 %v4062
    %v4971 = vunpack.c.h.b16 %v4062
    %v4972 = vunpack.c.l.b16 %v4063
    %v4973 = vunpack.c.h.b16 %v4063
    %v4974 = vunpack.c.l.b16 %v4064
    %v4975 = vunpack.c.h.b16 %v4064
    %v4976 = vunpack.c.l.b16 %v4065
    %v4977 = vunpack.c.h.b16 %v4065
    %v4978 = vunpack.c.l.b16 %v4066
    %v4979 = vunpack.c.h.b16 %v4066
    %v4980 = vunpack.c.l.b16 %v4067
    %v4981 = vunpack.c.h.b16 %v4067
    %v4982 = vunpack.c.l.b16 %v4068
    %v4983 = vunpack.c.h.b16 %v4068
    %v4984 = vunpack.c.l.b16 %v4069
    %v4985 = vunpack.c.h.b16 %v4069
    %v4986 = vunpack.c.l.b16 %v4070
    %v4987 = vunpack.c.h.b16 %v4070
    %v4988 = vunpack.c.l.b16 %v4071
    %v4989 = vunpack.c.h.b16 %v4071
    %v4990 = vunpack.c.l.b16 %v4072
    %v4991 = vunpack.c.h.b16 %v4072
    %v4992 = vunpack.c.l.b16 %v4073
    %v4993 = vunpack.c.h.b16 %v4073
    %v4994 = vunpack.c.l.b16 %v4074
    %v4995 = vunpack.c.h.b16 %v4074
    %v4996 = vunpack.c.l.b16 %v4075
    %v4997 = vunpack.c.h.b16 %v4075
    %v4998 = vunpack.c.l.b16 %v4076
    %v4999 = vunpack.c.h.b16 %v4076
    %v5000 = vunpack.c.l.b16 %v4077
    %v5001 = vunpack.c.h.b16 %v4077
    %v5002 = vunpack.c.l.b16 %v4078
    %v5003 = vunpack.c.h.b16 %v4078
    %v5004 = vunpack.c.l.b16 %v4079
    %v5005 = vunpack.c.h.b16 %v4079
    %v5006 = vunpack.c.l.b16 %v4080
    %v5007 = vunpack.c.h.b16 %v4080
    %v5008 = vunpack.c.l.b16 %v4081
    %v5009 = vunpack.c.h.b16 %v4081
    %v5010 = vunpack.c.l.b16 %v4082
    %v5011 = vunpack.c.h.b16 %v4082
    %v5012 = vunpack.c.l.b16 %v4083
    %v5013 = vunpack.c.h.b16 %v4083
    %v5014 = vunpack.c.l.b16 %v4084
    %v5015 = vunpack.c.h.b16 %v4084
    %v5016 = vunpack.c.l.b16 %v4085
    %v5017 = vunpack.c.h.b16 %v4085
    %v5018 = vunpack.c.l.b16 %v4086
    %v5019 = vunpack.c.h.b16 %v4086
    %v5020 = vunpack.c.l.b16 %v4087
    %v5021 = vunpack.c.h.b16 %v4087
    %v5022 = vunpack.c.l.b16 %v4088
    %v5023 = vunpack.c.h.b16 %v4088
    %v5024 = vunpack.c.l.b16 %v4089
    %v5025 = vunpack.c.h.b16 %v4089
    %v5026 = vunpack.c.l.b16 %v4090
    %v5027 = vunpack.c.h.b16 %v4090
    %v5028 = vunpack.c.l.b16 %v4091
    %v5029 = vunpack.c.h.b16 %v4091
    %v5030 = vunpack.c.l.b16 %v4092
    %v5031 = vunpack.c.h.b16 %v4092
    %v5032 = vunpack.c.l.b16 %v4093
    %v5033 = vunpack.c.h.b16 %v4093
    %v5034 = vunpack.c.l.b16 %v4094
    %v5035 = vunpack.c.h.b16 %v4094
    %v5036 = vunpack.c.l.b16 %v4095
    %v5037 = vunpack.c.h.b16 %v4095
    %v5038 = vunpack.c.l.b16 %v4096
    %v5039 = vunpack.c.h.b16 %v4096
    %v5040 = vunpack.c.l.b16 %v4097
    %v5041 = vunpack.c.h.b16 %v4097
    %v5042 = vunpack.c.l.b16 %v4098
    %v5043 = vunpack.c.h.b16 %v4098
    %v5044 = vunpack.c.l.b16 %v4099
    %v5045 = vunpack.c.h.b16 %v4099
    %v5046 = vunpack.c.l.b16 %v4100
    %v5047 = vunpack.c.h.b16 %v4100
    %v5048 = vunpack.c.l.b16 %v4101
    %v5049 = vunpack.c.h.b16 %v4101
    %v5050 = vunpack.c.l.b16 %v4102
    %v5051 = vunpack.c.h.b16 %v4102
    %v5052 = vunpack.c.l.b16 %v4103
    %v5053 = vunpack.c.h.b16 %v4103
    %v5054 = vunpack.c.l.b16 %v4104
    %v5055 = vunpack.c.h.b16 %v4104
    %v5056 = vunpack.c.l.b16 %v4105
    %v5057 = vunpack.c.h.b16 %v4105
    %v5058 = vunpack.c.l.b16 %v4106
    %v5059 = vunpack.c.h.b16 %v4106
    %v5060 = vunpack.c.l.b16 %v4107
    %v5061 = vunpack.c.h.b16 %v4107
    %v5062 = vunpack.c.l.b16 %v4108
    %v5063 = vunpack.c.h.b16 %v4108
    %v5064 = vunpack.c.l.b16 %v4109
    %v5065 = vunpack.c.h.b16 %v4109
    %v5066 = vunpack.c.l.b16 %v4110
    %v5067 = vunpack.c.h.b16 %v4110
    %v5068 = vunpack.c.l.b16 %v4111
    %v5069 = vunpack.c.h.b16 %v4111
    %v5070 = vunpack.c.l.b16 %v4112
    %v5071 = vunpack.c.h.b16 %v4112
    %v5072 = vunpack.c.l.b16 %v4113
    %v5073 = vunpack.c.h.b16 %v4113
    %v5074 = vunpack.c.l.b16 %v4114
    %v5075 = vunpack.c.h.b16 %v4114
    %v5076 = vunpack.c.l.b16 %v4115
    %v5077 = vunpack.c.h.b16 %v4115
    %v5078 = vunpack.c.l.b16 %v4116
    %v5079 = vunpack.c.h.b16 %v4116
    %v5080 = vunpack.c.l.b16 %v4117
    %v5081 = vunpack.c.h.b16 %v4117
    %v5082 = vunpack.c.l.b16 %v4118
    %v5083 = vunpack.c.h.b16 %v4118
    %v5084 = vunpack.c.l.b16 %v4119
    %v5085 = vunpack.c.h.b16 %v4119
    %v5086 = vunpack.c.l.b16 %v4120
    %v5087 = vunpack.c.h.b16 %v4120
    %v5088 = vunpack.c.l.b16 %v4121
    %v5089 = vunpack.c.h.b16 %v4121
    %v5090 = vunpack.c.l.b16 %v4122
    %v5091 = vunpack.c.h.b16 %v4122
    %v5092 = vunpack.c.l.b16 %v4123
    %v5093 = vunpack.c.h.b16 %v4123
    %v5094 = vunpack.c.l.b16 %v4124
    %v5095 = vunpack.c.h.b16 %v4124
    %v5096 = vunpack.c.l.b16 %v4125
    %v5097 = vunpack.c.h.b16 %v4125
    %v5098 = vunpack.c.l.b16 %v4126
    %v5099 = vunpack.c.h.b16 %v4126
    %v5100 = vunpack.c.l.b16 %v4127
    %v5101 = vunpack.c.h.b16 %v4127
    %v5102 = vunpack.c.l.b16 %v4128
    %v5103 = vunpack.c.h.b16 %v4128
    %v5104 = vunpack.c.l.b16 %v4129
    %v5105 = vunpack.c.h.b16 %v4129
    %v5106 = vunpack.c.l.b16 %v4130
    %v5107 = vunpack.c.h.b16 %v4130
    %v5108 = vunpack.c.l.b16 %v4131
    %v5109 = vunpack.c.h.b16 %v4131
    %v5110 = vunpack.c.l.b16 %v4132
    %v5111 = vunpack.c.h.b16 %v4132
    %v5112 = vunpack.c.l.b16 %v4133
    %v5113 = vunpack.c.h.b16 %v4133
    %v5114 = vunpack.c.l.b16 %v4134
    %v5115 = vunpack.c.h.b16 %v4134
    %v5116 = vunpack.c.l.b16 %v4135
    %v5117 = vunpack.c.h.b16 %v4135
    %v5118 = vunpack.c.l.b16 %v4136
    %v5119 = vunpack.c.h.b16 %v4136
    %v5120 = vunpack.c.l.b16 %v4137
    %v5121 = vunpack.c.h.b16 %v4137
    %v5122 = vunpack.c.l.b16 %v4138
    %v5123 = vunpack.c.h.b16 %v4138
    %v5124 = vunpack.c.l.b16 %v4139
    %v5125 = vunpack.c.h.b16 %v4139
    %v5126 = vunpack.c.l.b16 %v4140
    %v5127 = vunpack.c.h.b16 %v4140
    %v5128 = vunpack.c.l.b16 %v4141
    %v5129 = vunpack.c.h.b16 %v4141
    %v5130 = vunpack.c.l.b16 %v4142
    %v5131 = vunpack.c.h.b16 %v4142
    %v5132 = vunpack.c.l.b16 %v4143
    %v5133 = vunpack.c.h.b16 %v4143
    %v5134 = vunpack.c.l.b16 %v4144
    %v5135 = vunpack.c.h.b16 %v4144
    %v5136 = vunpack.c.l.b16 %v4145
    %v5137 = vunpack.c.h.b16 %v4145
    %v5138 = vunpack.c.l.b16 %v4146
    %v5139 = vunpack.c.h.b16 %v4146
    %v5140 = vunpack.c.l.b16 %v4147
    %v5141 = vunpack.c.h.b16 %v4147
    %v5142 = vunpack.c.l.b16 %v4148
    %v5143 = vunpack.c.h.b16 %v4148
    %v5144 = vunpack.c.l.b16 %v4149
    %v5145 = vunpack.c.h.b16 %v4149
    %v5146 = vunpack.c.l.b16 %v4150
    %v5147 = vunpack.c.h.b16 %v4150
    %v5148 = vunpack.c.l.b16 %v4151
    %v5149 = vunpack.c.h.b16 %v4151
    %v5150 = vunpack.c.l.b16 %v4152
    %v5151 = vunpack.c.h.b16 %v4152
    %v5152 = vunpack.c.l.b16 %v4153
    %v5153 = vunpack.c.h.b16 %v4153
    %v5154 = vunpack.c.l.b16 %v4154
    %v5155 = vunpack.c.h.b16 %v4154
    %v5156 = vunpack.c.l.b16 %v4155
    %v5157 = vunpack.c.h.b16 %v4155
    %v5158 = vpack.c.b16 %v4526, %v4518
    %v5159 = vpack.c.b16 %v4527, %v4519
    %v5160 = vpack.c.b16 %v4528, %v4520
    %v5161 = vpack.c.b16 %v4529, %v4521
    %v5162 = vpack.c.b16 %v4530, %v4522
    %v5163 = vpack.c.b16 %v4531, %v4523
    %v5164 = vpack.c.b16 %v4532, %v4524
    %v5165 = vpack.c.b16 %v4533, %v4525
    %v5166 = vpack.c.b16 %v4542, %v4534
    %v5167 = vpack.c.b16 %v4543, %v4535
    %v5168 = vpack.c.b16 %v4544, %v4536
    %v5169 = vpack.c.b16 %v4545, %v4537
    %v5170 = vpack.c.b16 %v4546, %v4538
    %v5171 = vpack.c.b16 %v4547, %v4539
    %v5172 = vpack.c.b16 %v4548, %v4540
    %v5173 = vpack.c.b16 %v4549, %v4541
    %v5174 = vpack.c.b16 %v4558, %v4550
    %v5175 = vpack.c.b16 %v4559, %v4551
    %v5176 = vpack.c.b16 %v4560, %v4552
    %v5177 = vpack.c.b16 %v4561, %v4553
    %v5178 = vpack.c.b16 %v4562, %v4554
    %v5179 = vpack.c.b16 %v4563, %v4555
    %v5180 = vpack.c.b16 %v4564, %v4556
    %v5181 = vpack.c.b16 %v4565, %v4557
    %v5182 = vpack.c.b16 %v4574, %v4566
    %v5183 = vpack.c.b16 %v4575, %v4567
    %v5184 = vpack.c.b16 %v4576, %v4568
    %v5185 = vpack.c.b16 %v4577, %v4569
    %v5186 = vpack.c.b16 %v4578, %v4570
    %v5187 = vpack.c.b16 %v4579, %v4571
    %v5188 = vpack.c.b16 %v4580, %v4572
    %v5189 = vpack.c.b16 %v4581, %v4573
    %v5190 = vpack.c.b16 %v4590, %v4582
    %v5191 = vpack.c.b16 %v4591, %v4583
    %v5192 = vpack.c.b16 %v4592, %v4584
    %v5193 = vpack.c.b16 %v4593, %v4585
    %v5194 = vpack.c.b16 %v4594, %v4586
    %v5195 = vpack.c.b16 %v4595, %v4587
    %v5196 = vpack.c.b16 %v4596, %v4588
    %v5197 = vpack.c.b16 %v4597, %v4589
    %v5198 = vpack.c.b16 %v4606, %v4598
    %v5199 = vpack.c.b16 %v4607, %v4599
    %v5200 = vpack.c.b16 %v4608, %v4600
    %v5201 = vpack.c.b16 %v4609, %v4601
    %v5202 = vpack.c.b16 %v4610, %v4602
    %v5203 = vpack.c.b16 %v4611, %v4603
    %v5204 = vpack.c.b16 %v4612, %v4604
    %v5205 = vpack.c.b16 %v4613, %v4605
    %v5206 = vpack.c.b16 %v4622, %v4614
    %v5207 = vpack.c.b16 %v4623, %v4615
    %v5208 = vpack.c.b16 %v4624, %v4616
    %v5209 = vpack.c.b16 %v4625, %v4617
    %v5210 = vpack.c.b16 %v4626, %v4618
    %v5211 = vpack.c.b16 %v4627, %v4619
    %v5212 = vpack.c.b16 %v4628, %v4620
    %v5213 = vpack.c.b16 %v4629, %v4621
    %v5214 = vpack.c.b16 %v4638, %v4630
    %v5215 = vpack.c.b16 %v4639, %v4631
    %v5216 = vpack.c.b16 %v4640, %v4632
    %v5217 = vpack.c.b16 %v4641, %v4633
    %v5218 = vpack.c.b16 %v4642, %v4634
    %v5219 = vpack.c.b16 %v4643, %v4635
    %v5220 = vpack.c.b16 %v4644, %v4636
    %v5221 = vpack.c.b16 %v4645, %v4637
    %v5222 = vpack.c.b16 %v4654, %v4646
    %v5223 = vpack.c.b16 %v4655, %v4647
    %v5224 = vpack.c.b16 %v4656, %v4648
    %v5225 = vpack.c.b16 %v4657, %v4649
    %v5226 = vpack.c.b16 %v4658, %v4650
    %v5227 = vpack.c.b16 %v4659, %v4651
    %v5228 = vpack.c.b16 %v4660, %v4652
    %v5229 = vpack.c.b16 %v4661, %v4653
    %v5230 = vpack.c.b16 %v4670, %v4662
    %v5231 = vpack.c.b16 %v4671, %v4663
    %v5232 = vpack.c.b16 %v4672, %v4664
    %v5233 = vpack.c.b16 %v4673, %v4665
    %v5234 = vpack.c.b16 %v4674, %v4666
    %v5235 = vpack.c.b16 %v4675, %v4667
    %v5236 = vpack.c.b16 %v4676, %v4668
    %v5237 = vpack.c.b16 %v4677, %v4669
    %v5238 = vpack.c.b16 %v4686, %v4678
    %v5239 = vpack.c.b16 %v4687, %v4679
    %v5240 = vpack.c.b16 %v4688, %v4680
    %v5241 = vpack.c.b16 %v4689, %v4681
    %v5242 = vpack.c.b16 %v4690, %v4682
    %v5243 = vpack.c.b16 %v4691, %v4683
    %v5244 = vpack.c.b16 %v4692, %v4684
    %v5245 = vpack.c.b16 %v4693, %v4685
    %v5246 = vpack.c.b16 %v4702, %v4694
    %v5247 = vpack.c.b16 %v4703, %v4695
    %v5248 = vpack.c.b16 %v4704, %v4696
    %v5249 = vpack.c.b16 %v4705, %v4697
    %v5250 = vpack.c.b16 %v4706, %v4698
    %v5251 = vpack.c.b16 %v4707, %v4699
    %v5252 = vpack.c.b16 %v4708, %v4700
    %v5253 = vpack.c.b16 %v4709, %v4701
    %v5254 = vpack.c.b16 %v4718, %v4710
    %v5255 = vpack.c.b16 %v4719, %v4711
    %v5256 = vpack.c.b16 %v4720, %v4712
    %v5257 = vpack.c.b16 %v4721, %v4713
    %v5258 = vpack.c.b16 %v4722, %v4714
    %v5259 = vpack.c.b16 %v4723, %v4715
    %v5260 = vpack.c.b16 %v4724, %v4716
    %v5261 = vpack.c.b16 %v4725, %v4717
    %v5262 = vpack.c.b16 %v4734, %v4726
    %v5263 = vpack.c.b16 %v4735, %v4727
    %v5264 = vpack.c.b16 %v4736, %v4728
    %v5265 = vpack.c.b16 %v4737, %v4729
    %v5266 = vpack.c.b16 %v4738, %v4730
    %v5267 = vpack.c.b16 %v4739, %v4731
    %v5268 = vpack.c.b16 %v4740, %v4732
    %v5269 = vpack.c.b16 %v4741, %v4733
    %v5270 = vpack.c.b16 %v4750, %v4742
    %v5271 = vpack.c.b16 %v4751, %v4743
    %v5272 = vpack.c.b16 %v4752, %v4744
    %v5273 = vpack.c.b16 %v4753, %v4745
    %v5274 = vpack.c.b16 %v4754, %v4746
    %v5275 = vpack.c.b16 %v4755, %v4747
    %v5276 = vpack.c.b16 %v4756, %v4748
    %v5277 = vpack.c.b16 %v4757, %v4749
    %v5278 = vpack.c.b16 %v4766, %v4758
    %v5279 = vpack.c.b16 %v4767, %v4759
    %v5280 = vpack.c.b16 %v4768, %v4760
    %v5281 = vpack.c.b16 %v4769, %v4761
    %v5282 = vpack.c.b16 %v4770, %v4762
    %v5283 = vpack.c.b16 %v4771, %v4763
    %v5284 = vpack.c.b16 %v4772, %v4764
    %v5285 = vpack.c.b16 %v4773, %v4765
    %v5286 = vpack.c.b16 %v4782, %v4774
    %v5287 = vpack.c.b16 %v4783, %v4775
    %v5288 = vpack.c.b16 %v4784, %v4776
    %v5289 = vpack.c.b16 %v4785, %v4777
    %v5290 = vpack.c.b16 %v4786, %v4778
    %v5291 = vpack.c.b16 %v4787, %v4779
    %v5292 = vpack.c.b16 %v4788, %v4780
    %v5293 = vpack.c.b16 %v4789, %v4781
    %v5294 = vpack.c.b16 %v4798, %v4790
    %v5295 = vpack.c.b16 %v4799, %v4791
    %v5296 = vpack.c.b16 %v4800, %v4792
    %v5297 = vpack.c.b16 %v4801, %v4793
    %v5298 = vpack.c.b16 %v4802, %v4794
    %v5299 = vpack.c.b16 %v4803, %v4795
    %v5300 = vpack.c.b16 %v4804, %v4796
    %v5301 = vpack.c.b16 %v4805, %v4797
    %v5302 = vpack.c.b16 %v4814, %v4806
    %v5303 = vpack.c.b16 %v4815, %v4807
    %v5304 = vpack.c.b16 %v4816, %v4808
    %v5305 = vpack.c.b16 %v4817, %v4809
    %v5306 = vpack.c.b16 %v4818, %v4810
    %v5307 = vpack.c.b16 %v4819, %v4811
    %v5308 = vpack.c.b16 %v4820, %v4812
    %v5309 = vpack.c.b16 %v4821, %v4813
    %v5310 = vpack.c.b16 %v4830, %v4822
    %v5311 = vpack.c.b16 %v4831, %v4823
    %v5312 = vpack.c.b16 %v4832, %v4824
    %v5313 = vpack.c.b16 %v4833, %v4825
    %v5314 = vpack.c.b16 %v4834, %v4826
    %v5315 = vpack.c.b16 %v4835, %v4827
    %v5316 = vpack.c.b16 %v4836, %v4828
    %v5317 = vpack.c.b16 %v4837, %v4829
    %v5318 = vpack.c.b16 %v4846, %v4838
    %v5319 = vpack.c.b16 %v4847, %v4839
    %v5320 = vpack.c.b16 %v4848, %v4840
    %v5321 = vpack.c.b16 %v4849, %v4841
    %v5322 = vpack.c.b16 %v4850, %v4842
    %v5323 = vpack.c.b16 %v4851, %v4843
    %v5324 = vpack.c.b16 %v4852, %v4844
    %v5325 = vpack.c.b16 %v4853, %v4845
    %v5326 = vpack.c.b16 %v4862, %v4854
    %v5327 = vpack.c.b16 %v4863, %v4855
    %v5328 = vpack.c.b16 %v4864, %v4856
    %v5329 = vpack.c.b16 %v4865, %v4857
    %v5330 = vpack.c.b16 %v4866, %v4858
    %v5331 = vpack.c.b16 %v4867, %v4859
    %v5332 = vpack.c.b16 %v4868, %v4860
    %v5333 = vpack.c.b16 %v4869, %v4861
    %v5334 = vpack.c.b16 %v4878, %v4870
    %v5335 = vpack.c.b16 %v4879, %v4871
    %v5336 = vpack.c.b16 %v4880, %v4872
    %v5337 = vpack.c.b16 %v4881, %v4873
    %v5338 = vpack.c.b16 %v4882, %v4874
    %v5339 = vpack.c.b16 %v4883, %v4875
    %v5340 = vpack.c.b16 %v4884, %v4876
    %v5341 = vpack.c.b16 %v4885, %v4877
    %v5342 = vpack.c.b16 %v4894, %v4886
    %v5343 = vpack.c.b16 %v4895, %v4887
    %v5344 = vpack.c.b16 %v4896, %v4888
    %v5345 = vpack.c.b16 %v4897, %v4889
    %v5346 = vpack.c.b16 %v4898, %v4890
    %v5347 = vpack.c.b16 %v4899, %v4891
    %v5348 = vpack.c.b16 %v4900, %v4892
    %v5349 = vpack.c.b16 %v4901, %v4893
    %v5350 = vpack.c.b16 %v4910, %v4902
    %v5351 = vpack.c.b16 %v4911, %v4903
    %v5352 = vpack.c.b16 %v4912, %v4904
    %v5353 = vpack.c.b16 %v4913, %v4905
    %v5354 = vpack.c.b16 %v4914, %v4906
    %v5355 = vpack.c.b16 %v4915, %v4907
    %v5356 = vpack.c.b16 %v4916, %v4908
    %v5357 = vpack.c.b16 %v4917, %v4909
    %v5358 = vpack.c.b16 %v4926, %v4918
    %v5359 = vpack.c.b16 %v4927, %v4919
    %v5360 = vpack.c.b16 %v4928, %v4920
    %v5361 = vpack.c.b16 %v4929, %v4921
    %v5362 = vpack.c.b16 %v4930, %v4922
    %v5363 = vpack.c.b16 %v4931, %v4923
    %v5364 = vpack.c.b16 %v4932, %v4924
    %v5365 = vpack.c.b16 %v4933, %v4925
    %v5366 = vpack.c.b16 %v4942, %v4934
    %v5367 = vpack.c.b16 %v4943, %v4935
    %v5368 = vpack.c.b16 %v4944, %v4936
    %v5369 = vpack.c.b16 %v4945, %v4937
    %v5370 = vpack.c.b16 %v4946, %v4938
    %v5371 = vpack.c.b16 %v4947, %v4939
    %v5372 = vpack.c.b16 %v4948, %v4940
    %v5373 = vpack.c.b16 %v4949, %v4941
    %v5374 = vpack.c.b16 %v4958, %v4950
    %v5375 = vpack.c.b16 %v4959, %v4951
    %v5376 = vpack.c.b16 %v4960, %v4952
    %v5377 = vpack.c.b16 %v4961, %v4953
    %v5378 = vpack.c.b16 %v4962, %v4954
    %v5379 = vpack.c.b16 %v4963, %v4955
    %v5380 = vpack.c.b16 %v4964, %v4956
    %v5381 = vpack.c.b16 %v4965, %v4957
    %v5382 = vpack.c.b16 %v4974, %v4966
    %v5383 = vpack.c.b16 %v4975, %v4967
    %v5384 = vpack.c.b16 %v4976, %v4968
    %v5385 = vpack.c.b16 %v4977, %v4969
    %v5386 = vpack.c.b16 %v4978, %v4970
    %v5387 = vpack.c.b16 %v4979, %v4971
    %v5388 = vpack.c.b16 %v4980, %v4972
    %v5389 = vpack.c.b16 %v4981, %v4973
    %v5390 = vpack.c.b16 %v4990, %v4982
    %v5391 = vpack.c.b16 %v4991, %v4983
    %v5392 = vpack.c.b16 %v4992, %v4984
    %v5393 = vpack.c.b16 %v4993, %v4985
    %v5394 = vpack.c.b16 %v4994, %v4986
    %v5395 = vpack.c.b16 %v4995, %v4987
    %v5396 = vpack.c.b16 %v4996, %v4988
    %v5397 = vpack.c.b16 %v4997, %v4989
    %v5398 = vpack.c.b16 %v5006, %v4998
    %v5399 = vpack.c.b16 %v5007, %v4999
    %v5400 = vpack.c.b16 %v5008, %v5000
    %v5401 = vpack.c.b16 %v5009, %v5001
    %v5402 = vpack.c.b16 %v5010, %v5002
    %v5403 = vpack.c.b16 %v5011, %v5003
    %v5404 = vpack.c.b16 %v5012, %v5004
    %v5405 = vpack.c.b16 %v5013, %v5005
    %v5406 = vpack.c.b16 %v5022, %v5014
    %v5407 = vpack.c.b16 %v5023, %v5015
    %v5408 = vpack.c.b16 %v5024, %v5016
    %v5409 = vpack.c.b16 %v5025, %v5017
    %v5410 = vpack.c.b16 %v5026, %v5018
    %v5411 = vpack.c.b16 %v5027, %v5019
    %v5412 = vpack.c.b16 %v5028, %v5020
    %v5413 = vpack.c.b16 %v5029, %v5021
    %v5414 = vpack.c.b16 %v5038, %v5030
    %v5415 = vpack.c.b16 %v5039, %v5031
    %v5416 = vpack.c.b16 %v5040, %v5032
    %v5417 = vpack.c.b16 %v5041, %v5033
    %v5418 = vpack.c.b16 %v5042, %v5034
    %v5419 = vpack.c.b16 %v5043, %v5035
    %v5420 = vpack.c.b16 %v5044, %v5036
    %v5421 = vpack.c.b16 %v5045, %v5037
    %v5422 = vpack.c.b16 %v5054, %v5046
    %v5423 = vpack.c.b16 %v5055, %v5047
    %v5424 = vpack.c.b16 %v5056, %v5048
    %v5425 = vpack.c.b16 %v5057, %v5049
    %v5426 = vpack.c.b16 %v5058, %v5050
    %v5427 = vpack.c.b16 %v5059, %v5051
    %v5428 = vpack.c.b16 %v5060, %v5052
    %v5429 = vpack.c.b16 %v5061, %v5053
    %v5430 = vpack.c.b16 %v5070, %v5062
    %v5431 = vpack.c.b16 %v5071, %v5063
    %v5432 = vpack.c.b16 %v5072, %v5064
    %v5433 = vpack.c.b16 %v5073, %v5065
    %v5434 = vpack.c.b16 %v5074, %v5066
    %v5435 = vpack.c.b16 %v5075, %v5067
    %v5436 = vpack.c.b16 %v5076, %v5068
    %v5437 = vpack.c.b16 %v5077, %v5069
    %v5438 = vpack.c.b16 %v5086, %v5078
    %v5439 = vpack.c.b16 %v5087, %v5079
    %v5440 = vpack.c.b16 %v5088, %v5080
    %v5441 = vpack.c.b16 %v5089, %v5081
    %v5442 = vpack.c.b16 %v5090, %v5082
    %v5443 = vpack.c.b16 %v5091, %v5083
    %v5444 = vpack.c.b16 %v5092, %v5084
    %v5445 = vpack.c.b16 %v5093, %v5085
    %v5446 = vpack.c.b16 %v5102, %v5094
    %v5447 = vpack.c.b16 %v5103, %v5095
    %v5448 = vpack.c.b16 %v5104, %v5096
    %v5449 = vpack.c.b16 %v5105, %v5097
    %v5450 = vpack.c.b16 %v5106, %v5098
    %v5451 = vpack.c.b16 %v5107, %v5099
    %v5452 = vpack.c.b16 %v5108, %v5100
    %v5453 = vpack.c.b16 %v5109, %v5101
    %v5454 = vpack.c.b16 %v5118, %v5110
    %v5455 = vpack.c.b16 %v5119, %v5111
    %v5456 = vpack.c.b16 %v5120, %v5112
    %v5457 = vpack.c.b16 %v5121, %v5113
    %v5458 = vpack.c.b16 %v5122, %v5114
    %v5459 = vpack.c.b16 %v5123, %v5115
    %v5460 = vpack.c.b16 %v5124, %v5116
    %v5461 = vpack.c.b16 %v5125, %v5117
    %v5462 = vpack.c.b16 %v5134, %v5126
    %v5463 = vpack.c.b16 %v5135, %v5127
    %v5464 = vpack.c.b16 %v5136, %v5128
    %v5465 = vpack.c.b16 %v5137, %v5129
    %v5466 = vpack.c.b16 %v5138, %v5130
    %v5467 = vpack.c.b16 %v5139, %v5131
    %v5468 = vpack.c.b16 %v5140, %v5132
    %v5469 = vpack.c.b16 %v5141, %v5133
    %v5470 = vpack.c.b16 %v5150, %v5142
    %v5471 = vpack.c.b16 %v5151, %v5143
    %v5472 = vpack.c.b16 %v5152, %v5144
    %v5473 = vpack.c.b16 %v5153, %v5145
    %v5474 = vpack.c.b16 %v5154, %v5146
    %v5475 = vpack.c.b16 %v5155, %v5147
    %v5476 = vpack.c.b16 %v5156, %v5148
    %v5477 = vpack.c.b16 %v5157, %v5149
    %5798 = vmatprep.subr.bf16.mxu0 %v5159
    %5799 = vmatpush1.bf16.msra.mxu0 %v5158
    %5800 = vmatprep.subr.bf16.mxu0 %v5167
    %5801 = vmatpush1.bf16.msra.mxu0 %v5166
    %5802 = vmatprep.subr.bf16.mxu0 %v5175
    %5803 = vmatpush1.bf16.msra.mxu0 %v5174
    %5804 = vmatprep.subr.bf16.mxu0 %v5183
    %5805 = vmatpush1.bf16.msra.mxu0 %v5182
    %5806 = vmatprep.subr.bf16.mxu0 %v5191
    %5807 = vmatpush1.bf16.msra.mxu0 %v5190
    %5808 = vmatprep.subr.bf16.mxu0 %v5199
    %5809 = vmatpush1.bf16.msra.mxu0 %v5198
    %5810 = vmatprep.subr.bf16.mxu0 %v5207
    %5811 = vmatpush1.bf16.msra.mxu0 %v5206
    %5812 = vmatprep.subr.bf16.mxu0 %v5215
    %5813 = vmatpush1.bf16.msra.mxu0 %v5214
    %5814 = vmatprep.subr.bf16.mxu0 %v5223
    %5815 = vmatpush1.bf16.msra.mxu0 %v5222
    %5816 = vmatprep.subr.bf16.mxu0 %v5231
    %5817 = vmatpush1.bf16.msra.mxu0 %v5230
    %5818 = vmatprep.subr.bf16.mxu0 %v5239
    %5819 = vmatpush1.bf16.msra.mxu0 %v5238
    %5820 = vmatprep.subr.bf16.mxu0 %v5247
    %5821 = vmatpush1.bf16.msra.mxu0 %v5246
    %5822 = vmatprep.subr.bf16.mxu0 %v5255
    %5823 = vmatpush1.bf16.msra.mxu0 %v5254
    %5824 = vmatprep.subr.bf16.mxu0 %v5263
    %5825 = vmatpush1.bf16.msra.mxu0 %v5262
    %5826 = vmatprep.subr.bf16.mxu0 %v5271
    %5827 = vmatpush1.bf16.msra.mxu0 %v5270
    %5828 = vmatprep.subr.bf16.mxu0 %v5279
    %5829 = vmatpush1.bf16.msra.mxu0 %v5278
    %5830 = vmatprep.mubr.bf16.mxu0 %v3832
    %5831 = vmatmul.mubr.bf16.gmra.mrb[0].mxu0 %v3831
    %v5832 = vpop.f32.mrb[0].mxu0
    %v5833 = vadd.f32 %v4161, %v5832
    %v5834 = vpop.f32.mrb[0].mxu0
    %v5835 = vadd.f32 %v4165, %v5834
    %v5836 = vpop.f32.mrb[0].mxu0
    %v5837 = vpop.f32.mrb[0].mxu0
    %5838 = vdwg.mxu0
    %5839 = vmatprep.subr.bf16.mxu0 %v5287
    %5840 = vmatpush1.bf16.msra.mxu0 %v5286
    %5841 = vmatprep.subr.bf16.mxu0 %v5295
    %5842 = vmatpush1.bf16.msra.mxu0 %v5294
    %5843 = vmatprep.subr.bf16.mxu0 %v5303
    %5844 = vmatpush1.bf16.msra.mxu0 %v5302
    %5845 = vmatprep.subr.bf16.mxu0 %v5311
    %5846 = vmatpush1.bf16.msra.mxu0 %v5310
    %5847 = vmatprep.subr.bf16.mxu0 %v5319
    %5848 = vmatpush1.bf16.msra.mxu0 %v5318
    %5849 = vmatprep.subr.bf16.mxu0 %v5327
    %5850 = vmatpush1.bf16.msra.mxu0 %v5326
    %5851 = vmatprep.subr.bf16.mxu0 %v5335
    %5852 = vmatpush1.bf16.msra.mxu0 %v5334
    %5853 = vmatprep.subr.bf16.mxu0 %v5343
    %5854 = vmatpush1.bf16.msra.mxu0 %v5342
    %5855 = vmatprep.subr.bf16.mxu0 %v5351
    %5856 = vmatpush1.bf16.msra.mxu0 %v5350
    %5857 = vmatprep.subr.bf16.mxu0 %v5359
    %5858 = vmatpush1.bf16.msra.mxu0 %v5358
    %5859 = vmatprep.subr.bf16.mxu0 %v5367
    %5860 = vmatpush1.bf16.msra.mxu0 %v5366
    %5861 = vmatprep.subr.bf16.mxu0 %v5375
    %5862 = vmatpush1.bf16.msra.mxu0 %v5374
    %5863 = vmatprep.subr.bf16.mxu0 %v5383
    %5864 = vmatpush1.bf16.msra.mxu0 %v5382
    %5865 = vmatprep.subr.bf16.mxu0 %v5391
    %5866 = vmatpush1.bf16.msra.mxu0 %v5390
    %5867 = vmatprep.subr.bf16.mxu0 %v5399
    %5868 = vmatpush1.bf16.msra.mxu0 %v5398
    %5869 = vmatprep.subr.bf16.mxu0 %v5407
    %5870 = vmatpush1.bf16.msra.mxu0 %v5406
    %5871 = vmatprep.mubr.bf16.mxu0 %v3834
    %5872 = vmatmul.mubr.bf16.gmra.mrb[0].mxu0 %v3833
    %v5873 = vpop.f32.mrb[0].mxu0
    %v5874 = vadd.f32 %v5833, %v5873
    %v5875 = vpop.f32.mrb[0].mxu0
    %v5876 = vadd.f32 %v5835, %v5875
    %v5877 = vpop.f32.mrb[0].mxu0
    %v5878 = vpop.f32.mrb[0].mxu0
    %5879 = vdwg.mxu0
    %5880 = vmatprep.subr.bf16.mxu0 %v5415
    %5881 = vmatpush1.bf16.msra.mxu0 %v5414
    %5882 = vmatprep.subr.bf16.mxu0 %v5423
    %5883 = vmatpush1.bf16.msra.mxu0 %v5422
    %5884 = vmatprep.subr.bf16.mxu0 %v5431
    %5885 = vmatpush1.bf16.msra.mxu0 %v5430
    %5886 = vmatprep.subr.bf16.mxu0 %v5439
    %5887 = vmatpush1.bf16.msra.mxu0 %v5438
    %5888 = vmatprep.subr.bf16.mxu0 %v5447
    %5889 = vmatpush1.bf16.msra.mxu0 %v5446
    %5890 = vmatprep.subr.bf16.mxu0 %v5455
    %5891 = vmatpush1.bf16.msra.mxu0 %v5454
    %5892 = vmatprep.subr.bf16.mxu0 %v5463
    %5893 = vmatpush1.bf16.msra.mxu0 %v5462
    %5894 = vmatprep.subr.bf16.mxu0 %v5471
    %5895 = vmatpush1.bf16.msra.mxu0 %v5470
    %5896 = vmatprep.subr.bf16.mxu0 0
    %5897 = vmatpush1.bf16.msra.mxu0 0
    %5898 = vmatprep.subr.bf16.mxu0 0
    %5899 = vmatpush1.bf16.msra.mxu0 0
    %5900 = vmatprep.subr.bf16.mxu0 0
    %5901 = vmatpush1.bf16.msra.mxu0 0
    %5902 = vmatprep.subr.bf16.mxu0 0
    %5903 = vmatpush1.bf16.msra.mxu0 0
    %5904 = vmatprep.subr.bf16.mxu0 0
    %5905 = vmatpush1.bf16.msra.mxu0 0
    %5906 = vmatprep.subr.bf16.mxu0 0
    %5907 = vmatpush1.bf16.msra.mxu0 0
    %5908 = vmatprep.subr.bf16.mxu0 0
    %5909 = vmatpush1.bf16.msra.mxu0 0
    %5910 = vmatprep.subr.bf16.mxu0 0
    %5911 = vmatpush1.bf16.msra.mxu0 0
    %5912 = vmatprep.mubr.bf16.mxu0 0
    %5913 = vmatmul.mubr.bf16.gmra.mrb[0].mxu0 %v3835
    %v5914 = vpop.f32.mrb[0].mxu0
    %v5915 = vadd.f32 %v5874, %v5914
    %v5916 = vpop.f32.mrb[0].mxu0
    %v5917 = vadd.f32 %v5876, %v5916
    %v5918 = vpop.f32.mrb[0].mxu0
    %v5919 = vpop.f32.mrb[0].mxu0
    %5920 = vdwg.mxu0
    %5921 = vmatprep.subr.bf16.mxu0 %v5161
    %5922 = vmatpush1.bf16.msra.mxu0 %v5160
    %5923 = vmatprep.subr.bf16.mxu0 %v5169
    %5924 = vmatpush1.bf16.msra.mxu0 %v5168
    %5925 = vmatprep.subr.bf16.mxu0 %v5177
    %5926 = vmatpush1.bf16.msra.mxu0 %v5176
    %5927 = vmatprep.subr.bf16.mxu0 %v5185
    %5928 = vmatpush1.bf16.msra.mxu0 %v5184
    %5929 = vmatprep.subr.bf16.mxu0 %v5193
    %5930 = vmatpush1.bf16.msra.mxu0 %v5192
    %5931 = vmatprep.subr.bf16.mxu0 %v5201
    %5932 = vmatpush1.bf16.msra.mxu0 %v5200
    %5933 = vmatprep.subr.bf16.mxu0 %v5209
    %5934 = vmatpush1.bf16.msra.mxu0 %v5208
    %5935 = vmatprep.subr.bf16.mxu0 %v5217
    %5936 = vmatpush1.bf16.msra.mxu0 %v5216
    %5937 = vmatprep.subr.bf16.mxu0 %v5225
    %5938 = vmatpush1.bf16.msra.mxu0 %v5224
    %5939 = vmatprep.subr.bf16.mxu0 %v5233
    %5940 = vmatpush1.bf16.msra.mxu0 %v5232
    %5941 = vmatprep.subr.bf16.mxu0 %v5241
    %5942 = vmatpush1.bf16.msra.mxu0 %v5240
    %5943 = vmatprep.subr.bf16.mxu0 %v5249
    %5944 = vmatpush1.bf16.msra.mxu0 %v5248
    %5945 = vmatprep.subr.bf16.mxu0 %v5257
    %5946 = vmatpush1.bf16.msra.mxu0 %v5256
    %5947 = vmatprep.subr.bf16.mxu0 %v5265
    %5948 = vmatpush1.bf16.msra.mxu0 %v5264
    %5949 = vmatprep.subr.bf16.mxu0 %v5273
    %5950 = vmatpush1.bf16.msra.mxu0 %v5272
    %5951 = vmatprep.subr.bf16.mxu0 %v5281
    %5952 = vmatpush1.bf16.msra.mxu0 %v5280
    %5953 = vmatprep.mubr.bf16.mxu0 %v3832
    %5954 = vmatmul.mubr.bf16.gmra.mrb[0].mxu0 %v3831
    %v5955 = vpop.f32.mrb[0].mxu0
    %v5956 = vadd.f32 %v4169, %v5955
    %v5957 = vpop.f32.mrb[0].mxu0
    %v5958 = vadd.f32 %v4173, %v5957
    %v5959 = vpop.f32.mrb[0].mxu0
    %v5960 = vpop.f32.mrb[0].mxu0
    %5961 = vdwg.mxu0
    %5962 = vmatprep.subr.bf16.mxu0 %v5289
    %5963 = vmatpush1.bf16.msra.mxu0 %v5288
    %5964 = vmatprep.subr.bf16.mxu0 %v5297
    %5965 = vmatpush1.bf16.msra.mxu0 %v5296
    %5966 = vmatprep.subr.bf16.mxu0 %v5305
    %5967 = vmatpush1.bf16.msra.mxu0 %v5304
    %5968 = vmatprep.subr.bf16.mxu0 %v5313
    %5969 = vmatpush1.bf16.msra.mxu0 %v5312
    %5970 = vmatprep.subr.bf16.mxu0 %v5321
    %5971 = vmatpush1.bf16.msra.mxu0 %v5320
    %5972 = vmatprep.subr.bf16.mxu0 %v5329
    %5973 = vmatpush1.bf16.msra.mxu0 %v5328
    %5974 = vmatprep.subr.bf16.mxu0 %v5337
    %5975 = vmatpush1.bf16.msra.mxu0 %v5336
    %5976 = vmatprep.subr.bf16.mxu0 %v5345
    %5977 = vmatpush1.bf16.msra.mxu0 %v5344
    %5978 = vmatprep.subr.bf16.mxu0 %v5353
    %5979 = vmatpush1.bf16.msra.mxu0 %v5352
    %5980 = vmatprep.subr.bf16.mxu0 %v5361
    %5981 = vmatpush1.bf16.msra.mxu0 %v5360
    %5982 = vmatprep.subr.bf16.mxu0 %v5369
    %5983 = vmatpush1.bf16.msra.mxu0 %v5368
    %5984 = vmatprep.subr.bf16.mxu0 %v5377
    %5985 = vmatpush1.bf16.msra.mxu0 %v5376
    %5986 = vmatprep.subr.bf16.mxu0 %v5385
    %5987 = vmatpush1.bf16.msra.mxu0 %v5384
    %5988 = vmatprep.subr.bf16.mxu0 %v5393
    %5989 = vmatpush1.bf16.msra.mxu0 %v5392
    %5990 = vmatprep.subr.bf16.mxu0 %v5401
    %5991 = vmatpush1.bf16.msra.mxu0 %v5400
    %5992 = vmatprep.subr.bf16.mxu0 %v5409
    %5993 = vmatpush1.bf16.msra.mxu0 %v5408
    %5994 = vmatprep.mubr.bf16.mxu0 %v3834
    %5995 = vmatmul.mubr.bf16.gmra.mrb[0].mxu0 %v3833
    %v5996 = vpop.f32.mrb[0].mxu0
    %v5997 = vadd.f32 %v5956, %v5996
    %v5998 = vpop.f32.mrb[0].mxu0
    %v5999 = vadd.f32 %v5958, %v5998
    %v6000 = vpop.f32.mrb[0].mxu0
    %v6001 = vpop.f32.mrb[0].mxu0
    %6002 = vdwg.mxu0
    %6003 = vmatprep.subr.bf16.mxu0 %v5417
    %6004 = vmatpush1.bf16.msra.mxu0 %v5416
    %6005 = vmatprep.subr.bf16.mxu0 %v5425
    %6006 = vmatpush1.bf16.msra.mxu0 %v5424
    %6007 = vmatprep.subr.bf16.mxu0 %v5433
    %6008 = vmatpush1.bf16.msra.mxu0 %v5432
    %6009 = vmatprep.subr.bf16.mxu0 %v5441
    %6010 = vmatpush1.bf16.msra.mxu0 %v5440
    %6011 = vmatprep.subr.bf16.mxu0 %v5449
    %6012 = vmatpush1.bf16.msra.mxu0 %v5448
    %6013 = vmatprep.subr.bf16.mxu0 %v5457
    %6014 = vmatpush1.bf16.msra.mxu0 %v5456
    %6015 = vmatprep.subr.bf16.mxu0 %v5465
    %6016 = vmatpush1.bf16.msra.mxu0 %v5464
    %6017 = vmatprep.subr.bf16.mxu0 %v5473
    %6018 = vmatpush1.bf16.msra.mxu0 %v5472
    %6019 = vmatprep.subr.bf16.mxu0 0
    %6020 = vmatpush1.bf16.msra.mxu0 0
    %6021 = vmatprep.subr.bf16.mxu0 0
    %6022 = vmatpush1.bf16.msra.mxu0 0
    %6023 = vmatprep.subr.bf16.mxu0 0
    %6024 = vmatpush1.bf16.msra.mxu0 0
    %6025 = vmatprep.subr.bf16.mxu0 0
    %6026 = vmatpush1.bf16.msra.mxu0 0
    %6027 = vmatprep.subr.bf16.mxu0 0
    %6028 = vmatpush1.bf16.msra.mxu0 0
    %6029 = vmatprep.subr.bf16.mxu0 0
    %6030 = vmatpush1.bf16.msra.mxu0 0
    %6031 = vmatprep.subr.bf16.mxu0 0
    %6032 = vmatpush1.bf16.msra.mxu0 0
    %6033 = vmatprep.subr.bf16.mxu0 0
    %6034 = vmatpush1.bf16.msra.mxu0 0
    %6035 = vmatprep.mubr.bf16.mxu0 0
    %6036 = vmatmul.mubr.bf16.gmra.mrb[0].mxu0 %v3835
    %v6037 = vpop.f32.mrb[0].mxu0
    %v6038 = vadd.f32 %v5997, %v6037
    %v6039 = vpop.f32.mrb[0].mxu0
    %v6040 = vadd.f32 %v5999, %v6039
    %v6041 = vpop.f32.mrb[0].mxu0
    %v6042 = vpop.f32.mrb[0].mxu0
    %6043 = vdwg.mxu0
    %6044 = vmatprep.subr.bf16.mxu0 %v5163
    %6045 = vmatpush1.bf16.msra.mxu0 %v5162
    %6046 = vmatprep.subr.bf16.mxu0 %v5171
    %6047 = vmatpush1.bf16.msra.mxu0 %v5170
    %6048 = vmatprep.subr.bf16.mxu0 %v5179
    %6049 = vmatpush1.bf16.msra.mxu0 %v5178
    %6050 = vmatprep.subr.bf16.mxu0 %v5187
    %6051 = vmatpush1.bf16.msra.mxu0 %v5186
    %6052 = vmatprep.subr.bf16.mxu0 %v5195
    %6053 = vmatpush1.bf16.msra.mxu0 %v5194
    %6054 = vmatprep.subr.bf16.mxu0 %v5203
    %6055 = vmatpush1.bf16.msra.mxu0 %v5202
    %6056 = vmatprep.subr.bf16.mxu0 %v5211
    %6057 = vmatpush1.bf16.msra.mxu0 %v5210
    %6058 = vmatprep.subr.bf16.mxu0 %v5219
    %6059 = vmatpush1.bf16.msra.mxu0 %v5218
    %6060 = vmatprep.subr.bf16.mxu0 %v5227
    %6061 = vmatpush1.bf16.msra.mxu0 %v5226
    %6062 = vmatprep.subr.bf16.mxu0 %v5235
    %6063 = vmatpush1.bf16.msra.mxu0 %v5234
    %6064 = vmatprep.subr.bf16.mxu0 %v5243
    %6065 = vmatpush1.bf16.msra.mxu0 %v5242
    %6066 = vmatprep.subr.bf16.mxu0 %v5251
    %6067 = vmatpush1.bf16.msra.mxu0 %v5250
    %6068 = vmatprep.subr.bf16.mxu0 %v5259
    %6069 = vmatpush1.bf16.msra.mxu0 %v5258
    %6070 = vmatprep.subr.bf16.mxu0 %v5267
    %6071 = vmatpush1.bf16.msra.mxu0 %v5266
    %6072 = vmatprep.subr.bf16.mxu0 %v5275
    %6073 = vmatpush1.bf16.msra.mxu0 %v5274
    %6074 = vmatprep.subr.bf16.mxu0 %v5283
    %6075 = vmatpush1.bf16.msra.mxu0 %v5282
    %6076 = vmatprep.mubr.bf16.mxu0 %v3832
    %6077 = vmatmul.mubr.bf16.gmra.mrb[0].mxu0 %v3831
    %v6078 = vpop.f32.mrb[0].mxu0
    %v6079 = vadd.f32 %v4177, %v6078
    %v6080 = vpop.f32.mrb[0].mxu0
    %v6081 = vadd.f32 %v4181, %v6080
    %v6082 = vpop.f32.mrb[0].mxu0
    %v6083 = vpop.f32.mrb[0].mxu0
    %6084 = vdwg.mxu0
    %6085 = vmatprep.subr.bf16.mxu0 %v5291
    %6086 = vmatpush1.bf16.msra.mxu0 %v5290
    %6087 = vmatprep.subr.bf16.mxu0 %v5299
    %6088 = vmatpush1.bf16.msra.mxu0 %v5298
    %6089 = vmatprep.subr.bf16.mxu0 %v5307
    %6090 = vmatpush1.bf16.msra.mxu0 %v5306
    %6091 = vmatprep.subr.bf16.mxu0 %v5315
    %6092 = vmatpush1.bf16.msra.mxu0 %v5314
    %6093 = vmatprep.subr.bf16.mxu0 %v5323
    %6094 = vmatpush1.bf16.msra.mxu0 %v5322
    %6095 = vmatprep.subr.bf16.mxu0 %v5331
    %6096 = vmatpush1.bf16.msra.mxu0 %v5330
    %6097 = vmatprep.subr.bf16.mxu0 %v5339
    %6098 = vmatpush1.bf16.msra.mxu0 %v5338
    %6099 = vmatprep.subr.bf16.mxu0 %v5347
    %6100 = vmatpush1.bf16.msra.mxu0 %v5346
    %6101 = vmatprep.subr.bf16.mxu0 %v5355
    %6102 = vmatpush1.bf16.msra.mxu0 %v5354
    %6103 = vmatprep.subr.bf16.mxu0 %v5363
    %6104 = vmatpush1.bf16.msra.mxu0 %v5362
    %6105 = vmatprep.subr.bf16.mxu0 %v5371
    %6106 = vmatpush1.bf16.msra.mxu0 %v5370
    %6107 = vmatprep.subr.bf16.mxu0 %v5379
    %6108 = vmatpush1.bf16.msra.mxu0 %v5378
    %6109 = vmatprep.subr.bf16.mxu0 %v5387
    %6110 = vmatpush1.bf16.msra.mxu0 %v5386
    %6111 = vmatprep.subr.bf16.mxu0 %v5395
    %6112 = vmatpush1.bf16.msra.mxu0 %v5394
    %6113 = vmatprep.subr.bf16.mxu0 %v5403
    %6114 = vmatpush1.bf16.msra.mxu0 %v5402
    %6115 = vmatprep.subr.bf16.mxu0 %v5411
    %6116 = vmatpush1.bf16.msra.mxu0 %v5410
    %6117 = vmatprep.mubr.bf16.mxu0 %v3834
    %6118 = vmatmul.mubr.bf16.gmra.mrb[0].mxu0 %v3833
    %v6119 = vpop.f32.mrb[0].mxu0
    %v6120 = vadd.f32 %v6079, %v6119
    %v6121 = vpop.f32.mrb[0].mxu0
    %v6122 = vadd.f32 %v6081, %v6121
    %v6123 = vpop.f32.mrb[0].mxu0
    %v6124 = vpop.f32.mrb[0].mxu0
    %6125 = vdwg.mxu0
    %6126 = vmatprep.subr.bf16.mxu0 %v5419
    %6127 = vmatpush1.bf16.msra.mxu0 %v5418
    %6128 = vmatprep.subr.bf16.mxu0 %v5427
    %6129 = vmatpush1.bf16.msra.mxu0 %v5426
    %6130 = vmatprep.subr.bf16.mxu0 %v5435
    %6131 = vmatpush1.bf16.msra.mxu0 %v5434
    %6132 = vmatprep.subr.bf16.mxu0 %v5443
    %6133 = vmatpush1.bf16.msra.mxu0 %v5442
    %6134 = vmatprep.subr.bf16.mxu0 %v5451
    %6135 = vmatpush1.bf16.msra.mxu0 %v5450
    %6136 = vmatprep.subr.bf16.mxu0 %v5459
    %6137 = vmatpush1.bf16.msra.mxu0 %v5458
    %6138 = vmatprep.subr.bf16.mxu0 %v5467
    %6139 = vmatpush1.bf16.msra.mxu0 %v5466
    %6140 = vmatprep.subr.bf16.mxu0 %v5475
    %6141 = vmatpush1.bf16.msra.mxu0 %v5474
    %6142 = vmatprep.subr.bf16.mxu0 0
    %6143 = vmatpush1.bf16.msra.mxu0 0
    %6144 = vmatprep.subr.bf16.mxu0 0
    %6145 = vmatpush1.bf16.msra.mxu0 0
    %6146 = vmatprep.subr.bf16.mxu0 0
    %6147 = vmatpush1.bf16.msra.mxu0 0
    %6148 = vmatprep.subr.bf16.mxu0 0
    %6149 = vmatpush1.bf16.msra.mxu0 0
    %6150 = vmatprep.subr.bf16.mxu0 0
    %6151 = vmatpush1.bf16.msra.mxu0 0
    %6152 = vmatprep.subr.bf16.mxu0 0
    %6153 = vmatpush1.bf16.msra.mxu0 0
    %6154 = vmatprep.subr.bf16.mxu0 0
    %6155 = vmatpush1.bf16.msra.mxu0 0
    %6156 = vmatprep.subr.bf16.mxu0 0
    %6157 = vmatpush1.bf16.msra.mxu0 0
    %6158 = vmatprep.mubr.bf16.mxu0 0
    %6159 = vmatmul.mubr.bf16.gmra.mrb[0].mxu0 %v3835
    %v6160 = vpop.f32.mrb[0].mxu0
    %v6161 = vadd.f32 %v6120, %v6160
    %v6162 = vpop.f32.mrb[0].mxu0
    %v6163 = vadd.f32 %v6122, %v6162
    %v6164 = vpop.f32.mrb[0].mxu0
    %v6165 = vpop.f32.mrb[0].mxu0
    %6166 = vdwg.mxu0
    %6167 = vmatprep.subr.bf16.mxu0 %v5165
    %6168 = vmatpush1.bf16.msra.mxu0 %v5164
    %6169 = vmatprep.subr.bf16.mxu0 %v5173
    %6170 = vmatpush1.bf16.msra.mxu0 %v5172
    %6171 = vmatprep.subr.bf16.mxu0 %v5181
    %6172 = vmatpush1.bf16.msra.mxu0 %v5180
    %6173 = vmatprep.subr.bf16.mxu0 %v5189
    %6174 = vmatpush1.bf16.msra.mxu0 %v5188
    %6175 = vmatprep.subr.bf16.mxu0 %v5197
    %6176 = vmatpush1.bf16.msra.mxu0 %v5196
    %6177 = vmatprep.subr.bf16.mxu0 %v5205
    %6178 = vmatpush1.bf16.msra.mxu0 %v5204
    %6179 = vmatprep.subr.bf16.mxu0 %v5213
    %6180 = vmatpush1.bf16.msra.mxu0 %v5212
    %6181 = vmatprep.subr.bf16.mxu0 %v5221
    %6182 = vmatpush1.bf16.msra.mxu0 %v5220
    %6183 = vmatprep.subr.bf16.mxu0 %v5229
    %6184 = vmatpush1.bf16.msra.mxu0 %v5228
    %6185 = vmatprep.subr.bf16.mxu0 %v5237
    %6186 = vmatpush1.bf16.msra.mxu0 %v5236
    %6187 = vmatprep.subr.bf16.mxu0 %v5245
    %6188 = vmatpush1.bf16.msra.mxu0 %v5244
    %6189 = vmatprep.subr.bf16.mxu0 %v5253
    %6190 = vmatpush1.bf16.msra.mxu0 %v5252
    %6191 = vmatprep.subr.bf16.mxu0 %v5261
    %6192 = vmatpush1.bf16.msra.mxu0 %v5260
    %6193 = vmatprep.subr.bf16.mxu0 %v5269
    %6194 = vmatpush1.bf16.msra.mxu0 %v5268
    %6195 = vmatprep.subr.bf16.mxu0 %v5277
    %6196 = vmatpush1.bf16.msra.mxu0 %v5276
    %6197 = vmatprep.subr.bf16.mxu0 %v5285
    %6198 = vmatpush1.bf16.msra.mxu0 %v5284
    %6199 = vmatprep.mubr.bf16.mxu0 %v3832
    %6200 = vmatmul.mubr.bf16.gmra.mrb[0].mxu0 %v3831
    %v6201 = vpop.f32.mrb[0].mxu0
    %v6202 = vadd.f32 %v4185, %v6201
    %v6203 = vpop.f32.mrb[0].mxu0
    %v6204 = vadd.f32 %v4189, %v6203
    %v6205 = vpop.f32.mrb[0].mxu0
    %v6206 = vpop.f32.mrb[0].mxu0
    %6207 = vdwg.mxu0
    %6208 = vmatprep.subr.bf16.mxu0 %v5293
    %6209 = vmatpush1.bf16.msra.mxu0 %v5292
    %6210 = vmatprep.subr.bf16.mxu0 %v5301
    %6211 = vmatpush1.bf16.msra.mxu0 %v5300
    %6212 = vmatprep.subr.bf16.mxu0 %v5309
    %6213 = vmatpush1.bf16.msra.mxu0 %v5308
    %6214 = vmatprep.subr.bf16.mxu0 %v5317
    %6215 = vmatpush1.bf16.msra.mxu0 %v5316
    %6216 = vmatprep.subr.bf16.mxu0 %v5325
    %6217 = vmatpush1.bf16.msra.mxu0 %v5324
    %6218 = vmatprep.subr.bf16.mxu0 %v5333
    %6219 = vmatpush1.bf16.msra.mxu0 %v5332
    %6220 = vmatprep.subr.bf16.mxu0 %v5341
    %6221 = vmatpush1.bf16.msra.mxu0 %v5340
    %6222 = vmatprep.subr.bf16.mxu0 %v5349
    %6223 = vmatpush1.bf16.msra.mxu0 %v5348
    %6224 = vmatprep.subr.bf16.mxu0 %v5357
    %6225 = vmatpush1.bf16.msra.mxu0 %v5356
    %6226 = vmatprep.subr.bf16.mxu0 %v5365
    %6227 = vmatpush1.bf16.msra.mxu0 %v5364
    %6228 = vmatprep.subr.bf16.mxu0 %v5373
    %6229 = vmatpush1.bf16.msra.mxu0 %v5372
    %6230 = vmatprep.subr.bf16.mxu0 %v5381
    %6231 = vmatpush1.bf16.msra.mxu0 %v5380
    %6232 = vmatprep.subr.bf16.mxu0 %v5389
    %6233 = vmatpush1.bf16.msra.mxu0 %v5388
    %6234 = vmatprep.subr.bf16.mxu0 %v5397
    %6235 = vmatpush1.bf16.msra.mxu0 %v5396
    %6236 = vmatprep.subr.bf16.mxu0 %v5405
    %6237 = vmatpush1.bf16.msra.mxu0 %v5404
    %6238 = vmatprep.subr.bf16.mxu0 %v5413
    %6239 = vmatpush1.bf16.msra.mxu0 %v5412
    %6240 = vmatprep.mubr.bf16.mxu0 %v3834
    %6241 = vmatmul.mubr.bf16.gmra.mrb[0].mxu0 %v3833
    %v6242 = vpop.f32.mrb[0].mxu0
    %v6243 = vadd.f32 %v6202, %v6242
    %v6244 = vpop.f32.mrb[0].mxu0
    %v6245 = vadd.f32 %v6204, %v6244
    %v6246 = vpop.f32.mrb[0].mxu0
    %v6247 = vpop.f32.mrb[0].mxu0
    %6248 = vdwg.mxu0
    %6249 = vmatprep.subr.bf16.mxu0 %v5421
    %6250 = vmatpush1.bf16.msra.mxu0 %v5420
    %6251 = vmatprep.subr.bf16.mxu0 %v5429
    %6252 = vmatpush1.bf16.msra.mxu0 %v5428
    %6253 = vmatprep.subr.bf16.mxu0 %v5437
    %6254 = vmatpush1.bf16.msra.mxu0 %v5436
    %6255 = vmatprep.subr.bf16.mxu0 %v5445
    %6256 = vmatpush1.bf16.msra.mxu0 %v5444
    %6257 = vmatprep.subr.bf16.mxu0 %v5453
    %6258 = vmatpush1.bf16.msra.mxu0 %v5452
    %6259 = vmatprep.subr.bf16.mxu0 %v5461
    %6260 = vmatpush1.bf16.msra.mxu0 %v5460
    %6261 = vmatprep.subr.bf16.mxu0 %v5469
    %6262 = vmatpush1.bf16.msra.mxu0 %v5468
    %6263 = vmatprep.subr.bf16.mxu0 %v5477
    %6264 = vmatpush1.bf16.msra.mxu0 %v5476
    %6265 = vmatprep.subr.bf16.mxu0 0
    %6266 = vmatpush1.bf16.msra.mxu0 0
    %6267 = vmatprep.subr.bf16.mxu0 0
    %6268 = vmatpush1.bf16.msra.mxu0 0
    %6269 = vmatprep.subr.bf16.mxu0 0
    %6270 = vmatpush1.bf16.msra.mxu0 0
    %6271 = vmatprep.subr.bf16.mxu0 0
    %6272 = vmatpush1.bf16.msra.mxu0 0
    %6273 = vmatprep.subr.bf16.mxu0 0
    %6274 = vmatpush1.bf16.msra.mxu0 0
    %6275 = vmatprep.subr.bf16.mxu0 0
    %6276 = vmatpush1.bf16.msra.mxu0 0
    %6277 = vmatprep.subr.bf16.mxu0 0
    %6278 = vmatpush1.bf16.msra.mxu0 0
    %6279 = vmatprep.subr.bf16.mxu0 0
    %6280 = vmatpush1.bf16.msra.mxu0 0
    %6281 = vmatprep.mubr.bf16.mxu0 0
    %6282 = vmatmul.mubr.bf16.gmra.mrb[0].mxu0 %v3835
    %v6283 = vpop.f32.mrb[0].mxu0
    %v6284 = vadd.f32 %v6243, %v6283
    %v6285 = vpop.f32.mrb[0].mxu0
    %v6286 = vadd.f32 %v6245, %v6285
    %v6287 = vpop.f32.mrb[0].mxu0
    %v6288 = vpop.f32.mrb[0].mxu0
    %6289 = vdwg.mxu0
    %v6290 = vmax.f32 %v5915, 0.0
    %v6291 = vmax.f32 %v5917, 0.0
    %v6292 = vmax.f32 %v6038, 0.0
    %v6293 = vmax.f32 %v6040, 0.0
    %v6294 = vmax.f32 %v6161, 0.0
    %v6295 = vmax.f32 %v6163, 0.0
    %v6296 = vmax.f32 %v6284, 0.0
    %v6297 = vmax.f32 %v6286, 0.0
    %v6298 = vpack.c.bf16 %v6290, %v6290
    %v6299 = vpack.c.bf16 %v6291, %v6291
    %v6300 = vpack.c.bf16 %v6292, %v6292
    %v6301 = vpack.c.bf16 %v6293, %v6293
    %v6302 = vpack.c.bf16 %v6294, %v6294
    %v6303 = vpack.c.bf16 %v6295, %v6295
    %v6304 = vpack.c.bf16 %v6296, %v6296
    %v6305 = vpack.c.bf16 %v6297, %v6297
    %v6306 = vld [vmem:[#allocation28] sm:$0xff]
    %v6307 = vld [vmem:[#allocation28 + $0x8] sm:$0xff]
    %v6308 = vld [vmem:[#allocation28 + $0x10] sm:$0xff]
    %v6309 = vld [vmem:[#allocation28 + $0x18] sm:$0xff]
    %v6310 = vld [vmem:[#allocation28 + $0x20] sm:$0xff]
    %v6311 = vld [vmem:[#allocation28 + $0x28] sm:$0xff]
    %v6312 = vld [vmem:[#allocation28 + $0x30] sm:$0xff]
    %v6313 = vld [vmem:[#allocation28 + $0x38] sm:$0xff]
    %v6314 = vld [vmem:[#allocation28 + $0x40] sm:$0xff]
    %v6315 = vld [vmem:[#allocation28 + $0x48] sm:$0xff]
    %v6316 = vld [vmem:[#allocation28 + $0x50] sm:$0xff]
    %v6317 = vld [vmem:[#allocation28 + $0x58] sm:$0xff]
    %v6318 = vld [vmem:[#allocation28 + $0x60] sm:$0xff]
    %v6319 = vld [vmem:[#allocation28 + $0x68] sm:$0xff]
    %v6320 = vld [vmem:[#allocation28 + $0x70] sm:$0xff]
    %v6321 = vld [vmem:[#allocation28 + $0x78] sm:$0xff]
    %v6322 = vld [vmem:[#allocation28 + $0x80] sm:$0xff]
    %v6323 = vld [vmem:[#allocation28 + $0x88] sm:$0xff]
    %v6324 = vld [vmem:[#allocation28 + $0x90] sm:$0xff]
    %v6325 = vld [vmem:[#allocation28 + $0x98] sm:$0xff]
    %v6326 = vld [vmem:[#allocation28 + $0xa0] sm:$0xff]
    %v6327 = vld [vmem:[#allocation28 + $0xa8] sm:$0xff]
    %v6328 = vld [vmem:[#allocation28 + $0xb0] sm:$0xff]
    %v6329 = vld [vmem:[#allocation28 + $0xb8] sm:$0xff]
    %v6330 = vld [vmem:[#allocation28 + $0xc0] sm:$0xff]
    %v6331 = vld [vmem:[#allocation28 + $0xc8] sm:$0xff]
    %v6332 = vld [vmem:[#allocation28 + $0xd0] sm:$0xff]
    %v6333 = vld [vmem:[#allocation28 + $0xd8] sm:$0xff]
    %v6334 = vld [vmem:[#allocation28 + $0xe0] sm:$0xff]
    %v6335 = vld [vmem:[#allocation28 + $0xe8] sm:$0xff]
    %v6336 = vld [vmem:[#allocation28 + $0xf0] sm:$0xff]
    %v6337 = vld [vmem:[#allocation28 + $0xf8] sm:$0xff]
    %v6338 = vld [vmem:[#allocation28 + $0x100] sm:$0xff]
    %v6339 = vld [vmem:[#allocation28 + $0x108] sm:$0xff]
    %v6340 = vld [vmem:[#allocation28 + $0x110] sm:$0xff]
    %v6341 = vld [vmem:[#allocation28 + $0x118] sm:$0xff]
    %v6342 = vld [vmem:[#allocation28 + $0x120] sm:$0xff]
    %v6343 = vld [vmem:[#allocation28 + $0x128] sm:$0xff]
    %v6344 = vld [vmem:[#allocation28 + $0x130] sm:$0xff]
    %v6345 = vld [vmem:[#allocation28 + $0x138] sm:$0xff]
    %v6346 = vld [vmem:[#allocation28 + $0x140] sm:$0xff]
    %v6347 = vld [vmem:[#allocation28 + $0x148] sm:$0xff]
    %v6348 = vld [vmem:[#allocation28 + $0x150] sm:$0xff]
    %v6349 = vld [vmem:[#allocation28 + $0x158] sm:$0xff]
    %v6350 = vld [vmem:[#allocation28 + $0x160] sm:$0xff]
    %v6351 = vld [vmem:[#allocation28 + $0x168] sm:$0xff]
    %v6352 = vld [vmem:[#allocation28 + $0x170] sm:$0xff]
    %v6353 = vld [vmem:[#allocation28 + $0x178] sm:$0xff]
    %v6354 = vld [vmem:[#allocation28 + $0x180] sm:$0xff]
    %v6355 = vld [vmem:[#allocation28 + $0x188] sm:$0xff]
    %v6356 = vld [vmem:[#allocation28 + $0x190] sm:$0xff]
    %v6357 = vld [vmem:[#allocation28 + $0x198] sm:$0xff]
    %v6358 = vld [vmem:[#allocation28 + $0x1a0] sm:$0xff]
    %v6359 = vld [vmem:[#allocation28 + $0x1a8] sm:$0xff]
    %v6360 = vld [vmem:[#allocation28 + $0x1b0] sm:$0xff]
    %v6361 = vld [vmem:[#allocation28 + $0x1b8] sm:$0xff]
    %v6362 = vld [vmem:[#allocation28 + $0x1c0] sm:$0xff]
    %v6363 = vld [vmem:[#allocation28 + $0x1c8] sm:$0xff]
    %v6364 = vld [vmem:[#allocation28 + $0x1d0] sm:$0xff]
    %v6365 = vld [vmem:[#allocation28 + $0x1d8] sm:$0xff]
    %v6366 = vld [vmem:[#allocation28 + $0x1e0] sm:$0xff]
    %v6367 = vld [vmem:[#allocation28 + $0x1e8] sm:$0xff]
    %v6368 = vld [vmem:[#allocation28 + $0x1f0] sm:$0xff]
    %v6369 = vld [vmem:[#allocation28 + $0x1f8] sm:$0xff]
    %v6370 = vld [vmem:[#allocation28 + $0x200] sm:$0xff]
    %v6371 = vld [vmem:[#allocation28 + $0x208] sm:$0xff]
    %v6372 = vld [vmem:[#allocation28 + $0x210] sm:$0xff]
    %v6373 = vld [vmem:[#allocation28 + $0x218] sm:$0xff]
    %v6374 = vld [vmem:[#allocation28 + $0x220] sm:$0xff]
    %v6375 = vld [vmem:[#allocation28 + $0x228] sm:$0xff]
    %v6376 = vld [vmem:[#allocation28 + $0x230] sm:$0xff]
    %v6377 = vld [vmem:[#allocation28 + $0x238] sm:$0xff]
    %v6378 = vld [vmem:[#allocation28 + $0x240] sm:$0xff]
    %v6379 = vld [vmem:[#allocation28 + $0x248] sm:$0xff]
    %v6380 = vld [vmem:[#allocation28 + $0x250] sm:$0xff]
    %v6381 = vld [vmem:[#allocation28 + $0x258] sm:$0xff]
    %v6382 = vld [vmem:[#allocation28 + $0x260] sm:$0xff]
    %v6383 = vld [vmem:[#allocation28 + $0x268] sm:$0xff]
    %v6384 = vld [vmem:[#allocation28 + $0x270] sm:$0xff]
    %v6385 = vld [vmem:[#allocation28 + $0x278] sm:$0xff]
    %v6386 = vld [vmem:[#allocation28 + $0x280] sm:$0xff]
    %v6387 = vld [vmem:[#allocation28 + $0x288] sm:$0xff]
    %v6388 = vld [vmem:[#allocation28 + $0x290] sm:$0xff]
    %v6389 = vld [vmem:[#allocation28 + $0x298] sm:$0xff]
    %v6390 = vld [vmem:[#allocation28 + $0x2a0] sm:$0xff]
    %v6391 = vld [vmem:[#allocation28 + $0x2a8] sm:$0xff]
    %v6392 = vld [vmem:[#allocation28 + $0x2b0] sm:$0xff]
    %v6393 = vld [vmem:[#allocation28 + $0x2b8] sm:$0xff]
    %v6394 = vld [vmem:[#allocation28 + $0x2c0] sm:$0xff]
    %v6395 = vld [vmem:[#allocation28 + $0x2c8] sm:$0xff]
    %v6396 = vld [vmem:[#allocation28 + $0x2d0] sm:$0xff]
    %v6397 = vld [vmem:[#allocation28 + $0x2d8] sm:$0xff]
    %v6398 = vld [vmem:[#allocation28 + $0x2e0] sm:$0xff]
    %v6399 = vld [vmem:[#allocation28 + $0x2e8] sm:$0xff]
    %v6400 = vld [vmem:[#allocation28 + $0x2f0] sm:$0xff]
    %v6401 = vld [vmem:[#allocation28 + $0x2f8] sm:$0xff]
    %v6402 = vld [vmem:[#allocation28 + $0x300] sm:$0xff]
    %v6403 = vld [vmem:[#allocation28 + $0x308] sm:$0xff]
    %v6404 = vld [vmem:[#allocation28 + $0x310] sm:$0xff]
    %v6405 = vld [vmem:[#allocation28 + $0x318] sm:$0xff]
    %v6406 = vld [vmem:[#allocation28 + $0x320] sm:$0xff]
    %v6407 = vld [vmem:[#allocation28 + $0x328] sm:$0xff]
    %v6408 = vld [vmem:[#allocation28 + $0x330] sm:$0xff]
    %v6409 = vld [vmem:[#allocation28 + $0x338] sm:$0xff]
    %v6410 = vld [vmem:[#allocation28 + $0x340] sm:$0xff]
    %v6411 = vld [vmem:[#allocation28 + $0x348] sm:$0xff]
    %v6412 = vld [vmem:[#allocation28 + $0x350] sm:$0xff]
    %v6413 = vld [vmem:[#allocation28 + $0x358] sm:$0xff]
    %v6414 = vld [vmem:[#allocation28 + $0x360] sm:$0xff]
    %v6415 = vld [vmem:[#allocation28 + $0x368] sm:$0xff]
    %v6416 = vld [vmem:[#allocation28 + $0x370] sm:$0xff]
    %v6417 = vld [vmem:[#allocation28 + $0x378] sm:$0xff]
    %v6418 = vld [vmem:[#allocation28 + $0x380] sm:$0xff]
    %v6419 = vld [vmem:[#allocation28 + $0x388] sm:$0xff]
    %v6420 = vld [vmem:[#allocation28 + $0x390] sm:$0xff]
    %v6421 = vld [vmem:[#allocation28 + $0x398] sm:$0xff]
    %v6422 = vld [vmem:[#allocation28 + $0x3a0] sm:$0xff]
    %v6423 = vld [vmem:[#allocation28 + $0x3a8] sm:$0xff]
    %v6424 = vld [vmem:[#allocation28 + $0x3b0] sm:$0xff]
    %v6425 = vld [vmem:[#allocation28 + $0x3b8] sm:$0xff]
    %v6426 = vld [vmem:[#allocation28 + $0x3c0] sm:$0xff]
    %v6427 = vld [vmem:[#allocation28 + $0x3c8] sm:$0xff]
    %v6428 = vld [vmem:[#allocation28 + $0x3d0] sm:$0xff]
    %v6429 = vld [vmem:[#allocation28 + $0x3d8] sm:$0xff]
    %v6430 = vld [vmem:[#allocation28 + $0x3e0] sm:$0xff]
    %v6431 = vld [vmem:[#allocation28 + $0x3e8] sm:$0xff]
    %v6432 = vld [vmem:[#allocation28 + $0x3f0] sm:$0xff]
    %v6433 = vld [vmem:[#allocation28 + $0x3f8] sm:$0xff]
    %v6434 = vld [vmem:[#allocation28 + $0x400] sm:$0xff]
    %v6435 = vld [vmem:[#allocation28 + $0x408] sm:$0xff]
    %v6436 = vld [vmem:[#allocation28 + $0x410] sm:$0xff]
    %v6437 = vld [vmem:[#allocation28 + $0x418] sm:$0xff]
    %v6438 = vld [vmem:[#allocation28 + $0x420] sm:$0xff]
    %v6439 = vld [vmem:[#allocation28 + $0x428] sm:$0xff]
    %v6440 = vld [vmem:[#allocation28 + $0x430] sm:$0xff]
    %v6441 = vld [vmem:[#allocation28 + $0x438] sm:$0xff]
    %v6442 = vld [vmem:[#allocation28 + $0x440] sm:$0xff]
    %v6443 = vld [vmem:[#allocation28 + $0x448] sm:$0xff]
    %v6444 = vld [vmem:[#allocation28 + $0x450] sm:$0xff]
    %v6445 = vld [vmem:[#allocation28 + $0x458] sm:$0xff]
    %v6446 = vld [vmem:[#allocation28 + $0x460] sm:$0xff]
    %v6447 = vld [vmem:[#allocation28 + $0x468] sm:$0xff]
    %v6448 = vld [vmem:[#allocation28 + $0x470] sm:$0xff]
    %v6449 = vld [vmem:[#allocation28 + $0x478] sm:$0xff]
    %v6450 = vld [vmem:[#allocation28 + $0x480] sm:$0xff]
    %v6451 = vld [vmem:[#allocation28 + $0x488] sm:$0xff]
    %v6452 = vld [vmem:[#allocation28 + $0x490] sm:$0xff]
    %v6453 = vld [vmem:[#allocation28 + $0x498] sm:$0xff]
    %v6454 = vld [vmem:[#allocation28 + $0x4a0] sm:$0xff]
    %v6455 = vld [vmem:[#allocation28 + $0x4a8] sm:$0xff]
    %v6456 = vld [vmem:[#allocation28 + $0x4b0] sm:$0xff]
    %v6457 = vld [vmem:[#allocation28 + $0x4b8] sm:$0xff]
    %v6458 = vld [vmem:[#allocation28 + $0x4c0] sm:$0xff]
    %v6459 = vld [vmem:[#allocation28 + $0x4c8] sm:$0xff]
    %v6460 = vld [vmem:[#allocation28 + $0x4d0] sm:$0xff]
    %v6461 = vld [vmem:[#allocation28 + $0x4d8] sm:$0xff]
    %v6462 = vld [vmem:[#allocation28 + $0x4e0] sm:$0xff]
    %v6463 = vld [vmem:[#allocation28 + $0x4e8] sm:$0xff]
    %v6464 = vld [vmem:[#allocation28 + $0x4f0] sm:$0xff]
    %v6465 = vld [vmem:[#allocation28 + $0x4f8] sm:$0xff]
    %v6466 = vld [vmem:[#allocation28 + $0x500] sm:$0xff]
    %v6467 = vld [vmem:[#allocation28 + $0x508] sm:$0xff]
    %v6468 = vld [vmem:[#allocation28 + $0x510] sm:$0xff]
    %v6469 = vld [vmem:[#allocation28 + $0x518] sm:$0xff]
    %v6470 = vld [vmem:[#allocation28 + $0x520] sm:$0xff]
    %v6471 = vld [vmem:[#allocation28 + $0x528] sm:$0xff]
    %v6472 = vld [vmem:[#allocation28 + $0x530] sm:$0xff]
    %v6473 = vld [vmem:[#allocation28 + $0x538] sm:$0xff]
    %v6474 = vld [vmem:[#allocation28 + $0x540] sm:$0xff]
    %v6475 = vld [vmem:[#allocation28 + $0x548] sm:$0xff]
    %v6476 = vld [vmem:[#allocation28 + $0x550] sm:$0xff]
    %v6477 = vld [vmem:[#allocation28 + $0x558] sm:$0xff]
    %v6478 = vld [vmem:[#allocation28 + $0x560] sm:$0xff]
    %v6479 = vld [vmem:[#allocation28 + $0x568] sm:$0xff]
    %v6480 = vld [vmem:[#allocation28 + $0x570] sm:$0xff]
    %v6481 = vld [vmem:[#allocation28 + $0x578] sm:$0xff]
    %v6482 = vld [vmem:[#allocation28 + $0x580] sm:$0xff]
    %v6483 = vld [vmem:[#allocation28 + $0x588] sm:$0xff]
    %v6484 = vld [vmem:[#allocation28 + $0x590] sm:$0xff]
    %v6485 = vld [vmem:[#allocation28 + $0x598] sm:$0xff]
    %v6486 = vld [vmem:[#allocation28 + $0x5a0] sm:$0xff]
    %v6487 = vld [vmem:[#allocation28 + $0x5a8] sm:$0xff]
    %v6488 = vld [vmem:[#allocation28 + $0x5b0] sm:$0xff]
    %v6489 = vld [vmem:[#allocation28 + $0x5b8] sm:$0xff]
    %v6490 = vld [vmem:[#allocation28 + $0x5c0] sm:$0xff]
    %v6491 = vld [vmem:[#allocation28 + $0x5c8] sm:$0xff]
    %v6492 = vld [vmem:[#allocation28 + $0x5d0] sm:$0xff]
    %v6493 = vld [vmem:[#allocation28 + $0x5d8] sm:$0xff]
    %v6494 = vld [vmem:[#allocation28 + $0x5e0] sm:$0xff]
    %v6495 = vld [vmem:[#allocation28 + $0x5e8] sm:$0xff]
    %v6496 = vld [vmem:[#allocation28 + $0x5f0] sm:$0xff]
    %v6497 = vld [vmem:[#allocation28 + $0x5f8] sm:$0xff]
    %v6498 = vld [vmem:[#allocation28 + $0x600] sm:$0xff]
    %v6499 = vld [vmem:[#allocation28 + $0x608] sm:$0xff]
    %v6500 = vld [vmem:[#allocation28 + $0x610] sm:$0xff]
    %v6501 = vld [vmem:[#allocation28 + $0x618] sm:$0xff]
    %v6502 = vld [vmem:[#allocation28 + $0x620] sm:$0xff]
    %v6503 = vld [vmem:[#allocation28 + $0x628] sm:$0xff]
    %v6504 = vld [vmem:[#allocation28 + $0x630] sm:$0xff]
    %v6505 = vld [vmem:[#allocation28 + $0x638] sm:$0xff]
    %v6506 = vld [vmem:[#allocation28 + $0x640] sm:$0xff]
    %v6507 = vld [vmem:[#allocation28 + $0x648] sm:$0xff]
    %v6508 = vld [vmem:[#allocation28 + $0x650] sm:$0xff]
    %v6509 = vld [vmem:[#allocation28 + $0x658] sm:$0xff]
    %v6510 = vld [vmem:[#allocation28 + $0x660] sm:$0xff]
    %v6511 = vld [vmem:[#allocation28 + $0x668] sm:$0xff]
    %v6512 = vld [vmem:[#allocation28 + $0x670] sm:$0xff]
    %v6513 = vld [vmem:[#allocation28 + $0x678] sm:$0xff]
    %v6514 = vld [vmem:[#allocation28 + $0x680] sm:$0xff]
    %v6515 = vld [vmem:[#allocation28 + $0x688] sm:$0xff]
    %v6516 = vld [vmem:[#allocation28 + $0x690] sm:$0xff]
    %v6517 = vld [vmem:[#allocation28 + $0x698] sm:$0xff]
    %v6518 = vld [vmem:[#allocation28 + $0x6a0] sm:$0xff]
    %v6519 = vld [vmem:[#allocation28 + $0x6a8] sm:$0xff]
    %v6520 = vld [vmem:[#allocation28 + $0x6b0] sm:$0xff]
    %v6521 = vld [vmem:[#allocation28 + $0x6b8] sm:$0xff]
    %v6522 = vld [vmem:[#allocation28 + $0x6c0] sm:$0xff]
    %v6523 = vld [vmem:[#allocation28 + $0x6c8] sm:$0xff]
    %v6524 = vld [vmem:[#allocation28 + $0x6d0] sm:$0xff]
    %v6525 = vld [vmem:[#allocation28 + $0x6d8] sm:$0xff]
    %v6526 = vld [vmem:[#allocation28 + $0x6e0] sm:$0xff]
    %v6527 = vld [vmem:[#allocation28 + $0x6e8] sm:$0xff]
    %v6528 = vld [vmem:[#allocation28 + $0x6f0] sm:$0xff]
    %v6529 = vld [vmem:[#allocation28 + $0x6f8] sm:$0xff]
    %v6530 = vld [vmem:[#allocation28 + $0x700] sm:$0xff]
    %v6531 = vld [vmem:[#allocation28 + $0x708] sm:$0xff]
    %v6532 = vld [vmem:[#allocation28 + $0x710] sm:$0xff]
    %v6533 = vld [vmem:[#allocation28 + $0x718] sm:$0xff]
    %v6534 = vld [vmem:[#allocation28 + $0x720] sm:$0xff]
    %v6535 = vld [vmem:[#allocation28 + $0x728] sm:$0xff]
    %v6536 = vld [vmem:[#allocation28 + $0x730] sm:$0xff]
    %v6537 = vld [vmem:[#allocation28 + $0x738] sm:$0xff]
    %v6538 = vld [vmem:[#allocation28 + $0x740] sm:$0xff]
    %v6539 = vld [vmem:[#allocation28 + $0x748] sm:$0xff]
    %v6540 = vld [vmem:[#allocation28 + $0x750] sm:$0xff]
    %v6541 = vld [vmem:[#allocation28 + $0x758] sm:$0xff]
    %v6542 = vld [vmem:[#allocation28 + $0x760] sm:$0xff]
    %v6543 = vld [vmem:[#allocation28 + $0x768] sm:$0xff]
    %v6544 = vld [vmem:[#allocation28 + $0x770] sm:$0xff]
    %v6545 = vld [vmem:[#allocation28 + $0x778] sm:$0xff]
    %v6546 = vld [vmem:[#allocation28 + $0x780] sm:$0xff]
    %v6547 = vld [vmem:[#allocation28 + $0x788] sm:$0xff]
    %v6548 = vld [vmem:[#allocation28 + $0x790] sm:$0xff]
    %v6549 = vld [vmem:[#allocation28 + $0x798] sm:$0xff]
    %v6550 = vld [vmem:[#allocation28 + $0x7a0] sm:$0xff]
    %v6551 = vld [vmem:[#allocation28 + $0x7a8] sm:$0xff]
    %v6552 = vld [vmem:[#allocation28 + $0x7b0] sm:$0xff]
    %v6553 = vld [vmem:[#allocation28 + $0x7b8] sm:$0xff]
    %v6554 = vld [vmem:[#allocation28 + $0x7c0] sm:$0xff]
    %v6555 = vld [vmem:[#allocation28 + $0x7c8] sm:$0xff]
    %v6556 = vld [vmem:[#allocation28 + $0x7d0] sm:$0xff]
    %v6557 = vld [vmem:[#allocation28 + $0x7d8] sm:$0xff]
    %v6558 = vld [vmem:[#allocation28 + $0x7e0] sm:$0xff]
    %v6559 = vld [vmem:[#allocation28 + $0x7e8] sm:$0xff]
    %v6560 = vld [vmem:[#allocation28 + $0x7f0] sm:$0xff]
    %v6561 = vld [vmem:[#allocation28 + $0x7f8] sm:$0xff]
    %v6562 = vld [vmem:[#allocation29] sm:$0xf]
    %v6564 = vlaneseq
    %v6565 = vshrl.u32 %v6564, 7
    %v6566 = vsub.s32 0, %v6565
    %v6567 = vrot.slane %v6562, %v6566
    %v6568 = vlaneseq
    %v6569 = vshrl.u32 %v6568, 7
    %v6570 = vsub.s32 1, %v6569
    %v6571 = vrot.slane %v6562, %v6570
    %v6572 = vlaneseq
    %v6573 = vshrl.u32 %v6572, 7
    %v6574 = vsub.s32 2, %v6573
    %v6575 = vrot.slane %v6562, %v6574
    %v6576 = vlaneseq
    %v6577 = vshrl.u32 %v6576, 7
    %v6578 = vsub.s32 3, %v6577
    %v6579 = vrot.slane %v6562, %v6578
    %v6840 = vunpack.c.l.b16 %v6306
    %v6841 = vunpack.c.h.b16 %v6306
    %v6842 = vunpack.c.l.b16 %v6307
    %v6843 = vunpack.c.h.b16 %v6307
    %v6844 = vunpack.c.l.b16 %v6308
    %v6845 = vunpack.c.h.b16 %v6308
    %v6846 = vunpack.c.l.b16 %v6309
    %v6847 = vunpack.c.h.b16 %v6309
    %v6848 = vunpack.c.l.b16 %v6310
    %v6849 = vunpack.c.h.b16 %v6310
    %v6850 = vunpack.c.l.b16 %v6311
    %v6851 = vunpack.c.h.b16 %v6311
    %v6852 = vunpack.c.l.b16 %v6312
    %v6853 = vunpack.c.h.b16 %v6312
    %v6854 = vunpack.c.l.b16 %v6313
    %v6855 = vunpack.c.h.b16 %v6313
    %v6856 = vunpack.c.l.b16 %v6314
    %v6857 = vunpack.c.h.b16 %v6314
    %v6858 = vunpack.c.l.b16 %v6315
    %v6859 = vunpack.c.h.b16 %v6315
    %v6860 = vunpack.c.l.b16 %v6316
    %v6861 = vunpack.c.h.b16 %v6316
    %v6862 = vunpack.c.l.b16 %v6317
    %v6863 = vunpack.c.h.b16 %v6317
    %v6864 = vunpack.c.l.b16 %v6318
    %v6865 = vunpack.c.h.b16 %v6318
    %v6866 = vunpack.c.l.b16 %v6319
    %v6867 = vunpack.c.h.b16 %v6319
    %v6868 = vunpack.c.l.b16 %v6320
    %v6869 = vunpack.c.h.b16 %v6320
    %v6870 = vunpack.c.l.b16 %v6321
    %v6871 = vunpack.c.h.b16 %v6321
    %v6872 = vunpack.c.l.b16 %v6322
    %v6873 = vunpack.c.h.b16 %v6322
    %v6874 = vunpack.c.l.b16 %v6323
    %v6875 = vunpack.c.h.b16 %v6323
    %v6876 = vunpack.c.l.b16 %v6324
    %v6877 = vunpack.c.h.b16 %v6324
    %v6878 = vunpack.c.l.b16 %v6325
    %v6879 = vunpack.c.h.b16 %v6325
    %v6880 = vunpack.c.l.b16 %v6326
    %v6881 = vunpack.c.h.b16 %v6326
    %v6882 = vunpack.c.l.b16 %v6327
    %v6883 = vunpack.c.h.b16 %v6327
    %v6884 = vunpack.c.l.b16 %v6328
    %v6885 = vunpack.c.h.b16 %v6328
    %v6886 = vunpack.c.l.b16 %v6329
    %v6887 = vunpack.c.h.b16 %v6329
    %v6888 = vunpack.c.l.b16 %v6330
    %v6889 = vunpack.c.h.b16 %v6330
    %v6890 = vunpack.c.l.b16 %v6331
    %v6891 = vunpack.c.h.b16 %v6331
    %v6892 = vunpack.c.l.b16 %v6332
    %v6893 = vunpack.c.h.b16 %v6332
    %v6894 = vunpack.c.l.b16 %v6333
    %v6895 = vunpack.c.h.b16 %v6333
    %v6896 = vunpack.c.l.b16 %v6334
    %v6897 = vunpack.c.h.b16 %v6334
    %v6898 = vunpack.c.l.b16 %v6335
    %v6899 = vunpack.c.h.b16 %v6335
    %v6900 = vunpack.c.l.b16 %v6336
    %v6901 = vunpack.c.h.b16 %v6336
    %v6902 = vunpack.c.l.b16 %v6337
    %v6903 = vunpack.c.h.b16 %v6337
    %v6904 = vunpack.c.l.b16 %v6338
    %v6905 = vunpack.c.h.b16 %v6338
    %v6906 = vunpack.c.l.b16 %v6339
    %v6907 = vunpack.c.h.b16 %v6339
    %v6908 = vunpack.c.l.b16 %v6340
    %v6909 = vunpack.c.h.b16 %v6340
    %v6910 = vunpack.c.l.b16 %v6341
    %v6911 = vunpack.c.h.b16 %v6341
    %v6912 = vunpack.c.l.b16 %v6342
    %v6913 = vunpack.c.h.b16 %v6342
    %v6914 = vunpack.c.l.b16 %v6343
    %v6915 = vunpack.c.h.b16 %v6343
    %v6916 = vunpack.c.l.b16 %v6344
    %v6917 = vunpack.c.h.b16 %v6344
    %v6918 = vunpack.c.l.b16 %v6345
    %v6919 = vunpack.c.h.b16 %v6345
    %v6920 = vunpack.c.l.b16 %v6346
    %v6921 = vunpack.c.h.b16 %v6346
    %v6922 = vunpack.c.l.b16 %v6347
    %v6923 = vunpack.c.h.b16 %v6347
    %v6924 = vunpack.c.l.b16 %v6348
    %v6925 = vunpack.c.h.b16 %v6348
    %v6926 = vunpack.c.l.b16 %v6349
    %v6927 = vunpack.c.h.b16 %v6349
    %v6928 = vunpack.c.l.b16 %v6350
    %v6929 = vunpack.c.h.b16 %v6350
    %v6930 = vunpack.c.l.b16 %v6351
    %v6931 = vunpack.c.h.b16 %v6351
    %v6932 = vunpack.c.l.b16 %v6352
    %v6933 = vunpack.c.h.b16 %v6352
    %v6934 = vunpack.c.l.b16 %v6353
    %v6935 = vunpack.c.h.b16 %v6353
    %v6936 = vunpack.c.l.b16 %v6354
    %v6937 = vunpack.c.h.b16 %v6354
    %v6938 = vunpack.c.l.b16 %v6355
    %v6939 = vunpack.c.h.b16 %v6355
    %v6940 = vunpack.c.l.b16 %v6356
    %v6941 = vunpack.c.h.b16 %v6356
    %v6942 = vunpack.c.l.b16 %v6357
    %v6943 = vunpack.c.h.b16 %v6357
    %v6944 = vunpack.c.l.b16 %v6358
    %v6945 = vunpack.c.h.b16 %v6358
    %v6946 = vunpack.c.l.b16 %v6359
    %v6947 = vunpack.c.h.b16 %v6359
    %v6948 = vunpack.c.l.b16 %v6360
    %v6949 = vunpack.c.h.b16 %v6360
    %v6950 = vunpack.c.l.b16 %v6361
    %v6951 = vunpack.c.h.b16 %v6361
    %v6952 = vunpack.c.l.b16 %v6362
    %v6953 = vunpack.c.h.b16 %v6362
    %v6954 = vunpack.c.l.b16 %v6363
    %v6955 = vunpack.c.h.b16 %v6363
    %v6956 = vunpack.c.l.b16 %v6364
    %v6957 = vunpack.c.h.b16 %v6364
    %v6958 = vunpack.c.l.b16 %v6365
    %v6959 = vunpack.c.h.b16 %v6365
    %v6960 = vunpack.c.l.b16 %v6366
    %v6961 = vunpack.c.h.b16 %v6366
    %v6962 = vunpack.c.l.b16 %v6367
    %v6963 = vunpack.c.h.b16 %v6367
    %v6964 = vunpack.c.l.b16 %v6368
    %v6965 = vunpack.c.h.b16 %v6368
    %v6966 = vunpack.c.l.b16 %v6369
    %v6967 = vunpack.c.h.b16 %v6369
    %v6968 = vunpack.c.l.b16 %v6370
    %v6969 = vunpack.c.h.b16 %v6370
    %v6970 = vunpack.c.l.b16 %v6371
    %v6971 = vunpack.c.h.b16 %v6371
    %v6972 = vunpack.c.l.b16 %v6372
    %v6973 = vunpack.c.h.b16 %v6372
    %v6974 = vunpack.c.l.b16 %v6373
    %v6975 = vunpack.c.h.b16 %v6373
    %v6976 = vunpack.c.l.b16 %v6374
    %v6977 = vunpack.c.h.b16 %v6374
    %v6978 = vunpack.c.l.b16 %v6375
    %v6979 = vunpack.c.h.b16 %v6375
    %v6980 = vunpack.c.l.b16 %v6376
    %v6981 = vunpack.c.h.b16 %v6376
    %v6982 = vunpack.c.l.b16 %v6377
    %v6983 = vunpack.c.h.b16 %v6377
    %v6984 = vunpack.c.l.b16 %v6378
    %v6985 = vunpack.c.h.b16 %v6378
    %v6986 = vunpack.c.l.b16 %v6379
    %v6987 = vunpack.c.h.b16 %v6379
    %v6988 = vunpack.c.l.b16 %v6380
    %v6989 = vunpack.c.h.b16 %v6380
    %v6990 = vunpack.c.l.b16 %v6381
    %v6991 = vunpack.c.h.b16 %v6381
    %v6992 = vunpack.c.l.b16 %v6382
    %v6993 = vunpack.c.h.b16 %v6382
    %v6994 = vunpack.c.l.b16 %v6383
    %v6995 = vunpack.c.h.b16 %v6383
    %v6996 = vunpack.c.l.b16 %v6384
    %v6997 = vunpack.c.h.b16 %v6384
    %v6998 = vunpack.c.l.b16 %v6385
    %v6999 = vunpack.c.h.b16 %v6385
    %v7000 = vunpack.c.l.b16 %v6386
    %v7001 = vunpack.c.h.b16 %v6386
    %v7002 = vunpack.c.l.b16 %v6387
    %v7003 = vunpack.c.h.b16 %v6387
    %v7004 = vunpack.c.l.b16 %v6388
    %v7005 = vunpack.c.h.b16 %v6388
    %v7006 = vunpack.c.l.b16 %v6389
    %v7007 = vunpack.c.h.b16 %v6389
    %v7008 = vunpack.c.l.b16 %v6390
    %v7009 = vunpack.c.h.b16 %v6390
    %v7010 = vunpack.c.l.b16 %v6391
    %v7011 = vunpack.c.h.b16 %v6391
    %v7012 = vunpack.c.l.b16 %v6392
    %v7013 = vunpack.c.h.b16 %v6392
    %v7014 = vunpack.c.l.b16 %v6393
    %v7015 = vunpack.c.h.b16 %v6393
    %v7016 = vunpack.c.l.b16 %v6394
    %v7017 = vunpack.c.h.b16 %v6394
    %v7018 = vunpack.c.l.b16 %v6395
    %v7019 = vunpack.c.h.b16 %v6395
    %v7020 = vunpack.c.l.b16 %v6396
    %v7021 = vunpack.c.h.b16 %v6396
    %v7022 = vunpack.c.l.b16 %v6397
    %v7023 = vunpack.c.h.b16 %v6397
    %v7024 = vunpack.c.l.b16 %v6398
    %v7025 = vunpack.c.h.b16 %v6398
    %v7026 = vunpack.c.l.b16 %v6399
    %v7027 = vunpack.c.h.b16 %v6399
    %v7028 = vunpack.c.l.b16 %v6400
    %v7029 = vunpack.c.h.b16 %v6400
    %v7030 = vunpack.c.l.b16 %v6401
    %v7031 = vunpack.c.h.b16 %v6401
    %v7032 = vunpack.c.l.b16 %v6402
    %v7033 = vunpack.c.h.b16 %v6402
    %v7034 = vunpack.c.l.b16 %v6403
    %v7035 = vunpack.c.h.b16 %v6403
    %v7036 = vunpack.c.l.b16 %v6404
    %v7037 = vunpack.c.h.b16 %v6404
    %v7038 = vunpack.c.l.b16 %v6405
    %v7039 = vunpack.c.h.b16 %v6405
    %v7040 = vunpack.c.l.b16 %v6406
    %v7041 = vunpack.c.h.b16 %v6406
    %v7042 = vunpack.c.l.b16 %v6407
    %v7043 = vunpack.c.h.b16 %v6407
    %v7044 = vunpack.c.l.b16 %v6408
    %v7045 = vunpack.c.h.b16 %v6408
    %v7046 = vunpack.c.l.b16 %v6409
    %v7047 = vunpack.c.h.b16 %v6409
    %v7048 = vunpack.c.l.b16 %v6410
    %v7049 = vunpack.c.h.b16 %v6410
    %v7050 = vunpack.c.l.b16 %v6411
    %v7051 = vunpack.c.h.b16 %v6411
    %v7052 = vunpack.c.l.b16 %v6412
    %v7053 = vunpack.c.h.b16 %v6412
    %v7054 = vunpack.c.l.b16 %v6413
    %v7055 = vunpack.c.h.b16 %v6413
    %v7056 = vunpack.c.l.b16 %v6414
    %v7057 = vunpack.c.h.b16 %v6414
    %v7058 = vunpack.c.l.b16 %v6415
    %v7059 = vunpack.c.h.b16 %v6415
    %v7060 = vunpack.c.l.b16 %v6416
    %v7061 = vunpack.c.h.b16 %v6416
    %v7062 = vunpack.c.l.b16 %v6417
    %v7063 = vunpack.c.h.b16 %v6417
    %v7064 = vunpack.c.l.b16 %v6418
    %v7065 = vunpack.c.h.b16 %v6418
    %v7066 = vunpack.c.l.b16 %v6419
    %v7067 = vunpack.c.h.b16 %v6419
    %v7068 = vunpack.c.l.b16 %v6420
    %v7069 = vunpack.c.h.b16 %v6420
    %v7070 = vunpack.c.l.b16 %v6421
    %v7071 = vunpack.c.h.b16 %v6421
    %v7072 = vunpack.c.l.b16 %v6422
    %v7073 = vunpack.c.h.b16 %v6422
    %v7074 = vunpack.c.l.b16 %v6423
    %v7075 = vunpack.c.h.b16 %v6423
    %v7076 = vunpack.c.l.b16 %v6424
    %v7077 = vunpack.c.h.b16 %v6424
    %v7078 = vunpack.c.l.b16 %v6425
    %v7079 = vunpack.c.h.b16 %v6425
    %v7080 = vunpack.c.l.b16 %v6426
    %v7081 = vunpack.c.h.b16 %v6426
    %v7082 = vunpack.c.l.b16 %v6427
    %v7083 = vunpack.c.h.b16 %v6427
    %v7084 = vunpack.c.l.b16 %v6428
    %v7085 = vunpack.c.h.b16 %v6428
    %v7086 = vunpack.c.l.b16 %v6429
    %v7087 = vunpack.c.h.b16 %v6429
    %v7088 = vunpack.c.l.b16 %v6430
    %v7089 = vunpack.c.h.b16 %v6430
    %v7090 = vunpack.c.l.b16 %v6431
    %v7091 = vunpack.c.h.b16 %v6431
    %v7092 = vunpack.c.l.b16 %v6432
    %v7093 = vunpack.c.h.b16 %v6432
    %v7094 = vunpack.c.l.b16 %v6433
    %v7095 = vunpack.c.h.b16 %v6433
    %v7096 = vunpack.c.l.b16 %v6434
    %v7097 = vunpack.c.h.b16 %v6434
    %v7098 = vunpack.c.l.b16 %v6435
    %v7099 = vunpack.c.h.b16 %v6435
    %v7100 = vunpack.c.l.b16 %v6436
    %v7101 = vunpack.c.h.b16 %v6436
    %v7102 = vunpack.c.l.b16 %v6437
    %v7103 = vunpack.c.h.b16 %v6437
    %v7104 = vunpack.c.l.b16 %v6438
    %v7105 = vunpack.c.h.b16 %v6438
    %v7106 = vunpack.c.l.b16 %v6439
    %v7107 = vunpack.c.h.b16 %v6439
    %v7108 = vunpack.c.l.b16 %v6440
    %v7109 = vunpack.c.h.b16 %v6440
    %v7110 = vunpack.c.l.b16 %v6441
    %v7111 = vunpack.c.h.b16 %v6441
    %v7112 = vunpack.c.l.b16 %v6442
    %v7113 = vunpack.c.h.b16 %v6442
    %v7114 = vunpack.c.l.b16 %v6443
    %v7115 = vunpack.c.h.b16 %v6443
    %v7116 = vunpack.c.l.b16 %v6444
    %v7117 = vunpack.c.h.b16 %v6444
    %v7118 = vunpack.c.l.b16 %v6445
    %v7119 = vunpack.c.h.b16 %v6445
    %v7120 = vunpack.c.l.b16 %v6446
    %v7121 = vunpack.c.h.b16 %v6446
    %v7122 = vunpack.c.l.b16 %v6447
    %v7123 = vunpack.c.h.b16 %v6447
    %v7124 = vunpack.c.l.b16 %v6448
    %v7125 = vunpack.c.h.b16 %v6448
    %v7126 = vunpack.c.l.b16 %v6449
    %v7127 = vunpack.c.h.b16 %v6449
    %v7128 = vunpack.c.l.b16 %v6450
    %v7129 = vunpack.c.h.b16 %v6450
    %v7130 = vunpack.c.l.b16 %v6451
    %v7131 = vunpack.c.h.b16 %v6451
    %v7132 = vunpack.c.l.b16 %v6452
    %v7133 = vunpack.c.h.b16 %v6452
    %v7134 = vunpack.c.l.b16 %v6453
    %v7135 = vunpack.c.h.b16 %v6453
    %v7136 = vunpack.c.l.b16 %v6454
    %v7137 = vunpack.c.h.b16 %v6454
    %v7138 = vunpack.c.l.b16 %v6455
    %v7139 = vunpack.c.h.b16 %v6455
    %v7140 = vunpack.c.l.b16 %v6456
    %v7141 = vunpack.c.h.b16 %v6456
    %v7142 = vunpack.c.l.b16 %v6457
    %v7143 = vunpack.c.h.b16 %v6457
    %v7144 = vunpack.c.l.b16 %v6458
    %v7145 = vunpack.c.h.b16 %v6458
    %v7146 = vunpack.c.l.b16 %v6459
    %v7147 = vunpack.c.h.b16 %v6459
    %v7148 = vunpack.c.l.b16 %v6460
    %v7149 = vunpack.c.h.b16 %v6460
    %v7150 = vunpack.c.l.b16 %v6461
    %v7151 = vunpack.c.h.b16 %v6461
    %v7152 = vunpack.c.l.b16 %v6462
    %v7153 = vunpack.c.h.b16 %v6462
    %v7154 = vunpack.c.l.b16 %v6463
    %v7155 = vunpack.c.h.b16 %v6463
    %v7156 = vunpack.c.l.b16 %v6464
    %v7157 = vunpack.c.h.b16 %v6464
    %v7158 = vunpack.c.l.b16 %v6465
    %v7159 = vunpack.c.h.b16 %v6465
    %v7160 = vunpack.c.l.b16 %v6466
    %v7161 = vunpack.c.h.b16 %v6466
    %v7162 = vunpack.c.l.b16 %v6467
    %v7163 = vunpack.c.h.b16 %v6467
    %v7164 = vunpack.c.l.b16 %v6468
    %v7165 = vunpack.c.h.b16 %v6468
    %v7166 = vunpack.c.l.b16 %v6469
    %v7167 = vunpack.c.h.b16 %v6469
    %v7168 = vunpack.c.l.b16 %v6470
    %v7169 = vunpack.c.h.b16 %v6470
    %v7170 = vunpack.c.l.b16 %v6471
    %v7171 = vunpack.c.h.b16 %v6471
    %v7172 = vunpack.c.l.b16 %v6472
    %v7173 = vunpack.c.h.b16 %v6472
    %v7174 = vunpack.c.l.b16 %v6473
    %v7175 = vunpack.c.h.b16 %v6473
    %v7176 = vunpack.c.l.b16 %v6474
    %v7177 = vunpack.c.h.b16 %v6474
    %v7178 = vunpack.c.l.b16 %v6475
    %v7179 = vunpack.c.h.b16 %v6475
    %v7180 = vunpack.c.l.b16 %v6476
    %v7181 = vunpack.c.h.b16 %v6476
    %v7182 = vunpack.c.l.b16 %v6477
    %v7183 = vunpack.c.h.b16 %v6477
    %v7184 = vunpack.c.l.b16 %v6478
    %v7185 = vunpack.c.h.b16 %v6478
    %v7186 = vunpack.c.l.b16 %v6479
    %v7187 = vunpack.c.h.b16 %v6479
    %v7188 = vunpack.c.l.b16 %v6480
    %v7189 = vunpack.c.h.b16 %v6480
    %v7190 = vunpack.c.l.b16 %v6481
    %v7191 = vunpack.c.h.b16 %v6481
    %v7192 = vunpack.c.l.b16 %v6482
    %v7193 = vunpack.c.h.b16 %v6482
    %v7194 = vunpack.c.l.b16 %v6483
    %v7195 = vunpack.c.h.b16 %v6483
    %v7196 = vunpack.c.l.b16 %v6484
    %v7197 = vunpack.c.h.b16 %v6484
    %v7198 = vunpack.c.l.b16 %v6485
    %v7199 = vunpack.c.h.b16 %v6485
    %v7200 = vunpack.c.l.b16 %v6486
    %v7201 = vunpack.c.h.b16 %v6486
    %v7202 = vunpack.c.l.b16 %v6487
    %v7203 = vunpack.c.h.b16 %v6487
    %v7204 = vunpack.c.l.b16 %v6488
    %v7205 = vunpack.c.h.b16 %v6488
    %v7206 = vunpack.c.l.b16 %v6489
    %v7207 = vunpack.c.h.b16 %v6489
    %v7208 = vunpack.c.l.b16 %v6490
    %v7209 = vunpack.c.h.b16 %v6490
    %v7210 = vunpack.c.l.b16 %v6491
    %v7211 = vunpack.c.h.b16 %v6491
    %v7212 = vunpack.c.l.b16 %v6492
    %v7213 = vunpack.c.h.b16 %v6492
    %v7214 = vunpack.c.l.b16 %v6493
    %v7215 = vunpack.c.h.b16 %v6493
    %v7216 = vunpack.c.l.b16 %v6494
    %v7217 = vunpack.c.h.b16 %v6494
    %v7218 = vunpack.c.l.b16 %v6495
    %v7219 = vunpack.c.h.b16 %v6495
    %v7220 = vunpack.c.l.b16 %v6496
    %v7221 = vunpack.c.h.b16 %v6496
    %v7222 = vunpack.c.l.b16 %v6497
    %v7223 = vunpack.c.h.b16 %v6497
    %v7224 = vunpack.c.l.b16 %v6498
    %v7225 = vunpack.c.h.b16 %v6498
    %v7226 = vunpack.c.l.b16 %v6499
    %v7227 = vunpack.c.h.b16 %v6499
    %v7228 = vunpack.c.l.b16 %v6500
    %v7229 = vunpack.c.h.b16 %v6500
    %v7230 = vunpack.c.l.b16 %v6501
    %v7231 = vunpack.c.h.b16 %v6501
    %v7232 = vunpack.c.l.b16 %v6502
    %v7233 = vunpack.c.h.b16 %v6502
    %v7234 = vunpack.c.l.b16 %v6503
    %v7235 = vunpack.c.h.b16 %v6503
    %v7236 = vunpack.c.l.b16 %v6504
    %v7237 = vunpack.c.h.b16 %v6504
    %v7238 = vunpack.c.l.b16 %v6505
    %v7239 = vunpack.c.h.b16 %v6505
    %v7240 = vunpack.c.l.b16 %v6506
    %v7241 = vunpack.c.h.b16 %v6506
    %v7242 = vunpack.c.l.b16 %v6507
    %v7243 = vunpack.c.h.b16 %v6507
    %v7244 = vunpack.c.l.b16 %v6508
    %v7245 = vunpack.c.h.b16 %v6508
    %v7246 = vunpack.c.l.b16 %v6509
    %v7247 = vunpack.c.h.b16 %v6509
    %v7248 = vunpack.c.l.b16 %v6510
    %v7249 = vunpack.c.h.b16 %v6510
    %v7250 = vunpack.c.l.b16 %v6511
    %v7251 = vunpack.c.h.b16 %v6511
    %v7252 = vunpack.c.l.b16 %v6512
    %v7253 = vunpack.c.h.b16 %v6512
    %v7254 = vunpack.c.l.b16 %v6513
    %v7255 = vunpack.c.h.b16 %v6513
    %v7256 = vunpack.c.l.b16 %v6514
    %v7257 = vunpack.c.h.b16 %v6514
    %v7258 = vunpack.c.l.b16 %v6515
    %v7259 = vunpack.c.h.b16 %v6515
    %v7260 = vunpack.c.l.b16 %v6516
    %v7261 = vunpack.c.h.b16 %v6516
    %v7262 = vunpack.c.l.b16 %v6517
    %v7263 = vunpack.c.h.b16 %v6517
    %v7264 = vunpack.c.l.b16 %v6518
    %v7265 = vunpack.c.h.b16 %v6518
    %v7266 = vunpack.c.l.b16 %v6519
    %v7267 = vunpack.c.h.b16 %v6519
    %v7268 = vunpack.c.l.b16 %v6520
    %v7269 = vunpack.c.h.b16 %v6520
    %v7270 = vunpack.c.l.b16 %v6521
    %v7271 = vunpack.c.h.b16 %v6521
    %v7272 = vunpack.c.l.b16 %v6522
    %v7273 = vunpack.c.h.b16 %v6522
    %v7274 = vunpack.c.l.b16 %v6523
    %v7275 = vunpack.c.h.b16 %v6523
    %v7276 = vunpack.c.l.b16 %v6524
    %v7277 = vunpack.c.h.b16 %v6524
    %v7278 = vunpack.c.l.b16 %v6525
    %v7279 = vunpack.c.h.b16 %v6525
    %v7280 = vunpack.c.l.b16 %v6526
    %v7281 = vunpack.c.h.b16 %v6526
    %v7282 = vunpack.c.l.b16 %v6527
    %v7283 = vunpack.c.h.b16 %v6527
    %v7284 = vunpack.c.l.b16 %v6528
    %v7285 = vunpack.c.h.b16 %v6528
    %v7286 = vunpack.c.l.b16 %v6529
    %v7287 = vunpack.c.h.b16 %v6529
    %v7288 = vunpack.c.l.b16 %v6530
    %v7289 = vunpack.c.h.b16 %v6530
    %v7290 = vunpack.c.l.b16 %v6531
    %v7291 = vunpack.c.h.b16 %v6531
    %v7292 = vunpack.c.l.b16 %v6532
    %v7293 = vunpack.c.h.b16 %v6532
    %v7294 = vunpack.c.l.b16 %v6533
    %v7295 = vunpack.c.h.b16 %v6533
    %v7296 = vunpack.c.l.b16 %v6534
    %v7297 = vunpack.c.h.b16 %v6534
    %v7298 = vunpack.c.l.b16 %v6535
    %v7299 = vunpack.c.h.b16 %v6535
    %v7300 = vunpack.c.l.b16 %v6536
    %v7301 = vunpack.c.h.b16 %v6536
    %v7302 = vunpack.c.l.b16 %v6537
    %v7303 = vunpack.c.h.b16 %v6537
    %v7304 = vunpack.c.l.b16 %v6538
    %v7305 = vunpack.c.h.b16 %v6538
    %v7306 = vunpack.c.l.b16 %v6539
    %v7307 = vunpack.c.h.b16 %v6539
    %v7308 = vunpack.c.l.b16 %v6540
    %v7309 = vunpack.c.h.b16 %v6540
    %v7310 = vunpack.c.l.b16 %v6541
    %v7311 = vunpack.c.h.b16 %v6541
    %v7312 = vunpack.c.l.b16 %v6542
    %v7313 = vunpack.c.h.b16 %v6542
    %v7314 = vunpack.c.l.b16 %v6543
    %v7315 = vunpack.c.h.b16 %v6543
    %v7316 = vunpack.c.l.b16 %v6544
    %v7317 = vunpack.c.h.b16 %v6544
    %v7318 = vunpack.c.l.b16 %v6545
    %v7319 = vunpack.c.h.b16 %v6545
    %v7320 = vunpack.c.l.b16 %v6546
    %v7321 = vunpack.c.h.b16 %v6546
    %v7322 = vunpack.c.l.b16 %v6547
    %v7323 = vunpack.c.h.b16 %v6547
    %v7324 = vunpack.c.l.b16 %v6548
    %v7325 = vunpack.c.h.b16 %v6548
    %v7326 = vunpack.c.l.b16 %v6549
    %v7327 = vunpack.c.h.b16 %v6549
    %v7328 = vunpack.c.l.b16 %v6550
    %v7329 = vunpack.c.h.b16 %v6550
    %v7330 = vunpack.c.l.b16 %v6551
    %v7331 = vunpack.c.h.b16 %v6551
    %v7332 = vunpack.c.l.b16 %v6552
    %v7333 = vunpack.c.h.b16 %v6552
    %v7334 = vunpack.c.l.b16 %v6553
    %v7335 = vunpack.c.h.b16 %v6553
    %v7336 = vunpack.c.l.b16 %v6554
    %v7337 = vunpack.c.h.b16 %v6554
    %v7338 = vunpack.c.l.b16 %v6555
    %v7339 = vunpack.c.h.b16 %v6555
    %v7340 = vunpack.c.l.b16 %v6556
    %v7341 = vunpack.c.h.b16 %v6556
    %v7342 = vunpack.c.l.b16 %v6557
    %v7343 = vunpack.c.h.b16 %v6557
    %v7344 = vunpack.c.l.b16 %v6558
    %v7345 = vunpack.c.h.b16 %v6558
    %v7346 = vunpack.c.l.b16 %v6559
    %v7347 = vunpack.c.h.b16 %v6559
    %v7348 = vunpack.c.l.b16 %v6560
    %v7349 = vunpack.c.h.b16 %v6560
    %v7350 = vunpack.c.l.b16 %v6561
    %v7351 = vunpack.c.h.b16 %v6561
    %v7352 = vpack.c.b16 %v6844, %v6840
    %v7353 = vpack.c.b16 %v6845, %v6841
    %v7354 = vpack.c.b16 %v6846, %v6842
    %v7355 = vpack.c.b16 %v6847, %v6843
    %v7356 = vpack.c.b16 %v6852, %v6848
    %v7357 = vpack.c.b16 %v6853, %v6849
    %v7358 = vpack.c.b16 %v6854, %v6850
    %v7359 = vpack.c.b16 %v6855, %v6851
    %v7360 = vpack.c.b16 %v6860, %v6856
    %v7361 = vpack.c.b16 %v6861, %v6857
    %v7362 = vpack.c.b16 %v6862, %v6858
    %v7363 = vpack.c.b16 %v6863, %v6859
    %v7364 = vpack.c.b16 %v6868, %v6864
    %v7365 = vpack.c.b16 %v6869, %v6865
    %v7366 = vpack.c.b16 %v6870, %v6866
    %v7367 = vpack.c.b16 %v6871, %v6867
    %v7368 = vpack.c.b16 %v6876, %v6872
    %v7369 = vpack.c.b16 %v6877, %v6873
    %v7370 = vpack.c.b16 %v6878, %v6874
    %v7371 = vpack.c.b16 %v6879, %v6875
    %v7372 = vpack.c.b16 %v6884, %v6880
    %v7373 = vpack.c.b16 %v6885, %v6881
    %v7374 = vpack.c.b16 %v6886, %v6882
    %v7375 = vpack.c.b16 %v6887, %v6883
    %v7376 = vpack.c.b16 %v6892, %v6888
    %v7377 = vpack.c.b16 %v6893, %v6889
    %v7378 = vpack.c.b16 %v6894, %v6890
    %v7379 = vpack.c.b16 %v6895, %v6891
    %v7380 = vpack.c.b16 %v6900, %v6896
    %v7381 = vpack.c.b16 %v6901, %v6897
    %v7382 = vpack.c.b16 %v6902, %v6898
    %v7383 = vpack.c.b16 %v6903, %v6899
    %v7384 = vpack.c.b16 %v6908, %v6904
    %v7385 = vpack.c.b16 %v6909, %v6905
    %v7386 = vpack.c.b16 %v6910, %v6906
    %v7387 = vpack.c.b16 %v6911, %v6907
    %v7388 = vpack.c.b16 %v6916, %v6912
    %v7389 = vpack.c.b16 %v6917, %v6913
    %v7390 = vpack.c.b16 %v6918, %v6914
    %v7391 = vpack.c.b16 %v6919, %v6915
    %v7392 = vpack.c.b16 %v6924, %v6920
    %v7393 = vpack.c.b16 %v6925, %v6921
    %v7394 = vpack.c.b16 %v6926, %v6922
    %v7395 = vpack.c.b16 %v6927, %v6923
    %v7396 = vpack.c.b16 %v6932, %v6928
    %v7397 = vpack.c.b16 %v6933, %v6929
    %v7398 = vpack.c.b16 %v6934, %v6930
    %v7399 = vpack.c.b16 %v6935, %v6931
    %v7400 = vpack.c.b16 %v6940, %v6936
    %v7401 = vpack.c.b16 %v6941, %v6937
    %v7402 = vpack.c.b16 %v6942, %v6938
    %v7403 = vpack.c.b16 %v6943, %v6939
    %v7404 = vpack.c.b16 %v6948, %v6944
    %v7405 = vpack.c.b16 %v6949, %v6945
    %v7406 = vpack.c.b16 %v6950, %v6946
    %v7407 = vpack.c.b16 %v6951, %v6947
    %v7408 = vpack.c.b16 %v6956, %v6952
    %v7409 = vpack.c.b16 %v6957, %v6953
    %v7410 = vpack.c.b16 %v6958, %v6954
    %v7411 = vpack.c.b16 %v6959, %v6955
    %v7412 = vpack.c.b16 %v6964, %v6960
    %v7413 = vpack.c.b16 %v6965, %v6961
    %v7414 = vpack.c.b16 %v6966, %v6962
    %v7415 = vpack.c.b16 %v6967, %v6963
    %v7416 = vpack.c.b16 %v6972, %v6968
    %v7417 = vpack.c.b16 %v6973, %v6969
    %v7418 = vpack.c.b16 %v6974, %v6970
    %v7419 = vpack.c.b16 %v6975, %v6971
    %v7420 = vpack.c.b16 %v6980, %v6976
    %v7421 = vpack.c.b16 %v6981, %v6977
    %v7422 = vpack.c.b16 %v6982, %v6978
    %v7423 = vpack.c.b16 %v6983, %v6979
    %v7424 = vpack.c.b16 %v6988, %v6984
    %v7425 = vpack.c.b16 %v6989, %v6985
    %v7426 = vpack.c.b16 %v6990, %v6986
    %v7427 = vpack.c.b16 %v6991, %v6987
    %v7428 = vpack.c.b16 %v6996, %v6992
    %v7429 = vpack.c.b16 %v6997, %v6993
    %v7430 = vpack.c.b16 %v6998, %v6994
    %v7431 = vpack.c.b16 %v6999, %v6995
    %v7432 = vpack.c.b16 %v7004, %v7000
    %v7433 = vpack.c.b16 %v7005, %v7001
    %v7434 = vpack.c.b16 %v7006, %v7002
    %v7435 = vpack.c.b16 %v7007, %v7003
    %v7436 = vpack.c.b16 %v7012, %v7008
    %v7437 = vpack.c.b16 %v7013, %v7009
    %v7438 = vpack.c.b16 %v7014, %v7010
    %v7439 = vpack.c.b16 %v7015, %v7011
    %v7440 = vpack.c.b16 %v7020, %v7016
    %v7441 = vpack.c.b16 %v7021, %v7017
    %v7442 = vpack.c.b16 %v7022, %v7018
    %v7443 = vpack.c.b16 %v7023, %v7019
    %v7444 = vpack.c.b16 %v7028, %v7024
    %v7445 = vpack.c.b16 %v7029, %v7025
    %v7446 = vpack.c.b16 %v7030, %v7026
    %v7447 = vpack.c.b16 %v7031, %v7027
    %v7448 = vpack.c.b16 %v7036, %v7032
    %v7449 = vpack.c.b16 %v7037, %v7033
    %v7450 = vpack.c.b16 %v7038, %v7034
    %v7451 = vpack.c.b16 %v7039, %v7035
    %v7452 = vpack.c.b16 %v7044, %v7040
    %v7453 = vpack.c.b16 %v7045, %v7041
    %v7454 = vpack.c.b16 %v7046, %v7042
    %v7455 = vpack.c.b16 %v7047, %v7043
    %v7456 = vpack.c.b16 %v7052, %v7048
    %v7457 = vpack.c.b16 %v7053, %v7049
    %v7458 = vpack.c.b16 %v7054, %v7050
    %v7459 = vpack.c.b16 %v7055, %v7051
    %v7460 = vpack.c.b16 %v7060, %v7056
    %v7461 = vpack.c.b16 %v7061, %v7057
    %v7462 = vpack.c.b16 %v7062, %v7058
    %v7463 = vpack.c.b16 %v7063, %v7059
    %v7464 = vpack.c.b16 %v7068, %v7064
    %v7465 = vpack.c.b16 %v7069, %v7065
    %v7466 = vpack.c.b16 %v7070, %v7066
    %v7467 = vpack.c.b16 %v7071, %v7067
    %v7468 = vpack.c.b16 %v7076, %v7072
    %v7469 = vpack.c.b16 %v7077, %v7073
    %v7470 = vpack.c.b16 %v7078, %v7074
    %v7471 = vpack.c.b16 %v7079, %v7075
    %v7472 = vpack.c.b16 %v7084, %v7080
    %v7473 = vpack.c.b16 %v7085, %v7081
    %v7474 = vpack.c.b16 %v7086, %v7082
    %v7475 = vpack.c.b16 %v7087, %v7083
    %v7476 = vpack.c.b16 %v7092, %v7088
    %v7477 = vpack.c.b16 %v7093, %v7089
    %v7478 = vpack.c.b16 %v7094, %v7090
    %v7479 = vpack.c.b16 %v7095, %v7091
    %v7480 = vpack.c.b16 %v7100, %v7096
    %v7481 = vpack.c.b16 %v7101, %v7097
    %v7482 = vpack.c.b16 %v7102, %v7098
    %v7483 = vpack.c.b16 %v7103, %v7099
    %v7484 = vpack.c.b16 %v7108, %v7104
    %v7485 = vpack.c.b16 %v7109, %v7105
    %v7486 = vpack.c.b16 %v7110, %v7106
    %v7487 = vpack.c.b16 %v7111, %v7107
    %v7488 = vpack.c.b16 %v7116, %v7112
    %v7489 = vpack.c.b16 %v7117, %v7113
    %v7490 = vpack.c.b16 %v7118, %v7114
    %v7491 = vpack.c.b16 %v7119, %v7115
    %v7492 = vpack.c.b16 %v7124, %v7120
    %v7493 = vpack.c.b16 %v7125, %v7121
    %v7494 = vpack.c.b16 %v7126, %v7122
    %v7495 = vpack.c.b16 %v7127, %v7123
    %v7496 = vpack.c.b16 %v7132, %v7128
    %v7497 = vpack.c.b16 %v7133, %v7129
    %v7498 = vpack.c.b16 %v7134, %v7130
    %v7499 = vpack.c.b16 %v7135, %v7131
    %v7500 = vpack.c.b16 %v7140, %v7136
    %v7501 = vpack.c.b16 %v7141, %v7137
    %v7502 = vpack.c.b16 %v7142, %v7138
    %v7503 = vpack.c.b16 %v7143, %v7139
    %v7504 = vpack.c.b16 %v7148, %v7144
    %v7505 = vpack.c.b16 %v7149, %v7145
    %v7506 = vpack.c.b16 %v7150, %v7146
    %v7507 = vpack.c.b16 %v7151, %v7147
    %v7508 = vpack.c.b16 %v7156, %v7152
    %v7509 = vpack.c.b16 %v7157, %v7153
    %v7510 = vpack.c.b16 %v7158, %v7154
    %v7511 = vpack.c.b16 %v7159, %v7155
    %v7512 = vpack.c.b16 %v7164, %v7160
    %v7513 = vpack.c.b16 %v7165, %v7161
    %v7514 = vpack.c.b16 %v7166, %v7162
    %v7515 = vpack.c.b16 %v7167, %v7163
    %v7516 = vpack.c.b16 %v7172, %v7168
    %v7517 = vpack.c.b16 %v7173, %v7169
    %v7518 = vpack.c.b16 %v7174, %v7170
    %v7519 = vpack.c.b16 %v7175, %v7171
    %v7520 = vpack.c.b16 %v7180, %v7176
    %v7521 = vpack.c.b16 %v7181, %v7177
    %v7522 = vpack.c.b16 %v7182, %v7178
    %v7523 = vpack.c.b16 %v7183, %v7179
    %v7524 = vpack.c.b16 %v7188, %v7184
    %v7525 = vpack.c.b16 %v7189, %v7185
    %v7526 = vpack.c.b16 %v7190, %v7186
    %v7527 = vpack.c.b16 %v7191, %v7187
    %v7528 = vpack.c.b16 %v7196, %v7192
    %v7529 = vpack.c.b16 %v7197, %v7193
    %v7530 = vpack.c.b16 %v7198, %v7194
    %v7531 = vpack.c.b16 %v7199, %v7195
    %v7532 = vpack.c.b16 %v7204, %v7200
    %v7533 = vpack.c.b16 %v7205, %v7201
    %v7534 = vpack.c.b16 %v7206, %v7202
    %v7535 = vpack.c.b16 %v7207, %v7203
    %v7536 = vpack.c.b16 %v7212, %v7208
    %v7537 = vpack.c.b16 %v7213, %v7209
    %v7538 = vpack.c.b16 %v7214, %v7210
    %v7539 = vpack.c.b16 %v7215, %v7211
    %v7540 = vpack.c.b16 %v7220, %v7216
    %v7541 = vpack.c.b16 %v7221, %v7217
    %v7542 = vpack.c.b16 %v7222, %v7218
    %v7543 = vpack.c.b16 %v7223, %v7219
    %v7544 = vpack.c.b16 %v7228, %v7224
    %v7545 = vpack.c.b16 %v7229, %v7225
    %v7546 = vpack.c.b16 %v7230, %v7226
    %v7547 = vpack.c.b16 %v7231, %v7227
    %v7548 = vpack.c.b16 %v7236, %v7232
    %v7549 = vpack.c.b16 %v7237, %v7233
    %v7550 = vpack.c.b16 %v7238, %v7234
    %v7551 = vpack.c.b16 %v7239, %v7235
    %v7552 = vpack.c.b16 %v7244, %v7240
    %v7553 = vpack.c.b16 %v7245, %v7241
    %v7554 = vpack.c.b16 %v7246, %v7242
    %v7555 = vpack.c.b16 %v7247, %v7243
    %v7556 = vpack.c.b16 %v7252, %v7248
    %v7557 = vpack.c.b16 %v7253, %v7249
    %v7558 = vpack.c.b16 %v7254, %v7250
    %v7559 = vpack.c.b16 %v7255, %v7251
    %v7560 = vpack.c.b16 %v7260, %v7256
    %v7561 = vpack.c.b16 %v7261, %v7257
    %v7562 = vpack.c.b16 %v7262, %v7258
    %v7563 = vpack.c.b16 %v7263, %v7259
    %v7564 = vpack.c.b16 %v7268, %v7264
    %v7565 = vpack.c.b16 %v7269, %v7265
    %v7566 = vpack.c.b16 %v7270, %v7266
    %v7567 = vpack.c.b16 %v7271, %v7267
    %v7568 = vpack.c.b16 %v7276, %v7272
    %v7569 = vpack.c.b16 %v7277, %v7273
    %v7570 = vpack.c.b16 %v7278, %v7274
    %v7571 = vpack.c.b16 %v7279, %v7275
    %v7572 = vpack.c.b16 %v7284, %v7280
    %v7573 = vpack.c.b16 %v7285, %v7281
    %v7574 = vpack.c.b16 %v7286, %v7282
    %v7575 = vpack.c.b16 %v7287, %v7283
    %v7576 = vpack.c.b16 %v7292, %v7288
    %v7577 = vpack.c.b16 %v7293, %v7289
    %v7578 = vpack.c.b16 %v7294, %v7290
    %v7579 = vpack.c.b16 %v7295, %v7291
    %v7580 = vpack.c.b16 %v7300, %v7296
    %v7581 = vpack.c.b16 %v7301, %v7297
    %v7582 = vpack.c.b16 %v7302, %v7298
    %v7583 = vpack.c.b16 %v7303, %v7299
    %v7584 = vpack.c.b16 %v7308, %v7304
    %v7585 = vpack.c.b16 %v7309, %v7305
    %v7586 = vpack.c.b16 %v7310, %v7306
    %v7587 = vpack.c.b16 %v7311, %v7307
    %v7588 = vpack.c.b16 %v7316, %v7312
    %v7589 = vpack.c.b16 %v7317, %v7313
    %v7590 = vpack.c.b16 %v7318, %v7314
    %v7591 = vpack.c.b16 %v7319, %v7315
    %v7592 = vpack.c.b16 %v7324, %v7320
    %v7593 = vpack.c.b16 %v7325, %v7321
    %v7594 = vpack.c.b16 %v7326, %v7322
    %v7595 = vpack.c.b16 %v7327, %v7323
    %v7596 = vpack.c.b16 %v7332, %v7328
    %v7597 = vpack.c.b16 %v7333, %v7329
    %v7598 = vpack.c.b16 %v7334, %v7330
    %v7599 = vpack.c.b16 %v7335, %v7331
    %v7600 = vpack.c.b16 %v7340, %v7336
    %v7601 = vpack.c.b16 %v7341, %v7337
    %v7602 = vpack.c.b16 %v7342, %v7338
    %v7603 = vpack.c.b16 %v7343, %v7339
    %v7604 = vpack.c.b16 %v7348, %v7344
    %v7605 = vpack.c.b16 %v7349, %v7345
    %v7606 = vpack.c.b16 %v7350, %v7346
    %v7607 = vpack.c.b16 %v7351, %v7347
    %7864 = vmatprep.subr.bf16.mxu0 %v7353
    %7865 = vmatpush1.bf16.msra.mxu0 %v7352
    %7866 = vmatprep.subr.bf16.mxu0 %v7357
    %7867 = vmatpush1.bf16.msra.mxu0 %v7356
    %7868 = vmatprep.subr.bf16.mxu0 %v7361
    %7869 = vmatpush1.bf16.msra.mxu0 %v7360
    %7870 = vmatprep.subr.bf16.mxu0 %v7365
    %7871 = vmatpush1.bf16.msra.mxu0 %v7364
    %7872 = vmatprep.subr.bf16.mxu0 %v7369
    %7873 = vmatpush1.bf16.msra.mxu0 %v7368
    %7874 = vmatprep.subr.bf16.mxu0 %v7373
    %7875 = vmatpush1.bf16.msra.mxu0 %v7372
    %7876 = vmatprep.subr.bf16.mxu0 %v7377
    %7877 = vmatpush1.bf16.msra.mxu0 %v7376
    %7878 = vmatprep.subr.bf16.mxu0 %v7381
    %7879 = vmatpush1.bf16.msra.mxu0 %v7380
    %7880 = vmatprep.subr.bf16.mxu0 %v7385
    %7881 = vmatpush1.bf16.msra.mxu0 %v7384
    %7882 = vmatprep.subr.bf16.mxu0 %v7389
    %7883 = vmatpush1.bf16.msra.mxu0 %v7388
    %7884 = vmatprep.subr.bf16.mxu0 %v7393
    %7885 = vmatpush1.bf16.msra.mxu0 %v7392
    %7886 = vmatprep.subr.bf16.mxu0 %v7397
    %7887 = vmatpush1.bf16.msra.mxu0 %v7396
    %7888 = vmatprep.subr.bf16.mxu0 %v7401
    %7889 = vmatpush1.bf16.msra.mxu0 %v7400
    %7890 = vmatprep.subr.bf16.mxu0 %v7405
    %7891 = vmatpush1.bf16.msra.mxu0 %v7404
    %7892 = vmatprep.subr.bf16.mxu0 %v7409
    %7893 = vmatpush1.bf16.msra.mxu0 %v7408
    %7894 = vmatprep.subr.bf16.mxu0 %v7413
    %7895 = vmatpush1.bf16.msra.mxu0 %v7412
    %7896 = vmatprep.mubr.bf16.mxu0 %v6299
    %7897 = vmatmul.mubr.bf16.gmra.mrb[0].mxu0 %v6298
    %v7898 = vpop.f32.mrb[0].mxu0
    %v7899 = vadd.f32 %v6567, %v7898
    %v7900 = vpop.f32.mrb[0].mxu0
    %v7901 = vadd.f32 %v6571, %v7900
    %v7902 = vpop.f32.mrb[0].mxu0
    %v7903 = vpop.f32.mrb[0].mxu0
    %7904 = vdwg.mxu0
    %7905 = vmatprep.subr.bf16.mxu0 %v7417
    %7906 = vmatpush1.bf16.msra.mxu0 %v7416
    %7907 = vmatprep.subr.bf16.mxu0 %v7421
    %7908 = vmatpush1.bf16.msra.mxu0 %v7420
    %7909 = vmatprep.subr.bf16.mxu0 %v7425
    %7910 = vmatpush1.bf16.msra.mxu0 %v7424
    %7911 = vmatprep.subr.bf16.mxu0 %v7429
    %7912 = vmatpush1.bf16.msra.mxu0 %v7428
    %7913 = vmatprep.subr.bf16.mxu0 %v7433
    %7914 = vmatpush1.bf16.msra.mxu0 %v7432
    %7915 = vmatprep.subr.bf16.mxu0 %v7437
    %7916 = vmatpush1.bf16.msra.mxu0 %v7436
    %7917 = vmatprep.subr.bf16.mxu0 %v7441
    %7918 = vmatpush1.bf16.msra.mxu0 %v7440
    %7919 = vmatprep.subr.bf16.mxu0 %v7445
    %7920 = vmatpush1.bf16.msra.mxu0 %v7444
    %7921 = vmatprep.subr.bf16.mxu0 %v7449
    %7922 = vmatpush1.bf16.msra.mxu0 %v7448
    %7923 = vmatprep.subr.bf16.mxu0 %v7453
    %7924 = vmatpush1.bf16.msra.mxu0 %v7452
    %7925 = vmatprep.subr.bf16.mxu0 %v7457
    %7926 = vmatpush1.bf16.msra.mxu0 %v7456
    %7927 = vmatprep.subr.bf16.mxu0 %v7461
    %7928 = vmatpush1.bf16.msra.mxu0 %v7460
    %7929 = vmatprep.subr.bf16.mxu0 %v7465
    %7930 = vmatpush1.bf16.msra.mxu0 %v7464
    %7931 = vmatprep.subr.bf16.mxu0 %v7469
    %7932 = vmatpush1.bf16.msra.mxu0 %v7468
    %7933 = vmatprep.subr.bf16.mxu0 %v7473
    %7934 = vmatpush1.bf16.msra.mxu0 %v7472
    %7935 = vmatprep.subr.bf16.mxu0 %v7477
    %7936 = vmatpush1.bf16.msra.mxu0 %v7476
    %7937 = vmatprep.mubr.bf16.mxu0 %v6301
    %7938 = vmatmul.mubr.bf16.gmra.mrb[0].mxu0 %v6300
    %v7939 = vpop.f32.mrb[0].mxu0
    %v7940 = vadd.f32 %v7899, %v7939
    %v7941 = vpop.f32.mrb[0].mxu0
    %v7942 = vadd.f32 %v7901, %v7941
    %v7943 = vpop.f32.mrb[0].mxu0
    %v7944 = vpop.f32.mrb[0].mxu0
    %7945 = vdwg.mxu0
    %7946 = vmatprep.subr.bf16.mxu0 %v7481
    %7947 = vmatpush1.bf16.msra.mxu0 %v7480
    %7948 = vmatprep.subr.bf16.mxu0 %v7485
    %7949 = vmatpush1.bf16.msra.mxu0 %v7484
    %7950 = vmatprep.subr.bf16.mxu0 %v7489
    %7951 = vmatpush1.bf16.msra.mxu0 %v7488
    %7952 = vmatprep.subr.bf16.mxu0 %v7493
    %7953 = vmatpush1.bf16.msra.mxu0 %v7492
    %7954 = vmatprep.subr.bf16.mxu0 %v7497
    %7955 = vmatpush1.bf16.msra.mxu0 %v7496
    %7956 = vmatprep.subr.bf16.mxu0 %v7501
    %7957 = vmatpush1.bf16.msra.mxu0 %v7500
    %7958 = vmatprep.subr.bf16.mxu0 %v7505
    %7959 = vmatpush1.bf16.msra.mxu0 %v7504
    %7960 = vmatprep.subr.bf16.mxu0 %v7509
    %7961 = vmatpush1.bf16.msra.mxu0 %v7508
    %7962 = vmatprep.subr.bf16.mxu0 %v7513
    %7963 = vmatpush1.bf16.msra.mxu0 %v7512
    %7964 = vmatprep.subr.bf16.mxu0 %v7517
    %7965 = vmatpush1.bf16.msra.mxu0 %v7516
    %7966 = vmatprep.subr.bf16.mxu0 %v7521
    %7967 = vmatpush1.bf16.msra.mxu0 %v7520
    %7968 = vmatprep.subr.bf16.mxu0 %v7525
    %7969 = vmatpush1.bf16.msra.mxu0 %v7524
    %7970 = vmatprep.subr.bf16.mxu0 %v7529
    %7971 = vmatpush1.bf16.msra.mxu0 %v7528
    %7972 = vmatprep.subr.bf16.mxu0 %v7533
    %7973 = vmatpush1.bf16.msra.mxu0 %v7532
    %7974 = vmatprep.subr.bf16.mxu0 %v7537
    %7975 = vmatpush1.bf16.msra.mxu0 %v7536
    %7976 = vmatprep.subr.bf16.mxu0 %v7541
    %7977 = vmatpush1.bf16.msra.mxu0 %v7540
    %7978 = vmatprep.mubr.bf16.mxu0 %v6303
    %7979 = vmatmul.mubr.bf16.gmra.mrb[0].mxu0 %v6302
    %v7980 = vpop.f32.mrb[0].mxu0
    %v7981 = vadd.f32 %v7940, %v7980
    %v7982 = vpop.f32.mrb[0].mxu0
    %v7983 = vadd.f32 %v7942, %v7982
    %v7984 = vpop.f32.mrb[0].mxu0
    %v7985 = vpop.f32.mrb[0].mxu0
    %7986 = vdwg.mxu0
    %7987 = vmatprep.subr.bf16.mxu0 %v7545
    %7988 = vmatpush1.bf16.msra.mxu0 %v7544
    %7989 = vmatprep.subr.bf16.mxu0 %v7549
    %7990 = vmatpush1.bf16.msra.mxu0 %v7548
    %7991 = vmatprep.subr.bf16.mxu0 %v7553
    %7992 = vmatpush1.bf16.msra.mxu0 %v7552
    %7993 = vmatprep.subr.bf16.mxu0 %v7557
    %7994 = vmatpush1.bf16.msra.mxu0 %v7556
    %7995 = vmatprep.subr.bf16.mxu0 %v7561
    %7996 = vmatpush1.bf16.msra.mxu0 %v7560
    %7997 = vmatprep.subr.bf16.mxu0 %v7565
    %7998 = vmatpush1.bf16.msra.mxu0 %v7564
    %7999 = vmatprep.subr.bf16.mxu0 %v7569
    %8000 = vmatpush1.bf16.msra.mxu0 %v7568
    %8001 = vmatprep.subr.bf16.mxu0 %v7573
    %8002 = vmatpush1.bf16.msra.mxu0 %v7572
    %8003 = vmatprep.subr.bf16.mxu0 %v7577
    %8004 = vmatpush1.bf16.msra.mxu0 %v7576
    %8005 = vmatprep.subr.bf16.mxu0 %v7581
    %8006 = vmatpush1.bf16.msra.mxu0 %v7580
    %8007 = vmatprep.subr.bf16.mxu0 %v7585
    %8008 = vmatpush1.bf16.msra.mxu0 %v7584
    %8009 = vmatprep.subr.bf16.mxu0 %v7589
    %8010 = vmatpush1.bf16.msra.mxu0 %v7588
    %8011 = vmatprep.subr.bf16.mxu0 %v7593
    %8012 = vmatpush1.bf16.msra.mxu0 %v7592
    %8013 = vmatprep.subr.bf16.mxu0 %v7597
    %8014 = vmatpush1.bf16.msra.mxu0 %v7596
    %8015 = vmatprep.subr.bf16.mxu0 %v7601
    %8016 = vmatpush1.bf16.msra.mxu0 %v7600
    %8017 = vmatprep.subr.bf16.mxu0 %v7605
    %8018 = vmatpush1.bf16.msra.mxu0 %v7604
    %8019 = vmatprep.mubr.bf16.mxu0 %v6305
    %8020 = vmatmul.mubr.bf16.gmra.mrb[0].mxu0 %v6304
    %v8021 = vpop.f32.mrb[0].mxu0
    %v8022 = vadd.f32 %v7981, %v8021
    %v8023 = vpop.f32.mrb[0].mxu0
    %v8024 = vadd.f32 %v7983, %v8023
    %v8025 = vpop.f32.mrb[0].mxu0
    %v8026 = vpop.f32.mrb[0].mxu0
    %8027 = vdwg.mxu0
    %8028 = vmatprep.subr.bf16.mxu0 %v7355
    %8029 = vmatpush1.bf16.msra.mxu0 %v7354
    %8030 = vmatprep.subr.bf16.mxu0 %v7359
    %8031 = vmatpush1.bf16.msra.mxu0 %v7358
    %8032 = vmatprep.subr.bf16.mxu0 %v7363
    %8033 = vmatpush1.bf16.msra.mxu0 %v7362
    %8034 = vmatprep.subr.bf16.mxu0 %v7367
    %8035 = vmatpush1.bf16.msra.mxu0 %v7366
    %8036 = vmatprep.subr.bf16.mxu0 %v7371
    %8037 = vmatpush1.bf16.msra.mxu0 %v7370
    %8038 = vmatprep.subr.bf16.mxu0 %v7375
    %8039 = vmatpush1.bf16.msra.mxu0 %v7374
    %8040 = vmatprep.subr.bf16.mxu0 %v7379
    %8041 = vmatpush1.bf16.msra.mxu0 %v7378
    %8042 = vmatprep.subr.bf16.mxu0 %v7383
    %8043 = vmatpush1.bf16.msra.mxu0 %v7382
    %8044 = vmatprep.subr.bf16.mxu0 %v7387
    %8045 = vmatpush1.bf16.msra.mxu0 %v7386
    %8046 = vmatprep.subr.bf16.mxu0 %v7391
    %8047 = vmatpush1.bf16.msra.mxu0 %v7390
    %8048 = vmatprep.subr.bf16.mxu0 %v7395
    %8049 = vmatpush1.bf16.msra.mxu0 %v7394
    %8050 = vmatprep.subr.bf16.mxu0 %v7399
    %8051 = vmatpush1.bf16.msra.mxu0 %v7398
    %8052 = vmatprep.subr.bf16.mxu0 %v7403
    %8053 = vmatpush1.bf16.msra.mxu0 %v7402
    %8054 = vmatprep.subr.bf16.mxu0 %v7407
    %8055 = vmatpush1.bf16.msra.mxu0 %v7406
    %8056 = vmatprep.subr.bf16.mxu0 %v7411
    %8057 = vmatpush1.bf16.msra.mxu0 %v7410
    %8058 = vmatprep.subr.bf16.mxu0 %v7415
    %8059 = vmatpush1.bf16.msra.mxu0 %v7414
    %8060 = vmatprep.mubr.bf16.mxu0 %v6299
    %8061 = vmatmul.mubr.bf16.gmra.mrb[0].mxu0 %v6298
    %v8062 = vpop.f32.mrb[0].mxu0
    %v8063 = vadd.f32 %v6575, %v8062
    %v8064 = vpop.f32.mrb[0].mxu0
    %v8065 = vadd.f32 %v6579, %v8064
    %v8066 = vpop.f32.mrb[0].mxu0
    %v8067 = vpop.f32.mrb[0].mxu0
    %8068 = vdwg.mxu0
    %8069 = vmatprep.subr.bf16.mxu0 %v7419
    %8070 = vmatpush1.bf16.msra.mxu0 %v7418
    %8071 = vmatprep.subr.bf16.mxu0 %v7423
    %8072 = vmatpush1.bf16.msra.mxu0 %v7422
    %8073 = vmatprep.subr.bf16.mxu0 %v7427
    %8074 = vmatpush1.bf16.msra.mxu0 %v7426
    %8075 = vmatprep.subr.bf16.mxu0 %v7431
    %8076 = vmatpush1.bf16.msra.mxu0 %v7430
    %8077 = vmatprep.subr.bf16.mxu0 %v7435
    %8078 = vmatpush1.bf16.msra.mxu0 %v7434
    %8079 = vmatprep.subr.bf16.mxu0 %v7439
    %8080 = vmatpush1.bf16.msra.mxu0 %v7438
    %8081 = vmatprep.subr.bf16.mxu0 %v7443
    %8082 = vmatpush1.bf16.msra.mxu0 %v7442
    %8083 = vmatprep.subr.bf16.mxu0 %v7447
    %8084 = vmatpush1.bf16.msra.mxu0 %v7446
    %8085 = vmatprep.subr.bf16.mxu0 %v7451
    %8086 = vmatpush1.bf16.msra.mxu0 %v7450
    %8087 = vmatprep.subr.bf16.mxu0 %v7455
    %8088 = vmatpush1.bf16.msra.mxu0 %v7454
    %8089 = vmatprep.subr.bf16.mxu0 %v7459
    %8090 = vmatpush1.bf16.msra.mxu0 %v7458
    %8091 = vmatprep.subr.bf16.mxu0 %v7463
    %8092 = vmatpush1.bf16.msra.mxu0 %v7462
    %8093 = vmatprep.subr.bf16.mxu0 %v7467
    %8094 = vmatpush1.bf16.msra.mxu0 %v7466
    %8095 = vmatprep.subr.bf16.mxu0 %v7471
    %8096 = vmatpush1.bf16.msra.mxu0 %v7470
    %8097 = vmatprep.subr.bf16.mxu0 %v7475
    %8098 = vmatpush1.bf16.msra.mxu0 %v7474
    %8099 = vmatprep.subr.bf16.mxu0 %v7479
    %8100 = vmatpush1.bf16.msra.mxu0 %v7478
    %8101 = vmatprep.mubr.bf16.mxu0 %v6301
    %8102 = vmatmul.mubr.bf16.gmra.mrb[0].mxu0 %v6300
    %v8103 = vpop.f32.mrb[0].mxu0
    %v8104 = vadd.f32 %v8063, %v8103
    %v8105 = vpop.f32.mrb[0].mxu0
    %v8106 = vadd.f32 %v8065, %v8105
    %v8107 = vpop.f32.mrb[0].mxu0
    %v8108 = vpop.f32.mrb[0].mxu0
    %8109 = vdwg.mxu0
    %8110 = vmatprep.subr.bf16.mxu0 %v7483
    %8111 = vmatpush1.bf16.msra.mxu0 %v7482
    %8112 = vmatprep.subr.bf16.mxu0 %v7487
    %8113 = vmatpush1.bf16.msra.mxu0 %v7486
    %8114 = vmatprep.subr.bf16.mxu0 %v7491
    %8115 = vmatpush1.bf16.msra.mxu0 %v7490
    %8116 = vmatprep.subr.bf16.mxu0 %v7495
    %8117 = vmatpush1.bf16.msra.mxu0 %v7494
    %8118 = vmatprep.subr.bf16.mxu0 %v7499
    %8119 = vmatpush1.bf16.msra.mxu0 %v7498
    %8120 = vmatprep.subr.bf16.mxu0 %v7503
    %8121 = vmatpush1.bf16.msra.mxu0 %v7502
    %8122 = vmatprep.subr.bf16.mxu0 %v7507
    %8123 = vmatpush1.bf16.msra.mxu0 %v7506
    %8124 = vmatprep.subr.bf16.mxu0 %v7511
    %8125 = vmatpush1.bf16.msra.mxu0 %v7510
    %8126 = vmatprep.subr.bf16.mxu0 %v7515
    %8127 = vmatpush1.bf16.msra.mxu0 %v7514
    %8128 = vmatprep.subr.bf16.mxu0 %v7519
    %8129 = vmatpush1.bf16.msra.mxu0 %v7518
    %8130 = vmatprep.subr.bf16.mxu0 %v7523
    %8131 = vmatpush1.bf16.msra.mxu0 %v7522
    %8132 = vmatprep.subr.bf16.mxu0 %v7527
    %8133 = vmatpush1.bf16.msra.mxu0 %v7526
    %8134 = vmatprep.subr.bf16.mxu0 %v7531
    %8135 = vmatpush1.bf16.msra.mxu0 %v7530
    %8136 = vmatprep.subr.bf16.mxu0 %v7535
    %8137 = vmatpush1.bf16.msra.mxu0 %v7534
    %8138 = vmatprep.subr.bf16.mxu0 %v7539
    %8139 = vmatpush1.bf16.msra.mxu0 %v7538
    %8140 = vmatprep.subr.bf16.mxu0 %v7543
    %8141 = vmatpush1.bf16.msra.mxu0 %v7542
    %8142 = vmatprep.mubr.bf16.mxu0 %v6303
    %8143 = vmatmul.mubr.bf16.gmra.mrb[0].mxu0 %v6302
    %v8144 = vpop.f32.mrb[0].mxu0
    %v8145 = vadd.f32 %v8104, %v8144
    %v8146 = vpop.f32.mrb[0].mxu0
    %v8147 = vadd.f32 %v8106, %v8146
    %v8148 = vpop.f32.mrb[0].mxu0
    %v8149 = vpop.f32.mrb[0].mxu0
    %8150 = vdwg.mxu0
    %8151 = vmatprep.subr.bf16.mxu0 %v7547
    %8152 = vmatpush1.bf16.msra.mxu0 %v7546
    %8153 = vmatprep.subr.bf16.mxu0 %v7551
    %8154 = vmatpush1.bf16.msra.mxu0 %v7550
    %8155 = vmatprep.subr.bf16.mxu0 %v7555
    %8156 = vmatpush1.bf16.msra.mxu0 %v7554
    %8157 = vmatprep.subr.bf16.mxu0 %v7559
    %8158 = vmatpush1.bf16.msra.mxu0 %v7558
    %8159 = vmatprep.subr.bf16.mxu0 %v7563
    %8160 = vmatpush1.bf16.msra.mxu0 %v7562
    %8161 = vmatprep.subr.bf16.mxu0 %v7567
    %8162 = vmatpush1.bf16.msra.mxu0 %v7566
    %8163 = vmatprep.subr.bf16.mxu0 %v7571
    %8164 = vmatpush1.bf16.msra.mxu0 %v7570
    %8165 = vmatprep.subr.bf16.mxu0 %v7575
    %8166 = vmatpush1.bf16.msra.mxu0 %v7574
    %8167 = vmatprep.subr.bf16.mxu0 %v7579
    %8168 = vmatpush1.bf16.msra.mxu0 %v7578
    %8169 = vmatprep.subr.bf16.mxu0 %v7583
    %8170 = vmatpush1.bf16.msra.mxu0 %v7582
    %8171 = vmatprep.subr.bf16.mxu0 %v7587
    %8172 = vmatpush1.bf16.msra.mxu0 %v7586
    %8173 = vmatprep.subr.bf16.mxu0 %v7591
    %8174 = vmatpush1.bf16.msra.mxu0 %v7590
    %8175 = vmatprep.subr.bf16.mxu0 %v7595
    %8176 = vmatpush1.bf16.msra.mxu0 %v7594
    %8177 = vmatprep.subr.bf16.mxu0 %v7599
    %8178 = vmatpush1.bf16.msra.mxu0 %v7598
    %8179 = vmatprep.subr.bf16.mxu0 %v7603
    %8180 = vmatpush1.bf16.msra.mxu0 %v7602
    %8181 = vmatprep.subr.bf16.mxu0 %v7607
    %8182 = vmatpush1.bf16.msra.mxu0 %v7606
    %8183 = vmatprep.mubr.bf16.mxu0 %v6305
    %8184 = vmatmul.mubr.bf16.gmra.mrb[0].mxu0 %v6304
    %v8185 = vpop.f32.mrb[0].mxu0
    %v8186 = vadd.f32 %v8145, %v8185
    %v8187 = vpop.f32.mrb[0].mxu0
    %v8188 = vadd.f32 %v8147, %v8187
    %v8189 = vpop.f32.mrb[0].mxu0
    %v8190 = vpop.f32.mrb[0].mxu0
    %8191 = vdwg.mxu0
    %v8192 = vmax.f32 %v8022, 0.0
    %v8193 = vmax.f32 %v8024, 0.0
    %v8194 = vmax.f32 %v8186, 0.0
    %v8195 = vmax.f32 %v8188, 0.0
    %v8196 = vpack.c.bf16 %v8192, %v8192
    %v8197 = vpack.c.bf16 %v8193, %v8193
    %v8198 = vpack.c.bf16 %v8194, %v8194
    %v8199 = vpack.c.bf16 %v8195, %v8195
    %v8200 = vld [vmem:[#allocation31] sm:$0xf]
    %v8201 = vld [vmem:[#allocation31 + $0x4] sm:$0xf]
    %v8202 = vld [vmem:[#allocation31 + $0x8] sm:$0xf]
    %v8203 = vld [vmem:[#allocation31 + $0xc] sm:$0xf]
    %v8204 = vld [vmem:[#allocation31 + $0x10] sm:$0xf]
    %v8205 = vld [vmem:[#allocation31 + $0x14] sm:$0xf]
    %v8206 = vld [vmem:[#allocation31 + $0x18] sm:$0xf]
    %v8207 = vld [vmem:[#allocation31 + $0x1c] sm:$0xf]
    %v8208 = vld [vmem:[#allocation31 + $0x20] sm:$0xf]
    %v8209 = vld [vmem:[#allocation31 + $0x24] sm:$0xf]
    %v8210 = vld [vmem:[#allocation31 + $0x28] sm:$0xf]
    %v8211 = vld [vmem:[#allocation31 + $0x2c] sm:$0xf]
    %v8212 = vld [vmem:[#allocation31 + $0x30] sm:$0xf]
    %v8213 = vld [vmem:[#allocation31 + $0x34] sm:$0xf]
    %v8214 = vld [vmem:[#allocation31 + $0x38] sm:$0xf]
    %v8215 = vld [vmem:[#allocation31 + $0x3c] sm:$0xf]
    %v8216 = vld [vmem:[#allocation31 + $0x40] sm:$0xf]
    %v8217 = vld [vmem:[#allocation31 + $0x44] sm:$0xf]
    %v8218 = vld [vmem:[#allocation31 + $0x48] sm:$0xf]
    %v8219 = vld [vmem:[#allocation31 + $0x4c] sm:$0xf]
    %v8220 = vld [vmem:[#allocation31 + $0x50] sm:$0xf]
    %v8221 = vld [vmem:[#allocation31 + $0x54] sm:$0xf]
    %v8222 = vld [vmem:[#allocation31 + $0x58] sm:$0xf]
    %v8223 = vld [vmem:[#allocation31 + $0x5c] sm:$0xf]
    %v8224 = vld [vmem:[#allocation31 + $0x60] sm:$0xf]
    %v8225 = vld [vmem:[#allocation31 + $0x64] sm:$0xf]
    %v8226 = vld [vmem:[#allocation31 + $0x68] sm:$0xf]
    %v8227 = vld [vmem:[#allocation31 + $0x6c] sm:$0xf]
    %v8228 = vld [vmem:[#allocation31 + $0x70] sm:$0xf]
    %v8229 = vld [vmem:[#allocation31 + $0x74] sm:$0xf]
    %v8230 = vld [vmem:[#allocation31 + $0x78] sm:$0xf]
    %v8231 = vld [vmem:[#allocation31 + $0x7c] sm:$0xf]
    %v8232 = vld [vmem:[#allocation31 + $0x80] sm:$0xf]
    %v8233 = vld [vmem:[#allocation31 + $0x84] sm:$0xf]
    %v8234 = vld [vmem:[#allocation31 + $0x88] sm:$0xf]
    %v8235 = vld [vmem:[#allocation31 + $0x8c] sm:$0xf]
    %v8236 = vld [vmem:[#allocation31 + $0x90] sm:$0xf]
    %v8237 = vld [vmem:[#allocation31 + $0x94] sm:$0xf]
    %v8238 = vld [vmem:[#allocation31 + $0x98] sm:$0xf]
    %v8239 = vld [vmem:[#allocation31 + $0x9c] sm:$0xf]
    %v8240 = vld [vmem:[#allocation31 + $0xa0] sm:$0xf]
    %v8241 = vld [vmem:[#allocation31 + $0xa4] sm:$0xf]
    %v8242 = vld [vmem:[#allocation31 + $0xa8] sm:$0xf]
    %v8243 = vld [vmem:[#allocation31 + $0xac] sm:$0xf]
    %v8244 = vld [vmem:[#allocation31 + $0xb0] sm:$0xf]
    %v8245 = vld [vmem:[#allocation31 + $0xb4] sm:$0xf]
    %v8246 = vld [vmem:[#allocation31 + $0xb8] sm:$0xf]
    %v8247 = vld [vmem:[#allocation31 + $0xbc] sm:$0xf]
    %v8248 = vld [vmem:[#allocation31 + $0xc0] sm:$0xf]
    %v8249 = vld [vmem:[#allocation31 + $0xc4] sm:$0xf]
    %v8250 = vld [vmem:[#allocation31 + $0xc8] sm:$0xf]
    %v8251 = vld [vmem:[#allocation31 + $0xcc] sm:$0xf]
    %v8252 = vld [vmem:[#allocation31 + $0xd0] sm:$0xf]
    %v8253 = vld [vmem:[#allocation31 + $0xd4] sm:$0xf]
    %v8254 = vld [vmem:[#allocation31 + $0xd8] sm:$0xf]
    %v8255 = vld [vmem:[#allocation31 + $0xdc] sm:$0xf]
    %v8256 = vld [vmem:[#allocation31 + $0xe0] sm:$0xf]
    %v8257 = vld [vmem:[#allocation31 + $0xe4] sm:$0xf]
    %v8258 = vld [vmem:[#allocation31 + $0xe8] sm:$0xf]
    %v8259 = vld [vmem:[#allocation31 + $0xec] sm:$0xf]
    %v8260 = vld [vmem:[#allocation31 + $0xf0] sm:$0xf]
    %v8261 = vld [vmem:[#allocation31 + $0xf4] sm:$0xf]
    %v8262 = vld [vmem:[#allocation31 + $0xf8] sm:$0xf]
    %v8263 = vld [vmem:[#allocation31 + $0xfc] sm:$0xf]
    %v8264 = vld [vmem:[#allocation32] sm:$0x1]
    %v8266 = vlaneseq
    %v8267 = vshrl.u32 %v8266, 7
    %v8268 = vsub.s32 0, %v8267
    %v8269 = vrot.slane %v8264, %v8268
    %v8335 = vunpack.c.l.b16 %v8200
    %v8336 = vunpack.c.l.b16 %v8201
    %v8337 = vunpack.c.l.b16 %v8202
    %v8338 = vunpack.c.l.b16 %v8203
    %v8339 = vunpack.c.l.b16 %v8204
    %v8340 = vunpack.c.l.b16 %v8205
    %v8341 = vunpack.c.l.b16 %v8206
    %v8342 = vunpack.c.l.b16 %v8207
    %v8343 = vunpack.c.l.b16 %v8208
    %v8344 = vunpack.c.l.b16 %v8209
    %v8345 = vunpack.c.l.b16 %v8210
    %v8346 = vunpack.c.l.b16 %v8211
    %v8347 = vunpack.c.l.b16 %v8212
    %v8348 = vunpack.c.l.b16 %v8213
    %v8349 = vunpack.c.l.b16 %v8214
    %v8350 = vunpack.c.l.b16 %v8215
    %v8351 = vunpack.c.l.b16 %v8216
    %v8352 = vunpack.c.l.b16 %v8217
    %v8353 = vunpack.c.l.b16 %v8218
    %v8354 = vunpack.c.l.b16 %v8219
    %v8355 = vunpack.c.l.b16 %v8220
    %v8356 = vunpack.c.l.b16 %v8221
    %v8357 = vunpack.c.l.b16 %v8222
    %v8358 = vunpack.c.l.b16 %v8223
    %v8359 = vunpack.c.l.b16 %v8224
    %v8360 = vunpack.c.l.b16 %v8225
    %v8361 = vunpack.c.l.b16 %v8226
    %v8362 = vunpack.c.l.b16 %v8227
    %v8363 = vunpack.c.l.b16 %v8228
    %v8364 = vunpack.c.l.b16 %v8229
    %v8365 = vunpack.c.l.b16 %v8230
    %v8366 = vunpack.c.l.b16 %v8231
    %v8367 = vunpack.c.l.b16 %v8232
    %v8368 = vunpack.c.l.b16 %v8233
    %v8369 = vunpack.c.l.b16 %v8234
    %v8370 = vunpack.c.l.b16 %v8235
    %v8371 = vunpack.c.l.b16 %v8236
    %v8372 = vunpack.c.l.b16 %v8237
    %v8373 = vunpack.c.l.b16 %v8238
    %v8374 = vunpack.c.l.b16 %v8239
    %v8375 = vunpack.c.l.b16 %v8240
    %v8376 = vunpack.c.l.b16 %v8241
    %v8377 = vunpack.c.l.b16 %v8242
    %v8378 = vunpack.c.l.b16 %v8243
    %v8379 = vunpack.c.l.b16 %v8244
    %v8380 = vunpack.c.l.b16 %v8245
    %v8381 = vunpack.c.l.b16 %v8246
    %v8382 = vunpack.c.l.b16 %v8247
    %v8383 = vunpack.c.l.b16 %v8248
    %v8384 = vunpack.c.l.b16 %v8249
    %v8385 = vunpack.c.l.b16 %v8250
    %v8386 = vunpack.c.l.b16 %v8251
    %v8387 = vunpack.c.l.b16 %v8252
    %v8388 = vunpack.c.l.b16 %v8253
    %v8389 = vunpack.c.l.b16 %v8254
    %v8390 = vunpack.c.l.b16 %v8255
    %v8391 = vunpack.c.l.b16 %v8256
    %v8392 = vunpack.c.l.b16 %v8257
    %v8393 = vunpack.c.l.b16 %v8258
    %v8394 = vunpack.c.l.b16 %v8259
    %v8395 = vunpack.c.l.b16 %v8260
    %v8396 = vunpack.c.l.b16 %v8261
    %v8397 = vunpack.c.l.b16 %v8262
    %v8398 = vunpack.c.l.b16 %v8263
    %v8399 = vpack.c.b16 %v8336, %v8335
    %v8400 = vpack.c.b16 %v8338, %v8337
    %v8401 = vpack.c.b16 %v8340, %v8339
    %v8402 = vpack.c.b16 %v8342, %v8341
    %v8403 = vpack.c.b16 %v8344, %v8343
    %v8404 = vpack.c.b16 %v8346, %v8345
    %v8405 = vpack.c.b16 %v8348, %v8347
    %v8406 = vpack.c.b16 %v8350, %v8349
    %v8407 = vpack.c.b16 %v8352, %v8351
    %v8408 = vpack.c.b16 %v8354, %v8353
    %v8409 = vpack.c.b16 %v8356, %v8355
    %v8410 = vpack.c.b16 %v8358, %v8357
    %v8411 = vpack.c.b16 %v8360, %v8359
    %v8412 = vpack.c.b16 %v8362, %v8361
    %v8413 = vpack.c.b16 %v8364, %v8363
    %v8414 = vpack.c.b16 %v8366, %v8365
    %v8415 = vpack.c.b16 %v8368, %v8367
    %v8416 = vpack.c.b16 %v8370, %v8369
    %v8417 = vpack.c.b16 %v8372, %v8371
    %v8418 = vpack.c.b16 %v8374, %v8373
    %v8419 = vpack.c.b16 %v8376, %v8375
    %v8420 = vpack.c.b16 %v8378, %v8377
    %v8421 = vpack.c.b16 %v8380, %v8379
    %v8422 = vpack.c.b16 %v8382, %v8381
    %v8423 = vpack.c.b16 %v8384, %v8383
    %v8424 = vpack.c.b16 %v8386, %v8385
    %v8425 = vpack.c.b16 %v8388, %v8387
    %v8426 = vpack.c.b16 %v8390, %v8389
    %v8427 = vpack.c.b16 %v8392, %v8391
    %v8428 = vpack.c.b16 %v8394, %v8393
    %v8429 = vpack.c.b16 %v8396, %v8395
    %v8430 = vpack.c.b16 %v8398, %v8397
    %8463 = vmatprep.subr.bf16.mxu0 0
    %8464 = vmatpush1.bf16.msra.mxu0 %v8399
    %8465 = vmatprep.subr.bf16.mxu0 0
    %8466 = vmatpush1.bf16.msra.mxu0 %v8400
    %8467 = vmatprep.subr.bf16.mxu0 0
    %8468 = vmatpush1.bf16.msra.mxu0 %v8401
    %8469 = vmatprep.subr.bf16.mxu0 0
    %8470 = vmatpush1.bf16.msra.mxu0 %v8402
    %8471 = vmatprep.subr.bf16.mxu0 0
    %8472 = vmatpush1.bf16.msra.mxu0 %v8403
    %8473 = vmatprep.subr.bf16.mxu0 0
    %8474 = vmatpush1.bf16.msra.mxu0 %v8404
    %8475 = vmatprep.subr.bf16.mxu0 0
    %8476 = vmatpush1.bf16.msra.mxu0 %v8405
    %8477 = vmatprep.subr.bf16.mxu0 0
    %8478 = vmatpush1.bf16.msra.mxu0 %v8406
    %8479 = vmatprep.subr.bf16.mxu0 0
    %8480 = vmatpush1.bf16.msra.mxu0 %v8407
    %8481 = vmatprep.subr.bf16.mxu0 0
    %8482 = vmatpush1.bf16.msra.mxu0 %v8408
    %8483 = vmatprep.subr.bf16.mxu0 0
    %8484 = vmatpush1.bf16.msra.mxu0 %v8409
    %8485 = vmatprep.subr.bf16.mxu0 0
    %8486 = vmatpush1.bf16.msra.mxu0 %v8410
    %8487 = vmatprep.subr.bf16.mxu0 0
    %8488 = vmatpush1.bf16.msra.mxu0 %v8411
    %8489 = vmatprep.subr.bf16.mxu0 0
    %8490 = vmatpush1.bf16.msra.mxu0 %v8412
    %8491 = vmatprep.subr.bf16.mxu0 0
    %8492 = vmatpush1.bf16.msra.mxu0 %v8413
    %8493 = vmatprep.subr.bf16.mxu0 0
    %8494 = vmatpush1.bf16.msra.mxu0 %v8414
    %8495 = vmatprep.mubr.bf16.mxu0 %v8197
    %8496 = vmatmul.mubr.bf16.gmra.mrb[0].mxu0 %v8196
    %v8497 = vpop.f32.mrb[0].mxu0
    %v8498 = vadd.f32 %v8269, %v8497
    %v8499 = vpop.f32.mrb[0].mxu0
    %v8500 = vpop.f32.mrb[0].mxu0
    %v8501 = vpop.f32.mrb[0].mxu0
    %8502 = vdwg.mxu0
    %8503 = vmatprep.subr.bf16.mxu0 0
    %8504 = vmatpush1.bf16.msra.mxu0 %v8415
    %8505 = vmatprep.subr.bf16.mxu0 0
    %8506 = vmatpush1.bf16.msra.mxu0 %v8416
    %8507 = vmatprep.subr.bf16.mxu0 0
    %8508 = vmatpush1.bf16.msra.mxu0 %v8417
    %8509 = vmatprep.subr.bf16.mxu0 0
    %8510 = vmatpush1.bf16.msra.mxu0 %v8418
    %8511 = vmatprep.subr.bf16.mxu0 0
    %8512 = vmatpush1.bf16.msra.mxu0 %v8419
    %8513 = vmatprep.subr.bf16.mxu0 0
    %8514 = vmatpush1.bf16.msra.mxu0 %v8420
    %8515 = vmatprep.subr.bf16.mxu0 0
    %8516 = vmatpush1.bf16.msra.mxu0 %v8421
    %8517 = vmatprep.subr.bf16.mxu0 0
    %8518 = vmatpush1.bf16.msra.mxu0 %v8422
    %8519 = vmatprep.subr.bf16.mxu0 0
    %8520 = vmatpush1.bf16.msra.mxu0 %v8423
    %8521 = vmatprep.subr.bf16.mxu0 0
    %8522 = vmatpush1.bf16.msra.mxu0 %v8424
    %8523 = vmatprep.subr.bf16.mxu0 0
    %8524 = vmatpush1.bf16.msra.mxu0 %v8425
    %8525 = vmatprep.subr.bf16.mxu0 0
    %8526 = vmatpush1.bf16.msra.mxu0 %v8426
    %8527 = vmatprep.subr.bf16.mxu0 0
    %8528 = vmatpush1.bf16.msra.mxu0 %v8427
    %8529 = vmatprep.subr.bf16.mxu0 0
    %8530 = vmatpush1.bf16.msra.mxu0 %v8428
    %8531 = vmatprep.subr.bf16.mxu0 0
    %8532 = vmatpush1.bf16.msra.mxu0 %v8429
    %8533 = vmatprep.subr.bf16.mxu0 0
    %8534 = vmatpush1.bf16.msra.mxu0 %v8430
    %8535 = vmatprep.mubr.bf16.mxu0 %v8199
    %8536 = vmatmul.mubr.bf16.gmra.mrb[0].mxu0 %v8198
    %v8537 = vpop.f32.mrb[0].mxu0
    %v8538 = vadd.f32 %v8498, %v8537
    %v8539 = vpop.f32.mrb[0].mxu0
    %v8540 = vpop.f32.mrb[0].mxu0
    %v8541 = vpop.f32.mrb[0].mxu0
    %8542 = vdwg.mxu0
    %8543 = vst [vmem:[#allocation34] sm:$0xff] %v8538
    // Predicated region
    $region166: #{tpu_custom_call.1} parent=1 // pred_check
      _
    $region167: #{tpu_custom_call.1} parent=1 // pred_check_branch
      %8545 = sbr.rel (0) target = $region169
    $region168: #{tpu_custom_call.1} parent=1 // pred_region
      %s8547 = ssub.s32 128, 128
      %8548 = vsyncadd [#allocation4], %s8547
      %s8550 = sshll.u32 [#allocation34], 4
      %s8551 = int_to_ptr.vmem [resolvable:$true] %s8550
      %8553 = dma.vmem_to_hbm [thread:$0]  %s8551, 128, %s21, [#allocation4]
    $region169: #{tpu_custom_call.1} parent=1 // pred_fallthru
      _
    // Predicated region
    $region170: #{tpu_custom_call.1} parent=1 // pred_check
      _
    $region171: #{tpu_custom_call.1} parent=1 // pred_check_branch
      %8555 = sbr.rel (0) target = $region173
    $region172: #{tpu_custom_call.1} parent=1 // pred_region
      %8556 = dma.done [#allocation4], 128
    $region173: #{tpu_custom_call.1} parent=1 // pred_fallthru
      _
    %8557 = vsyncpa [#allocation3], 1
    %8558 = vsyncpa [#allocation6], 1
    %8559 = vsyncpa [#allocation9], 1
    %8560 = vsyncpa [#allocation12], 1
    %8561 = vsyncpa [#allocation15], 1
    %8562 = vsyncpa [#allocation18], 1
    %8563 = vsyncpa [#allocation21], 1
    %8564 = vsyncpa [#allocation24], 1
    %8565 = vsyncpa [#allocation27], 1
    %8566 = vsyncpa [#allocation30], 1
    %8567 = vsyncpa [#allocation33], 1
    %8568 = vsyncpa [#allocation4], 1

</llo_original>
